<compile_context>
chip_gen: v6e
topology: v6e:2x2x1
jax: 0.10.0
libtpu: 0.0.40
codegen_flags: <defaults>
</compile_context>

<pallas_src>
import jax
import jax.numpy as jnp
from jax.experimental import pallas as pl
from jax.experimental.pallas import tpu as pltpu


def _silu(v):
    return v * jax.nn.sigmoid(v)


def weighted_average_kernel(
    x_ref,                    # (TILE_N, D) bf16 row tile
    seg_ref,                  # (TILE_N, 1) int32 segment ids (-1 = ignore row)
    w01_ref, b01_ref,         # fused first layer: (D, 2*h1) bf16, (1, 2*h1) f32
    w2_ref, b2_ref,           # (2*h1, h2) bf16 (rows h1.. zero), (1, h2) f32
    w3_ref, b3_ref,           # (h2, D) bf16, (1, D) f32
    u2_ref, c2_ref,           # MLPw head: (1, 2*h1) f32 (lanes <h1 zero), (1, 1) f32
    out_ref,                  # (B, D) f32 per-core partial segment sums
):
    i = pl.program_id(1)      # row-tile index within this core (reduction axis)

    @pl.when(i == 0)
    def _init():
        out_ref[...] = jnp.zeros_like(out_ref)

    num_segments = out_ref.shape[0]

    x = x_ref[...]                                                  # (TN, D) bf16

    # ---- fused first layer for both branches: one lane-dense 128-wide MXU op ----
    a = jnp.dot(x, w01_ref[...], preferred_element_type=jnp.float32) + b01_ref[...]
    a = _silu(a)                                                    # (TN, 2*h1) f32
    # TODO(synk): on v6e/v7x run this elementwise chain in bf16 (bf16 VPU/EUP); keep f32 on v5e.

    # ---- MLP branch: zero-padded w2 rows kill the MLPw lanes -> no lane slice needed ----
    h = _silu(jnp.dot(a.astype(jnp.bfloat16), w2_ref[...],
                      preferred_element_type=jnp.float32) + b2_ref[...])
    fx = jnp.dot(h.astype(jnp.bfloat16), w3_ref[...],
                 preferred_element_type=jnp.float32) + b3_ref[...]  # (TN, D) f32

    # ---- MLPw head: lane reduction against zero-padded u2 (MLP lanes contribute 0) ----
    logit = jnp.sum(a * u2_ref[...], axis=-1, keepdims=True) + c2_ref[...]
    w = jax.nn.sigmoid(logit)                                       # (TN, 1) f32

    weighted = w * fx                                               # (TN, D) f32

    # ---- segment scatter on VALU/XLU (B tiny; keep the MXU for the MLP) ----
    # Rows past N / duplicate tiles carry seg == -1 and match no segment, so any garbage
    # they produced above is replaced by an exact 0.0 by the select before the sum.
    seg = seg_ref[...]                                              # (TN, 1) int32
    parts = [
        jnp.sum(jnp.where(seg == b, weighted, 0.0), axis=0, keepdims=True)
        for b in range(num_segments)
    ]
    out_ref[...] = out_ref[...] + jnp.concatenate(parts, axis=0)    # (B, D) f32


def weighted_average(x, batch, params, num_segments, *, tile_n=1024, num_cores=2):
    """x: (N, D), batch: (N,) int segment ids in [0, num_segments)."""
    n, d = x.shape
    out_dtype = x.dtype
    w1, b1, w2, b2, w3, b3, u1, c1, u2, c2 = params
    h1 = w1.shape[1]
    h2 = w2.shape[1]

    # ---- weight prep (tiny, done once) ----
    w01 = jnp.concatenate([w1, u1], axis=1).astype(jnp.bfloat16)          # (D, 2*h1)
    b01 = jnp.concatenate([b1, c1], axis=1).astype(jnp.float32)           # (1, 2*h1)
    w2f = jnp.concatenate([w2, jnp.zeros((h1, h2), w2.dtype)],
                          axis=0).astype(jnp.bfloat16)                    # (2*h1, h2)
    w3b = w3.astype(jnp.bfloat16)                                         # (h2, D)
    b2f = b2.astype(jnp.float32)
    b3f = b3.astype(jnp.float32)
    u2f = jnp.concatenate([jnp.zeros((1, h1), u2.dtype), u2],
                          axis=1).astype(jnp.float32)                     # (1, 2*h1)
    c2f = c2.astype(jnp.float32)

    # ---- grid layout: (cores, tiles-per-core); the tile axis is the reduction ----
    n_tiles = pl.cdiv(n, tile_n)
    num_cores = max(1, min(num_cores, n_tiles))
    tpc = pl.cdiv(n_tiles, num_cores)
    grid_rows = num_cores * tpc * tile_n

    # x streams as bf16, unpadded; segment ids are tiny so we pad them to the full grid
    # extent with -1 (matches no segment) which also masks edge/duplicate-tile rows.
    x_b = x.astype(jnp.bfloat16)
    seg_p = jnp.pad(batch.astype(jnp.int32), (0, grid_rows - n),
                    constant_values=-1).reshape(grid_rows, 1)

    def x_map(c, i):
        # Clamp so no DMA is ever fully out of bounds; duplicated rows are filtered
        # in-kernel via their seg == -1 entries.
        return (jnp.minimum(c * tpc + i, n_tiles - 1), 0)

    def seg_map(c, i):
        return (c * tpc + i, 0)

    const2 = lambda c, i: (0, 0)     # weights/biases stay VMEM-resident across all tiles

    grid_spec = pltpu.PrefetchScalarGridSpec(
        num_scalar_prefetch=0,
        grid=(num_cores, tpc),
        in_specs=[
            pl.BlockSpec((tile_n, d), x_map),          # x row tile (bf16)
            pl.BlockSpec((tile_n, 1), seg_map),        # segment-id tile (int32)
            pl.BlockSpec(w01.shape, const2),
            pl.BlockSpec(b01.shape, const2),
            pl.BlockSpec(w2f.shape, const2),
            pl.BlockSpec(b2f.shape, const2),
            pl.BlockSpec(w3b.shape, const2),
            pl.BlockSpec(b3f.shape, const2),
            pl.BlockSpec(u2f.shape, const2),
            pl.BlockSpec(c2f.shape, const2),
        ],
        out_specs=pl.BlockSpec((None, num_segments, d), lambda c, i: (c, 0, 0)),
    )
    partials = pl.pallas_call(
        weighted_average_kernel,
        out_shape=jax.ShapeDtypeStruct((num_cores, num_segments, d), jnp.float32),
        grid_spec=grid_spec,
        compiler_params=pltpu.CompilerParams(
            dimension_semantics=("parallel", "arbitrary")),
    )(x_b, seg_p, w01, b01, w2f, b2f, w3b, b3f, u2f, c2f)

    # Counts are independent of the MLP: one cheap segment_sum outside the kernel and a
    # single exact divide (scatter_reduce 'mean' with include_self=True -> /(count + 1)).
    counts = jax.ops.segment_sum(jnp.ones((n,), jnp.float32),
                                 batch.astype(jnp.int32),
                                 num_segments=num_segments)
    res = partials.sum(axis=0) / (counts[:, None] + 1.0)
    return res.astype(out_dtype)


def init_params(key, input_size, hidden_layers):
    """Deterministic synthetic params. Weights stored as (in, out); biases as (1, out)."""
    h1, h2 = hidden_layers
    keys = jax.random.split(key, 10)

    def w(k, i, o):
        return (jax.random.normal(k, (i, o), jnp.float32) / jnp.sqrt(i)).astype(jnp.float32)

    def b(k, o):
        return (jax.random.normal(k, (1, o), jnp.float32) * 0.01).astype(jnp.float32)

    # MLP: D -> h1 -> h2 -> D
    w1, b1 = w(keys[0], input_size, h1), b(keys[1], h1)
    w2, b2 = w(keys[2], h1, h2), b(keys[3], h2)
    w3, b3 = w(keys[4], h2, input_size), b(keys[5], input_size)
    # MLPw: D -> h1 -> 1 (hidden_layers[:-1] == [h1]); final weight kept as (1, h1)
    u1, c1 = w(keys[6], input_size, h1), b(keys[7], h1)
    u2 = w(keys[8], h1, 1).T                       # (1, h1)
    c2 = b(keys[9], 1)                             # (1, 1)
    return (w1, b1, w2, b2, w3, b3, u1, c1, u2, c2)


def reference(x, batch, params, num_segments):
    """Pure-JAX f32 reference matching the PyTorch forward (include_self=True mean)."""
    w1, b1, w2, b2, w3, b3, u1, c1, u2, c2 = params
    h = jax.nn.silu(x @ w1 + b1)
    h = jax.nn.silu(h @ w2 + b2)
    fx = h @ w3 + b3
    g = jax.nn.silu(x @ u1 + c1)
    w = jax.nn.sigmoid(jnp.sum(g * u2, axis=-1, keepdims=True) + c2)
    weighted = w * fx
    seg_sum = jax.ops.segment_sum(weighted, batch, num_segments=num_segments)
    counts = jax.ops.segment_sum(jnp.ones((x.shape[0], 1), x.dtype), batch,
                                 num_segments=num_segments)
    return seg_sum / (counts + 1.0)


if __name__ == "__main__":
    INPUT_SIZE = 128            # module default
    HIDDEN_LAYERS = [64, 32]    # -> MLP: 128-64-32-128, MLPw: 128-64-1
    N = 2500                    # "N is any integer": exercises multi-tile, both cores,
                                # the partial edge tile, and the clamped duplicate tile
    NUM_SEGMENTS = 5            # batch.max() + 1
    TILE_N = 1024               # rows per grid step (sweep 1024-2048)

    key = jax.random.PRNGKey(0)
    k_x, k_b, k_p = jax.random.split(key, 3)
    x = jax.random.normal(k_x, (N, INPUT_SIZE), jnp.float32)
    batch = jax.random.randint(k_b, (N,), 0, NUM_SEGMENTS, dtype=jnp.int32)
    params = init_params(k_p, INPUT_SIZE, HIDDEN_LAYERS)

    out = weighted_average(x, batch, params, NUM_SEGMENTS, tile_n=TILE_N)
    out = jax.block_until_ready(out)

    ref = reference(x, batch, params, NUM_SEGMENTS)
    assert out.shape == (NUM_SEGMENTS, INPUT_SIZE)
    # bf16 x / bf16 MXU operands vs the f32 reference -> loosened tolerance.
    max_err = float(jnp.max(jnp.abs(out - ref)))
    assert jnp.allclose(out, ref, atol=2e-2, rtol=2e-2), f"max abs err {max_err}"
    print("KERNEL_OK")
</pallas_src>

<mosaic_0001>
module attributes {stable_mosaic.version = 11 : i64} {
  func.func @weighted_average_kernel(%arg0: i32, %arg1: i32, %arg2: memref<1024x128xbf16, #tpu.memory_space<vmem>>, %arg3: memref<1024x1xi32, #tpu.memory_space<vmem>>, %arg4: memref<128x128xbf16, #tpu.memory_space<vmem>>, %arg5: memref<1x128xf32, #tpu.memory_space<vmem>>, %arg6: memref<128x32xbf16, #tpu.memory_space<vmem>>, %arg7: memref<1x32xf32, #tpu.memory_space<vmem>>, %arg8: memref<32x128xbf16, #tpu.memory_space<vmem>>, %arg9: memref<1x128xf32, #tpu.memory_space<vmem>>, %arg10: memref<1x128xf32, #tpu.memory_space<vmem>>, %arg11: memref<1x1xf32, #tpu.memory_space<vmem>>, %arg12: memref<1x5x128xf32, #tpu.memory_space<vmem>>) attributes {dimension_semantics = [#tpu.dimension_semantics<parallel>, #tpu.dimension_semantics<arbitrary>], iteration_bounds = array<i64: 2, 2>, scalar_prefetch = 0 : i64, scratch_operands = 0 : i64, tpu.core_type = #tpu.core_type<tc>, window_params = [{transform_indices = @transform_0, window_bounds = array<i64: 1024, 128>}, {transform_indices = @transform_1, window_bounds = array<i64: 1024, 1>}, {pipeline_mode = #tpu.pipeline_mode<synchronous>, transform_indices = @transform_2, window_bounds = array<i64: 128, 128>}, {pipeline_mode = #tpu.pipeline_mode<synchronous>, transform_indices = @transform_3, window_bounds = array<i64: 1, 128>}, {pipeline_mode = #tpu.pipeline_mode<synchronous>, transform_indices = @transform_4, window_bounds = array<i64: 128, 32>}, {pipeline_mode = #tpu.pipeline_mode<synchronous>, transform_indices = @transform_5, window_bounds = array<i64: 1, 32>}, {pipeline_mode = #tpu.pipeline_mode<synchronous>, transform_indices = @transform_6, window_bounds = array<i64: 32, 128>}, {pipeline_mode = #tpu.pipeline_mode<synchronous>, transform_indices = @transform_7, window_bounds = array<i64: 1, 128>}, {pipeline_mode = #tpu.pipeline_mode<synchronous>, transform_indices = @transform_8, window_bounds = array<i64: 1, 128>}, {pipeline_mode = #tpu.pipeline_mode<synchronous>, transform_indices = @transform_9, window_bounds = array<i64: 1, 1>}, {transform_indices = @transform_10, window_bounds = array<i64: 1, 5, 128>}]} {
    %c0_i32 = arith.constant 0 : i32
    %0 = arith.cmpi eq, %arg1, %c0_i32 : i32
    %1 = arith.extui %0 : i1 to i32
    %c0_i32_0 = arith.constant 0 : i32
    %2 = arith.cmpi ne, %1, %c0_i32_0 : i32
    scf.if %2 {
      %cst_43 = arith.constant 0.000000e+00 : f32
      %96 = vector.broadcast %cst_43 : f32 to vector<5x128xf32>
      %c0_44 = arith.constant 0 : index
      %c0_45 = arith.constant 0 : index
      %c0_46 = arith.constant 0 : index
      %97 = vector.load %arg12[%c0_44, %c0_45, %c0_46] : memref<1x5x128xf32, #tpu.memory_space<vmem>>, vector<1x5x128xf32>
      %98 = vector.shape_cast %97 : vector<1x5x128xf32> to vector<5x128xf32>
      %99 = vector.shape_cast %96 : vector<5x128xf32> to vector<1x5x128xf32>
      tpu.vector_store %arg12[%c0_44, %c0_45, %c0_46], %99 {strides = array<i32>} : memref<1x5x128xf32, #tpu.memory_space<vmem>>, vector<1x5x128xf32>,
    } else {
    }
    %c0 = arith.constant 0 : index
    %c0_1 = arith.constant 0 : index
    %3 = vector.load %arg2[%c0, %c0_1] : memref<1024x128xbf16, #tpu.memory_space<vmem>>, vector<1024x128xbf16>
    %c0_2 = arith.constant 0 : index
    %c0_3 = arith.constant 0 : index
    %4 = vector.load %arg4[%c0_2, %c0_3] : memref<128x128xbf16, #tpu.memory_space<vmem>>, vector<128x128xbf16>
    %cst = arith.constant dense<0.000000e+00> : vector<1024x128xf32>
    %5 = tpu.matmul %3, %4, %cst {dimension_numbers = #tpu.dot_dimension_numbers<[1], [0], [0], [1], [0, 0, 1, 1], [], []>} : vector<1024x128xbf16>, vector<128x128xbf16>, vector<1024x128xf32> -> vector<1024x128xf32>
    %c0_4 = arith.constant 0 : index
    %c0_5 = arith.constant 0 : index
    %6 = vector.load %arg5[%c0_4, %c0_5] : memref<1x128xf32, #tpu.memory_space<vmem>>, vector<1x128xf32>
    %7 = vector.broadcast %6 : vector<1x128xf32> to vector<1024x128xf32>
    %8 = arith.addf %5, %7 : vector<1024x128xf32>
    %9 = arith.negf %8 : vector<1024x128xf32>
    %10 = math.exp %9 : vector<1024x128xf32>
    %cst_6 = arith.constant 1.000000e+00 : f32
    %11 = vector.broadcast %cst_6 : f32 to vector<1024x128xf32>
    %12 = arith.addf %11, %10 : vector<1024x128xf32>
    %13 = arith.divf %11, %12 : vector<1024x128xf32>
    %14 = arith.mulf %8, %13 : vector<1024x128xf32>
    %15 = arith.truncf %14 : vector<1024x128xf32> to vector<1024x128xbf16>
    %c0_7 = arith.constant 0 : index
    %c0_8 = arith.constant 0 : index
    %16 = vector.load %arg6[%c0_7, %c0_8] : memref<128x32xbf16, #tpu.memory_space<vmem>>, vector<128x32xbf16>
    %cst_9 = arith.constant dense<0.000000e+00> : vector<1024x32xf32>
    %17 = tpu.matmul %15, %16, %cst_9 {dimension_numbers = #tpu.dot_dimension_numbers<[1], [0], [0], [1], [0, 0, 1, 1], [], []>} : vector<1024x128xbf16>, vector<128x32xbf16>, vector<1024x32xf32> -> vector<1024x32xf32>
    %c0_10 = arith.constant 0 : index
    %c0_11 = arith.constant 0 : index
    %18 = vector.load %arg7[%c0_10, %c0_11] : memref<1x32xf32, #tpu.memory_space<vmem>>, vector<1x32xf32>
    %19 = vector.broadcast %18 : vector<1x32xf32> to vector<1024x32xf32>
    %20 = arith.addf %17, %19 : vector<1024x32xf32>
    %21 = arith.negf %20 : vector<1024x32xf32>
    %22 = math.exp %21 : vector<1024x32xf32>
    %cst_12 = arith.constant 1.000000e+00 : f32
    %23 = vector.broadcast %cst_12 : f32 to vector<1024x32xf32>
    %24 = arith.addf %23, %22 : vector<1024x32xf32>
    %25 = arith.divf %23, %24 : vector<1024x32xf32>
    %26 = arith.mulf %20, %25 : vector<1024x32xf32>
    %27 = arith.truncf %26 : vector<1024x32xf32> to vector<1024x32xbf16>
    %c0_13 = arith.constant 0 : index
    %c0_14 = arith.constant 0 : index
    %28 = vector.load %arg8[%c0_13, %c0_14] : memref<32x128xbf16, #tpu.memory_space<vmem>>, vector<32x128xbf16>
    %cst_15 = arith.constant dense<0.000000e+00> : vector<1024x128xf32>
    %29 = tpu.matmul %27, %28, %cst_15 {dimension_numbers = #tpu.dot_dimension_numbers<[1], [0], [0], [1], [0, 0, 1, 1], [], []>} : vector<1024x32xbf16>, vector<32x128xbf16>, vector<1024x128xf32> -> vector<1024x128xf32>
    %c0_16 = arith.constant 0 : index
    %c0_17 = arith.constant 0 : index
    %30 = vector.load %arg9[%c0_16, %c0_17] : memref<1x128xf32, #tpu.memory_space<vmem>>, vector<1x128xf32>
    %31 = vector.broadcast %30 : vector<1x128xf32> to vector<1024x128xf32>
    %32 = arith.addf %29, %31 : vector<1024x128xf32>
    %c0_18 = arith.constant 0 : index
    %c0_19 = arith.constant 0 : index
    %33 = vector.load %arg10[%c0_18, %c0_19] : memref<1x128xf32, #tpu.memory_space<vmem>>, vector<1x128xf32>
    %34 = vector.broadcast %33 : vector<1x128xf32> to vector<1024x128xf32>
    %35 = arith.mulf %14, %34 : vector<1024x128xf32>
    %cst_20 = arith.constant dense<0.000000e+00> : vector<1024xf32>
    %36 = vector.multi_reduction <add>, %35, %cst_20 [1] : vector<1024x128xf32> to vector<1024xf32>
    %37 = vector.shape_cast %36 : vector<1024xf32> to vector<1024x1xf32>
    %c0_21 = arith.constant 0 : index
    %c0_22 = arith.constant 0 : index
    %38 = vector.load %arg11[%c0_21, %c0_22] : memref<1x1xf32, #tpu.memory_space<vmem>>, vector<1x1xf32>
    %39 = vector.broadcast %38 : vector<1x1xf32> to vector<1024x1xf32>
    %40 = arith.addf %37, %39 : vector<1024x1xf32>
    %41 = arith.negf %40 : vector<1024x1xf32>
    %42 = math.exp %41 : vector<1024x1xf32>
    %cst_23 = arith.constant 1.000000e+00 : f32
    %43 = vector.broadcast %cst_23 : f32 to vector<1024x1xf32>
    %44 = arith.addf %43, %42 : vector<1024x1xf32>
    %45 = arith.divf %43, %44 : vector<1024x1xf32>
    %46 = vector.broadcast %45 : vector<1024x1xf32> to vector<1024x128xf32>
    %47 = arith.mulf %46, %32 : vector<1024x128xf32>
    %c0_24 = arith.constant 0 : index
    %c0_25 = arith.constant 0 : index
    %48 = vector.load %arg3[%c0_24, %c0_25] : memref<1024x1xi32, #tpu.memory_space<vmem>>, vector<1024x1xi32>
    %c0_i32_26 = arith.constant 0 : i32
    %49 = vector.broadcast %c0_i32_26 : i32 to vector<1024x1xi32>
    %50 = arith.cmpi eq, %48, %49 : vector<1024x1xi32>
    %cst_27 = arith.constant 0.000000e+00 : f32
    %51 = vector.shape_cast %50 : vector<1024x1xi1> to vector<1024x1xi1>
    %52 = vector.broadcast %51 : vector<1024x1xi1> to vector<1024x128xi1>
    %53 = vector.broadcast %cst_27 : f32 to vector<1024x128xf32>
    %54 = arith.select %52, %47, %53 : vector<1024x128xi1>, vector<1024x128xf32>
    %cst_28 = arith.constant dense<0.000000e+00> : vector<128xf32>
    %55 = vector.multi_reduction <add>, %54, %cst_28 [0] : vector<1024x128xf32> to vector<128xf32>
    %56 = vector.shape_cast %55 : vector<128xf32> to vector<1x128xf32>
    %c1_i32 = arith.constant 1 : i32
    %57 = vector.broadcast %c1_i32 : i32 to vector<1024x1xi32>
    %58 = arith.cmpi eq, %48, %57 : vector<1024x1xi32>
    %cst_29 = arith.constant 0.000000e+00 : f32
    %59 = vector.shape_cast %58 : vector<1024x1xi1> to vector<1024x1xi1>
    %60 = vector.broadcast %59 : vector<1024x1xi1> to vector<1024x128xi1>
    %61 = vector.broadcast %cst_29 : f32 to vector<1024x128xf32>
    %62 = arith.select %60, %47, %61 : vector<1024x128xi1>, vector<1024x128xf32>
    %cst_30 = arith.constant dense<0.000000e+00> : vector<128xf32>
    %63 = vector.multi_reduction <add>, %62, %cst_30 [0] : vector<1024x128xf32> to vector<128xf32>
    %64 = vector.shape_cast %63 : vector<128xf32> to vector<1x128xf32>
    %c2_i32 = arith.constant 2 : i32
    %65 = vector.broadcast %c2_i32 : i32 to vector<1024x1xi32>
    %66 = arith.cmpi eq, %48, %65 : vector<1024x1xi32>
    %cst_31 = arith.constant 0.000000e+00 : f32
    %67 = vector.shape_cast %66 : vector<1024x1xi1> to vector<1024x1xi1>
    %68 = vector.broadcast %67 : vector<1024x1xi1> to vector<1024x128xi1>
    %69 = vector.broadcast %cst_31 : f32 to vector<1024x128xf32>
    %70 = arith.select %68, %47, %69 : vector<1024x128xi1>, vector<1024x128xf32>
    %cst_32 = arith.constant dense<0.000000e+00> : vector<128xf32>
    %71 = vector.multi_reduction <add>, %70, %cst_32 [0] : vector<1024x128xf32> to vector<128xf32>
    %72 = vector.shape_cast %71 : vector<128xf32> to vector<1x128xf32>
    %c3_i32 = arith.constant 3 : i32
    %73 = vector.broadcast %c3_i32 : i32 to vector<1024x1xi32>
    %74 = arith.cmpi eq, %48, %73 : vector<1024x1xi32>
    %cst_33 = arith.constant 0.000000e+00 : f32
    %75 = vector.shape_cast %74 : vector<1024x1xi1> to vector<1024x1xi1>
    %76 = vector.broadcast %75 : vector<1024x1xi1> to vector<1024x128xi1>
    %77 = vector.broadcast %cst_33 : f32 to vector<1024x128xf32>
    %78 = arith.select %76, %47, %77 : vector<1024x128xi1>, vector<1024x128xf32>
    %cst_34 = arith.constant dense<0.000000e+00> : vector<128xf32>
    %79 = vector.multi_reduction <add>, %78, %cst_34 [0] : vector<1024x128xf32> to vector<128xf32>
    %80 = vector.shape_cast %79 : vector<128xf32> to vector<1x128xf32>
    %c4_i32 = arith.constant 4 : i32
    %81 = vector.broadcast %c4_i32 : i32 to vector<1024x1xi32>
    %82 = arith.cmpi eq, %48, %81 : vector<1024x1xi32>
    %cst_35 = arith.constant 0.000000e+00 : f32
    %83 = vector.shape_cast %82 : vector<1024x1xi1> to vector<1024x1xi1>
    %84 = vector.broadcast %83 : vector<1024x1xi1> to vector<1024x128xi1>
    %85 = vector.broadcast %cst_35 : f32 to vector<1024x128xf32>
    %86 = arith.select %84, %47, %85 : vector<1024x128xi1>, vector<1024x128xf32>
    %cst_36 = arith.constant dense<0.000000e+00> : vector<128xf32>
    %87 = vector.multi_reduction <add>, %86, %cst_36 [0] : vector<1024x128xf32> to vector<128xf32>
    %88 = vector.shape_cast %87 : vector<128xf32> to vector<1x128xf32>
    %c0_37 = arith.constant 0 : index
    %c0_38 = arith.constant 0 : index
    %c0_39 = arith.constant 0 : index
    %89 = vector.load %arg12[%c0_37, %c0_38, %c0_39] : memref<1x5x128xf32, #tpu.memory_space<vmem>>, vector<1x5x128xf32>
    %90 = vector.shape_cast %89 : vector<1x5x128xf32> to vector<5x128xf32>
    %91 = tpu.concatenate %56, %64, %72, %80, %88 in 0 : vector<1x128xf32>, vector<1x128xf32>, vector<1x128xf32>, vector<1x128xf32>, vector<1x128xf32> -> vector<5x128xf32>
    %92 = arith.addf %90, %91 : vector<5x128xf32>
    %c0_40 = arith.constant 0 : index
    %c0_41 = arith.constant 0 : index
    %c0_42 = arith.constant 0 : index
    %93 = vector.load %arg12[%c0_40, %c0_41, %c0_42] : memref<1x5x128xf32, #tpu.memory_space<vmem>>, vector<1x5x128xf32>
    %94 = vector.shape_cast %93 : vector<1x5x128xf32> to vector<5x128xf32>
    %95 = vector.shape_cast %92 : vector<5x128xf32> to vector<1x5x128xf32>
    tpu.vector_store %arg12[%c0_40, %c0_41, %c0_42], %95 {strides = array<i32>} : memref<1x5x128xf32, #tpu.memory_space<vmem>>, vector<1x5x128xf32>,
    return
  }
  func.func @transform_0(%arg0: i32, %arg1: i32) -> (i32, i32) {
    %c2_i32 = arith.constant 2 : i32
    %0 = arith.muli %arg0, %c2_i32 : i32
    %1 = arith.addi %0, %arg1 : i32
    %c2_i32_0 = arith.constant 2 : i32
    %2 = arith.minsi %1, %c2_i32_0 : i32
    %c0_i32 = arith.constant 0 : i32
    %c0_i32_1 = arith.constant 0 : i32
    return %2, %c0_i32 : i32, i32
  }
  func.func @transform_1(%arg0: i32, %arg1: i32) -> (i32, i32) {
    %c2_i32 = arith.constant 2 : i32
    %0 = arith.muli %arg0, %c2_i32 : i32
    %1 = arith.addi %0, %arg1 : i32
    %c0_i32 = arith.constant 0 : i32
    %c0_i32_0 = arith.constant 0 : i32
    return %1, %c0_i32 : i32, i32
  }
  func.func @transform_2(%arg0: i32, %arg1: i32) -> (i32, i32) {
    %c0_i32 = arith.constant 0 : i32
    %c0_i32_0 = arith.constant 0 : i32
    %c0_i32_1 = arith.constant 0 : i32
    return %c0_i32, %c0_i32_0 : i32, i32
  }
  func.func @transform_3(%arg0: i32, %arg1: i32) -> (i32, i32) {
    %c0_i32 = arith.constant 0 : i32
    %c0_i32_0 = arith.constant 0 : i32
    %c0_i32_1 = arith.constant 0 : i32
    return %c0_i32, %c0_i32_0 : i32, i32
  }
  func.func @transform_4(%arg0: i32, %arg1: i32) -> (i32, i32) {
    %c0_i32 = arith.constant 0 : i32
    %c0_i32_0 = arith.constant 0 : i32
    %c0_i32_1 = arith.constant 0 : i32
    return %c0_i32, %c0_i32_0 : i32, i32
  }
  func.func @transform_5(%arg0: i32, %arg1: i32) -> (i32, i32) {
    %c0_i32 = arith.constant 0 : i32
    %c0_i32_0 = arith.constant 0 : i32
    %c0_i32_1 = arith.constant 0 : i32
    return %c0_i32, %c0_i32_0 : i32, i32
  }
  func.func @transform_6(%arg0: i32, %arg1: i32) -> (i32, i32) {
    %c0_i32 = arith.constant 0 : i32
    %c0_i32_0 = arith.constant 0 : i32
    %c0_i32_1 = arith.constant 0 : i32
    return %c0_i32, %c0_i32_0 : i32, i32
  }
  func.func @transform_7(%arg0: i32, %arg1: i32) -> (i32, i32) {
    %c0_i32 = arith.constant 0 : i32
    %c0_i32_0 = arith.constant 0 : i32
    %c0_i32_1 = arith.constant 0 : i32
    return %c0_i32, %c0_i32_0 : i32, i32
  }
  func.func @transform_8(%arg0: i32, %arg1: i32) -> (i32, i32) {
    %c0_i32 = arith.constant 0 : i32
    %c0_i32_0 = arith.constant 0 : i32
    %c0_i32_1 = arith.constant 0 : i32
    return %c0_i32, %c0_i32_0 : i32, i32
  }
  func.func @transform_9(%arg0: i32, %arg1: i32) -> (i32, i32) {
    %c0_i32 = arith.constant 0 : i32
    %c0_i32_0 = arith.constant 0 : i32
    %c0_i32_1 = arith.constant 0 : i32
    return %c0_i32, %c0_i32_0 : i32, i32
  }
  func.func @transform_10(%arg0: i32, %arg1: i32) -> (i32, i32, i32) {
    %c0_i32 = arith.constant 0 : i32
    %c0_i32_0 = arith.constant 0 : i32
    %c0_i32_1 = arith.constant 0 : i32
    return %arg0, %c0_i32, %c0_i32_0 : i32, i32, i32
  }
}

</mosaic_0001>

<llo_original>
// kernel: tpu_custom_call.1
$region0: #{tpu_custom_call.1}
  #allocation0 [shape = 'u32[]', space=smem, size = 0x4, offset = 0x4, fixed_abs, tag = 'smem constant byte address 0x4 - core index']
  #allocation1 [shape = 'u32[144,128]{1,0:T(1,128)}', space=vmem, size = 0x12000, scoped, tag = 'internal scratch']
  #allocation2 [shape = 'f32[1,1]{1,0:T(1,128)S(1)}', space=vmem, size = 0x200, scoped, tag = 'scoped memory for tpu_custom_call.1']
  %s0 = inlined_call_operand.vmem [shape: bf16[2500,128], index: 0, kind: input, shape index: {}]
  %s1 = inlined_call_operand.vmem [shape: s32[4096,1], index: 1, kind: input, shape index: {}]
  %s2 = inlined_call_operand.vmem [shape: bf16[128,128], index: 2, kind: input, shape index: {}]
  %s3 = inlined_call_operand.vmem [shape: f32[1,128], index: 3, kind: input, shape index: {}]
  %s4 = inlined_call_operand.vmem [shape: bf16[128,32], index: 4, kind: input, shape index: {}]
  %s5 = inlined_call_operand.vmem [shape: f32[1,32], index: 5, kind: input, shape index: {}]
  %s6 = inlined_call_operand.vmem [shape: bf16[32,128], index: 6, kind: input, shape index: {}]
  %s7 = inlined_call_operand.vmem [shape: f32[1,128], index: 7, kind: input, shape index: {}]
  %s8 = inlined_call_operand.vmem [shape: f32[1,128], index: 8, kind: input, shape index: {}]
  %s9 = inlined_call_operand.<no memory space> [shape: f32[1,1], index: 9, kind: input, shape index: {}]
  %s10 = inlined_call_operand.vmem [shape: f32[2,5,128], index: 10, kind: output, shape index: {}]
  %s11 = sld [smem:[#allocation0]]
  $region77: #{tpu_custom_call.1} parent=0
    _
  %s13 = ssub.s32 1, %s11
  %s14 = scalar_select 0, %s13, %s11
  %v15 = vstv %s9
  %16 = vst [vmem:[#allocation2] sm:$0x1] %v15
  loop: start=0, step=1, limit=6
  $region2: #{tpu_custom_call.1} parent=0 // loop_pre_header
    _
  $region3: #{tpu_custom_call.1} parent=0 // loop_header
    %s18 = sphi 0, %s22
    %p19 = scmp.ge.s32.totalorder %s18, 6
    %s25 = sphi 0, %s37
    %s26 = sphi 0, %s33
    %s27 = sphi 0, %s25
    %s28 = sphi 0, %s26
    %s29 = sphi 0, %s27
    %s30 = sphi 0, %s28
    %s48 = sphi 0, %s50
    %s51 = sphi 0, %s48
    %s52 = sphi 0, %s51
    %s68 = sphi 0, %s52
    %s78 = sphi 0, %s80
    %s81 = sphi 0, %s78
    %s82 = sphi 0, %s81
    %s98 = sphi 0, %s82
    %s102 = sphi 0, %s102
    %s104 = sphi 0, %s102
    %s105 = sphi 0, %s104
    %s119 = sphi 0, %s105
    %s123 = sphi 0, %s123
    %s125 = sphi 0, %s123
    %s126 = sphi 0, %s125
    %s140 = sphi 0, %s126
    %s144 = sphi 0, %s144
    %s146 = sphi 0, %s144
    %s147 = sphi 0, %s146
    %s161 = sphi 0, %s147
    %s165 = sphi 0, %s165
    %s167 = sphi 0, %s165
    %s168 = sphi 0, %s167
    %s182 = sphi 0, %s168
    %s186 = sphi 0, %s186
    %s188 = sphi 0, %s186
    %s189 = sphi 0, %s188
    %s203 = sphi 0, %s189
    %s207 = sphi 0, %s207
    %s209 = sphi 0, %s207
    %s210 = sphi 0, %s209
    %s224 = sphi 0, %s210
    %s228 = sphi 0, %s228
    %s230 = sphi 0, %s228
    %s231 = sphi 0, %s230
    %s245 = sphi 0, %s231
    %s249 = sphi 0, %s249
    %s251 = sphi 0, %s249
    %s252 = sphi 0, %s251
    %s266 = sphi 0, %s252
    %s272 = sphi 0, %s274
    %s275 = sphi 0, %s272
    %s276 = sphi 0, %s275
    %s292 = sphi 0, %s276
  $region4: #{tpu_custom_call.1} parent=0 // loop_header_branch
    %21 = sbr.rel (%p19) target = $region8
  $region5: #{tpu_custom_call.1} parent=0 // loop_body
    %s23 = ssub.s32 %s18, 1
    %s24 = ssub.s32 %s18, 2
    %s31 = sadd.s32 1, %s26
    %p32 = scmp.ge.s32.totalorder %s31, 2
    %s33 = scalar_select %p32, 0, %s31
    %s34 = sadd.s32 1, %s25
    %s35 = scalar_select %p32, %s34, %s25
    %p36 = scmp.ge.s32.totalorder %s35, 2
    %s37 = scalar_select %p36, 0, %s35
    %s38 = smul.u32 %s25, 2
    %s39 = sadd.s32 %s38, %s26
    %p40 = scmp.lt.s32.totalorder %s39, 2
    %s41 = scalar_select %p40, %s39, 2
    %s42 = smul.u32 %s37, 2
    %s43 = sadd.s32 %s42, %s33
    %p44 = scmp.lt.s32.totalorder %s43, 2
    %s45 = scalar_select %p44, %s43, 2
    %s46 = ssub.s32 %s41, %s45
    %p47 = scmp.eq.s32.totalorder %s46, 0
    %s49 = sadd.s32 %s48, 1
    %s50 = scalar_select %p47, %s48, %s49
    %p53 = pneg %p47
    %p54 = scmp.eq.s32.totalorder %s18, 3
    %p55 = por %p53, %p54
    %p56 = scmp.ne.s32.totalorder %s48, %s51
    %p57 = scmp.eq.s32.totalorder %s18, 0
    %p58 = por %p56, %p57
    %p59 = scmp.ne.s32.totalorder %s48, %s51
    %p60 = scmp.eq.s32.totalorder %s23, 3
    %p61 = por %p59, %p60
    %p62 = scmp.ne.s32.totalorder %s51, %s52
    %p63 = scmp.eq.s32.totalorder %s23, 0
    %p64 = por %p62, %p63
    %p65 = scmp.ne.s32.totalorder %s51, %s52
    %p66 = scmp.eq.s32.totalorder %s24, 3
    %p67 = por %p65, %p66
    %p69 = scmp.ne.s32.totalorder %s52, %s68
    %p70 = scmp.eq.s32.totalorder %s24, 0
    %p71 = por %p69, %p70
    %s72 = smul.u32 %s25, 2
    %s73 = sadd.s32 %s72, %s26
    %s74 = smul.u32 %s37, 2
    %s75 = sadd.s32 %s74, %s33
    %s76 = ssub.s32 %s73, %s75
    %p77 = scmp.eq.s32.totalorder %s76, 0
    %s79 = sadd.s32 %s78, 1
    %s80 = scalar_select %p77, %s78, %s79
    %p83 = pneg %p77
    %p84 = scmp.eq.s32.totalorder %s18, 3
    %p85 = por %p83, %p84
    %p86 = scmp.ne.s32.totalorder %s78, %s81
    %p87 = scmp.eq.s32.totalorder %s18, 0
    %p88 = por %p86, %p87
    %p89 = scmp.ne.s32.totalorder %s78, %s81
    %p90 = scmp.eq.s32.totalorder %s23, 3
    %p91 = por %p89, %p90
    %p92 = scmp.ne.s32.totalorder %s81, %s82
    %p93 = scmp.eq.s32.totalorder %s23, 0
    %p94 = por %p92, %p93
    %p95 = scmp.ne.s32.totalorder %s81, %s82
    %p96 = scmp.eq.s32.totalorder %s24, 3
    %p97 = por %p95, %p96
    %p99 = scmp.ne.s32.totalorder %s82, %s98
    %p100 = scmp.eq.s32.totalorder %s24, 0
    %p101 = por %p99, %p100
    %s103 = sadd.s32 %s102, 1
    %p106 = scmp.eq.s32.totalorder %s18, 3
    %p107 = scmp.ne.s32.totalorder %s102, %s104
    %p108 = scmp.eq.s32.totalorder %s18, 0
    %p109 = por %p107, %p108
    %p110 = scmp.ne.s32.totalorder %s102, %s104
    %p111 = scmp.eq.s32.totalorder %s23, 3
    %p112 = por %p110, %p111
    %p113 = scmp.ne.s32.totalorder %s104, %s105
    %p114 = scmp.eq.s32.totalorder %s23, 0
    %p115 = por %p113, %p114
    %p116 = scmp.ne.s32.totalorder %s104, %s105
    %p117 = scmp.eq.s32.totalorder %s24, 3
    %p118 = por %p116, %p117
    %p120 = scmp.ne.s32.totalorder %s105, %s119
    %p121 = scmp.eq.s32.totalorder %s24, 0
    %p122 = por %p120, %p121
    %s124 = sadd.s32 %s123, 1
    %p127 = scmp.eq.s32.totalorder %s18, 3
    %p128 = scmp.ne.s32.totalorder %s123, %s125
    %p129 = scmp.eq.s32.totalorder %s18, 0
    %p130 = por %p128, %p129
    %p131 = scmp.ne.s32.totalorder %s123, %s125
    %p132 = scmp.eq.s32.totalorder %s23, 3
    %p133 = por %p131, %p132
    %p134 = scmp.ne.s32.totalorder %s125, %s126
    %p135 = scmp.eq.s32.totalorder %s23, 0
    %p136 = por %p134, %p135
    %p137 = scmp.ne.s32.totalorder %s125, %s126
    %p138 = scmp.eq.s32.totalorder %s24, 3
    %p139 = por %p137, %p138
    %p141 = scmp.ne.s32.totalorder %s126, %s140
    %p142 = scmp.eq.s32.totalorder %s24, 0
    %p143 = por %p141, %p142
    %s145 = sadd.s32 %s144, 1
    %p148 = scmp.eq.s32.totalorder %s18, 3
    %p149 = scmp.ne.s32.totalorder %s144, %s146
    %p150 = scmp.eq.s32.totalorder %s18, 0
    %p151 = por %p149, %p150
    %p152 = scmp.ne.s32.totalorder %s144, %s146
    %p153 = scmp.eq.s32.totalorder %s23, 3
    %p154 = por %p152, %p153
    %p155 = scmp.ne.s32.totalorder %s146, %s147
    %p156 = scmp.eq.s32.totalorder %s23, 0
    %p157 = por %p155, %p156
    %p158 = scmp.ne.s32.totalorder %s146, %s147
    %p159 = scmp.eq.s32.totalorder %s24, 3
    %p160 = por %p158, %p159
    %p162 = scmp.ne.s32.totalorder %s147, %s161
    %p163 = scmp.eq.s32.totalorder %s24, 0
    %p164 = por %p162, %p163
    %s166 = sadd.s32 %s165, 1
    %p169 = scmp.eq.s32.totalorder %s18, 3
    %p170 = scmp.ne.s32.totalorder %s165, %s167
    %p171 = scmp.eq.s32.totalorder %s18, 0
    %p172 = por %p170, %p171
    %p173 = scmp.ne.s32.totalorder %s165, %s167
    %p174 = scmp.eq.s32.totalorder %s23, 3
    %p175 = por %p173, %p174
    %p176 = scmp.ne.s32.totalorder %s167, %s168
    %p177 = scmp.eq.s32.totalorder %s23, 0
    %p178 = por %p176, %p177
    %p179 = scmp.ne.s32.totalorder %s167, %s168
    %p180 = scmp.eq.s32.totalorder %s24, 3
    %p181 = por %p179, %p180
    %p183 = scmp.ne.s32.totalorder %s168, %s182
    %p184 = scmp.eq.s32.totalorder %s24, 0
    %p185 = por %p183, %p184
    %s187 = sadd.s32 %s186, 1
    %p190 = scmp.eq.s32.totalorder %s18, 3
    %p191 = scmp.ne.s32.totalorder %s186, %s188
    %p192 = scmp.eq.s32.totalorder %s18, 0
    %p193 = por %p191, %p192
    %p194 = scmp.ne.s32.totalorder %s186, %s188
    %p195 = scmp.eq.s32.totalorder %s23, 3
    %p196 = por %p194, %p195
    %p197 = scmp.ne.s32.totalorder %s188, %s189
    %p198 = scmp.eq.s32.totalorder %s23, 0
    %p199 = por %p197, %p198
    %p200 = scmp.ne.s32.totalorder %s188, %s189
    %p201 = scmp.eq.s32.totalorder %s24, 3
    %p202 = por %p200, %p201
    %p204 = scmp.ne.s32.totalorder %s189, %s203
    %p205 = scmp.eq.s32.totalorder %s24, 0
    %p206 = por %p204, %p205
    %s208 = sadd.s32 %s207, 1
    %p211 = scmp.eq.s32.totalorder %s18, 3
    %p212 = scmp.ne.s32.totalorder %s207, %s209
    %p213 = scmp.eq.s32.totalorder %s18, 0
    %p214 = por %p212, %p213
    %p215 = scmp.ne.s32.totalorder %s207, %s209
    %p216 = scmp.eq.s32.totalorder %s23, 3
    %p217 = por %p215, %p216
    %p218 = scmp.ne.s32.totalorder %s209, %s210
    %p219 = scmp.eq.s32.totalorder %s23, 0
    %p220 = por %p218, %p219
    %p221 = scmp.ne.s32.totalorder %s209, %s210
    %p222 = scmp.eq.s32.totalorder %s24, 3
    %p223 = por %p221, %p222
    %p225 = scmp.ne.s32.totalorder %s210, %s224
    %p226 = scmp.eq.s32.totalorder %s24, 0
    %p227 = por %p225, %p226
    %s229 = sadd.s32 %s228, 1
    %p232 = scmp.eq.s32.totalorder %s18, 3
    %p233 = scmp.ne.s32.totalorder %s228, %s230
    %p234 = scmp.eq.s32.totalorder %s18, 0
    %p235 = por %p233, %p234
    %p236 = scmp.ne.s32.totalorder %s228, %s230
    %p237 = scmp.eq.s32.totalorder %s23, 3
    %p238 = por %p236, %p237
    %p239 = scmp.ne.s32.totalorder %s230, %s231
    %p240 = scmp.eq.s32.totalorder %s23, 0
    %p241 = por %p239, %p240
    %p242 = scmp.ne.s32.totalorder %s230, %s231
    %p243 = scmp.eq.s32.totalorder %s24, 3
    %p244 = por %p242, %p243
    %p246 = scmp.ne.s32.totalorder %s231, %s245
    %p247 = scmp.eq.s32.totalorder %s24, 0
    %p248 = por %p246, %p247
    %s250 = sadd.s32 %s249, 1
    %p253 = scmp.eq.s32.totalorder %s18, 3
    %p254 = scmp.ne.s32.totalorder %s249, %s251
    %p255 = scmp.eq.s32.totalorder %s18, 0
    %p256 = por %p254, %p255
    %p257 = scmp.ne.s32.totalorder %s249, %s251
    %p258 = scmp.eq.s32.totalorder %s23, 3
    %p259 = por %p257, %p258
    %p260 = scmp.ne.s32.totalorder %s251, %s252
    %p261 = scmp.eq.s32.totalorder %s23, 0
    %p262 = por %p260, %p261
    %p263 = scmp.ne.s32.totalorder %s251, %s252
    %p264 = scmp.eq.s32.totalorder %s24, 3
    %p265 = por %p263, %p264
    %p267 = scmp.ne.s32.totalorder %s252, %s266
    %p268 = scmp.eq.s32.totalorder %s24, 0
    %p269 = por %p267, %p268
    %s270 = ssub.s32 %s25, %s37
    %p271 = scmp.eq.s32.totalorder %s270, 0
    %s273 = sadd.s32 %s272, 1
    %s274 = scalar_select %p271, %s272, %s273
    %p277 = pneg %p271
    %p278 = scmp.eq.s32.totalorder %s18, 3
    %p279 = por %p277, %p278
    %p280 = scmp.ne.s32.totalorder %s272, %s275
    %p281 = scmp.eq.s32.totalorder %s18, 0
    %p282 = por %p280, %p281
    %p283 = scmp.ne.s32.totalorder %s272, %s275
    %p284 = scmp.eq.s32.totalorder %s23, 3
    %p285 = por %p283, %p284
    %p286 = scmp.ne.s32.totalorder %s275, %s276
    %p287 = scmp.eq.s32.totalorder %s23, 0
    %p288 = por %p286, %p287
    %p289 = scmp.ne.s32.totalorder %s275, %s276
    %p290 = scmp.eq.s32.totalorder %s24, 3
    %p291 = por %p289, %p290
    %p293 = scmp.ne.s32.totalorder %s276, %s292
    %p294 = scmp.eq.s32.totalorder %s24, 0
    %p295 = por %p293, %p294
    %p296 = scmp.le.s32.totalorder 1, %s18
    %p297 = scmp.lt.s32.totalorder %s18, 5
    %p298 = pnand %p296, %p297
    %p299 = pneg %p298
    // Predicated region
    $region9: #{tpu_custom_call.1} parent=5 // pred_check
      _
    $region10: #{tpu_custom_call.1} parent=5 // pred_check_branch
      %301 = sbr.rel (%p298) target = $region12
    $region11: #{tpu_custom_call.1} parent=5 // pred_region
      %s302 = ssub.s32 %s18, 1
      // Predicated region
      $region13: #{tpu_custom_call.1} parent=11 // pred_check
        %p303 = pneg %p115
      $region14: #{tpu_custom_call.1} parent=11 // pred_check_branch
        %305 = sbr.rel (%p303) target = $region16
      $region15: #{tpu_custom_call.1} parent=11 // pred_region
        _
      $region16: #{tpu_custom_call.1} parent=11 // pred_fallthru
        _
      // Predicated region
      $region17: #{tpu_custom_call.1} parent=11 // pred_check
        %p306 = pneg %p136
      $region18: #{tpu_custom_call.1} parent=11 // pred_check_branch
        %308 = sbr.rel (%p306) target = $region20
      $region19: #{tpu_custom_call.1} parent=11 // pred_region
        _
      $region20: #{tpu_custom_call.1} parent=11 // pred_fallthru
        _
      // Predicated region
      $region21: #{tpu_custom_call.1} parent=11 // pred_check
        %p309 = pneg %p157
      $region22: #{tpu_custom_call.1} parent=11 // pred_check_branch
        %311 = sbr.rel (%p309) target = $region24
      $region23: #{tpu_custom_call.1} parent=11 // pred_region
        _
      $region24: #{tpu_custom_call.1} parent=11 // pred_fallthru
        _
      // Predicated region
      $region25: #{tpu_custom_call.1} parent=11 // pred_check
        %p312 = pneg %p178
      $region26: #{tpu_custom_call.1} parent=11 // pred_check_branch
        %314 = sbr.rel (%p312) target = $region28
      $region27: #{tpu_custom_call.1} parent=11 // pred_region
        _
      $region28: #{tpu_custom_call.1} parent=11 // pred_fallthru
        _
      // Predicated region
      $region29: #{tpu_custom_call.1} parent=11 // pred_check
        %p315 = pneg %p199
      $region30: #{tpu_custom_call.1} parent=11 // pred_check_branch
        %317 = sbr.rel (%p315) target = $region32
      $region31: #{tpu_custom_call.1} parent=11 // pred_region
        _
      $region32: #{tpu_custom_call.1} parent=11 // pred_fallthru
        _
      // Predicated region
      $region33: #{tpu_custom_call.1} parent=11 // pred_check
        %p318 = pneg %p220
      $region34: #{tpu_custom_call.1} parent=11 // pred_check_branch
        %320 = sbr.rel (%p318) target = $region36
      $region35: #{tpu_custom_call.1} parent=11 // pred_region
        _
      $region36: #{tpu_custom_call.1} parent=11 // pred_fallthru
        _
      // Predicated region
      $region37: #{tpu_custom_call.1} parent=11 // pred_check
        %p321 = pneg %p241
      $region38: #{tpu_custom_call.1} parent=11 // pred_check_branch
        %323 = sbr.rel (%p321) target = $region40
      $region39: #{tpu_custom_call.1} parent=11 // pred_region
        _
      $region40: #{tpu_custom_call.1} parent=11 // pred_fallthru
        _
      // Predicated region
      $region41: #{tpu_custom_call.1} parent=11 // pred_check
        %p324 = pneg %p262
      $region42: #{tpu_custom_call.1} parent=11 // pred_check_branch
        %326 = sbr.rel (%p324) target = $region44
      $region43: #{tpu_custom_call.1} parent=11 // pred_region
        _
      $region44: #{tpu_custom_call.1} parent=11 // pred_fallthru
        _
    $region12: #{tpu_custom_call.1} parent=5 // pred_fallthru
      _
    %p327 = scmp.lt.s32.totalorder %s18, 4
    // Predicated region
    $region45: #{tpu_custom_call.1} parent=5 // pred_check
      %p328 = pneg %p327
    $region46: #{tpu_custom_call.1} parent=5 // pred_check_branch
      %330 = sbr.rel (%p328) target = $region48
    $region47: #{tpu_custom_call.1} parent=5 // pred_region
      // Predicated region
      $region49: #{tpu_custom_call.1} parent=47 // pred_check
        %p331 = pneg %p58
      $region50: #{tpu_custom_call.1} parent=47 // pred_check_branch
        %333 = sbr.rel (%p331) target = $region52
      $region51: #{tpu_custom_call.1} parent=47 // pred_region
        %s334 = smul.u32 %s25, 2
        %s335 = sadd.s32 %s334, %s26
        %p336 = scmp.lt.s32.totalorder %s335, 2
        %s337 = scalar_select %p336, %s335, 2
        %s338 = smul.u32 128, %s337
        %s339 = ssub.s32 313, %s338
        %p340 = scmp.lt.s32.totalorder %s339, 128
        %s341 = scalar_select %p340, %s339, 128
        %s342 = smul.u32 64, %s341
        %p343 = scmp.lt.s32.totalorder %s338, 312
        %s344 = scalar_select %p343, %s338, 312
        %s345 = smul.addr %s344, 4
        %s346 = scalar_lea.vmem %s0, %s345
        %s347 = smul.u32 %s25, 2
        %s348 = sadd.s32 %s347, %s26
        %p349 = scmp.lt.s32.totalorder %s348, 2
        %s350 = scalar_select %p349, %s348, 2
        %s351 = smul.u32 128, %s350
        %s352 = ssub.s32 313, %s351
        %p353 = scmp.lt.s32.totalorder %s352, 128
        %s354 = scalar_select %p353, %s352, 128
        %s355 = smul.u32 64, %s354
      $region52: #{tpu_custom_call.1} parent=47 // pred_fallthru
        _
      // Predicated region
      $region53: #{tpu_custom_call.1} parent=47 // pred_check
        %p356 = pneg %p88
      $region54: #{tpu_custom_call.1} parent=47 // pred_check_branch
        %358 = sbr.rel (%p356) target = $region56
      $region55: #{tpu_custom_call.1} parent=47 // pred_region
        %s359 = smul.u32 %s25, 2
        %s360 = sadd.s32 %s359, %s26
        %s361 = smul.u32 128, %s360
        %p362 = scmp.lt.s32.totalorder %s361, 511
        %s363 = scalar_select %p362, %s361, 511
        %s364 = smul.addr %s363, 8
        %s365 = scalar_lea.vmem %s1, %s364
        %s366 = smul.u32 %s25, 2
        %s367 = sadd.s32 %s366, %s26
        %s368 = smul.u32 128, %s367
      $region56: #{tpu_custom_call.1} parent=47 // pred_fallthru
        _
    $region48: #{tpu_custom_call.1} parent=5 // pred_fallthru
      _
    %p369 = scmp.le.s32.totalorder 1, %s18
    %p370 = scmp.lt.s32.totalorder %s18, 5
    %p371 = pnand %p369, %p370
    %p372 = pneg %p371
    // Predicated region
    $region57: #{tpu_custom_call.1} parent=5 // pred_check
      _
    $region58: #{tpu_custom_call.1} parent=5 // pred_check_branch
      %374 = sbr.rel (%p371) target = $region60
    $region59: #{tpu_custom_call.1} parent=5 // pred_region
      %s375 = ssub.s32 %s18, 1
      %s376 = smul.u32 %s27, 2
      %s377 = sadd.s32 %s376, %s28
      %p378 = scmp.lt.s32.totalorder %s377, 2
      %s379 = scalar_select %p378, %s377, 2
      %s380 = smul.u32 128, %s379
      %s381 = ssub.s32 313, %s380
      %p382 = scmp.lt.s32.totalorder %s381, 128
      %s383 = scalar_select %p382, %s381, 128
      %s384 = smul.u32 64, %s383
      %p385 = scmp.lt.s32.totalorder %s380, 312
      %s386 = scalar_select %p385, %s380, 312
      %s387 = smul.addr %s386, 4
      %s388 = scalar_lea.vmem %s0, %s387
      %p389 = pneg %p64
      %p390 = pneg %p61
      %s391 = smul.u32 %s27, 2
      %s392 = sadd.s32 %s391, %s28
      %s393 = smul.u32 128, %s392
      %p394 = scmp.lt.s32.totalorder %s393, 511
      %s395 = scalar_select %p394, %s393, 511
      %s396 = smul.addr %s395, 8
      %s397 = scalar_lea.vmem %s1, %s396
      %p398 = pneg %p94
      %p399 = pneg %p91
      %p400 = pneg %p115
      %p401 = pneg %p112
      %p402 = pneg %p136
      %p403 = pneg %p133
      %p404 = pneg %p157
      %p405 = pneg %p154
      %p406 = pneg %p178
      %p407 = pneg %p175
      %p408 = pneg %p199
      %p409 = pneg %p196
      %p410 = pneg %p220
      %p411 = pneg %p217
      %p412 = pneg %p241
      %p413 = pneg %p238
      %p414 = pneg %p262
      %p415 = pneg %p259
      %p416 = pneg %p288
      %p417 = pneg %p285
      %p418 = scmp.lt.s32.totalorder %s27, 1
      %s419 = scalar_select %p418, %s27, 1
      %s420 = smul.addr %s419, 8
      %s421 = scalar_lea.vmem %s10, %s420
      %s422 = smul.u32 %s27, 2
      %s423 = sadd.s32 %s422, %s28
      %p424 = scmp.lt.s32.totalorder %s423, 2
      %s425 = scalar_select %p424, %s423, 2
      %s426 = smul.u32 128, %s425
      %s427 = ssub.s32 313, %s426
      %p428 = scmp.lt.s32.totalorder %s427, 128
      %s429 = scalar_select %p428, %s427, 128
      %s430 = smul.u32 64, %s429
      %p431 = scmp.lt.s32.totalorder %s426, 312
      %s432 = scalar_select %p431, %s426, 312
      %s433 = smul.addr %s432, 4
      %s434 = scalar_lea.vmem %s0, %s433
      %s435 = smul.u32 %s27, 2
      %s436 = sadd.s32 %s435, %s28
      %p437 = scmp.lt.s32.totalorder %s436, 2
      %s438 = scalar_select %p437, %s436, 2
      %s439 = smul.u32 128, %s438
      %s440 = ssub.s32 313, %s439
      %p441 = scmp.lt.s32.totalorder %s440, 128
      %s442 = scalar_select %p441, %s440, 128
      %s443 = smul.u32 64, %s442
      %s444 = smul.u32 %s27, 2
      %s445 = sadd.s32 %s444, %s28
      %s446 = smul.u32 128, %s445
      %p447 = scmp.lt.s32.totalorder %s446, 511
      %s448 = scalar_select %p447, %s446, 511
      %s449 = smul.addr %s448, 8
      %s450 = scalar_lea.vmem %s1, %s449
      %s451 = smul.u32 %s27, 2
      %s452 = sadd.s32 %s451, %s28
      %s453 = smul.u32 128, %s452
      %p454 = scmp.lt.s32.totalorder %s27, 1
      %s455 = scalar_select %p454, %s27, 1
      %s456 = smul.addr %s455, 8
      %s457 = scalar_lea.vmem %s10, %s456
      %p459 = scmp.eq.s32.totalorder %s28, 0
      // Predicated region
      $region61: #{tpu_custom_call.1} parent=59 // pred_check
        %p460 = pneg %p459
      $region62: #{tpu_custom_call.1} parent=59 // pred_check_branch
        %462 = sbr.rel (%p460) target = $region64
      $region63: #{tpu_custom_call.1} parent=59 // pred_region
        %463 = vst [vmem:[%s457] sm:$0x1f] 0.0
      $region64: #{tpu_custom_call.1} parent=59 // pred_fallthru
        _
      %v464 = vld [vmem:[%s434] sm:$0xf]
      %v465 = vld [vmem:[%s434 + $0x4] sm:$0xf]
      %v466 = vld [vmem:[%s434 + $0x8] sm:$0xf]
      %v467 = vld [vmem:[%s434 + $0xc] sm:$0xf]
      %v468 = vld [vmem:[%s434 + $0x10] sm:$0xf]
      %v469 = vld [vmem:[%s434 + $0x14] sm:$0xf]
      %v470 = vld [vmem:[%s434 + $0x18] sm:$0xf]
      %v471 = vld [vmem:[%s434 + $0x1c] sm:$0xf]
      %v472 = vld [vmem:[%s434 + $0x20] sm:$0xf]
      %v473 = vld [vmem:[%s434 + $0x24] sm:$0xf]
      %v474 = vld [vmem:[%s434 + $0x28] sm:$0xf]
      %v475 = vld [vmem:[%s434 + $0x2c] sm:$0xf]
      %v476 = vld [vmem:[%s434 + $0x30] sm:$0xf]
      %v477 = vld [vmem:[%s434 + $0x34] sm:$0xf]
      %v478 = vld [vmem:[%s434 + $0x38] sm:$0xf]
      %v479 = vld [vmem:[%s434 + $0x3c] sm:$0xf]
      %v480 = vld [vmem:[%s434 + $0x40] sm:$0xf]
      %v481 = vld [vmem:[%s434 + $0x44] sm:$0xf]
      %v482 = vld [vmem:[%s434 + $0x48] sm:$0xf]
      %v483 = vld [vmem:[%s434 + $0x4c] sm:$0xf]
      %v484 = vld [vmem:[%s434 + $0x50] sm:$0xf]
      %v485 = vld [vmem:[%s434 + $0x54] sm:$0xf]
      %v486 = vld [vmem:[%s434 + $0x58] sm:$0xf]
      %v487 = vld [vmem:[%s434 + $0x5c] sm:$0xf]
      %v488 = vld [vmem:[%s434 + $0x60] sm:$0xf]
      %v489 = vld [vmem:[%s434 + $0x64] sm:$0xf]
      %v490 = vld [vmem:[%s434 + $0x68] sm:$0xf]
      %v491 = vld [vmem:[%s434 + $0x6c] sm:$0xf]
      %v492 = vld [vmem:[%s434 + $0x70] sm:$0xf]
      %v493 = vld [vmem:[%s434 + $0x74] sm:$0xf]
      %v494 = vld [vmem:[%s434 + $0x78] sm:$0xf]
      %v495 = vld [vmem:[%s434 + $0x7c] sm:$0xf]
      %v496 = vld [vmem:[%s434 + $0x80] sm:$0xf]
      %v497 = vld [vmem:[%s434 + $0x84] sm:$0xf]
      %v498 = vld [vmem:[%s434 + $0x88] sm:$0xf]
      %v499 = vld [vmem:[%s434 + $0x8c] sm:$0xf]
      %v500 = vld [vmem:[%s434 + $0x90] sm:$0xf]
      %v501 = vld [vmem:[%s434 + $0x94] sm:$0xf]
      %v502 = vld [vmem:[%s434 + $0x98] sm:$0xf]
      %v503 = vld [vmem:[%s434 + $0x9c] sm:$0xf]
      %v504 = vld [vmem:[%s434 + $0xa0] sm:$0xf]
      %v505 = vld [vmem:[%s434 + $0xa4] sm:$0xf]
      %v506 = vld [vmem:[%s434 + $0xa8] sm:$0xf]
      %v507 = vld [vmem:[%s434 + $0xac] sm:$0xf]
      %v508 = vld [vmem:[%s434 + $0xb0] sm:$0xf]
      %v509 = vld [vmem:[%s434 + $0xb4] sm:$0xf]
      %v510 = vld [vmem:[%s434 + $0xb8] sm:$0xf]
      %v511 = vld [vmem:[%s434 + $0xbc] sm:$0xf]
      %v512 = vld [vmem:[%s434 + $0xc0] sm:$0xf]
      %v513 = vld [vmem:[%s434 + $0xc4] sm:$0xf]
      %v514 = vld [vmem:[%s434 + $0xc8] sm:$0xf]
      %v515 = vld [vmem:[%s434 + $0xcc] sm:$0xf]
      %v516 = vld [vmem:[%s434 + $0xd0] sm:$0xf]
      %v517 = vld [vmem:[%s434 + $0xd4] sm:$0xf]
      %v518 = vld [vmem:[%s434 + $0xd8] sm:$0xf]
      %v519 = vld [vmem:[%s434 + $0xdc] sm:$0xf]
      %v520 = vld [vmem:[%s434 + $0xe0] sm:$0xf]
      %v521 = vld [vmem:[%s434 + $0xe4] sm:$0xf]
      %v522 = vld [vmem:[%s434 + $0xe8] sm:$0xf]
      %v523 = vld [vmem:[%s434 + $0xec] sm:$0xf]
      %v524 = vld [vmem:[%s434 + $0xf0] sm:$0xf]
      %v525 = vld [vmem:[%s434 + $0xf4] sm:$0xf]
      %v526 = vld [vmem:[%s434 + $0xf8] sm:$0xf]
      %v527 = vld [vmem:[%s434 + $0xfc] sm:$0xf]
      %v528 = vld [vmem:[%s434 + $0x100] sm:$0xf]
      %v529 = vld [vmem:[%s434 + $0x104] sm:$0xf]
      %v530 = vld [vmem:[%s434 + $0x108] sm:$0xf]
      %v531 = vld [vmem:[%s434 + $0x10c] sm:$0xf]
      %v532 = vld [vmem:[%s434 + $0x110] sm:$0xf]
      %v533 = vld [vmem:[%s434 + $0x114] sm:$0xf]
      %v534 = vld [vmem:[%s434 + $0x118] sm:$0xf]
      %v535 = vld [vmem:[%s434 + $0x11c] sm:$0xf]
      %v536 = vld [vmem:[%s434 + $0x120] sm:$0xf]
      %v537 = vld [vmem:[%s434 + $0x124] sm:$0xf]
      %v538 = vld [vmem:[%s434 + $0x128] sm:$0xf]
      %v539 = vld [vmem:[%s434 + $0x12c] sm:$0xf]
      %v540 = vld [vmem:[%s434 + $0x130] sm:$0xf]
      %v541 = vld [vmem:[%s434 + $0x134] sm:$0xf]
      %v542 = vld [vmem:[%s434 + $0x138] sm:$0xf]
      %v543 = vld [vmem:[%s434 + $0x13c] sm:$0xf]
      %v544 = vld [vmem:[%s434 + $0x140] sm:$0xf]
      %v545 = vld [vmem:[%s434 + $0x144] sm:$0xf]
      %v546 = vld [vmem:[%s434 + $0x148] sm:$0xf]
      %v547 = vld [vmem:[%s434 + $0x14c] sm:$0xf]
      %v548 = vld [vmem:[%s434 + $0x150] sm:$0xf]
      %v549 = vld [vmem:[%s434 + $0x154] sm:$0xf]
      %v550 = vld [vmem:[%s434 + $0x158] sm:$0xf]
      %v551 = vld [vmem:[%s434 + $0x15c] sm:$0xf]
      %v552 = vld [vmem:[%s434 + $0x160] sm:$0xf]
      %v553 = vld [vmem:[%s434 + $0x164] sm:$0xf]
      %v554 = vld [vmem:[%s434 + $0x168] sm:$0xf]
      %v555 = vld [vmem:[%s434 + $0x16c] sm:$0xf]
      %v556 = vld [vmem:[%s434 + $0x170] sm:$0xf]
      %v557 = vld [vmem:[%s434 + $0x174] sm:$0xf]
      %v558 = vld [vmem:[%s434 + $0x178] sm:$0xf]
      %v559 = vld [vmem:[%s434 + $0x17c] sm:$0xf]
      %v560 = vld [vmem:[%s434 + $0x180] sm:$0xf]
      %v561 = vld [vmem:[%s434 + $0x184] sm:$0xf]
      %v562 = vld [vmem:[%s434 + $0x188] sm:$0xf]
      %v563 = vld [vmem:[%s434 + $0x18c] sm:$0xf]
      %v564 = vld [vmem:[%s434 + $0x190] sm:$0xf]
      %v565 = vld [vmem:[%s434 + $0x194] sm:$0xf]
      %v566 = vld [vmem:[%s434 + $0x198] sm:$0xf]
      %v567 = vld [vmem:[%s434 + $0x19c] sm:$0xf]
      %v568 = vld [vmem:[%s434 + $0x1a0] sm:$0xf]
      %v569 = vld [vmem:[%s434 + $0x1a4] sm:$0xf]
      %v570 = vld [vmem:[%s434 + $0x1a8] sm:$0xf]
      %v571 = vld [vmem:[%s434 + $0x1ac] sm:$0xf]
      %v572 = vld [vmem:[%s434 + $0x1b0] sm:$0xf]
      %v573 = vld [vmem:[%s434 + $0x1b4] sm:$0xf]
      %v574 = vld [vmem:[%s434 + $0x1b8] sm:$0xf]
      %v575 = vld [vmem:[%s434 + $0x1bc] sm:$0xf]
      %v576 = vld [vmem:[%s434 + $0x1c0] sm:$0xf]
      %v577 = vld [vmem:[%s434 + $0x1c4] sm:$0xf]
      %v578 = vld [vmem:[%s434 + $0x1c8] sm:$0xf]
      %v579 = vld [vmem:[%s434 + $0x1cc] sm:$0xf]
      %v580 = vld [vmem:[%s434 + $0x1d0] sm:$0xf]
      %v581 = vld [vmem:[%s434 + $0x1d4] sm:$0xf]
      %v582 = vld [vmem:[%s434 + $0x1d8] sm:$0xf]
      %v583 = vld [vmem:[%s434 + $0x1dc] sm:$0xf]
      %v584 = vld [vmem:[%s434 + $0x1e0] sm:$0xf]
      %v585 = vld [vmem:[%s434 + $0x1e4] sm:$0xf]
      %v586 = vld [vmem:[%s434 + $0x1e8] sm:$0xf]
      %v587 = vld [vmem:[%s434 + $0x1ec] sm:$0xf]
      %v588 = vld [vmem:[%s434 + $0x1f0] sm:$0xf]
      %v589 = vld [vmem:[%s434 + $0x1f4] sm:$0xf]
      %v590 = vld [vmem:[%s434 + $0x1f8] sm:$0xf]
      %v591 = vld [vmem:[%s434 + $0x1fc] sm:$0xf]
      %v592 = vld [vmem:[%s2] sm:$0xf]
      %v593 = vld [vmem:[%s2 + $0x4] sm:$0xf]
      %v594 = vld [vmem:[%s2 + $0x8] sm:$0xf]
      %v595 = vld [vmem:[%s2 + $0xc] sm:$0xf]
      %v596 = vld [vmem:[%s2 + $0x10] sm:$0xf]
      %v597 = vld [vmem:[%s2 + $0x14] sm:$0xf]
      %v598 = vld [vmem:[%s2 + $0x18] sm:$0xf]
      %v599 = vld [vmem:[%s2 + $0x1c] sm:$0xf]
      %v600 = vld [vmem:[%s2 + $0x20] sm:$0xf]
      %v601 = vld [vmem:[%s2 + $0x24] sm:$0xf]
      %v602 = vld [vmem:[%s2 + $0x28] sm:$0xf]
      %v603 = vld [vmem:[%s2 + $0x2c] sm:$0xf]
      %v604 = vld [vmem:[%s2 + $0x30] sm:$0xf]
      %v605 = vld [vmem:[%s2 + $0x34] sm:$0xf]
      %v606 = vld [vmem:[%s2 + $0x38] sm:$0xf]
      %v607 = vld [vmem:[%s2 + $0x3c] sm:$0xf]
      %v608 = vld [vmem:[%s3] sm:$0x1]
      %v610 = vlaneseq
      %v611 = vshrl.u32 %v610, 7
      %v612 = vsub.s32 0, %v611
      %v613 = vrot.slane %v608, %v612
      %v743 = vunpack.c.l.b16 %v464
      %v744 = vunpack.c.l.b16 %v465
      %v745 = vunpack.c.l.b16 %v466
      %v746 = vunpack.c.l.b16 %v467
      %v747 = vunpack.c.l.b16 %v468
      %v748 = vunpack.c.l.b16 %v469
      %v749 = vunpack.c.l.b16 %v470
      %v750 = vunpack.c.l.b16 %v471
      %v751 = vunpack.c.l.b16 %v472
      %v752 = vunpack.c.l.b16 %v473
      %v753 = vunpack.c.l.b16 %v474
      %v754 = vunpack.c.l.b16 %v475
      %v755 = vunpack.c.l.b16 %v476
      %v756 = vunpack.c.l.b16 %v477
      %v757 = vunpack.c.l.b16 %v478
      %v758 = vunpack.c.l.b16 %v479
      %v759 = vunpack.c.l.b16 %v480
      %v760 = vunpack.c.l.b16 %v481
      %v761 = vunpack.c.l.b16 %v482
      %v762 = vunpack.c.l.b16 %v483
      %v763 = vunpack.c.l.b16 %v484
      %v764 = vunpack.c.l.b16 %v485
      %v765 = vunpack.c.l.b16 %v486
      %v766 = vunpack.c.l.b16 %v487
      %v767 = vunpack.c.l.b16 %v488
      %v768 = vunpack.c.l.b16 %v489
      %v769 = vunpack.c.l.b16 %v490
      %v770 = vunpack.c.l.b16 %v491
      %v771 = vunpack.c.l.b16 %v492
      %v772 = vunpack.c.l.b16 %v493
      %v773 = vunpack.c.l.b16 %v494
      %v774 = vunpack.c.l.b16 %v495
      %v775 = vunpack.c.l.b16 %v496
      %v776 = vunpack.c.l.b16 %v497
      %v777 = vunpack.c.l.b16 %v498
      %v778 = vunpack.c.l.b16 %v499
      %v779 = vunpack.c.l.b16 %v500
      %v780 = vunpack.c.l.b16 %v501
      %v781 = vunpack.c.l.b16 %v502
      %v782 = vunpack.c.l.b16 %v503
      %v783 = vunpack.c.l.b16 %v504
      %v784 = vunpack.c.l.b16 %v505
      %v785 = vunpack.c.l.b16 %v506
      %v786 = vunpack.c.l.b16 %v507
      %v787 = vunpack.c.l.b16 %v508
      %v788 = vunpack.c.l.b16 %v509
      %v789 = vunpack.c.l.b16 %v510
      %v790 = vunpack.c.l.b16 %v511
      %v791 = vunpack.c.l.b16 %v512
      %v792 = vunpack.c.l.b16 %v513
      %v793 = vunpack.c.l.b16 %v514
      %v794 = vunpack.c.l.b16 %v515
      %v795 = vunpack.c.l.b16 %v516
      %v796 = vunpack.c.l.b16 %v517
      %v797 = vunpack.c.l.b16 %v518
      %v798 = vunpack.c.l.b16 %v519
      %v799 = vunpack.c.l.b16 %v520
      %v800 = vunpack.c.l.b16 %v521
      %v801 = vunpack.c.l.b16 %v522
      %v802 = vunpack.c.l.b16 %v523
      %v803 = vunpack.c.l.b16 %v524
      %v804 = vunpack.c.l.b16 %v525
      %v805 = vunpack.c.l.b16 %v526
      %v806 = vunpack.c.l.b16 %v527
      %v807 = vunpack.c.l.b16 %v528
      %v808 = vunpack.c.l.b16 %v529
      %v809 = vunpack.c.l.b16 %v530
      %v810 = vunpack.c.l.b16 %v531
      %v811 = vunpack.c.l.b16 %v532
      %v812 = vunpack.c.l.b16 %v533
      %v813 = vunpack.c.l.b16 %v534
      %v814 = vunpack.c.l.b16 %v535
      %v815 = vunpack.c.l.b16 %v536
      %v816 = vunpack.c.l.b16 %v537
      %v817 = vunpack.c.l.b16 %v538
      %v818 = vunpack.c.l.b16 %v539
      %v819 = vunpack.c.l.b16 %v540
      %v820 = vunpack.c.l.b16 %v541
      %v821 = vunpack.c.l.b16 %v542
      %v822 = vunpack.c.l.b16 %v543
      %v823 = vunpack.c.l.b16 %v544
      %v824 = vunpack.c.l.b16 %v545
      %v825 = vunpack.c.l.b16 %v546
      %v826 = vunpack.c.l.b16 %v547
      %v827 = vunpack.c.l.b16 %v548
      %v828 = vunpack.c.l.b16 %v549
      %v829 = vunpack.c.l.b16 %v550
      %v830 = vunpack.c.l.b16 %v551
      %v831 = vunpack.c.l.b16 %v552
      %v832 = vunpack.c.l.b16 %v553
      %v833 = vunpack.c.l.b16 %v554
      %v834 = vunpack.c.l.b16 %v555
      %v835 = vunpack.c.l.b16 %v556
      %v836 = vunpack.c.l.b16 %v557
      %v837 = vunpack.c.l.b16 %v558
      %v838 = vunpack.c.l.b16 %v559
      %v839 = vunpack.c.l.b16 %v560
      %v840 = vunpack.c.l.b16 %v561
      %v841 = vunpack.c.l.b16 %v562
      %v842 = vunpack.c.l.b16 %v563
      %v843 = vunpack.c.l.b16 %v564
      %v844 = vunpack.c.l.b16 %v565
      %v845 = vunpack.c.l.b16 %v566
      %v846 = vunpack.c.l.b16 %v567
      %v847 = vunpack.c.l.b16 %v568
      %v848 = vunpack.c.l.b16 %v569
      %v849 = vunpack.c.l.b16 %v570
      %v850 = vunpack.c.l.b16 %v571
      %v851 = vunpack.c.l.b16 %v572
      %v852 = vunpack.c.l.b16 %v573
      %v853 = vunpack.c.l.b16 %v574
      %v854 = vunpack.c.l.b16 %v575
      %v855 = vunpack.c.l.b16 %v576
      %v856 = vunpack.c.l.b16 %v577
      %v857 = vunpack.c.l.b16 %v578
      %v858 = vunpack.c.l.b16 %v579
      %v859 = vunpack.c.l.b16 %v580
      %v860 = vunpack.c.l.b16 %v581
      %v861 = vunpack.c.l.b16 %v582
      %v862 = vunpack.c.l.b16 %v583
      %v863 = vunpack.c.l.b16 %v584
      %v864 = vunpack.c.l.b16 %v585
      %v865 = vunpack.c.l.b16 %v586
      %v866 = vunpack.c.l.b16 %v587
      %v867 = vunpack.c.l.b16 %v588
      %v868 = vunpack.c.l.b16 %v589
      %v869 = vunpack.c.l.b16 %v590
      %v870 = vunpack.c.l.b16 %v591
      %v871 = vpack.c.b16 %v744, %v743
      %v872 = vpack.c.b16 %v746, %v745
      %v873 = vpack.c.b16 %v748, %v747
      %v874 = vpack.c.b16 %v750, %v749
      %v875 = vpack.c.b16 %v752, %v751
      %v876 = vpack.c.b16 %v754, %v753
      %v877 = vpack.c.b16 %v756, %v755
      %v878 = vpack.c.b16 %v758, %v757
      %v879 = vpack.c.b16 %v760, %v759
      %v880 = vpack.c.b16 %v762, %v761
      %v881 = vpack.c.b16 %v764, %v763
      %v882 = vpack.c.b16 %v766, %v765
      %v883 = vpack.c.b16 %v768, %v767
      %v884 = vpack.c.b16 %v770, %v769
      %v885 = vpack.c.b16 %v772, %v771
      %v886 = vpack.c.b16 %v774, %v773
      %v887 = vpack.c.b16 %v776, %v775
      %v888 = vpack.c.b16 %v778, %v777
      %v889 = vpack.c.b16 %v780, %v779
      %v890 = vpack.c.b16 %v782, %v781
      %v891 = vpack.c.b16 %v784, %v783
      %v892 = vpack.c.b16 %v786, %v785
      %v893 = vpack.c.b16 %v788, %v787
      %v894 = vpack.c.b16 %v790, %v789
      %v895 = vpack.c.b16 %v792, %v791
      %v896 = vpack.c.b16 %v794, %v793
      %v897 = vpack.c.b16 %v796, %v795
      %v898 = vpack.c.b16 %v798, %v797
      %v899 = vpack.c.b16 %v800, %v799
      %v900 = vpack.c.b16 %v802, %v801
      %v901 = vpack.c.b16 %v804, %v803
      %v902 = vpack.c.b16 %v806, %v805
      %v903 = vpack.c.b16 %v808, %v807
      %v904 = vpack.c.b16 %v810, %v809
      %v905 = vpack.c.b16 %v812, %v811
      %v906 = vpack.c.b16 %v814, %v813
      %v907 = vpack.c.b16 %v816, %v815
      %v908 = vpack.c.b16 %v818, %v817
      %v909 = vpack.c.b16 %v820, %v819
      %v910 = vpack.c.b16 %v822, %v821
      %v911 = vpack.c.b16 %v824, %v823
      %v912 = vpack.c.b16 %v826, %v825
      %v913 = vpack.c.b16 %v828, %v827
      %v914 = vpack.c.b16 %v830, %v829
      %v915 = vpack.c.b16 %v832, %v831
      %v916 = vpack.c.b16 %v834, %v833
      %v917 = vpack.c.b16 %v836, %v835
      %v918 = vpack.c.b16 %v838, %v837
      %v919 = vpack.c.b16 %v840, %v839
      %v920 = vpack.c.b16 %v842, %v841
      %v921 = vpack.c.b16 %v844, %v843
      %v922 = vpack.c.b16 %v846, %v845
      %v923 = vpack.c.b16 %v848, %v847
      %v924 = vpack.c.b16 %v850, %v849
      %v925 = vpack.c.b16 %v852, %v851
      %v926 = vpack.c.b16 %v854, %v853
      %v927 = vpack.c.b16 %v856, %v855
      %v928 = vpack.c.b16 %v858, %v857
      %v929 = vpack.c.b16 %v860, %v859
      %v930 = vpack.c.b16 %v862, %v861
      %v931 = vpack.c.b16 %v864, %v863
      %v932 = vpack.c.b16 %v866, %v865
      %v933 = vpack.c.b16 %v868, %v867
      %v934 = vpack.c.b16 %v870, %v869
      %v1015 = vunpack.c.l.b16 %v592
      %v1016 = vunpack.c.l.b16 %v593
      %v1017 = vunpack.c.l.b16 %v594
      %v1018 = vunpack.c.l.b16 %v595
      %v1019 = vunpack.c.l.b16 %v596
      %v1020 = vunpack.c.l.b16 %v597
      %v1021 = vunpack.c.l.b16 %v598
      %v1022 = vunpack.c.l.b16 %v599
      %v1023 = vunpack.c.l.b16 %v600
      %v1024 = vunpack.c.l.b16 %v601
      %v1025 = vunpack.c.l.b16 %v602
      %v1026 = vunpack.c.l.b16 %v603
      %v1027 = vunpack.c.l.b16 %v604
      %v1028 = vunpack.c.l.b16 %v605
      %v1029 = vunpack.c.l.b16 %v606
      %v1030 = vunpack.c.l.b16 %v607
      %v1031 = vpack.c.b16 %v1016, %v1015
      %v1032 = vpack.c.b16 %v1018, %v1017
      %v1033 = vpack.c.b16 %v1020, %v1019
      %v1034 = vpack.c.b16 %v1022, %v1021
      %v1035 = vpack.c.b16 %v1024, %v1023
      %v1036 = vpack.c.b16 %v1026, %v1025
      %v1037 = vpack.c.b16 %v1028, %v1027
      %v1038 = vpack.c.b16 %v1030, %v1029
      %1047 = vmatprep.subr.bf16.mxu0 0
      %1048 = vmatpush1.bf16.msra.mxu0 %v1038
      %1049 = vmatprep.subr.bf16.mxu0 0
      %1050 = vmatpush1.bf16.msra.mxu0 %v1037
      %1051 = vmatprep.subr.bf16.mxu0 0
      %1052 = vmatpush1.bf16.msra.mxu0 %v1036
      %1053 = vmatprep.subr.bf16.mxu0 0
      %1054 = vmatpush1.bf16.msra.mxu0 %v1035
      %1055 = vmatprep.subr.bf16.mxu0 0
      %1056 = vmatpush1.bf16.msra.mxu0 %v1034
      %1057 = vmatprep.subr.bf16.mxu0 0
      %1058 = vmatpush1.bf16.msra.mxu0 %v1033
      %1059 = vmatprep.subr.bf16.mxu0 0
      %1060 = vmatpush1.bf16.msra.mxu0 %v1032
      %1061 = vmatprep.subr.bf16.mxu0 0
      %1062 = vmatpush1.bf16.msra.mxu0 %v1031
      %1063 = vmatprep.subr.bf16.mxu0 0
      %1064 = vmatpush2.bf16.msra.mxu0 0
      %1065 = vmatprep.subr.bf16.mxu0 0
      %1066 = vmatpush2.bf16.msra.mxu0 0
      %1067 = vmatprep.subr.bf16.mxu0 0
      %1068 = vmatpush2.bf16.msra.mxu0 0
      %1069 = vmatprep.subr.bf16.mxu0 0
      %1070 = vmatpush2.bf16.msra.mxu0 0
      %1071 = vmatprep.subr.bf16.mxu0 0
      %1072 = vmatpush2.bf16.msra.mxu0 0
      %1073 = vmatprep.subr.bf16.mxu0 0
      %1074 = vmatpush2.bf16.msra.mxu0 0
      %1075 = vmatprep.subr.bf16.mxu0 0
      %1076 = vmatpush2.bf16.msra.mxu0 0
      %1077 = vmatprep.subr.bf16.mxu0 0
      %1078 = vmatpush2.bf16.msra.mxu0 0
      %1079 = vmatprep.mubr.bf16.mxu0 0
      %1080 = vmatmul.mubr.bf16.gmra.mxu0 %v871
      %v1081 = vpop.f32.mrf.mxu0
      %v1082 = vadd.f32 %v613, %v1081
      %v1083 = vpop.f32.mrf.mxu0
      %v1084 = vpop.f32.mrf.mxu0
      %v1085 = vadd.f32 %v613, %v1084
      %v1086 = vpop.f32.mrf.mxu0
      %1087 = vmatprep.mubr.bf16.mxu0 0
      %1088 = vmatmul.mubr.bf16.gmra.mxu0 %v872
      %v1089 = vpop.f32.mrf.mxu0
      %v1090 = vadd.f32 %v613, %v1089
      %v1091 = vpop.f32.mrf.mxu0
      %v1092 = vpop.f32.mrf.mxu0
      %v1093 = vadd.f32 %v613, %v1092
      %v1094 = vpop.f32.mrf.mxu0
      %1095 = vmatprep.mubr.bf16.mxu0 0
      %1096 = vmatmul.mubr.bf16.gmra.mxu0 %v873
      %v1097 = vpop.f32.mrf.mxu0
      %v1098 = vadd.f32 %v613, %v1097
      %v1099 = vpop.f32.mrf.mxu0
      %v1100 = vpop.f32.mrf.mxu0
      %v1101 = vadd.f32 %v613, %v1100
      %v1102 = vpop.f32.mrf.mxu0
      %1103 = vmatprep.mubr.bf16.mxu0 0
      %1104 = vmatmul.mubr.bf16.gmra.mxu0 %v874
      %v1105 = vpop.f32.mrf.mxu0
      %v1106 = vadd.f32 %v613, %v1105
      %v1107 = vpop.f32.mrf.mxu0
      %v1108 = vpop.f32.mrf.mxu0
      %v1109 = vadd.f32 %v613, %v1108
      %v1110 = vpop.f32.mrf.mxu0
      %1111 = vmatprep.mubr.bf16.mxu0 0
      %1112 = vmatmul.mubr.bf16.gmra.mxu0 %v875
      %v1113 = vpop.f32.mrf.mxu0
      %v1114 = vadd.f32 %v613, %v1113
      %v1115 = vpop.f32.mrf.mxu0
      %v1116 = vpop.f32.mrf.mxu0
      %v1117 = vadd.f32 %v613, %v1116
      %v1118 = vpop.f32.mrf.mxu0
      %1119 = vmatprep.mubr.bf16.mxu0 0
      %1120 = vmatmul.mubr.bf16.gmra.mxu0 %v876
      %v1121 = vpop.f32.mrf.mxu0
      %v1122 = vadd.f32 %v613, %v1121
      %v1123 = vpop.f32.mrf.mxu0
      %v1124 = vpop.f32.mrf.mxu0
      %v1125 = vadd.f32 %v613, %v1124
      %v1126 = vpop.f32.mrf.mxu0
      %1127 = vmatprep.mubr.bf16.mxu0 0
      %1128 = vmatmul.mubr.bf16.gmra.mxu0 %v877
      %v1129 = vpop.f32.mrf.mxu0
      %v1130 = vadd.f32 %v613, %v1129
      %v1131 = vpop.f32.mrf.mxu0
      %v1132 = vpop.f32.mrf.mxu0
      %v1133 = vadd.f32 %v613, %v1132
      %v1134 = vpop.f32.mrf.mxu0
      %1135 = vmatprep.mubr.bf16.mxu0 0
      %1136 = vmatmul.mubr.bf16.gmra.mxu0 %v878
      %v1137 = vpop.f32.mrf.mxu0
      %v1138 = vadd.f32 %v613, %v1137
      %v1139 = vpop.f32.mrf.mxu0
      %v1140 = vpop.f32.mrf.mxu0
      %v1141 = vadd.f32 %v613, %v1140
      %v1142 = vpop.f32.mrf.mxu0
      %1143 = vmatprep.mubr.bf16.mxu0 0
      %1144 = vmatmul.mubr.bf16.gmra.mxu0 %v879
      %v1145 = vpop.f32.mrf.mxu0
      %v1146 = vadd.f32 %v613, %v1145
      %v1147 = vpop.f32.mrf.mxu0
      %v1148 = vpop.f32.mrf.mxu0
      %v1149 = vadd.f32 %v613, %v1148
      %v1150 = vpop.f32.mrf.mxu0
      %1151 = vmatprep.mubr.bf16.mxu0 0
      %1152 = vmatmul.mubr.bf16.gmra.mxu0 %v880
      %v1153 = vpop.f32.mrf.mxu0
      %v1154 = vadd.f32 %v613, %v1153
      %v1155 = vpop.f32.mrf.mxu0
      %v1156 = vpop.f32.mrf.mxu0
      %v1157 = vadd.f32 %v613, %v1156
      %v1158 = vpop.f32.mrf.mxu0
      %1159 = vmatprep.mubr.bf16.mxu0 0
      %1160 = vmatmul.mubr.bf16.gmra.mxu0 %v881
      %v1161 = vpop.f32.mrf.mxu0
      %v1162 = vadd.f32 %v613, %v1161
      %v1163 = vpop.f32.mrf.mxu0
      %v1164 = vpop.f32.mrf.mxu0
      %v1165 = vadd.f32 %v613, %v1164
      %v1166 = vpop.f32.mrf.mxu0
      %1167 = vmatprep.mubr.bf16.mxu0 0
      %1168 = vmatmul.mubr.bf16.gmra.mxu0 %v882
      %v1169 = vpop.f32.mrf.mxu0
      %v1170 = vadd.f32 %v613, %v1169
      %v1171 = vpop.f32.mrf.mxu0
      %v1172 = vpop.f32.mrf.mxu0
      %v1173 = vadd.f32 %v613, %v1172
      %v1174 = vpop.f32.mrf.mxu0
      %1175 = vmatprep.mubr.bf16.mxu0 0
      %1176 = vmatmul.mubr.bf16.gmra.mxu0 %v883
      %v1177 = vpop.f32.mrf.mxu0
      %v1178 = vadd.f32 %v613, %v1177
      %v1179 = vpop.f32.mrf.mxu0
      %v1180 = vpop.f32.mrf.mxu0
      %v1181 = vadd.f32 %v613, %v1180
      %v1182 = vpop.f32.mrf.mxu0
      %1183 = vmatprep.mubr.bf16.mxu0 0
      %1184 = vmatmul.mubr.bf16.gmra.mxu0 %v884
      %v1185 = vpop.f32.mrf.mxu0
      %v1186 = vadd.f32 %v613, %v1185
      %v1187 = vpop.f32.mrf.mxu0
      %v1188 = vpop.f32.mrf.mxu0
      %v1189 = vadd.f32 %v613, %v1188
      %v1190 = vpop.f32.mrf.mxu0
      %1191 = vmatprep.mubr.bf16.mxu0 0
      %1192 = vmatmul.mubr.bf16.gmra.mxu0 %v885
      %v1193 = vpop.f32.mrf.mxu0
      %v1194 = vadd.f32 %v613, %v1193
      %v1195 = vpop.f32.mrf.mxu0
      %v1196 = vpop.f32.mrf.mxu0
      %v1197 = vadd.f32 %v613, %v1196
      %v1198 = vpop.f32.mrf.mxu0
      %1199 = vmatprep.mubr.bf16.mxu0 0
      %1200 = vmatmul.mubr.bf16.gmra.mxu0 %v886
      %v1201 = vpop.f32.mrf.mxu0
      %v1202 = vadd.f32 %v613, %v1201
      %v1203 = vpop.f32.mrf.mxu0
      %v1204 = vpop.f32.mrf.mxu0
      %v1205 = vadd.f32 %v613, %v1204
      %v1206 = vpop.f32.mrf.mxu0
      %1207 = vmatprep.mubr.bf16.mxu0 0
      %1208 = vmatmul.mubr.bf16.gmra.mxu0 %v887
      %v1209 = vpop.f32.mrf.mxu0
      %v1210 = vadd.f32 %v613, %v1209
      %v1211 = vpop.f32.mrf.mxu0
      %v1212 = vpop.f32.mrf.mxu0
      %v1213 = vadd.f32 %v613, %v1212
      %v1214 = vpop.f32.mrf.mxu0
      %1215 = vmatprep.mubr.bf16.mxu0 0
      %1216 = vmatmul.mubr.bf16.gmra.mxu0 %v888
      %v1217 = vpop.f32.mrf.mxu0
      %v1218 = vadd.f32 %v613, %v1217
      %v1219 = vpop.f32.mrf.mxu0
      %v1220 = vpop.f32.mrf.mxu0
      %v1221 = vadd.f32 %v613, %v1220
      %v1222 = vpop.f32.mrf.mxu0
      %1223 = vmatprep.mubr.bf16.mxu0 0
      %1224 = vmatmul.mubr.bf16.gmra.mxu0 %v889
      %v1225 = vpop.f32.mrf.mxu0
      %v1226 = vadd.f32 %v613, %v1225
      %v1227 = vpop.f32.mrf.mxu0
      %v1228 = vpop.f32.mrf.mxu0
      %v1229 = vadd.f32 %v613, %v1228
      %v1230 = vpop.f32.mrf.mxu0
      %1231 = vmatprep.mubr.bf16.mxu0 0
      %1232 = vmatmul.mubr.bf16.gmra.mxu0 %v890
      %v1233 = vpop.f32.mrf.mxu0
      %v1234 = vadd.f32 %v613, %v1233
      %v1235 = vpop.f32.mrf.mxu0
      %v1236 = vpop.f32.mrf.mxu0
      %v1237 = vadd.f32 %v613, %v1236
      %v1238 = vpop.f32.mrf.mxu0
      %1239 = vmatprep.mubr.bf16.mxu0 0
      %1240 = vmatmul.mubr.bf16.gmra.mxu0 %v891
      %v1241 = vpop.f32.mrf.mxu0
      %v1242 = vadd.f32 %v613, %v1241
      %v1243 = vpop.f32.mrf.mxu0
      %v1244 = vpop.f32.mrf.mxu0
      %v1245 = vadd.f32 %v613, %v1244
      %v1246 = vpop.f32.mrf.mxu0
      %1247 = vmatprep.mubr.bf16.mxu0 0
      %1248 = vmatmul.mubr.bf16.gmra.mxu0 %v892
      %v1249 = vpop.f32.mrf.mxu0
      %v1250 = vadd.f32 %v613, %v1249
      %v1251 = vpop.f32.mrf.mxu0
      %v1252 = vpop.f32.mrf.mxu0
      %v1253 = vadd.f32 %v613, %v1252
      %v1254 = vpop.f32.mrf.mxu0
      %1255 = vmatprep.mubr.bf16.mxu0 0
      %1256 = vmatmul.mubr.bf16.gmra.mxu0 %v893
      %v1257 = vpop.f32.mrf.mxu0
      %v1258 = vadd.f32 %v613, %v1257
      %v1259 = vpop.f32.mrf.mxu0
      %v1260 = vpop.f32.mrf.mxu0
      %v1261 = vadd.f32 %v613, %v1260
      %v1262 = vpop.f32.mrf.mxu0
      %1263 = vmatprep.mubr.bf16.mxu0 0
      %1264 = vmatmul.mubr.bf16.gmra.mxu0 %v894
      %v1265 = vpop.f32.mrf.mxu0
      %v1266 = vadd.f32 %v613, %v1265
      %v1267 = vpop.f32.mrf.mxu0
      %v1268 = vpop.f32.mrf.mxu0
      %v1269 = vadd.f32 %v613, %v1268
      %v1270 = vpop.f32.mrf.mxu0
      %1271 = vmatprep.mubr.bf16.mxu0 0
      %1272 = vmatmul.mubr.bf16.gmra.mxu0 %v895
      %v1273 = vpop.f32.mrf.mxu0
      %v1274 = vadd.f32 %v613, %v1273
      %v1275 = vpop.f32.mrf.mxu0
      %v1276 = vpop.f32.mrf.mxu0
      %v1277 = vadd.f32 %v613, %v1276
      %v1278 = vpop.f32.mrf.mxu0
      %1279 = vmatprep.mubr.bf16.mxu0 0
      %1280 = vmatmul.mubr.bf16.gmra.mxu0 %v896
      %v1281 = vpop.f32.mrf.mxu0
      %v1282 = vadd.f32 %v613, %v1281
      %v1283 = vpop.f32.mrf.mxu0
      %v1284 = vpop.f32.mrf.mxu0
      %v1285 = vadd.f32 %v613, %v1284
      %v1286 = vpop.f32.mrf.mxu0
      %1287 = vmatprep.mubr.bf16.mxu0 0
      %1288 = vmatmul.mubr.bf16.gmra.mxu0 %v897
      %v1289 = vpop.f32.mrf.mxu0
      %v1290 = vadd.f32 %v613, %v1289
      %v1291 = vpop.f32.mrf.mxu0
      %v1292 = vpop.f32.mrf.mxu0
      %v1293 = vadd.f32 %v613, %v1292
      %v1294 = vpop.f32.mrf.mxu0
      %1295 = vmatprep.mubr.bf16.mxu0 0
      %1296 = vmatmul.mubr.bf16.gmra.mxu0 %v898
      %v1297 = vpop.f32.mrf.mxu0
      %v1298 = vadd.f32 %v613, %v1297
      %v1299 = vpop.f32.mrf.mxu0
      %v1300 = vpop.f32.mrf.mxu0
      %v1301 = vadd.f32 %v613, %v1300
      %v1302 = vpop.f32.mrf.mxu0
      %1303 = vmatprep.mubr.bf16.mxu0 0
      %1304 = vmatmul.mubr.bf16.gmra.mxu0 %v899
      %v1305 = vpop.f32.mrf.mxu0
      %v1306 = vadd.f32 %v613, %v1305
      %v1307 = vpop.f32.mrf.mxu0
      %v1308 = vpop.f32.mrf.mxu0
      %v1309 = vadd.f32 %v613, %v1308
      %v1310 = vpop.f32.mrf.mxu0
      %1311 = vmatprep.mubr.bf16.mxu0 0
      %1312 = vmatmul.mubr.bf16.gmra.mxu0 %v900
      %v1313 = vpop.f32.mrf.mxu0
      %v1314 = vadd.f32 %v613, %v1313
      %v1315 = vpop.f32.mrf.mxu0
      %v1316 = vpop.f32.mrf.mxu0
      %v1317 = vadd.f32 %v613, %v1316
      %v1318 = vpop.f32.mrf.mxu0
      %1319 = vmatprep.mubr.bf16.mxu0 0
      %1320 = vmatmul.mubr.bf16.gmra.mxu0 %v901
      %v1321 = vpop.f32.mrf.mxu0
      %v1322 = vadd.f32 %v613, %v1321
      %v1323 = vpop.f32.mrf.mxu0
      %v1324 = vpop.f32.mrf.mxu0
      %v1325 = vadd.f32 %v613, %v1324
      %v1326 = vpop.f32.mrf.mxu0
      %1327 = vmatprep.mubr.bf16.mxu0 0
      %1328 = vmatmul.mubr.bf16.gmra.mxu0 %v902
      %v1329 = vpop.f32.mrf.mxu0
      %v1330 = vadd.f32 %v613, %v1329
      %v1331 = vpop.f32.mrf.mxu0
      %v1332 = vpop.f32.mrf.mxu0
      %v1333 = vadd.f32 %v613, %v1332
      %v1334 = vpop.f32.mrf.mxu0
      %1335 = vmatprep.mubr.bf16.mxu0 0
      %1336 = vmatmul.mubr.bf16.gmra.mxu0 %v903
      %v1337 = vpop.f32.mrf.mxu0
      %v1338 = vadd.f32 %v613, %v1337
      %v1339 = vpop.f32.mrf.mxu0
      %v1340 = vpop.f32.mrf.mxu0
      %v1341 = vadd.f32 %v613, %v1340
      %v1342 = vpop.f32.mrf.mxu0
      %1343 = vmatprep.mubr.bf16.mxu0 0
      %1344 = vmatmul.mubr.bf16.gmra.mxu0 %v904
      %v1345 = vpop.f32.mrf.mxu0
      %v1346 = vadd.f32 %v613, %v1345
      %v1347 = vpop.f32.mrf.mxu0
      %v1348 = vpop.f32.mrf.mxu0
      %v1349 = vadd.f32 %v613, %v1348
      %v1350 = vpop.f32.mrf.mxu0
      %1351 = vmatprep.mubr.bf16.mxu0 0
      %1352 = vmatmul.mubr.bf16.gmra.mxu0 %v905
      %v1353 = vpop.f32.mrf.mxu0
      %v1354 = vadd.f32 %v613, %v1353
      %v1355 = vpop.f32.mrf.mxu0
      %v1356 = vpop.f32.mrf.mxu0
      %v1357 = vadd.f32 %v613, %v1356
      %v1358 = vpop.f32.mrf.mxu0
      %1359 = vmatprep.mubr.bf16.mxu0 0
      %1360 = vmatmul.mubr.bf16.gmra.mxu0 %v906
      %v1361 = vpop.f32.mrf.mxu0
      %v1362 = vadd.f32 %v613, %v1361
      %v1363 = vpop.f32.mrf.mxu0
      %v1364 = vpop.f32.mrf.mxu0
      %v1365 = vadd.f32 %v613, %v1364
      %v1366 = vpop.f32.mrf.mxu0
      %1367 = vmatprep.mubr.bf16.mxu0 0
      %1368 = vmatmul.mubr.bf16.gmra.mxu0 %v907
      %v1369 = vpop.f32.mrf.mxu0
      %v1370 = vadd.f32 %v613, %v1369
      %v1371 = vpop.f32.mrf.mxu0
      %v1372 = vpop.f32.mrf.mxu0
      %v1373 = vadd.f32 %v613, %v1372
      %v1374 = vpop.f32.mrf.mxu0
      %1375 = vmatprep.mubr.bf16.mxu0 0
      %1376 = vmatmul.mubr.bf16.gmra.mxu0 %v908
      %v1377 = vpop.f32.mrf.mxu0
      %v1378 = vadd.f32 %v613, %v1377
      %v1379 = vpop.f32.mrf.mxu0
      %v1380 = vpop.f32.mrf.mxu0
      %v1381 = vadd.f32 %v613, %v1380
      %v1382 = vpop.f32.mrf.mxu0
      %1383 = vmatprep.mubr.bf16.mxu0 0
      %1384 = vmatmul.mubr.bf16.gmra.mxu0 %v909
      %v1385 = vpop.f32.mrf.mxu0
      %v1386 = vadd.f32 %v613, %v1385
      %v1387 = vpop.f32.mrf.mxu0
      %v1388 = vpop.f32.mrf.mxu0
      %v1389 = vadd.f32 %v613, %v1388
      %v1390 = vpop.f32.mrf.mxu0
      %1391 = vmatprep.mubr.bf16.mxu0 0
      %1392 = vmatmul.mubr.bf16.gmra.mxu0 %v910
      %v1393 = vpop.f32.mrf.mxu0
      %v1394 = vadd.f32 %v613, %v1393
      %v1395 = vpop.f32.mrf.mxu0
      %v1396 = vpop.f32.mrf.mxu0
      %v1397 = vadd.f32 %v613, %v1396
      %v1398 = vpop.f32.mrf.mxu0
      %1399 = vmatprep.mubr.bf16.mxu0 0
      %1400 = vmatmul.mubr.bf16.gmra.mxu0 %v911
      %v1401 = vpop.f32.mrf.mxu0
      %v1402 = vadd.f32 %v613, %v1401
      %v1403 = vpop.f32.mrf.mxu0
      %v1404 = vpop.f32.mrf.mxu0
      %v1405 = vadd.f32 %v613, %v1404
      %v1406 = vpop.f32.mrf.mxu0
      %1407 = vmatprep.mubr.bf16.mxu0 0
      %1408 = vmatmul.mubr.bf16.gmra.mxu0 %v912
      %v1409 = vpop.f32.mrf.mxu0
      %v1410 = vadd.f32 %v613, %v1409
      %v1411 = vpop.f32.mrf.mxu0
      %v1412 = vpop.f32.mrf.mxu0
      %v1413 = vadd.f32 %v613, %v1412
      %v1414 = vpop.f32.mrf.mxu0
      %1415 = vmatprep.mubr.bf16.mxu0 0
      %1416 = vmatmul.mubr.bf16.gmra.mxu0 %v913
      %v1417 = vpop.f32.mrf.mxu0
      %v1418 = vadd.f32 %v613, %v1417
      %v1419 = vpop.f32.mrf.mxu0
      %v1420 = vpop.f32.mrf.mxu0
      %v1421 = vadd.f32 %v613, %v1420
      %v1422 = vpop.f32.mrf.mxu0
      %1423 = vmatprep.mubr.bf16.mxu0 0
      %1424 = vmatmul.mubr.bf16.gmra.mxu0 %v914
      %v1425 = vpop.f32.mrf.mxu0
      %v1426 = vadd.f32 %v613, %v1425
      %v1427 = vpop.f32.mrf.mxu0
      %v1428 = vpop.f32.mrf.mxu0
      %v1429 = vadd.f32 %v613, %v1428
      %v1430 = vpop.f32.mrf.mxu0
      %1431 = vmatprep.mubr.bf16.mxu0 0
      %1432 = vmatmul.mubr.bf16.gmra.mxu0 %v915
      %v1433 = vpop.f32.mrf.mxu0
      %v1434 = vadd.f32 %v613, %v1433
      %v1435 = vpop.f32.mrf.mxu0
      %v1436 = vpop.f32.mrf.mxu0
      %v1437 = vadd.f32 %v613, %v1436
      %v1438 = vpop.f32.mrf.mxu0
      %1439 = vmatprep.mubr.bf16.mxu0 0
      %1440 = vmatmul.mubr.bf16.gmra.mxu0 %v916
      %v1441 = vpop.f32.mrf.mxu0
      %v1442 = vadd.f32 %v613, %v1441
      %v1443 = vpop.f32.mrf.mxu0
      %v1444 = vpop.f32.mrf.mxu0
      %v1445 = vadd.f32 %v613, %v1444
      %v1446 = vpop.f32.mrf.mxu0
      %1447 = vmatprep.mubr.bf16.mxu0 0
      %1448 = vmatmul.mubr.bf16.gmra.mxu0 %v917
      %v1449 = vpop.f32.mrf.mxu0
      %v1450 = vadd.f32 %v613, %v1449
      %v1451 = vpop.f32.mrf.mxu0
      %v1452 = vpop.f32.mrf.mxu0
      %v1453 = vadd.f32 %v613, %v1452
      %v1454 = vpop.f32.mrf.mxu0
      %1455 = vmatprep.mubr.bf16.mxu0 0
      %1456 = vmatmul.mubr.bf16.gmra.mxu0 %v918
      %v1457 = vpop.f32.mrf.mxu0
      %v1458 = vadd.f32 %v613, %v1457
      %v1459 = vpop.f32.mrf.mxu0
      %v1460 = vpop.f32.mrf.mxu0
      %v1461 = vadd.f32 %v613, %v1460
      %v1462 = vpop.f32.mrf.mxu0
      %1463 = vmatprep.mubr.bf16.mxu0 0
      %1464 = vmatmul.mubr.bf16.gmra.mxu0 %v919
      %v1465 = vpop.f32.mrf.mxu0
      %v1466 = vadd.f32 %v613, %v1465
      %v1467 = vpop.f32.mrf.mxu0
      %v1468 = vpop.f32.mrf.mxu0
      %v1469 = vadd.f32 %v613, %v1468
      %v1470 = vpop.f32.mrf.mxu0
      %1471 = vmatprep.mubr.bf16.mxu0 0
      %1472 = vmatmul.mubr.bf16.gmra.mxu0 %v920
      %v1473 = vpop.f32.mrf.mxu0
      %v1474 = vadd.f32 %v613, %v1473
      %v1475 = vpop.f32.mrf.mxu0
      %v1476 = vpop.f32.mrf.mxu0
      %v1477 = vadd.f32 %v613, %v1476
      %v1478 = vpop.f32.mrf.mxu0
      %1479 = vmatprep.mubr.bf16.mxu0 0
      %1480 = vmatmul.mubr.bf16.gmra.mxu0 %v921
      %v1481 = vpop.f32.mrf.mxu0
      %v1482 = vadd.f32 %v613, %v1481
      %v1483 = vpop.f32.mrf.mxu0
      %v1484 = vpop.f32.mrf.mxu0
      %v1485 = vadd.f32 %v613, %v1484
      %v1486 = vpop.f32.mrf.mxu0
      %1487 = vmatprep.mubr.bf16.mxu0 0
      %1488 = vmatmul.mubr.bf16.gmra.mxu0 %v922
      %v1489 = vpop.f32.mrf.mxu0
      %v1490 = vadd.f32 %v613, %v1489
      %v1491 = vpop.f32.mrf.mxu0
      %v1492 = vpop.f32.mrf.mxu0
      %v1493 = vadd.f32 %v613, %v1492
      %v1494 = vpop.f32.mrf.mxu0
      %1495 = vmatprep.mubr.bf16.mxu0 0
      %1496 = vmatmul.mubr.bf16.gmra.mxu0 %v923
      %v1497 = vpop.f32.mrf.mxu0
      %v1498 = vadd.f32 %v613, %v1497
      %v1499 = vpop.f32.mrf.mxu0
      %v1500 = vpop.f32.mrf.mxu0
      %v1501 = vadd.f32 %v613, %v1500
      %v1502 = vpop.f32.mrf.mxu0
      %1503 = vmatprep.mubr.bf16.mxu0 0
      %1504 = vmatmul.mubr.bf16.gmra.mxu0 %v924
      %v1505 = vpop.f32.mrf.mxu0
      %v1506 = vadd.f32 %v613, %v1505
      %v1507 = vpop.f32.mrf.mxu0
      %v1508 = vpop.f32.mrf.mxu0
      %v1509 = vadd.f32 %v613, %v1508
      %v1510 = vpop.f32.mrf.mxu0
      %1511 = vmatprep.mubr.bf16.mxu0 0
      %1512 = vmatmul.mubr.bf16.gmra.mxu0 %v925
      %v1513 = vpop.f32.mrf.mxu0
      %v1514 = vadd.f32 %v613, %v1513
      %v1515 = vpop.f32.mrf.mxu0
      %v1516 = vpop.f32.mrf.mxu0
      %v1517 = vadd.f32 %v613, %v1516
      %v1518 = vpop.f32.mrf.mxu0
      %1519 = vmatprep.mubr.bf16.mxu0 0
      %1520 = vmatmul.mubr.bf16.gmra.mxu0 %v926
      %v1521 = vpop.f32.mrf.mxu0
      %v1522 = vadd.f32 %v613, %v1521
      %v1523 = vpop.f32.mrf.mxu0
      %v1524 = vpop.f32.mrf.mxu0
      %v1525 = vadd.f32 %v613, %v1524
      %v1526 = vpop.f32.mrf.mxu0
      %1527 = vmatprep.mubr.bf16.mxu0 0
      %1528 = vmatmul.mubr.bf16.gmra.mxu0 %v927
      %v1529 = vpop.f32.mrf.mxu0
      %v1530 = vadd.f32 %v613, %v1529
      %v1531 = vpop.f32.mrf.mxu0
      %v1532 = vpop.f32.mrf.mxu0
      %v1533 = vadd.f32 %v613, %v1532
      %v1534 = vpop.f32.mrf.mxu0
      %1535 = vmatprep.mubr.bf16.mxu0 0
      %1536 = vmatmul.mubr.bf16.gmra.mxu0 %v928
      %v1537 = vpop.f32.mrf.mxu0
      %v1538 = vadd.f32 %v613, %v1537
      %v1539 = vpop.f32.mrf.mxu0
      %v1540 = vpop.f32.mrf.mxu0
      %v1541 = vadd.f32 %v613, %v1540
      %v1542 = vpop.f32.mrf.mxu0
      %1543 = vmatprep.mubr.bf16.mxu0 0
      %1544 = vmatmul.mubr.bf16.gmra.mxu0 %v929
      %v1545 = vpop.f32.mrf.mxu0
      %v1546 = vadd.f32 %v613, %v1545
      %v1547 = vpop.f32.mrf.mxu0
      %v1548 = vpop.f32.mrf.mxu0
      %v1549 = vadd.f32 %v613, %v1548
      %v1550 = vpop.f32.mrf.mxu0
      %1551 = vmatprep.mubr.bf16.mxu0 0
      %1552 = vmatmul.mubr.bf16.gmra.mxu0 %v930
      %v1553 = vpop.f32.mrf.mxu0
      %v1554 = vadd.f32 %v613, %v1553
      %v1555 = vpop.f32.mrf.mxu0
      %v1556 = vpop.f32.mrf.mxu0
      %v1557 = vadd.f32 %v613, %v1556
      %v1558 = vpop.f32.mrf.mxu0
      %1559 = vmatprep.mubr.bf16.mxu0 0
      %1560 = vmatmul.mubr.bf16.gmra.mxu0 %v931
      %v1561 = vpop.f32.mrf.mxu0
      %v1562 = vadd.f32 %v613, %v1561
      %v1563 = vpop.f32.mrf.mxu0
      %v1564 = vpop.f32.mrf.mxu0
      %v1565 = vadd.f32 %v613, %v1564
      %v1566 = vpop.f32.mrf.mxu0
      %1567 = vmatprep.mubr.bf16.mxu0 0
      %1568 = vmatmul.mubr.bf16.gmra.mxu0 %v932
      %v1569 = vpop.f32.mrf.mxu0
      %v1570 = vadd.f32 %v613, %v1569
      %v1571 = vpop.f32.mrf.mxu0
      %v1572 = vpop.f32.mrf.mxu0
      %v1573 = vadd.f32 %v613, %v1572
      %v1574 = vpop.f32.mrf.mxu0
      %1575 = vmatprep.mubr.bf16.mxu0 0
      %1576 = vmatmul.mubr.bf16.gmra.mxu0 %v933
      %v1577 = vpop.f32.mrf.mxu0
      %v1578 = vadd.f32 %v613, %v1577
      %v1579 = vpop.f32.mrf.mxu0
      %v1580 = vpop.f32.mrf.mxu0
      %v1581 = vadd.f32 %v613, %v1580
      %v1582 = vpop.f32.mrf.mxu0
      %1583 = vmatprep.mubr.bf16.mxu0 0
      %1584 = vmatmul.mubr.bf16.gmra.mxu0 %v934
      %v1585 = vpop.f32.mrf.mxu0
      %v1586 = vadd.f32 %v613, %v1585
      %v1587 = vpop.f32.mrf.mxu0
      %v1588 = vpop.f32.mrf.mxu0
      %v1589 = vadd.f32 %v613, %v1588
      %v1590 = vpop.f32.mrf.mxu0
      %1591 = vdwg.mxu0
      %v1592 = vxor.u32 %v1082, 2147483648
      %v1593 = vxor.u32 %v1085, 2147483648
      %v1594 = vxor.u32 %v1090, 2147483648
      %v1595 = vxor.u32 %v1093, 2147483648
      %v1596 = vxor.u32 %v1098, 2147483648
      %v1597 = vxor.u32 %v1101, 2147483648
      %v1598 = vxor.u32 %v1106, 2147483648
      %v1599 = vxor.u32 %v1109, 2147483648
      %v1600 = vxor.u32 %v1114, 2147483648
      %v1601 = vxor.u32 %v1117, 2147483648
      %v1602 = vxor.u32 %v1122, 2147483648
      %v1603 = vxor.u32 %v1125, 2147483648
      %v1604 = vxor.u32 %v1130, 2147483648
      %v1605 = vxor.u32 %v1133, 2147483648
      %v1606 = vxor.u32 %v1138, 2147483648
      %v1607 = vxor.u32 %v1141, 2147483648
      %v1608 = vxor.u32 %v1146, 2147483648
      %v1609 = vxor.u32 %v1149, 2147483648
      %v1610 = vxor.u32 %v1154, 2147483648
      %v1611 = vxor.u32 %v1157, 2147483648
      %v1612 = vxor.u32 %v1162, 2147483648
      %v1613 = vxor.u32 %v1165, 2147483648
      %v1614 = vxor.u32 %v1170, 2147483648
      %v1615 = vxor.u32 %v1173, 2147483648
      %v1616 = vxor.u32 %v1178, 2147483648
      %v1617 = vxor.u32 %v1181, 2147483648
      %v1618 = vxor.u32 %v1186, 2147483648
      %v1619 = vxor.u32 %v1189, 2147483648
      %v1620 = vxor.u32 %v1194, 2147483648
      %v1621 = vxor.u32 %v1197, 2147483648
      %v1622 = vxor.u32 %v1202, 2147483648
      %v1623 = vxor.u32 %v1205, 2147483648
      %v1624 = vxor.u32 %v1210, 2147483648
      %v1625 = vxor.u32 %v1213, 2147483648
      %v1626 = vxor.u32 %v1218, 2147483648
      %v1627 = vxor.u32 %v1221, 2147483648
      %v1628 = vxor.u32 %v1226, 2147483648
      %v1629 = vxor.u32 %v1229, 2147483648
      %v1630 = vxor.u32 %v1234, 2147483648
      %v1631 = vxor.u32 %v1237, 2147483648
      %v1632 = vxor.u32 %v1242, 2147483648
      %v1633 = vxor.u32 %v1245, 2147483648
      %v1634 = vxor.u32 %v1250, 2147483648
      %v1635 = vxor.u32 %v1253, 2147483648
      %v1636 = vxor.u32 %v1258, 2147483648
      %v1637 = vxor.u32 %v1261, 2147483648
      %v1638 = vxor.u32 %v1266, 2147483648
      %v1639 = vxor.u32 %v1269, 2147483648
      %v1640 = vxor.u32 %v1274, 2147483648
      %v1641 = vxor.u32 %v1277, 2147483648
      %v1642 = vxor.u32 %v1282, 2147483648
      %v1643 = vxor.u32 %v1285, 2147483648
      %v1644 = vxor.u32 %v1290, 2147483648
      %v1645 = vxor.u32 %v1293, 2147483648
      %v1646 = vxor.u32 %v1298, 2147483648
      %v1647 = vxor.u32 %v1301, 2147483648
      %v1648 = vxor.u32 %v1306, 2147483648
      %v1649 = vxor.u32 %v1309, 2147483648
      %v1650 = vxor.u32 %v1314, 2147483648
      %v1651 = vxor.u32 %v1317, 2147483648
      %v1652 = vxor.u32 %v1322, 2147483648
      %v1653 = vxor.u32 %v1325, 2147483648
      %v1654 = vxor.u32 %v1330, 2147483648
      %v1655 = vxor.u32 %v1333, 2147483648
      %v1656 = vxor.u32 %v1338, 2147483648
      %v1657 = vxor.u32 %v1341, 2147483648
      %v1658 = vxor.u32 %v1346, 2147483648
      %v1659 = vxor.u32 %v1349, 2147483648
      %v1660 = vxor.u32 %v1354, 2147483648
      %v1661 = vxor.u32 %v1357, 2147483648
      %v1662 = vxor.u32 %v1362, 2147483648
      %v1663 = vxor.u32 %v1365, 2147483648
      %v1664 = vxor.u32 %v1370, 2147483648
      %v1665 = vxor.u32 %v1373, 2147483648
      %v1666 = vxor.u32 %v1378, 2147483648
      %v1667 = vxor.u32 %v1381, 2147483648
      %v1668 = vxor.u32 %v1386, 2147483648
      %v1669 = vxor.u32 %v1389, 2147483648
      %v1670 = vxor.u32 %v1394, 2147483648
      %v1671 = vxor.u32 %v1397, 2147483648
      %v1672 = vxor.u32 %v1402, 2147483648
      %v1673 = vxor.u32 %v1405, 2147483648
      %v1674 = vxor.u32 %v1410, 2147483648
      %v1675 = vxor.u32 %v1413, 2147483648
      %v1676 = vxor.u32 %v1418, 2147483648
      %v1677 = vxor.u32 %v1421, 2147483648
      %v1678 = vxor.u32 %v1426, 2147483648
      %v1679 = vxor.u32 %v1429, 2147483648
      %v1680 = vxor.u32 %v1434, 2147483648
      %v1681 = vxor.u32 %v1437, 2147483648
      %v1682 = vxor.u32 %v1442, 2147483648
      %v1683 = vxor.u32 %v1445, 2147483648
      %v1684 = vxor.u32 %v1450, 2147483648
      %v1685 = vxor.u32 %v1453, 2147483648
      %v1686 = vxor.u32 %v1458, 2147483648
      %v1687 = vxor.u32 %v1461, 2147483648
      %v1688 = vxor.u32 %v1466, 2147483648
      %v1689 = vxor.u32 %v1469, 2147483648
      %v1690 = vxor.u32 %v1474, 2147483648
      %v1691 = vxor.u32 %v1477, 2147483648
      %v1692 = vxor.u32 %v1482, 2147483648
      %v1693 = vxor.u32 %v1485, 2147483648
      %v1694 = vxor.u32 %v1490, 2147483648
      %v1695 = vxor.u32 %v1493, 2147483648
      %v1696 = vxor.u32 %v1498, 2147483648
      %v1697 = vxor.u32 %v1501, 2147483648
      %v1698 = vxor.u32 %v1506, 2147483648
      %v1699 = vxor.u32 %v1509, 2147483648
      %v1700 = vxor.u32 %v1514, 2147483648
      %v1701 = vxor.u32 %v1517, 2147483648
      %v1702 = vxor.u32 %v1522, 2147483648
      %v1703 = vxor.u32 %v1525, 2147483648
      %v1704 = vxor.u32 %v1530, 2147483648
      %v1705 = vxor.u32 %v1533, 2147483648
      %v1706 = vxor.u32 %v1538, 2147483648
      %v1707 = vxor.u32 %v1541, 2147483648
      %v1708 = vxor.u32 %v1546, 2147483648
      %v1709 = vxor.u32 %v1549, 2147483648
      %v1710 = vxor.u32 %v1554, 2147483648
      %v1711 = vxor.u32 %v1557, 2147483648
      %v1712 = vxor.u32 %v1562, 2147483648
      %v1713 = vxor.u32 %v1565, 2147483648
      %v1714 = vxor.u32 %v1570, 2147483648
      %v1715 = vxor.u32 %v1573, 2147483648
      %v1716 = vxor.u32 %v1578, 2147483648
      %v1717 = vxor.u32 %v1581, 2147483648
      %v1718 = vxor.u32 %v1586, 2147483648
      %v1719 = vxor.u32 %v1589, 2147483648
      %v1720 = vmul.f32 %v1592, 1.442695
      %v1721 = vpow.pop %v1720
      %v1722 = vmul.f32 %v1593, 1.442695
      %v1723 = vpow.pop %v1722
      %v1724 = vmul.f32 %v1594, 1.442695
      %v1725 = vpow.pop %v1724
      %v1726 = vmul.f32 %v1595, 1.442695
      %v1727 = vpow.pop %v1726
      %v1728 = vmul.f32 %v1596, 1.442695
      %v1729 = vpow.pop %v1728
      %v1730 = vmul.f32 %v1597, 1.442695
      %v1731 = vpow.pop %v1730
      %v1732 = vmul.f32 %v1598, 1.442695
      %v1733 = vpow.pop %v1732
      %v1734 = vmul.f32 %v1599, 1.442695
      %v1735 = vpow.pop %v1734
      %v1736 = vmul.f32 %v1600, 1.442695
      %v1737 = vpow.pop %v1736
      %v1738 = vmul.f32 %v1601, 1.442695
      %v1739 = vpow.pop %v1738
      %v1740 = vmul.f32 %v1602, 1.442695
      %v1741 = vpow.pop %v1740
      %v1742 = vmul.f32 %v1603, 1.442695
      %v1743 = vpow.pop %v1742
      %v1744 = vmul.f32 %v1604, 1.442695
      %v1745 = vpow.pop %v1744
      %v1746 = vmul.f32 %v1605, 1.442695
      %v1747 = vpow.pop %v1746
      %v1748 = vmul.f32 %v1606, 1.442695
      %v1749 = vpow.pop %v1748
      %v1750 = vmul.f32 %v1607, 1.442695
      %v1751 = vpow.pop %v1750
      %v1752 = vmul.f32 %v1608, 1.442695
      %v1753 = vpow.pop %v1752
      %v1754 = vmul.f32 %v1609, 1.442695
      %v1755 = vpow.pop %v1754
      %v1756 = vmul.f32 %v1610, 1.442695
      %v1757 = vpow.pop %v1756
      %v1758 = vmul.f32 %v1611, 1.442695
      %v1759 = vpow.pop %v1758
      %v1760 = vmul.f32 %v1612, 1.442695
      %v1761 = vpow.pop %v1760
      %v1762 = vmul.f32 %v1613, 1.442695
      %v1763 = vpow.pop %v1762
      %v1764 = vmul.f32 %v1614, 1.442695
      %v1765 = vpow.pop %v1764
      %v1766 = vmul.f32 %v1615, 1.442695
      %v1767 = vpow.pop %v1766
      %v1768 = vmul.f32 %v1616, 1.442695
      %v1769 = vpow.pop %v1768
      %v1770 = vmul.f32 %v1617, 1.442695
      %v1771 = vpow.pop %v1770
      %v1772 = vmul.f32 %v1618, 1.442695
      %v1773 = vpow.pop %v1772
      %v1774 = vmul.f32 %v1619, 1.442695
      %v1775 = vpow.pop %v1774
      %v1776 = vmul.f32 %v1620, 1.442695
      %v1777 = vpow.pop %v1776
      %v1778 = vmul.f32 %v1621, 1.442695
      %v1779 = vpow.pop %v1778
      %v1780 = vmul.f32 %v1622, 1.442695
      %v1781 = vpow.pop %v1780
      %v1782 = vmul.f32 %v1623, 1.442695
      %v1783 = vpow.pop %v1782
      %v1784 = vmul.f32 %v1624, 1.442695
      %v1785 = vpow.pop %v1784
      %v1786 = vmul.f32 %v1625, 1.442695
      %v1787 = vpow.pop %v1786
      %v1788 = vmul.f32 %v1626, 1.442695
      %v1789 = vpow.pop %v1788
      %v1790 = vmul.f32 %v1627, 1.442695
      %v1791 = vpow.pop %v1790
      %v1792 = vmul.f32 %v1628, 1.442695
      %v1793 = vpow.pop %v1792
      %v1794 = vmul.f32 %v1629, 1.442695
      %v1795 = vpow.pop %v1794
      %v1796 = vmul.f32 %v1630, 1.442695
      %v1797 = vpow.pop %v1796
      %v1798 = vmul.f32 %v1631, 1.442695
      %v1799 = vpow.pop %v1798
      %v1800 = vmul.f32 %v1632, 1.442695
      %v1801 = vpow.pop %v1800
      %v1802 = vmul.f32 %v1633, 1.442695
      %v1803 = vpow.pop %v1802
      %v1804 = vmul.f32 %v1634, 1.442695
      %v1805 = vpow.pop %v1804
      %v1806 = vmul.f32 %v1635, 1.442695
      %v1807 = vpow.pop %v1806
      %v1808 = vmul.f32 %v1636, 1.442695
      %v1809 = vpow.pop %v1808
      %v1810 = vmul.f32 %v1637, 1.442695
      %v1811 = vpow.pop %v1810
      %v1812 = vmul.f32 %v1638, 1.442695
      %v1813 = vpow.pop %v1812
      %v1814 = vmul.f32 %v1639, 1.442695
      %v1815 = vpow.pop %v1814
      %v1816 = vmul.f32 %v1640, 1.442695
      %v1817 = vpow.pop %v1816
      %v1818 = vmul.f32 %v1641, 1.442695
      %v1819 = vpow.pop %v1818
      %v1820 = vmul.f32 %v1642, 1.442695
      %v1821 = vpow.pop %v1820
      %v1822 = vmul.f32 %v1643, 1.442695
      %v1823 = vpow.pop %v1822
      %v1824 = vmul.f32 %v1644, 1.442695
      %v1825 = vpow.pop %v1824
      %v1826 = vmul.f32 %v1645, 1.442695
      %v1827 = vpow.pop %v1826
      %v1828 = vmul.f32 %v1646, 1.442695
      %v1829 = vpow.pop %v1828
      %v1830 = vmul.f32 %v1647, 1.442695
      %v1831 = vpow.pop %v1830
      %v1832 = vmul.f32 %v1648, 1.442695
      %v1833 = vpow.pop %v1832
      %v1834 = vmul.f32 %v1649, 1.442695
      %v1835 = vpow.pop %v1834
      %v1836 = vmul.f32 %v1650, 1.442695
      %v1837 = vpow.pop %v1836
      %v1838 = vmul.f32 %v1651, 1.442695
      %v1839 = vpow.pop %v1838
      %v1840 = vmul.f32 %v1652, 1.442695
      %v1841 = vpow.pop %v1840
      %v1842 = vmul.f32 %v1653, 1.442695
      %v1843 = vpow.pop %v1842
      %v1844 = vmul.f32 %v1654, 1.442695
      %v1845 = vpow.pop %v1844
      %v1846 = vmul.f32 %v1655, 1.442695
      %v1847 = vpow.pop %v1846
      %v1848 = vmul.f32 %v1656, 1.442695
      %v1849 = vpow.pop %v1848
      %v1850 = vmul.f32 %v1657, 1.442695
      %v1851 = vpow.pop %v1850
      %v1852 = vmul.f32 %v1658, 1.442695
      %v1853 = vpow.pop %v1852
      %v1854 = vmul.f32 %v1659, 1.442695
      %v1855 = vpow.pop %v1854
      %v1856 = vmul.f32 %v1660, 1.442695
      %v1857 = vpow.pop %v1856
      %v1858 = vmul.f32 %v1661, 1.442695
      %v1859 = vpow.pop %v1858
      %v1860 = vmul.f32 %v1662, 1.442695
      %v1861 = vpow.pop %v1860
      %v1862 = vmul.f32 %v1663, 1.442695
      %v1863 = vpow.pop %v1862
      %v1864 = vmul.f32 %v1664, 1.442695
      %v1865 = vpow.pop %v1864
      %v1866 = vmul.f32 %v1665, 1.442695
      %v1867 = vpow.pop %v1866
      %v1868 = vmul.f32 %v1666, 1.442695
      %v1869 = vpow.pop %v1868
      %v1870 = vmul.f32 %v1667, 1.442695
      %v1871 = vpow.pop %v1870
      %v1872 = vmul.f32 %v1668, 1.442695
      %v1873 = vpow.pop %v1872
      %v1874 = vmul.f32 %v1669, 1.442695
      %v1875 = vpow.pop %v1874
      %v1876 = vmul.f32 %v1670, 1.442695
      %v1877 = vpow.pop %v1876
      %v1878 = vmul.f32 %v1671, 1.442695
      %v1879 = vpow.pop %v1878
      %v1880 = vmul.f32 %v1672, 1.442695
      %v1881 = vpow.pop %v1880
      %v1882 = vmul.f32 %v1673, 1.442695
      %v1883 = vpow.pop %v1882
      %v1884 = vmul.f32 %v1674, 1.442695
      %v1885 = vpow.pop %v1884
      %v1886 = vmul.f32 %v1675, 1.442695
      %v1887 = vpow.pop %v1886
      %v1888 = vmul.f32 %v1676, 1.442695
      %v1889 = vpow.pop %v1888
      %v1890 = vmul.f32 %v1677, 1.442695
      %v1891 = vpow.pop %v1890
      %v1892 = vmul.f32 %v1678, 1.442695
      %v1893 = vpow.pop %v1892
      %v1894 = vmul.f32 %v1679, 1.442695
      %v1895 = vpow.pop %v1894
      %v1896 = vmul.f32 %v1680, 1.442695
      %v1897 = vpow.pop %v1896
      %v1898 = vmul.f32 %v1681, 1.442695
      %v1899 = vpow.pop %v1898
      %v1900 = vmul.f32 %v1682, 1.442695
      %v1901 = vpow.pop %v1900
      %v1902 = vmul.f32 %v1683, 1.442695
      %v1903 = vpow.pop %v1902
      %v1904 = vmul.f32 %v1684, 1.442695
      %v1905 = vpow.pop %v1904
      %v1906 = vmul.f32 %v1685, 1.442695
      %v1907 = vpow.pop %v1906
      %v1908 = vmul.f32 %v1686, 1.442695
      %v1909 = vpow.pop %v1908
      %v1910 = vmul.f32 %v1687, 1.442695
      %v1911 = vpow.pop %v1910
      %v1912 = vmul.f32 %v1688, 1.442695
      %v1913 = vpow.pop %v1912
      %v1914 = vmul.f32 %v1689, 1.442695
      %v1915 = vpow.pop %v1914
      %v1916 = vmul.f32 %v1690, 1.442695
      %v1917 = vpow.pop %v1916
      %v1918 = vmul.f32 %v1691, 1.442695
      %v1919 = vpow.pop %v1918
      %v1920 = vmul.f32 %v1692, 1.442695
      %v1921 = vpow.pop %v1920
      %v1922 = vmul.f32 %v1693, 1.442695
      %v1923 = vpow.pop %v1922
      %v1924 = vmul.f32 %v1694, 1.442695
      %v1925 = vpow.pop %v1924
      %v1926 = vmul.f32 %v1695, 1.442695
      %v1927 = vpow.pop %v1926
      %v1928 = vmul.f32 %v1696, 1.442695
      %v1929 = vpow.pop %v1928
      %v1930 = vmul.f32 %v1697, 1.442695
      %v1931 = vpow.pop %v1930
      %v1932 = vmul.f32 %v1698, 1.442695
      %v1933 = vpow.pop %v1932
      %v1934 = vmul.f32 %v1699, 1.442695
      %v1935 = vpow.pop %v1934
      %v1936 = vmul.f32 %v1700, 1.442695
      %v1937 = vpow.pop %v1936
      %v1938 = vmul.f32 %v1701, 1.442695
      %v1939 = vpow.pop %v1938
      %v1940 = vmul.f32 %v1702, 1.442695
      %v1941 = vpow.pop %v1940
      %v1942 = vmul.f32 %v1703, 1.442695
      %v1943 = vpow.pop %v1942
      %v1944 = vmul.f32 %v1704, 1.442695
      %v1945 = vpow.pop %v1944
      %v1946 = vmul.f32 %v1705, 1.442695
      %v1947 = vpow.pop %v1946
      %v1948 = vmul.f32 %v1706, 1.442695
      %v1949 = vpow.pop %v1948
      %v1950 = vmul.f32 %v1707, 1.442695
      %v1951 = vpow.pop %v1950
      %v1952 = vmul.f32 %v1708, 1.442695
      %v1953 = vpow.pop %v1952
      %v1954 = vmul.f32 %v1709, 1.442695
      %v1955 = vpow.pop %v1954
      %v1956 = vmul.f32 %v1710, 1.442695
      %v1957 = vpow.pop %v1956
      %v1958 = vmul.f32 %v1711, 1.442695
      %v1959 = vpow.pop %v1958
      %v1960 = vmul.f32 %v1712, 1.442695
      %v1961 = vpow.pop %v1960
      %v1962 = vmul.f32 %v1713, 1.442695
      %v1963 = vpow.pop %v1962
      %v1964 = vmul.f32 %v1714, 1.442695
      %v1965 = vpow.pop %v1964
      %v1966 = vmul.f32 %v1715, 1.442695
      %v1967 = vpow.pop %v1966
      %v1968 = vmul.f32 %v1716, 1.442695
      %v1969 = vpow.pop %v1968
      %v1970 = vmul.f32 %v1717, 1.442695
      %v1971 = vpow.pop %v1970
      %v1972 = vmul.f32 %v1718, 1.442695
      %v1973 = vpow.pop %v1972
      %v1974 = vmul.f32 %v1719, 1.442695
      %v1975 = vpow.pop %v1974
      %v1976 = vadd.f32 %v1721, 1.0
      %v1977 = vadd.f32 %v1723, 1.0
      %v1978 = vadd.f32 %v1725, 1.0
      %v1979 = vadd.f32 %v1727, 1.0
      %v1980 = vadd.f32 %v1729, 1.0
      %v1981 = vadd.f32 %v1731, 1.0
      %v1982 = vadd.f32 %v1733, 1.0
      %v1983 = vadd.f32 %v1735, 1.0
      %v1984 = vadd.f32 %v1737, 1.0
      %v1985 = vadd.f32 %v1739, 1.0
      %v1986 = vadd.f32 %v1741, 1.0
      %v1987 = vadd.f32 %v1743, 1.0
      %v1988 = vadd.f32 %v1745, 1.0
      %v1989 = vadd.f32 %v1747, 1.0
      %v1990 = vadd.f32 %v1749, 1.0
      %v1991 = vadd.f32 %v1751, 1.0
      %v1992 = vadd.f32 %v1753, 1.0
      %v1993 = vadd.f32 %v1755, 1.0
      %v1994 = vadd.f32 %v1757, 1.0
      %v1995 = vadd.f32 %v1759, 1.0
      %v1996 = vadd.f32 %v1761, 1.0
      %v1997 = vadd.f32 %v1763, 1.0
      %v1998 = vadd.f32 %v1765, 1.0
      %v1999 = vadd.f32 %v1767, 1.0
      %v2000 = vadd.f32 %v1769, 1.0
      %v2001 = vadd.f32 %v1771, 1.0
      %v2002 = vadd.f32 %v1773, 1.0
      %v2003 = vadd.f32 %v1775, 1.0
      %v2004 = vadd.f32 %v1777, 1.0
      %v2005 = vadd.f32 %v1779, 1.0
      %v2006 = vadd.f32 %v1781, 1.0
      %v2007 = vadd.f32 %v1783, 1.0
      %v2008 = vadd.f32 %v1785, 1.0
      %v2009 = vadd.f32 %v1787, 1.0
      %v2010 = vadd.f32 %v1789, 1.0
      %v2011 = vadd.f32 %v1791, 1.0
      %v2012 = vadd.f32 %v1793, 1.0
      %v2013 = vadd.f32 %v1795, 1.0
      %v2014 = vadd.f32 %v1797, 1.0
      %v2015 = vadd.f32 %v1799, 1.0
      %v2016 = vadd.f32 %v1801, 1.0
      %v2017 = vadd.f32 %v1803, 1.0
      %v2018 = vadd.f32 %v1805, 1.0
      %v2019 = vadd.f32 %v1807, 1.0
      %v2020 = vadd.f32 %v1809, 1.0
      %v2021 = vadd.f32 %v1811, 1.0
      %v2022 = vadd.f32 %v1813, 1.0
      %v2023 = vadd.f32 %v1815, 1.0
      %v2024 = vadd.f32 %v1817, 1.0
      %v2025 = vadd.f32 %v1819, 1.0
      %v2026 = vadd.f32 %v1821, 1.0
      %v2027 = vadd.f32 %v1823, 1.0
      %v2028 = vadd.f32 %v1825, 1.0
      %v2029 = vadd.f32 %v1827, 1.0
      %v2030 = vadd.f32 %v1829, 1.0
      %v2031 = vadd.f32 %v1831, 1.0
      %v2032 = vadd.f32 %v1833, 1.0
      %v2033 = vadd.f32 %v1835, 1.0
      %v2034 = vadd.f32 %v1837, 1.0
      %v2035 = vadd.f32 %v1839, 1.0
      %v2036 = vadd.f32 %v1841, 1.0
      %v2037 = vadd.f32 %v1843, 1.0
      %v2038 = vadd.f32 %v1845, 1.0
      %v2039 = vadd.f32 %v1847, 1.0
      %v2040 = vadd.f32 %v1849, 1.0
      %v2041 = vadd.f32 %v1851, 1.0
      %v2042 = vadd.f32 %v1853, 1.0
      %v2043 = vadd.f32 %v1855, 1.0
      %v2044 = vadd.f32 %v1857, 1.0
      %v2045 = vadd.f32 %v1859, 1.0
      %v2046 = vadd.f32 %v1861, 1.0
      %v2047 = vadd.f32 %v1863, 1.0
      %v2048 = vadd.f32 %v1865, 1.0
      %v2049 = vadd.f32 %v1867, 1.0
      %v2050 = vadd.f32 %v1869, 1.0
      %v2051 = vadd.f32 %v1871, 1.0
      %v2052 = vadd.f32 %v1873, 1.0
      %v2053 = vadd.f32 %v1875, 1.0
      %v2054 = vadd.f32 %v1877, 1.0
      %v2055 = vadd.f32 %v1879, 1.0
      %v2056 = vadd.f32 %v1881, 1.0
      %v2057 = vadd.f32 %v1883, 1.0
      %v2058 = vadd.f32 %v1885, 1.0
      %v2059 = vadd.f32 %v1887, 1.0
      %v2060 = vadd.f32 %v1889, 1.0
      %v2061 = vadd.f32 %v1891, 1.0
      %v2062 = vadd.f32 %v1893, 1.0
      %v2063 = vadd.f32 %v1895, 1.0
      %v2064 = vadd.f32 %v1897, 1.0
      %v2065 = vadd.f32 %v1899, 1.0
      %v2066 = vadd.f32 %v1901, 1.0
      %v2067 = vadd.f32 %v1903, 1.0
      %v2068 = vadd.f32 %v1905, 1.0
      %v2069 = vadd.f32 %v1907, 1.0
      %v2070 = vadd.f32 %v1909, 1.0
      %v2071 = vadd.f32 %v1911, 1.0
      %v2072 = vadd.f32 %v1913, 1.0
      %v2073 = vadd.f32 %v1915, 1.0
      %v2074 = vadd.f32 %v1917, 1.0
      %v2075 = vadd.f32 %v1919, 1.0
      %v2076 = vadd.f32 %v1921, 1.0
      %v2077 = vadd.f32 %v1923, 1.0
      %v2078 = vadd.f32 %v1925, 1.0
      %v2079 = vadd.f32 %v1927, 1.0
      %v2080 = vadd.f32 %v1929, 1.0
      %v2081 = vadd.f32 %v1931, 1.0
      %v2082 = vadd.f32 %v1933, 1.0
      %v2083 = vadd.f32 %v1935, 1.0
      %v2084 = vadd.f32 %v1937, 1.0
      %v2085 = vadd.f32 %v1939, 1.0
      %v2086 = vadd.f32 %v1941, 1.0
      %v2087 = vadd.f32 %v1943, 1.0
      %v2088 = vadd.f32 %v1945, 1.0
      %v2089 = vadd.f32 %v1947, 1.0
      %v2090 = vadd.f32 %v1949, 1.0
      %v2091 = vadd.f32 %v1951, 1.0
      %v2092 = vadd.f32 %v1953, 1.0
      %v2093 = vadd.f32 %v1955, 1.0
      %v2094 = vadd.f32 %v1957, 1.0
      %v2095 = vadd.f32 %v1959, 1.0
      %v2096 = vadd.f32 %v1961, 1.0
      %v2097 = vadd.f32 %v1963, 1.0
      %v2098 = vadd.f32 %v1965, 1.0
      %v2099 = vadd.f32 %v1967, 1.0
      %v2100 = vadd.f32 %v1969, 1.0
      %v2101 = vadd.f32 %v1971, 1.0
      %v2102 = vadd.f32 %v1973, 1.0
      %v2103 = vadd.f32 %v1975, 1.0
      %v2104 = vrcp.pop %v1976
      %v2105 = vmul.f32 1.0, %v2104
      %v2106 = vrcp.pop %v1977
      %v2107 = vmul.f32 1.0, %v2106
      %v2108 = vrcp.pop %v1978
      %v2109 = vmul.f32 1.0, %v2108
      %v2110 = vrcp.pop %v1979
      %v2111 = vmul.f32 1.0, %v2110
      %v2112 = vrcp.pop %v1980
      %v2113 = vmul.f32 1.0, %v2112
      %v2114 = vrcp.pop %v1981
      %v2115 = vmul.f32 1.0, %v2114
      %v2116 = vrcp.pop %v1982
      %v2117 = vmul.f32 1.0, %v2116
      %v2118 = vrcp.pop %v1983
      %v2119 = vmul.f32 1.0, %v2118
      %v2120 = vrcp.pop %v1984
      %v2121 = vmul.f32 1.0, %v2120
      %v2122 = vrcp.pop %v1985
      %v2123 = vmul.f32 1.0, %v2122
      %v2124 = vrcp.pop %v1986
      %v2125 = vmul.f32 1.0, %v2124
      %v2126 = vrcp.pop %v1987
      %v2127 = vmul.f32 1.0, %v2126
      %v2128 = vrcp.pop %v1988
      %v2129 = vmul.f32 1.0, %v2128
      %v2130 = vrcp.pop %v1989
      %v2131 = vmul.f32 1.0, %v2130
      %v2132 = vrcp.pop %v1990
      %v2133 = vmul.f32 1.0, %v2132
      %v2134 = vrcp.pop %v1991
      %v2135 = vmul.f32 1.0, %v2134
      %v2136 = vrcp.pop %v1992
      %v2137 = vmul.f32 1.0, %v2136
      %v2138 = vrcp.pop %v1993
      %v2139 = vmul.f32 1.0, %v2138
      %v2140 = vrcp.pop %v1994
      %v2141 = vmul.f32 1.0, %v2140
      %v2142 = vrcp.pop %v1995
      %v2143 = vmul.f32 1.0, %v2142
      %v2144 = vrcp.pop %v1996
      %v2145 = vmul.f32 1.0, %v2144
      %v2146 = vrcp.pop %v1997
      %v2147 = vmul.f32 1.0, %v2146
      %v2148 = vrcp.pop %v1998
      %v2149 = vmul.f32 1.0, %v2148
      %v2150 = vrcp.pop %v1999
      %v2151 = vmul.f32 1.0, %v2150
      %v2152 = vrcp.pop %v2000
      %v2153 = vmul.f32 1.0, %v2152
      %v2154 = vrcp.pop %v2001
      %v2155 = vmul.f32 1.0, %v2154
      %v2156 = vrcp.pop %v2002
      %v2157 = vmul.f32 1.0, %v2156
      %v2158 = vrcp.pop %v2003
      %v2159 = vmul.f32 1.0, %v2158
      %v2160 = vrcp.pop %v2004
      %v2161 = vmul.f32 1.0, %v2160
      %v2162 = vrcp.pop %v2005
      %v2163 = vmul.f32 1.0, %v2162
      %v2164 = vrcp.pop %v2006
      %v2165 = vmul.f32 1.0, %v2164
      %v2166 = vrcp.pop %v2007
      %v2167 = vmul.f32 1.0, %v2166
      %v2168 = vrcp.pop %v2008
      %v2169 = vmul.f32 1.0, %v2168
      %v2170 = vrcp.pop %v2009
      %v2171 = vmul.f32 1.0, %v2170
      %v2172 = vrcp.pop %v2010
      %v2173 = vmul.f32 1.0, %v2172
      %v2174 = vrcp.pop %v2011
      %v2175 = vmul.f32 1.0, %v2174
      %v2176 = vrcp.pop %v2012
      %v2177 = vmul.f32 1.0, %v2176
      %v2178 = vrcp.pop %v2013
      %v2179 = vmul.f32 1.0, %v2178
      %v2180 = vrcp.pop %v2014
      %v2181 = vmul.f32 1.0, %v2180
      %v2182 = vrcp.pop %v2015
      %v2183 = vmul.f32 1.0, %v2182
      %v2184 = vrcp.pop %v2016
      %v2185 = vmul.f32 1.0, %v2184
      %v2186 = vrcp.pop %v2017
      %v2187 = vmul.f32 1.0, %v2186
      %v2188 = vrcp.pop %v2018
      %v2189 = vmul.f32 1.0, %v2188
      %v2190 = vrcp.pop %v2019
      %v2191 = vmul.f32 1.0, %v2190
      %v2192 = vrcp.pop %v2020
      %v2193 = vmul.f32 1.0, %v2192
      %v2194 = vrcp.pop %v2021
      %v2195 = vmul.f32 1.0, %v2194
      %v2196 = vrcp.pop %v2022
      %v2197 = vmul.f32 1.0, %v2196
      %v2198 = vrcp.pop %v2023
      %v2199 = vmul.f32 1.0, %v2198
      %v2200 = vrcp.pop %v2024
      %v2201 = vmul.f32 1.0, %v2200
      %v2202 = vrcp.pop %v2025
      %v2203 = vmul.f32 1.0, %v2202
      %v2204 = vrcp.pop %v2026
      %v2205 = vmul.f32 1.0, %v2204
      %v2206 = vrcp.pop %v2027
      %v2207 = vmul.f32 1.0, %v2206
      %v2208 = vrcp.pop %v2028
      %v2209 = vmul.f32 1.0, %v2208
      %v2210 = vrcp.pop %v2029
      %v2211 = vmul.f32 1.0, %v2210
      %v2212 = vrcp.pop %v2030
      %v2213 = vmul.f32 1.0, %v2212
      %v2214 = vrcp.pop %v2031
      %v2215 = vmul.f32 1.0, %v2214
      %v2216 = vrcp.pop %v2032
      %v2217 = vmul.f32 1.0, %v2216
      %v2218 = vrcp.pop %v2033
      %v2219 = vmul.f32 1.0, %v2218
      %v2220 = vrcp.pop %v2034
      %v2221 = vmul.f32 1.0, %v2220
      %v2222 = vrcp.pop %v2035
      %v2223 = vmul.f32 1.0, %v2222
      %v2224 = vrcp.pop %v2036
      %v2225 = vmul.f32 1.0, %v2224
      %v2226 = vrcp.pop %v2037
      %v2227 = vmul.f32 1.0, %v2226
      %v2228 = vrcp.pop %v2038
      %v2229 = vmul.f32 1.0, %v2228
      %v2230 = vrcp.pop %v2039
      %v2231 = vmul.f32 1.0, %v2230
      %v2232 = vrcp.pop %v2040
      %v2233 = vmul.f32 1.0, %v2232
      %v2234 = vrcp.pop %v2041
      %v2235 = vmul.f32 1.0, %v2234
      %v2236 = vrcp.pop %v2042
      %v2237 = vmul.f32 1.0, %v2236
      %v2238 = vrcp.pop %v2043
      %v2239 = vmul.f32 1.0, %v2238
      %v2240 = vrcp.pop %v2044
      %v2241 = vmul.f32 1.0, %v2240
      %v2242 = vrcp.pop %v2045
      %v2243 = vmul.f32 1.0, %v2242
      %v2244 = vrcp.pop %v2046
      %v2245 = vmul.f32 1.0, %v2244
      %v2246 = vrcp.pop %v2047
      %v2247 = vmul.f32 1.0, %v2246
      %v2248 = vrcp.pop %v2048
      %v2249 = vmul.f32 1.0, %v2248
      %v2250 = vrcp.pop %v2049
      %v2251 = vmul.f32 1.0, %v2250
      %v2252 = vrcp.pop %v2050
      %v2253 = vmul.f32 1.0, %v2252
      %v2254 = vrcp.pop %v2051
      %v2255 = vmul.f32 1.0, %v2254
      %v2256 = vrcp.pop %v2052
      %v2257 = vmul.f32 1.0, %v2256
      %v2258 = vrcp.pop %v2053
      %v2259 = vmul.f32 1.0, %v2258
      %v2260 = vrcp.pop %v2054
      %v2261 = vmul.f32 1.0, %v2260
      %v2262 = vrcp.pop %v2055
      %v2263 = vmul.f32 1.0, %v2262
      %v2264 = vrcp.pop %v2056
      %v2265 = vmul.f32 1.0, %v2264
      %v2266 = vrcp.pop %v2057
      %v2267 = vmul.f32 1.0, %v2266
      %v2268 = vrcp.pop %v2058
      %v2269 = vmul.f32 1.0, %v2268
      %v2270 = vrcp.pop %v2059
      %v2271 = vmul.f32 1.0, %v2270
      %v2272 = vrcp.pop %v2060
      %v2273 = vmul.f32 1.0, %v2272
      %v2274 = vrcp.pop %v2061
      %v2275 = vmul.f32 1.0, %v2274
      %v2276 = vrcp.pop %v2062
      %v2277 = vmul.f32 1.0, %v2276
      %v2278 = vrcp.pop %v2063
      %v2279 = vmul.f32 1.0, %v2278
      %v2280 = vrcp.pop %v2064
      %v2281 = vmul.f32 1.0, %v2280
      %v2282 = vrcp.pop %v2065
      %v2283 = vmul.f32 1.0, %v2282
      %v2284 = vrcp.pop %v2066
      %v2285 = vmul.f32 1.0, %v2284
      %v2286 = vrcp.pop %v2067
      %v2287 = vmul.f32 1.0, %v2286
      %v2288 = vrcp.pop %v2068
      %v2289 = vmul.f32 1.0, %v2288
      %v2290 = vrcp.pop %v2069
      %v2291 = vmul.f32 1.0, %v2290
      %v2292 = vrcp.pop %v2070
      %v2293 = vmul.f32 1.0, %v2292
      %v2294 = vrcp.pop %v2071
      %v2295 = vmul.f32 1.0, %v2294
      %v2296 = vrcp.pop %v2072
      %v2297 = vmul.f32 1.0, %v2296
      %v2298 = vrcp.pop %v2073
      %v2299 = vmul.f32 1.0, %v2298
      %v2300 = vrcp.pop %v2074
      %v2301 = vmul.f32 1.0, %v2300
      %v2302 = vrcp.pop %v2075
      %v2303 = vmul.f32 1.0, %v2302
      %v2304 = vrcp.pop %v2076
      %v2305 = vmul.f32 1.0, %v2304
      %v2306 = vrcp.pop %v2077
      %v2307 = vmul.f32 1.0, %v2306
      %v2308 = vrcp.pop %v2078
      %v2309 = vmul.f32 1.0, %v2308
      %v2310 = vrcp.pop %v2079
      %v2311 = vmul.f32 1.0, %v2310
      %v2312 = vrcp.pop %v2080
      %v2313 = vmul.f32 1.0, %v2312
      %v2314 = vrcp.pop %v2081
      %v2315 = vmul.f32 1.0, %v2314
      %v2316 = vrcp.pop %v2082
      %v2317 = vmul.f32 1.0, %v2316
      %v2318 = vrcp.pop %v2083
      %v2319 = vmul.f32 1.0, %v2318
      %v2320 = vrcp.pop %v2084
      %v2321 = vmul.f32 1.0, %v2320
      %v2322 = vrcp.pop %v2085
      %v2323 = vmul.f32 1.0, %v2322
      %v2324 = vrcp.pop %v2086
      %v2325 = vmul.f32 1.0, %v2324
      %v2326 = vrcp.pop %v2087
      %v2327 = vmul.f32 1.0, %v2326
      %v2328 = vrcp.pop %v2088
      %v2329 = vmul.f32 1.0, %v2328
      %v2330 = vrcp.pop %v2089
      %v2331 = vmul.f32 1.0, %v2330
      %v2332 = vrcp.pop %v2090
      %v2333 = vmul.f32 1.0, %v2332
      %v2334 = vrcp.pop %v2091
      %v2335 = vmul.f32 1.0, %v2334
      %v2336 = vrcp.pop %v2092
      %v2337 = vmul.f32 1.0, %v2336
      %v2338 = vrcp.pop %v2093
      %v2339 = vmul.f32 1.0, %v2338
      %v2340 = vrcp.pop %v2094
      %v2341 = vmul.f32 1.0, %v2340
      %v2342 = vrcp.pop %v2095
      %v2343 = vmul.f32 1.0, %v2342
      %v2344 = vrcp.pop %v2096
      %v2345 = vmul.f32 1.0, %v2344
      %v2346 = vrcp.pop %v2097
      %v2347 = vmul.f32 1.0, %v2346
      %v2348 = vrcp.pop %v2098
      %v2349 = vmul.f32 1.0, %v2348
      %v2350 = vrcp.pop %v2099
      %v2351 = vmul.f32 1.0, %v2350
      %v2352 = vrcp.pop %v2100
      %v2353 = vmul.f32 1.0, %v2352
      %v2354 = vrcp.pop %v2101
      %v2355 = vmul.f32 1.0, %v2354
      %v2356 = vrcp.pop %v2102
      %v2357 = vmul.f32 1.0, %v2356
      %v2358 = vrcp.pop %v2103
      %v2359 = vmul.f32 1.0, %v2358
      %v2360 = vmul.f32 %v1082, %v2105
      %v2361 = vmul.f32 %v1085, %v2107
      %v2362 = vmul.f32 %v1090, %v2109
      %v2363 = vmul.f32 %v1093, %v2111
      %v2364 = vmul.f32 %v1098, %v2113
      %v2365 = vmul.f32 %v1101, %v2115
      %v2366 = vmul.f32 %v1106, %v2117
      %v2367 = vmul.f32 %v1109, %v2119
      %v2368 = vmul.f32 %v1114, %v2121
      %v2369 = vmul.f32 %v1117, %v2123
      %v2370 = vmul.f32 %v1122, %v2125
      %v2371 = vmul.f32 %v1125, %v2127
      %v2372 = vmul.f32 %v1130, %v2129
      %v2373 = vmul.f32 %v1133, %v2131
      %v2374 = vmul.f32 %v1138, %v2133
      %v2375 = vmul.f32 %v1141, %v2135
      %v2376 = vmul.f32 %v1146, %v2137
      %v2377 = vmul.f32 %v1149, %v2139
      %v2378 = vmul.f32 %v1154, %v2141
      %v2379 = vmul.f32 %v1157, %v2143
      %v2380 = vmul.f32 %v1162, %v2145
      %v2381 = vmul.f32 %v1165, %v2147
      %v2382 = vmul.f32 %v1170, %v2149
      %v2383 = vmul.f32 %v1173, %v2151
      %v2384 = vmul.f32 %v1178, %v2153
      %v2385 = vmul.f32 %v1181, %v2155
      %v2386 = vmul.f32 %v1186, %v2157
      %v2387 = vmul.f32 %v1189, %v2159
      %v2388 = vmul.f32 %v1194, %v2161
      %v2389 = vmul.f32 %v1197, %v2163
      %v2390 = vmul.f32 %v1202, %v2165
      %v2391 = vmul.f32 %v1205, %v2167
      %v2392 = vmul.f32 %v1210, %v2169
      %v2393 = vmul.f32 %v1213, %v2171
      %v2394 = vmul.f32 %v1218, %v2173
      %v2395 = vmul.f32 %v1221, %v2175
      %v2396 = vmul.f32 %v1226, %v2177
      %v2397 = vmul.f32 %v1229, %v2179
      %v2398 = vmul.f32 %v1234, %v2181
      %v2399 = vmul.f32 %v1237, %v2183
      %v2400 = vmul.f32 %v1242, %v2185
      %v2401 = vmul.f32 %v1245, %v2187
      %v2402 = vmul.f32 %v1250, %v2189
      %v2403 = vmul.f32 %v1253, %v2191
      %v2404 = vmul.f32 %v1258, %v2193
      %v2405 = vmul.f32 %v1261, %v2195
      %v2406 = vmul.f32 %v1266, %v2197
      %v2407 = vmul.f32 %v1269, %v2199
      %v2408 = vmul.f32 %v1274, %v2201
      %v2409 = vmul.f32 %v1277, %v2203
      %v2410 = vmul.f32 %v1282, %v2205
      %v2411 = vmul.f32 %v1285, %v2207
      %v2412 = vmul.f32 %v1290, %v2209
      %v2413 = vmul.f32 %v1293, %v2211
      %v2414 = vmul.f32 %v1298, %v2213
      %v2415 = vmul.f32 %v1301, %v2215
      %v2416 = vmul.f32 %v1306, %v2217
      %v2417 = vmul.f32 %v1309, %v2219
      %v2418 = vmul.f32 %v1314, %v2221
      %v2419 = vmul.f32 %v1317, %v2223
      %v2420 = vmul.f32 %v1322, %v2225
      %v2421 = vmul.f32 %v1325, %v2227
      %v2422 = vmul.f32 %v1330, %v2229
      %v2423 = vmul.f32 %v1333, %v2231
      %v2424 = vmul.f32 %v1338, %v2233
      %v2425 = vmul.f32 %v1341, %v2235
      %v2426 = vmul.f32 %v1346, %v2237
      %v2427 = vmul.f32 %v1349, %v2239
      %v2428 = vmul.f32 %v1354, %v2241
      %v2429 = vmul.f32 %v1357, %v2243
      %v2430 = vmul.f32 %v1362, %v2245
      %v2431 = vmul.f32 %v1365, %v2247
      %v2432 = vmul.f32 %v1370, %v2249
      %v2433 = vmul.f32 %v1373, %v2251
      %v2434 = vmul.f32 %v1378, %v2253
      %v2435 = vmul.f32 %v1381, %v2255
      %v2436 = vmul.f32 %v1386, %v2257
      %v2437 = vmul.f32 %v1389, %v2259
      %v2438 = vmul.f32 %v1394, %v2261
      %v2439 = vmul.f32 %v1397, %v2263
      %v2440 = vmul.f32 %v1402, %v2265
      %v2441 = vmul.f32 %v1405, %v2267
      %v2442 = vmul.f32 %v1410, %v2269
      %v2443 = vmul.f32 %v1413, %v2271
      %v2444 = vmul.f32 %v1418, %v2273
      %v2445 = vmul.f32 %v1421, %v2275
      %v2446 = vmul.f32 %v1426, %v2277
      %v2447 = vmul.f32 %v1429, %v2279
      %v2448 = vmul.f32 %v1434, %v2281
      %v2449 = vmul.f32 %v1437, %v2283
      %v2450 = vmul.f32 %v1442, %v2285
      %v2451 = vmul.f32 %v1445, %v2287
      %v2452 = vmul.f32 %v1450, %v2289
      %v2453 = vmul.f32 %v1453, %v2291
      %v2454 = vmul.f32 %v1458, %v2293
      %v2455 = vmul.f32 %v1461, %v2295
      %v2456 = vmul.f32 %v1466, %v2297
      %v2457 = vmul.f32 %v1469, %v2299
      %v2458 = vmul.f32 %v1474, %v2301
      %v2459 = vmul.f32 %v1477, %v2303
      %v2460 = vmul.f32 %v1482, %v2305
      %v2461 = vmul.f32 %v1485, %v2307
      %v2462 = vmul.f32 %v1490, %v2309
      %v2463 = vmul.f32 %v1493, %v2311
      %v2464 = vmul.f32 %v1498, %v2313
      %v2465 = vmul.f32 %v1501, %v2315
      %v2466 = vmul.f32 %v1506, %v2317
      %v2467 = vmul.f32 %v1509, %v2319
      %v2468 = vmul.f32 %v1514, %v2321
      %v2469 = vmul.f32 %v1517, %v2323
      %v2470 = vmul.f32 %v1522, %v2325
      %v2471 = vmul.f32 %v1525, %v2327
      %v2472 = vmul.f32 %v1530, %v2329
      %v2473 = vmul.f32 %v1533, %v2331
      %v2474 = vmul.f32 %v1538, %v2333
      %v2475 = vmul.f32 %v1541, %v2335
      %v2476 = vmul.f32 %v1546, %v2337
      %v2477 = vmul.f32 %v1549, %v2339
      %v2478 = vmul.f32 %v1554, %v2341
      %v2479 = vmul.f32 %v1557, %v2343
      %v2480 = vmul.f32 %v1562, %v2345
      %v2481 = vmul.f32 %v1565, %v2347
      %v2482 = vmul.f32 %v1570, %v2349
      %v2483 = vmul.f32 %v1573, %v2351
      %v2484 = vmul.f32 %v1578, %v2353
      %v2485 = vmul.f32 %v1581, %v2355
      %v2486 = vmul.f32 %v1586, %v2357
      %v2487 = vmul.f32 %v1589, %v2359
      %v2488 = vpack.c.bf16 %v2361, %v2360
      %v2489 = vpack.c.bf16 %v2363, %v2362
      %v2490 = vpack.c.bf16 %v2365, %v2364
      %v2491 = vpack.c.bf16 %v2367, %v2366
      %v2492 = vpack.c.bf16 %v2369, %v2368
      %v2493 = vpack.c.bf16 %v2371, %v2370
      %v2494 = vpack.c.bf16 %v2373, %v2372
      %v2495 = vpack.c.bf16 %v2375, %v2374
      %v2496 = vpack.c.bf16 %v2377, %v2376
      %v2497 = vpack.c.bf16 %v2379, %v2378
      %v2498 = vpack.c.bf16 %v2381, %v2380
      %v2499 = vpack.c.bf16 %v2383, %v2382
      %v2500 = vpack.c.bf16 %v2385, %v2384
      %v2501 = vpack.c.bf16 %v2387, %v2386
      %v2502 = vpack.c.bf16 %v2389, %v2388
      %v2503 = vpack.c.bf16 %v2391, %v2390
      %v2504 = vpack.c.bf16 %v2393, %v2392
      %v2505 = vpack.c.bf16 %v2395, %v2394
      %v2506 = vpack.c.bf16 %v2397, %v2396
      %v2507 = vpack.c.bf16 %v2399, %v2398
      %v2508 = vpack.c.bf16 %v2401, %v2400
      %v2509 = vpack.c.bf16 %v2403, %v2402
      %v2510 = vpack.c.bf16 %v2405, %v2404
      %v2511 = vpack.c.bf16 %v2407, %v2406
      %v2512 = vpack.c.bf16 %v2409, %v2408
      %v2513 = vpack.c.bf16 %v2411, %v2410
      %v2514 = vpack.c.bf16 %v2413, %v2412
      %v2515 = vpack.c.bf16 %v2415, %v2414
      %v2516 = vpack.c.bf16 %v2417, %v2416
      %v2517 = vpack.c.bf16 %v2419, %v2418
      %v2518 = vpack.c.bf16 %v2421, %v2420
      %v2519 = vpack.c.bf16 %v2423, %v2422
      %v2520 = vpack.c.bf16 %v2425, %v2424
      %v2521 = vpack.c.bf16 %v2427, %v2426
      %v2522 = vpack.c.bf16 %v2429, %v2428
      %v2523 = vpack.c.bf16 %v2431, %v2430
      %v2524 = vpack.c.bf16 %v2433, %v2432
      %v2525 = vpack.c.bf16 %v2435, %v2434
      %v2526 = vpack.c.bf16 %v2437, %v2436
      %v2527 = vpack.c.bf16 %v2439, %v2438
      %v2528 = vpack.c.bf16 %v2441, %v2440
      %v2529 = vpack.c.bf16 %v2443, %v2442
      %v2530 = vpack.c.bf16 %v2445, %v2444
      %v2531 = vpack.c.bf16 %v2447, %v2446
      %v2532 = vpack.c.bf16 %v2449, %v2448
      %v2533 = vpack.c.bf16 %v2451, %v2450
      %v2534 = vpack.c.bf16 %v2453, %v2452
      %v2535 = vpack.c.bf16 %v2455, %v2454
      %v2536 = vpack.c.bf16 %v2457, %v2456
      %v2537 = vpack.c.bf16 %v2459, %v2458
      %v2538 = vpack.c.bf16 %v2461, %v2460
      %v2539 = vpack.c.bf16 %v2463, %v2462
      %v2540 = vpack.c.bf16 %v2465, %v2464
      %v2541 = vpack.c.bf16 %v2467, %v2466
      %v2542 = vpack.c.bf16 %v2469, %v2468
      %v2543 = vpack.c.bf16 %v2471, %v2470
      %v2544 = vpack.c.bf16 %v2473, %v2472
      %v2545 = vpack.c.bf16 %v2475, %v2474
      %v2546 = vpack.c.bf16 %v2477, %v2476
      %v2547 = vpack.c.bf16 %v2479, %v2478
      %v2548 = vpack.c.bf16 %v2481, %v2480
      %v2549 = vpack.c.bf16 %v2483, %v2482
      %v2550 = vpack.c.bf16 %v2485, %v2484
      %v2551 = vpack.c.bf16 %v2487, %v2486
      %v2552 = vld [vmem:[%s4] sm:$0xf]
      %v2553 = vld [vmem:[%s4 + $0x4] sm:$0xf]
      %v2554 = vld [vmem:[%s4 + $0x8] sm:$0xf]
      %v2555 = vld [vmem:[%s4 + $0xc] sm:$0xf]
      %v2556 = vld [vmem:[%s4 + $0x10] sm:$0xf]
      %v2557 = vld [vmem:[%s4 + $0x14] sm:$0xf]
      %v2558 = vld [vmem:[%s4 + $0x18] sm:$0xf]
      %v2559 = vld [vmem:[%s4 + $0x1c] sm:$0xf]
      %v2560 = vld [vmem:[%s4 + $0x20] sm:$0xf]
      %v2561 = vld [vmem:[%s4 + $0x24] sm:$0xf]
      %v2562 = vld [vmem:[%s4 + $0x28] sm:$0xf]
      %v2563 = vld [vmem:[%s4 + $0x2c] sm:$0xf]
      %v2564 = vld [vmem:[%s4 + $0x30] sm:$0xf]
      %v2565 = vld [vmem:[%s4 + $0x34] sm:$0xf]
      %v2566 = vld [vmem:[%s4 + $0x38] sm:$0xf]
      %v2567 = vld [vmem:[%s4 + $0x3c] sm:$0xf]
      %v2568 = vld [vmem:[%s5] sm:$0x1]
      %v2570 = vlaneseq
      %v2571 = vshrl.u32 %v2570, 7
      %v2572 = vsub.s32 0, %v2571
      %v2573 = vrot.slane %v2568, %v2572
      %v2591 = vunpack.c.l.b16 %v2552
      %v2592 = vunpack.c.l.b16 %v2553
      %v2593 = vunpack.c.l.b16 %v2554
      %v2594 = vunpack.c.l.b16 %v2555
      %v2595 = vunpack.c.l.b16 %v2556
      %v2596 = vunpack.c.l.b16 %v2557
      %v2597 = vunpack.c.l.b16 %v2558
      %v2598 = vunpack.c.l.b16 %v2559
      %v2599 = vunpack.c.l.b16 %v2560
      %v2600 = vunpack.c.l.b16 %v2561
      %v2601 = vunpack.c.l.b16 %v2562
      %v2602 = vunpack.c.l.b16 %v2563
      %v2603 = vunpack.c.l.b16 %v2564
      %v2604 = vunpack.c.l.b16 %v2565
      %v2605 = vunpack.c.l.b16 %v2566
      %v2606 = vunpack.c.l.b16 %v2567
      %v2607 = vpack.c.b16 %v2592, %v2591
      %v2608 = vpack.c.b16 %v2594, %v2593
      %v2609 = vpack.c.b16 %v2596, %v2595
      %v2610 = vpack.c.b16 %v2598, %v2597
      %v2611 = vpack.c.b16 %v2600, %v2599
      %v2612 = vpack.c.b16 %v2602, %v2601
      %v2613 = vpack.c.b16 %v2604, %v2603
      %v2614 = vpack.c.b16 %v2606, %v2605
      %2623 = vmatprep.subr.bf16.mxu0 0
      %2624 = vmatpush1.bf16.msra.mxu0 %v2614
      %2625 = vmatprep.subr.bf16.mxu0 0
      %2626 = vmatpush1.bf16.msra.mxu0 %v2613
      %2627 = vmatprep.subr.bf16.mxu0 0
      %2628 = vmatpush1.bf16.msra.mxu0 %v2612
      %2629 = vmatprep.subr.bf16.mxu0 0
      %2630 = vmatpush1.bf16.msra.mxu0 %v2611
      %2631 = vmatprep.subr.bf16.mxu0 0
      %2632 = vmatpush1.bf16.msra.mxu0 %v2610
      %2633 = vmatprep.subr.bf16.mxu0 0
      %2634 = vmatpush1.bf16.msra.mxu0 %v2609
      %2635 = vmatprep.subr.bf16.mxu0 0
      %2636 = vmatpush1.bf16.msra.mxu0 %v2608
      %2637 = vmatprep.subr.bf16.mxu0 0
      %2638 = vmatpush1.bf16.msra.mxu0 %v2607
      %2639 = vmatprep.subr.bf16.mxu0 0
      %2640 = vmatpush2.bf16.msra.mxu0 0
      %2641 = vmatprep.subr.bf16.mxu0 0
      %2642 = vmatpush2.bf16.msra.mxu0 0
      %2643 = vmatprep.subr.bf16.mxu0 0
      %2644 = vmatpush2.bf16.msra.mxu0 0
      %2645 = vmatprep.subr.bf16.mxu0 0
      %2646 = vmatpush2.bf16.msra.mxu0 0
      %2647 = vmatprep.subr.bf16.mxu0 0
      %2648 = vmatpush2.bf16.msra.mxu0 0
      %2649 = vmatprep.subr.bf16.mxu0 0
      %2650 = vmatpush2.bf16.msra.mxu0 0
      %2651 = vmatprep.subr.bf16.mxu0 0
      %2652 = vmatpush2.bf16.msra.mxu0 0
      %2653 = vmatprep.subr.bf16.mxu0 0
      %2654 = vmatpush2.bf16.msra.mxu0 0
      %2655 = vmatprep.mubr.bf16.mxu0 0
      %2656 = vmatmul.mubr.bf16.gmra.mxu0 %v2488
      %v2657 = vpop.f32.mrf.mxu0
      %v2658 = vadd.f32 %v2573, %v2657
      %v2659 = vpop.f32.mrf.mxu0
      %v2660 = vpop.f32.mrf.mxu0
      %v2661 = vadd.f32 %v2573, %v2660
      %v2662 = vpop.f32.mrf.mxu0
      %2663 = vmatprep.mubr.bf16.mxu0 0
      %2664 = vmatmul.mubr.bf16.gmra.mxu0 %v2489
      %v2665 = vpop.f32.mrf.mxu0
      %v2666 = vadd.f32 %v2573, %v2665
      %v2667 = vpop.f32.mrf.mxu0
      %v2668 = vpop.f32.mrf.mxu0
      %v2669 = vadd.f32 %v2573, %v2668
      %v2670 = vpop.f32.mrf.mxu0
      %2671 = vmatprep.mubr.bf16.mxu0 0
      %2672 = vmatmul.mubr.bf16.gmra.mxu0 %v2490
      %v2673 = vpop.f32.mrf.mxu0
      %v2674 = vadd.f32 %v2573, %v2673
      %v2675 = vpop.f32.mrf.mxu0
      %v2676 = vpop.f32.mrf.mxu0
      %v2677 = vadd.f32 %v2573, %v2676
      %v2678 = vpop.f32.mrf.mxu0
      %2679 = vmatprep.mubr.bf16.mxu0 0
      %2680 = vmatmul.mubr.bf16.gmra.mxu0 %v2491
      %v2681 = vpop.f32.mrf.mxu0
      %v2682 = vadd.f32 %v2573, %v2681
      %v2683 = vpop.f32.mrf.mxu0
      %v2684 = vpop.f32.mrf.mxu0
      %v2685 = vadd.f32 %v2573, %v2684
      %v2686 = vpop.f32.mrf.mxu0
      %2687 = vmatprep.mubr.bf16.mxu0 0
      %2688 = vmatmul.mubr.bf16.gmra.mxu0 %v2492
      %v2689 = vpop.f32.mrf.mxu0
      %v2690 = vadd.f32 %v2573, %v2689
      %v2691 = vpop.f32.mrf.mxu0
      %v2692 = vpop.f32.mrf.mxu0
      %v2693 = vadd.f32 %v2573, %v2692
      %v2694 = vpop.f32.mrf.mxu0
      %2695 = vmatprep.mubr.bf16.mxu0 0
      %2696 = vmatmul.mubr.bf16.gmra.mxu0 %v2493
      %v2697 = vpop.f32.mrf.mxu0
      %v2698 = vadd.f32 %v2573, %v2697
      %v2699 = vpop.f32.mrf.mxu0
      %v2700 = vpop.f32.mrf.mxu0
      %v2701 = vadd.f32 %v2573, %v2700
      %v2702 = vpop.f32.mrf.mxu0
      %2703 = vmatprep.mubr.bf16.mxu0 0
      %2704 = vmatmul.mubr.bf16.gmra.mxu0 %v2494
      %v2705 = vpop.f32.mrf.mxu0
      %v2706 = vadd.f32 %v2573, %v2705
      %v2707 = vpop.f32.mrf.mxu0
      %v2708 = vpop.f32.mrf.mxu0
      %v2709 = vadd.f32 %v2573, %v2708
      %v2710 = vpop.f32.mrf.mxu0
      %2711 = vmatprep.mubr.bf16.mxu0 0
      %2712 = vmatmul.mubr.bf16.gmra.mxu0 %v2495
      %v2713 = vpop.f32.mrf.mxu0
      %v2714 = vadd.f32 %v2573, %v2713
      %v2715 = vpop.f32.mrf.mxu0
      %v2716 = vpop.f32.mrf.mxu0
      %v2717 = vadd.f32 %v2573, %v2716
      %v2718 = vpop.f32.mrf.mxu0
      %2719 = vmatprep.mubr.bf16.mxu0 0
      %2720 = vmatmul.mubr.bf16.gmra.mxu0 %v2496
      %v2721 = vpop.f32.mrf.mxu0
      %v2722 = vadd.f32 %v2573, %v2721
      %v2723 = vpop.f32.mrf.mxu0
      %v2724 = vpop.f32.mrf.mxu0
      %v2725 = vadd.f32 %v2573, %v2724
      %v2726 = vpop.f32.mrf.mxu0
      %2727 = vmatprep.mubr.bf16.mxu0 0
      %2728 = vmatmul.mubr.bf16.gmra.mxu0 %v2497
      %v2729 = vpop.f32.mrf.mxu0
      %v2730 = vadd.f32 %v2573, %v2729
      %v2731 = vpop.f32.mrf.mxu0
      %v2732 = vpop.f32.mrf.mxu0
      %v2733 = vadd.f32 %v2573, %v2732
      %v2734 = vpop.f32.mrf.mxu0
      %2735 = vmatprep.mubr.bf16.mxu0 0
      %2736 = vmatmul.mubr.bf16.gmra.mxu0 %v2498
      %v2737 = vpop.f32.mrf.mxu0
      %v2738 = vadd.f32 %v2573, %v2737
      %v2739 = vpop.f32.mrf.mxu0
      %v2740 = vpop.f32.mrf.mxu0
      %v2741 = vadd.f32 %v2573, %v2740
      %v2742 = vpop.f32.mrf.mxu0
      %2743 = vmatprep.mubr.bf16.mxu0 0
      %2744 = vmatmul.mubr.bf16.gmra.mxu0 %v2499
      %v2745 = vpop.f32.mrf.mxu0
      %v2746 = vadd.f32 %v2573, %v2745
      %v2747 = vpop.f32.mrf.mxu0
      %v2748 = vpop.f32.mrf.mxu0
      %v2749 = vadd.f32 %v2573, %v2748
      %v2750 = vpop.f32.mrf.mxu0
      %2751 = vmatprep.mubr.bf16.mxu0 0
      %2752 = vmatmul.mubr.bf16.gmra.mxu0 %v2500
      %v2753 = vpop.f32.mrf.mxu0
      %v2754 = vadd.f32 %v2573, %v2753
      %v2755 = vpop.f32.mrf.mxu0
      %v2756 = vpop.f32.mrf.mxu0
      %v2757 = vadd.f32 %v2573, %v2756
      %v2758 = vpop.f32.mrf.mxu0
      %2759 = vmatprep.mubr.bf16.mxu0 0
      %2760 = vmatmul.mubr.bf16.gmra.mxu0 %v2501
      %v2761 = vpop.f32.mrf.mxu0
      %v2762 = vadd.f32 %v2573, %v2761
      %v2763 = vpop.f32.mrf.mxu0
      %v2764 = vpop.f32.mrf.mxu0
      %v2765 = vadd.f32 %v2573, %v2764
      %v2766 = vpop.f32.mrf.mxu0
      %2767 = vmatprep.mubr.bf16.mxu0 0
      %2768 = vmatmul.mubr.bf16.gmra.mxu0 %v2502
      %v2769 = vpop.f32.mrf.mxu0
      %v2770 = vadd.f32 %v2573, %v2769
      %v2771 = vpop.f32.mrf.mxu0
      %v2772 = vpop.f32.mrf.mxu0
      %v2773 = vadd.f32 %v2573, %v2772
      %v2774 = vpop.f32.mrf.mxu0
      %2775 = vmatprep.mubr.bf16.mxu0 0
      %2776 = vmatmul.mubr.bf16.gmra.mxu0 %v2503
      %v2777 = vpop.f32.mrf.mxu0
      %v2778 = vadd.f32 %v2573, %v2777
      %v2779 = vpop.f32.mrf.mxu0
      %v2780 = vpop.f32.mrf.mxu0
      %v2781 = vadd.f32 %v2573, %v2780
      %v2782 = vpop.f32.mrf.mxu0
      %2783 = vmatprep.mubr.bf16.mxu0 0
      %2784 = vmatmul.mubr.bf16.gmra.mxu0 %v2504
      %v2785 = vpop.f32.mrf.mxu0
      %v2786 = vadd.f32 %v2573, %v2785
      %v2787 = vpop.f32.mrf.mxu0
      %v2788 = vpop.f32.mrf.mxu0
      %v2789 = vadd.f32 %v2573, %v2788
      %v2790 = vpop.f32.mrf.mxu0
      %2791 = vmatprep.mubr.bf16.mxu0 0
      %2792 = vmatmul.mubr.bf16.gmra.mxu0 %v2505
      %v2793 = vpop.f32.mrf.mxu0
      %v2794 = vadd.f32 %v2573, %v2793
      %v2795 = vpop.f32.mrf.mxu0
      %v2796 = vpop.f32.mrf.mxu0
      %v2797 = vadd.f32 %v2573, %v2796
      %v2798 = vpop.f32.mrf.mxu0
      %2799 = vmatprep.mubr.bf16.mxu0 0
      %2800 = vmatmul.mubr.bf16.gmra.mxu0 %v2506
      %v2801 = vpop.f32.mrf.mxu0
      %v2802 = vadd.f32 %v2573, %v2801
      %v2803 = vpop.f32.mrf.mxu0
      %v2804 = vpop.f32.mrf.mxu0
      %v2805 = vadd.f32 %v2573, %v2804
      %v2806 = vpop.f32.mrf.mxu0
      %2807 = vmatprep.mubr.bf16.mxu0 0
      %2808 = vmatmul.mubr.bf16.gmra.mxu0 %v2507
      %v2809 = vpop.f32.mrf.mxu0
      %v2810 = vadd.f32 %v2573, %v2809
      %v2811 = vpop.f32.mrf.mxu0
      %v2812 = vpop.f32.mrf.mxu0
      %v2813 = vadd.f32 %v2573, %v2812
      %v2814 = vpop.f32.mrf.mxu0
      %2815 = vmatprep.mubr.bf16.mxu0 0
      %2816 = vmatmul.mubr.bf16.gmra.mxu0 %v2508
      %v2817 = vpop.f32.mrf.mxu0
      %v2818 = vadd.f32 %v2573, %v2817
      %v2819 = vpop.f32.mrf.mxu0
      %v2820 = vpop.f32.mrf.mxu0
      %v2821 = vadd.f32 %v2573, %v2820
      %v2822 = vpop.f32.mrf.mxu0
      %2823 = vmatprep.mubr.bf16.mxu0 0
      %2824 = vmatmul.mubr.bf16.gmra.mxu0 %v2509
      %v2825 = vpop.f32.mrf.mxu0
      %v2826 = vadd.f32 %v2573, %v2825
      %v2827 = vpop.f32.mrf.mxu0
      %v2828 = vpop.f32.mrf.mxu0
      %v2829 = vadd.f32 %v2573, %v2828
      %v2830 = vpop.f32.mrf.mxu0
      %2831 = vmatprep.mubr.bf16.mxu0 0
      %2832 = vmatmul.mubr.bf16.gmra.mxu0 %v2510
      %v2833 = vpop.f32.mrf.mxu0
      %v2834 = vadd.f32 %v2573, %v2833
      %v2835 = vpop.f32.mrf.mxu0
      %v2836 = vpop.f32.mrf.mxu0
      %v2837 = vadd.f32 %v2573, %v2836
      %v2838 = vpop.f32.mrf.mxu0
      %2839 = vmatprep.mubr.bf16.mxu0 0
      %2840 = vmatmul.mubr.bf16.gmra.mxu0 %v2511
      %v2841 = vpop.f32.mrf.mxu0
      %v2842 = vadd.f32 %v2573, %v2841
      %v2843 = vpop.f32.mrf.mxu0
      %v2844 = vpop.f32.mrf.mxu0
      %v2845 = vadd.f32 %v2573, %v2844
      %v2846 = vpop.f32.mrf.mxu0
      %2847 = vmatprep.mubr.bf16.mxu0 0
      %2848 = vmatmul.mubr.bf16.gmra.mxu0 %v2512
      %v2849 = vpop.f32.mrf.mxu0
      %v2850 = vadd.f32 %v2573, %v2849
      %v2851 = vpop.f32.mrf.mxu0
      %v2852 = vpop.f32.mrf.mxu0
      %v2853 = vadd.f32 %v2573, %v2852
      %v2854 = vpop.f32.mrf.mxu0
      %2855 = vmatprep.mubr.bf16.mxu0 0
      %2856 = vmatmul.mubr.bf16.gmra.mxu0 %v2513
      %v2857 = vpop.f32.mrf.mxu0
      %v2858 = vadd.f32 %v2573, %v2857
      %v2859 = vpop.f32.mrf.mxu0
      %v2860 = vpop.f32.mrf.mxu0
      %v2861 = vadd.f32 %v2573, %v2860
      %v2862 = vpop.f32.mrf.mxu0
      %2863 = vmatprep.mubr.bf16.mxu0 0
      %2864 = vmatmul.mubr.bf16.gmra.mxu0 %v2514
      %v2865 = vpop.f32.mrf.mxu0
      %v2866 = vadd.f32 %v2573, %v2865
      %v2867 = vpop.f32.mrf.mxu0
      %v2868 = vpop.f32.mrf.mxu0
      %v2869 = vadd.f32 %v2573, %v2868
      %v2870 = vpop.f32.mrf.mxu0
      %2871 = vmatprep.mubr.bf16.mxu0 0
      %2872 = vmatmul.mubr.bf16.gmra.mxu0 %v2515
      %v2873 = vpop.f32.mrf.mxu0
      %v2874 = vadd.f32 %v2573, %v2873
      %v2875 = vpop.f32.mrf.mxu0
      %v2876 = vpop.f32.mrf.mxu0
      %v2877 = vadd.f32 %v2573, %v2876
      %v2878 = vpop.f32.mrf.mxu0
      %2879 = vmatprep.mubr.bf16.mxu0 0
      %2880 = vmatmul.mubr.bf16.gmra.mxu0 %v2516
      %v2881 = vpop.f32.mrf.mxu0
      %v2882 = vadd.f32 %v2573, %v2881
      %v2883 = vpop.f32.mrf.mxu0
      %v2884 = vpop.f32.mrf.mxu0
      %v2885 = vadd.f32 %v2573, %v2884
      %v2886 = vpop.f32.mrf.mxu0
      %2887 = vmatprep.mubr.bf16.mxu0 0
      %2888 = vmatmul.mubr.bf16.gmra.mxu0 %v2517
      %v2889 = vpop.f32.mrf.mxu0
      %v2890 = vadd.f32 %v2573, %v2889
      %v2891 = vpop.f32.mrf.mxu0
      %v2892 = vpop.f32.mrf.mxu0
      %v2893 = vadd.f32 %v2573, %v2892
      %v2894 = vpop.f32.mrf.mxu0
      %2895 = vmatprep.mubr.bf16.mxu0 0
      %2896 = vmatmul.mubr.bf16.gmra.mxu0 %v2518
      %v2897 = vpop.f32.mrf.mxu0
      %v2898 = vadd.f32 %v2573, %v2897
      %v2899 = vpop.f32.mrf.mxu0
      %v2900 = vpop.f32.mrf.mxu0
      %v2901 = vadd.f32 %v2573, %v2900
      %v2902 = vpop.f32.mrf.mxu0
      %2903 = vmatprep.mubr.bf16.mxu0 0
      %2904 = vmatmul.mubr.bf16.gmra.mxu0 %v2519
      %v2905 = vpop.f32.mrf.mxu0
      %v2906 = vadd.f32 %v2573, %v2905
      %v2907 = vpop.f32.mrf.mxu0
      %v2908 = vpop.f32.mrf.mxu0
      %v2909 = vadd.f32 %v2573, %v2908
      %v2910 = vpop.f32.mrf.mxu0
      %2911 = vmatprep.mubr.bf16.mxu0 0
      %2912 = vmatmul.mubr.bf16.gmra.mxu0 %v2520
      %v2913 = vpop.f32.mrf.mxu0
      %v2914 = vadd.f32 %v2573, %v2913
      %v2915 = vpop.f32.mrf.mxu0
      %v2916 = vpop.f32.mrf.mxu0
      %v2917 = vadd.f32 %v2573, %v2916
      %v2918 = vpop.f32.mrf.mxu0
      %2919 = vmatprep.mubr.bf16.mxu0 0
      %2920 = vmatmul.mubr.bf16.gmra.mxu0 %v2521
      %v2921 = vpop.f32.mrf.mxu0
      %v2922 = vadd.f32 %v2573, %v2921
      %v2923 = vpop.f32.mrf.mxu0
      %v2924 = vpop.f32.mrf.mxu0
      %v2925 = vadd.f32 %v2573, %v2924
      %v2926 = vpop.f32.mrf.mxu0
      %2927 = vmatprep.mubr.bf16.mxu0 0
      %2928 = vmatmul.mubr.bf16.gmra.mxu0 %v2522
      %v2929 = vpop.f32.mrf.mxu0
      %v2930 = vadd.f32 %v2573, %v2929
      %v2931 = vpop.f32.mrf.mxu0
      %v2932 = vpop.f32.mrf.mxu0
      %v2933 = vadd.f32 %v2573, %v2932
      %v2934 = vpop.f32.mrf.mxu0
      %2935 = vmatprep.mubr.bf16.mxu0 0
      %2936 = vmatmul.mubr.bf16.gmra.mxu0 %v2523
      %v2937 = vpop.f32.mrf.mxu0
      %v2938 = vadd.f32 %v2573, %v2937
      %v2939 = vpop.f32.mrf.mxu0
      %v2940 = vpop.f32.mrf.mxu0
      %v2941 = vadd.f32 %v2573, %v2940
      %v2942 = vpop.f32.mrf.mxu0
      %2943 = vmatprep.mubr.bf16.mxu0 0
      %2944 = vmatmul.mubr.bf16.gmra.mxu0 %v2524
      %v2945 = vpop.f32.mrf.mxu0
      %v2946 = vadd.f32 %v2573, %v2945
      %v2947 = vpop.f32.mrf.mxu0
      %v2948 = vpop.f32.mrf.mxu0
      %v2949 = vadd.f32 %v2573, %v2948
      %v2950 = vpop.f32.mrf.mxu0
      %2951 = vmatprep.mubr.bf16.mxu0 0
      %2952 = vmatmul.mubr.bf16.gmra.mxu0 %v2525
      %v2953 = vpop.f32.mrf.mxu0
      %v2954 = vadd.f32 %v2573, %v2953
      %v2955 = vpop.f32.mrf.mxu0
      %v2956 = vpop.f32.mrf.mxu0
      %v2957 = vadd.f32 %v2573, %v2956
      %v2958 = vpop.f32.mrf.mxu0
      %2959 = vmatprep.mubr.bf16.mxu0 0
      %2960 = vmatmul.mubr.bf16.gmra.mxu0 %v2526
      %v2961 = vpop.f32.mrf.mxu0
      %v2962 = vadd.f32 %v2573, %v2961
      %v2963 = vpop.f32.mrf.mxu0
      %v2964 = vpop.f32.mrf.mxu0
      %v2965 = vadd.f32 %v2573, %v2964
      %v2966 = vpop.f32.mrf.mxu0
      %2967 = vmatprep.mubr.bf16.mxu0 0
      %2968 = vmatmul.mubr.bf16.gmra.mxu0 %v2527
      %v2969 = vpop.f32.mrf.mxu0
      %v2970 = vadd.f32 %v2573, %v2969
      %v2971 = vpop.f32.mrf.mxu0
      %v2972 = vpop.f32.mrf.mxu0
      %v2973 = vadd.f32 %v2573, %v2972
      %v2974 = vpop.f32.mrf.mxu0
      %2975 = vmatprep.mubr.bf16.mxu0 0
      %2976 = vmatmul.mubr.bf16.gmra.mxu0 %v2528
      %v2977 = vpop.f32.mrf.mxu0
      %v2978 = vadd.f32 %v2573, %v2977
      %v2979 = vpop.f32.mrf.mxu0
      %v2980 = vpop.f32.mrf.mxu0
      %v2981 = vadd.f32 %v2573, %v2980
      %v2982 = vpop.f32.mrf.mxu0
      %2983 = vmatprep.mubr.bf16.mxu0 0
      %2984 = vmatmul.mubr.bf16.gmra.mxu0 %v2529
      %v2985 = vpop.f32.mrf.mxu0
      %v2986 = vadd.f32 %v2573, %v2985
      %v2987 = vpop.f32.mrf.mxu0
      %v2988 = vpop.f32.mrf.mxu0
      %v2989 = vadd.f32 %v2573, %v2988
      %v2990 = vpop.f32.mrf.mxu0
      %2991 = vmatprep.mubr.bf16.mxu0 0
      %2992 = vmatmul.mubr.bf16.gmra.mxu0 %v2530
      %v2993 = vpop.f32.mrf.mxu0
      %v2994 = vadd.f32 %v2573, %v2993
      %v2995 = vpop.f32.mrf.mxu0
      %v2996 = vpop.f32.mrf.mxu0
      %v2997 = vadd.f32 %v2573, %v2996
      %v2998 = vpop.f32.mrf.mxu0
      %2999 = vmatprep.mubr.bf16.mxu0 0
      %3000 = vmatmul.mubr.bf16.gmra.mxu0 %v2531
      %v3001 = vpop.f32.mrf.mxu0
      %v3002 = vadd.f32 %v2573, %v3001
      %v3003 = vpop.f32.mrf.mxu0
      %v3004 = vpop.f32.mrf.mxu0
      %v3005 = vadd.f32 %v2573, %v3004
      %v3006 = vpop.f32.mrf.mxu0
      %3007 = vmatprep.mubr.bf16.mxu0 0
      %3008 = vmatmul.mubr.bf16.gmra.mxu0 %v2532
      %v3009 = vpop.f32.mrf.mxu0
      %v3010 = vadd.f32 %v2573, %v3009
      %v3011 = vpop.f32.mrf.mxu0
      %v3012 = vpop.f32.mrf.mxu0
      %v3013 = vadd.f32 %v2573, %v3012
      %v3014 = vpop.f32.mrf.mxu0
      %3015 = vmatprep.mubr.bf16.mxu0 0
      %3016 = vmatmul.mubr.bf16.gmra.mxu0 %v2533
      %v3017 = vpop.f32.mrf.mxu0
      %v3018 = vadd.f32 %v2573, %v3017
      %v3019 = vpop.f32.mrf.mxu0
      %v3020 = vpop.f32.mrf.mxu0
      %v3021 = vadd.f32 %v2573, %v3020
      %v3022 = vpop.f32.mrf.mxu0
      %3023 = vmatprep.mubr.bf16.mxu0 0
      %3024 = vmatmul.mubr.bf16.gmra.mxu0 %v2534
      %v3025 = vpop.f32.mrf.mxu0
      %v3026 = vadd.f32 %v2573, %v3025
      %v3027 = vpop.f32.mrf.mxu0
      %v3028 = vpop.f32.mrf.mxu0
      %v3029 = vadd.f32 %v2573, %v3028
      %v3030 = vpop.f32.mrf.mxu0
      %3031 = vmatprep.mubr.bf16.mxu0 0
      %3032 = vmatmul.mubr.bf16.gmra.mxu0 %v2535
      %v3033 = vpop.f32.mrf.mxu0
      %v3034 = vadd.f32 %v2573, %v3033
      %v3035 = vpop.f32.mrf.mxu0
      %v3036 = vpop.f32.mrf.mxu0
      %v3037 = vadd.f32 %v2573, %v3036
      %v3038 = vpop.f32.mrf.mxu0
      %3039 = vmatprep.mubr.bf16.mxu0 0
      %3040 = vmatmul.mubr.bf16.gmra.mxu0 %v2536
      %v3041 = vpop.f32.mrf.mxu0
      %v3042 = vadd.f32 %v2573, %v3041
      %v3043 = vpop.f32.mrf.mxu0
      %v3044 = vpop.f32.mrf.mxu0
      %v3045 = vadd.f32 %v2573, %v3044
      %v3046 = vpop.f32.mrf.mxu0
      %3047 = vmatprep.mubr.bf16.mxu0 0
      %3048 = vmatmul.mubr.bf16.gmra.mxu0 %v2537
      %v3049 = vpop.f32.mrf.mxu0
      %v3050 = vadd.f32 %v2573, %v3049
      %v3051 = vpop.f32.mrf.mxu0
      %v3052 = vpop.f32.mrf.mxu0
      %v3053 = vadd.f32 %v2573, %v3052
      %v3054 = vpop.f32.mrf.mxu0
      %3055 = vmatprep.mubr.bf16.mxu0 0
      %3056 = vmatmul.mubr.bf16.gmra.mxu0 %v2538
      %v3057 = vpop.f32.mrf.mxu0
      %v3058 = vadd.f32 %v2573, %v3057
      %v3059 = vpop.f32.mrf.mxu0
      %v3060 = vpop.f32.mrf.mxu0
      %v3061 = vadd.f32 %v2573, %v3060
      %v3062 = vpop.f32.mrf.mxu0
      %3063 = vmatprep.mubr.bf16.mxu0 0
      %3064 = vmatmul.mubr.bf16.gmra.mxu0 %v2539
      %v3065 = vpop.f32.mrf.mxu0
      %v3066 = vadd.f32 %v2573, %v3065
      %v3067 = vpop.f32.mrf.mxu0
      %v3068 = vpop.f32.mrf.mxu0
      %v3069 = vadd.f32 %v2573, %v3068
      %v3070 = vpop.f32.mrf.mxu0
      %3071 = vmatprep.mubr.bf16.mxu0 0
      %3072 = vmatmul.mubr.bf16.gmra.mxu0 %v2540
      %v3073 = vpop.f32.mrf.mxu0
      %v3074 = vadd.f32 %v2573, %v3073
      %v3075 = vpop.f32.mrf.mxu0
      %v3076 = vpop.f32.mrf.mxu0
      %v3077 = vadd.f32 %v2573, %v3076
      %v3078 = vpop.f32.mrf.mxu0
      %3079 = vmatprep.mubr.bf16.mxu0 0
      %3080 = vmatmul.mubr.bf16.gmra.mxu0 %v2541
      %v3081 = vpop.f32.mrf.mxu0
      %v3082 = vadd.f32 %v2573, %v3081
      %v3083 = vpop.f32.mrf.mxu0
      %v3084 = vpop.f32.mrf.mxu0
      %v3085 = vadd.f32 %v2573, %v3084
      %v3086 = vpop.f32.mrf.mxu0
      %3087 = vmatprep.mubr.bf16.mxu0 0
      %3088 = vmatmul.mubr.bf16.gmra.mxu0 %v2542
      %v3089 = vpop.f32.mrf.mxu0
      %v3090 = vadd.f32 %v2573, %v3089
      %v3091 = vpop.f32.mrf.mxu0
      %v3092 = vpop.f32.mrf.mxu0
      %v3093 = vadd.f32 %v2573, %v3092
      %v3094 = vpop.f32.mrf.mxu0
      %3095 = vmatprep.mubr.bf16.mxu0 0
      %3096 = vmatmul.mubr.bf16.gmra.mxu0 %v2543
      %v3097 = vpop.f32.mrf.mxu0
      %v3098 = vadd.f32 %v2573, %v3097
      %v3099 = vpop.f32.mrf.mxu0
      %v3100 = vpop.f32.mrf.mxu0
      %v3101 = vadd.f32 %v2573, %v3100
      %v3102 = vpop.f32.mrf.mxu0
      %3103 = vmatprep.mubr.bf16.mxu0 0
      %3104 = vmatmul.mubr.bf16.gmra.mxu0 %v2544
      %v3105 = vpop.f32.mrf.mxu0
      %v3106 = vadd.f32 %v2573, %v3105
      %v3107 = vpop.f32.mrf.mxu0
      %v3108 = vpop.f32.mrf.mxu0
      %v3109 = vadd.f32 %v2573, %v3108
      %v3110 = vpop.f32.mrf.mxu0
      %3111 = vmatprep.mubr.bf16.mxu0 0
      %3112 = vmatmul.mubr.bf16.gmra.mxu0 %v2545
      %v3113 = vpop.f32.mrf.mxu0
      %v3114 = vadd.f32 %v2573, %v3113
      %v3115 = vpop.f32.mrf.mxu0
      %v3116 = vpop.f32.mrf.mxu0
      %v3117 = vadd.f32 %v2573, %v3116
      %v3118 = vpop.f32.mrf.mxu0
      %3119 = vmatprep.mubr.bf16.mxu0 0
      %3120 = vmatmul.mubr.bf16.gmra.mxu0 %v2546
      %v3121 = vpop.f32.mrf.mxu0
      %v3122 = vadd.f32 %v2573, %v3121
      %v3123 = vpop.f32.mrf.mxu0
      %v3124 = vpop.f32.mrf.mxu0
      %v3125 = vadd.f32 %v2573, %v3124
      %v3126 = vpop.f32.mrf.mxu0
      %3127 = vmatprep.mubr.bf16.mxu0 0
      %3128 = vmatmul.mubr.bf16.gmra.mxu0 %v2547
      %v3129 = vpop.f32.mrf.mxu0
      %v3130 = vadd.f32 %v2573, %v3129
      %v3131 = vpop.f32.mrf.mxu0
      %v3132 = vpop.f32.mrf.mxu0
      %v3133 = vadd.f32 %v2573, %v3132
      %v3134 = vpop.f32.mrf.mxu0
      %3135 = vmatprep.mubr.bf16.mxu0 0
      %3136 = vmatmul.mubr.bf16.gmra.mxu0 %v2548
      %v3137 = vpop.f32.mrf.mxu0
      %v3138 = vadd.f32 %v2573, %v3137
      %v3139 = vpop.f32.mrf.mxu0
      %v3140 = vpop.f32.mrf.mxu0
      %v3141 = vadd.f32 %v2573, %v3140
      %v3142 = vpop.f32.mrf.mxu0
      %3143 = vmatprep.mubr.bf16.mxu0 0
      %3144 = vmatmul.mubr.bf16.gmra.mxu0 %v2549
      %v3145 = vpop.f32.mrf.mxu0
      %v3146 = vadd.f32 %v2573, %v3145
      %v3147 = vpop.f32.mrf.mxu0
      %v3148 = vpop.f32.mrf.mxu0
      %v3149 = vadd.f32 %v2573, %v3148
      %v3150 = vpop.f32.mrf.mxu0
      %3151 = vmatprep.mubr.bf16.mxu0 0
      %3152 = vmatmul.mubr.bf16.gmra.mxu0 %v2550
      %v3153 = vpop.f32.mrf.mxu0
      %v3154 = vadd.f32 %v2573, %v3153
      %v3155 = vpop.f32.mrf.mxu0
      %v3156 = vpop.f32.mrf.mxu0
      %v3157 = vadd.f32 %v2573, %v3156
      %v3158 = vpop.f32.mrf.mxu0
      %3159 = vmatprep.mubr.bf16.mxu0 0
      %3160 = vmatmul.mubr.bf16.gmra.mxu0 %v2551
      %v3161 = vpop.f32.mrf.mxu0
      %v3162 = vadd.f32 %v2573, %v3161
      %v3163 = vpop.f32.mrf.mxu0
      %v3164 = vpop.f32.mrf.mxu0
      %v3165 = vadd.f32 %v2573, %v3164
      %v3166 = vpop.f32.mrf.mxu0
      %3167 = vdwg.mxu0
      %v3168 = vxor.u32 %v2658, 2147483648
      %v3169 = vxor.u32 %v2661, 2147483648
      %v3170 = vxor.u32 %v2666, 2147483648
      %v3171 = vxor.u32 %v2669, 2147483648
      %v3172 = vxor.u32 %v2674, 2147483648
      %v3173 = vxor.u32 %v2677, 2147483648
      %v3174 = vxor.u32 %v2682, 2147483648
      %v3175 = vxor.u32 %v2685, 2147483648
      %v3176 = vxor.u32 %v2690, 2147483648
      %v3177 = vxor.u32 %v2693, 2147483648
      %v3178 = vxor.u32 %v2698, 2147483648
      %v3179 = vxor.u32 %v2701, 2147483648
      %v3180 = vxor.u32 %v2706, 2147483648
      %v3181 = vxor.u32 %v2709, 2147483648
      %v3182 = vxor.u32 %v2714, 2147483648
      %v3183 = vxor.u32 %v2717, 2147483648
      %v3184 = vxor.u32 %v2722, 2147483648
      %v3185 = vxor.u32 %v2725, 2147483648
      %v3186 = vxor.u32 %v2730, 2147483648
      %v3187 = vxor.u32 %v2733, 2147483648
      %v3188 = vxor.u32 %v2738, 2147483648
      %v3189 = vxor.u32 %v2741, 2147483648
      %v3190 = vxor.u32 %v2746, 2147483648
      %v3191 = vxor.u32 %v2749, 2147483648
      %v3192 = vxor.u32 %v2754, 2147483648
      %v3193 = vxor.u32 %v2757, 2147483648
      %v3194 = vxor.u32 %v2762, 2147483648
      %v3195 = vxor.u32 %v2765, 2147483648
      %v3196 = vxor.u32 %v2770, 2147483648
      %v3197 = vxor.u32 %v2773, 2147483648
      %v3198 = vxor.u32 %v2778, 2147483648
      %v3199 = vxor.u32 %v2781, 2147483648
      %v3200 = vxor.u32 %v2786, 2147483648
      %v3201 = vxor.u32 %v2789, 2147483648
      %v3202 = vxor.u32 %v2794, 2147483648
      %v3203 = vxor.u32 %v2797, 2147483648
      %v3204 = vxor.u32 %v2802, 2147483648
      %v3205 = vxor.u32 %v2805, 2147483648
      %v3206 = vxor.u32 %v2810, 2147483648
      %v3207 = vxor.u32 %v2813, 2147483648
      %v3208 = vxor.u32 %v2818, 2147483648
      %v3209 = vxor.u32 %v2821, 2147483648
      %v3210 = vxor.u32 %v2826, 2147483648
      %v3211 = vxor.u32 %v2829, 2147483648
      %v3212 = vxor.u32 %v2834, 2147483648
      %v3213 = vxor.u32 %v2837, 2147483648
      %v3214 = vxor.u32 %v2842, 2147483648
      %v3215 = vxor.u32 %v2845, 2147483648
      %v3216 = vxor.u32 %v2850, 2147483648
      %v3217 = vxor.u32 %v2853, 2147483648
      %v3218 = vxor.u32 %v2858, 2147483648
      %v3219 = vxor.u32 %v2861, 2147483648
      %v3220 = vxor.u32 %v2866, 2147483648
      %v3221 = vxor.u32 %v2869, 2147483648
      %v3222 = vxor.u32 %v2874, 2147483648
      %v3223 = vxor.u32 %v2877, 2147483648
      %v3224 = vxor.u32 %v2882, 2147483648
      %v3225 = vxor.u32 %v2885, 2147483648
      %v3226 = vxor.u32 %v2890, 2147483648
      %v3227 = vxor.u32 %v2893, 2147483648
      %v3228 = vxor.u32 %v2898, 2147483648
      %v3229 = vxor.u32 %v2901, 2147483648
      %v3230 = vxor.u32 %v2906, 2147483648
      %v3231 = vxor.u32 %v2909, 2147483648
      %v3232 = vxor.u32 %v2914, 2147483648
      %v3233 = vxor.u32 %v2917, 2147483648
      %v3234 = vxor.u32 %v2922, 2147483648
      %v3235 = vxor.u32 %v2925, 2147483648
      %v3236 = vxor.u32 %v2930, 2147483648
      %v3237 = vxor.u32 %v2933, 2147483648
      %v3238 = vxor.u32 %v2938, 2147483648
      %v3239 = vxor.u32 %v2941, 2147483648
      %v3240 = vxor.u32 %v2946, 2147483648
      %v3241 = vxor.u32 %v2949, 2147483648
      %v3242 = vxor.u32 %v2954, 2147483648
      %v3243 = vxor.u32 %v2957, 2147483648
      %v3244 = vxor.u32 %v2962, 2147483648
      %v3245 = vxor.u32 %v2965, 2147483648
      %v3246 = vxor.u32 %v2970, 2147483648
      %v3247 = vxor.u32 %v2973, 2147483648
      %v3248 = vxor.u32 %v2978, 2147483648
      %v3249 = vxor.u32 %v2981, 2147483648
      %v3250 = vxor.u32 %v2986, 2147483648
      %v3251 = vxor.u32 %v2989, 2147483648
      %v3252 = vxor.u32 %v2994, 2147483648
      %v3253 = vxor.u32 %v2997, 2147483648
      %v3254 = vxor.u32 %v3002, 2147483648
      %v3255 = vxor.u32 %v3005, 2147483648
      %v3256 = vxor.u32 %v3010, 2147483648
      %v3257 = vxor.u32 %v3013, 2147483648
      %v3258 = vxor.u32 %v3018, 2147483648
      %v3259 = vxor.u32 %v3021, 2147483648
      %v3260 = vxor.u32 %v3026, 2147483648
      %v3261 = vxor.u32 %v3029, 2147483648
      %v3262 = vxor.u32 %v3034, 2147483648
      %v3263 = vxor.u32 %v3037, 2147483648
      %v3264 = vxor.u32 %v3042, 2147483648
      %v3265 = vxor.u32 %v3045, 2147483648
      %v3266 = vxor.u32 %v3050, 2147483648
      %v3267 = vxor.u32 %v3053, 2147483648
      %v3268 = vxor.u32 %v3058, 2147483648
      %v3269 = vxor.u32 %v3061, 2147483648
      %v3270 = vxor.u32 %v3066, 2147483648
      %v3271 = vxor.u32 %v3069, 2147483648
      %v3272 = vxor.u32 %v3074, 2147483648
      %v3273 = vxor.u32 %v3077, 2147483648
      %v3274 = vxor.u32 %v3082, 2147483648
      %v3275 = vxor.u32 %v3085, 2147483648
      %v3276 = vxor.u32 %v3090, 2147483648
      %v3277 = vxor.u32 %v3093, 2147483648
      %v3278 = vxor.u32 %v3098, 2147483648
      %v3279 = vxor.u32 %v3101, 2147483648
      %v3280 = vxor.u32 %v3106, 2147483648
      %v3281 = vxor.u32 %v3109, 2147483648
      %v3282 = vxor.u32 %v3114, 2147483648
      %v3283 = vxor.u32 %v3117, 2147483648
      %v3284 = vxor.u32 %v3122, 2147483648
      %v3285 = vxor.u32 %v3125, 2147483648
      %v3286 = vxor.u32 %v3130, 2147483648
      %v3287 = vxor.u32 %v3133, 2147483648
      %v3288 = vxor.u32 %v3138, 2147483648
      %v3289 = vxor.u32 %v3141, 2147483648
      %v3290 = vxor.u32 %v3146, 2147483648
      %v3291 = vxor.u32 %v3149, 2147483648
      %v3292 = vxor.u32 %v3154, 2147483648
      %v3293 = vxor.u32 %v3157, 2147483648
      %v3294 = vxor.u32 %v3162, 2147483648
      %v3295 = vxor.u32 %v3165, 2147483648
      %v3296 = vmul.f32 %v3168, 1.442695
      %v3297 = vpow.pop %v3296
      %v3298 = vmul.f32 %v3169, 1.442695
      %v3299 = vpow.pop %v3298
      %v3300 = vmul.f32 %v3170, 1.442695
      %v3301 = vpow.pop %v3300
      %v3302 = vmul.f32 %v3171, 1.442695
      %v3303 = vpow.pop %v3302
      %v3304 = vmul.f32 %v3172, 1.442695
      %v3305 = vpow.pop %v3304
      %v3306 = vmul.f32 %v3173, 1.442695
      %v3307 = vpow.pop %v3306
      %v3308 = vmul.f32 %v3174, 1.442695
      %v3309 = vpow.pop %v3308
      %v3310 = vmul.f32 %v3175, 1.442695
      %v3311 = vpow.pop %v3310
      %v3312 = vmul.f32 %v3176, 1.442695
      %v3313 = vpow.pop %v3312
      %v3314 = vmul.f32 %v3177, 1.442695
      %v3315 = vpow.pop %v3314
      %v3316 = vmul.f32 %v3178, 1.442695
      %v3317 = vpow.pop %v3316
      %v3318 = vmul.f32 %v3179, 1.442695
      %v3319 = vpow.pop %v3318
      %v3320 = vmul.f32 %v3180, 1.442695
      %v3321 = vpow.pop %v3320
      %v3322 = vmul.f32 %v3181, 1.442695
      %v3323 = vpow.pop %v3322
      %v3324 = vmul.f32 %v3182, 1.442695
      %v3325 = vpow.pop %v3324
      %v3326 = vmul.f32 %v3183, 1.442695
      %v3327 = vpow.pop %v3326
      %v3328 = vmul.f32 %v3184, 1.442695
      %v3329 = vpow.pop %v3328
      %v3330 = vmul.f32 %v3185, 1.442695
      %v3331 = vpow.pop %v3330
      %v3332 = vmul.f32 %v3186, 1.442695
      %v3333 = vpow.pop %v3332
      %v3334 = vmul.f32 %v3187, 1.442695
      %v3335 = vpow.pop %v3334
      %v3336 = vmul.f32 %v3188, 1.442695
      %v3337 = vpow.pop %v3336
      %v3338 = vmul.f32 %v3189, 1.442695
      %v3339 = vpow.pop %v3338
      %v3340 = vmul.f32 %v3190, 1.442695
      %v3341 = vpow.pop %v3340
      %v3342 = vmul.f32 %v3191, 1.442695
      %v3343 = vpow.pop %v3342
      %v3344 = vmul.f32 %v3192, 1.442695
      %v3345 = vpow.pop %v3344
      %v3346 = vmul.f32 %v3193, 1.442695
      %v3347 = vpow.pop %v3346
      %v3348 = vmul.f32 %v3194, 1.442695
      %v3349 = vpow.pop %v3348
      %v3350 = vmul.f32 %v3195, 1.442695
      %v3351 = vpow.pop %v3350
      %v3352 = vmul.f32 %v3196, 1.442695
      %v3353 = vpow.pop %v3352
      %v3354 = vmul.f32 %v3197, 1.442695
      %v3355 = vpow.pop %v3354
      %v3356 = vmul.f32 %v3198, 1.442695
      %v3357 = vpow.pop %v3356
      %v3358 = vmul.f32 %v3199, 1.442695
      %v3359 = vpow.pop %v3358
      %v3360 = vmul.f32 %v3200, 1.442695
      %v3361 = vpow.pop %v3360
      %v3362 = vmul.f32 %v3201, 1.442695
      %v3363 = vpow.pop %v3362
      %v3364 = vmul.f32 %v3202, 1.442695
      %v3365 = vpow.pop %v3364
      %v3366 = vmul.f32 %v3203, 1.442695
      %v3367 = vpow.pop %v3366
      %v3368 = vmul.f32 %v3204, 1.442695
      %v3369 = vpow.pop %v3368
      %v3370 = vmul.f32 %v3205, 1.442695
      %v3371 = vpow.pop %v3370
      %v3372 = vmul.f32 %v3206, 1.442695
      %v3373 = vpow.pop %v3372
      %v3374 = vmul.f32 %v3207, 1.442695
      %v3375 = vpow.pop %v3374
      %v3376 = vmul.f32 %v3208, 1.442695
      %v3377 = vpow.pop %v3376
      %v3378 = vmul.f32 %v3209, 1.442695
      %v3379 = vpow.pop %v3378
      %v3380 = vmul.f32 %v3210, 1.442695
      %v3381 = vpow.pop %v3380
      %v3382 = vmul.f32 %v3211, 1.442695
      %v3383 = vpow.pop %v3382
      %v3384 = vmul.f32 %v3212, 1.442695
      %v3385 = vpow.pop %v3384
      %v3386 = vmul.f32 %v3213, 1.442695
      %v3387 = vpow.pop %v3386
      %v3388 = vmul.f32 %v3214, 1.442695
      %v3389 = vpow.pop %v3388
      %v3390 = vmul.f32 %v3215, 1.442695
      %v3391 = vpow.pop %v3390
      %v3392 = vmul.f32 %v3216, 1.442695
      %v3393 = vpow.pop %v3392
      %v3394 = vmul.f32 %v3217, 1.442695
      %v3395 = vpow.pop %v3394
      %v3396 = vmul.f32 %v3218, 1.442695
      %v3397 = vpow.pop %v3396
      %v3398 = vmul.f32 %v3219, 1.442695
      %v3399 = vpow.pop %v3398
      %v3400 = vmul.f32 %v3220, 1.442695
      %v3401 = vpow.pop %v3400
      %v3402 = vmul.f32 %v3221, 1.442695
      %v3403 = vpow.pop %v3402
      %v3404 = vmul.f32 %v3222, 1.442695
      %v3405 = vpow.pop %v3404
      %v3406 = vmul.f32 %v3223, 1.442695
      %v3407 = vpow.pop %v3406
      %v3408 = vmul.f32 %v3224, 1.442695
      %v3409 = vpow.pop %v3408
      %v3410 = vmul.f32 %v3225, 1.442695
      %v3411 = vpow.pop %v3410
      %v3412 = vmul.f32 %v3226, 1.442695
      %v3413 = vpow.pop %v3412
      %v3414 = vmul.f32 %v3227, 1.442695
      %v3415 = vpow.pop %v3414
      %v3416 = vmul.f32 %v3228, 1.442695
      %v3417 = vpow.pop %v3416
      %v3418 = vmul.f32 %v3229, 1.442695
      %v3419 = vpow.pop %v3418
      %v3420 = vmul.f32 %v3230, 1.442695
      %v3421 = vpow.pop %v3420
      %v3422 = vmul.f32 %v3231, 1.442695
      %v3423 = vpow.pop %v3422
      %v3424 = vmul.f32 %v3232, 1.442695
      %v3425 = vpow.pop %v3424
      %v3426 = vmul.f32 %v3233, 1.442695
      %v3427 = vpow.pop %v3426
      %v3428 = vmul.f32 %v3234, 1.442695
      %v3429 = vpow.pop %v3428
      %v3430 = vmul.f32 %v3235, 1.442695
      %v3431 = vpow.pop %v3430
      %v3432 = vmul.f32 %v3236, 1.442695
      %v3433 = vpow.pop %v3432
      %v3434 = vmul.f32 %v3237, 1.442695
      %v3435 = vpow.pop %v3434
      %v3436 = vmul.f32 %v3238, 1.442695
      %v3437 = vpow.pop %v3436
      %v3438 = vmul.f32 %v3239, 1.442695
      %v3439 = vpow.pop %v3438
      %v3440 = vmul.f32 %v3240, 1.442695
      %v3441 = vpow.pop %v3440
      %v3442 = vmul.f32 %v3241, 1.442695
      %v3443 = vpow.pop %v3442
      %v3444 = vmul.f32 %v3242, 1.442695
      %v3445 = vpow.pop %v3444
      %v3446 = vmul.f32 %v3243, 1.442695
      %v3447 = vpow.pop %v3446
      %v3448 = vmul.f32 %v3244, 1.442695
      %v3449 = vpow.pop %v3448
      %v3450 = vmul.f32 %v3245, 1.442695
      %v3451 = vpow.pop %v3450
      %v3452 = vmul.f32 %v3246, 1.442695
      %v3453 = vpow.pop %v3452
      %v3454 = vmul.f32 %v3247, 1.442695
      %v3455 = vpow.pop %v3454
      %v3456 = vmul.f32 %v3248, 1.442695
      %v3457 = vpow.pop %v3456
      %v3458 = vmul.f32 %v3249, 1.442695
      %v3459 = vpow.pop %v3458
      %v3460 = vmul.f32 %v3250, 1.442695
      %v3461 = vpow.pop %v3460
      %v3462 = vmul.f32 %v3251, 1.442695
      %v3463 = vpow.pop %v3462
      %v3464 = vmul.f32 %v3252, 1.442695
      %v3465 = vpow.pop %v3464
      %v3466 = vmul.f32 %v3253, 1.442695
      %v3467 = vpow.pop %v3466
      %v3468 = vmul.f32 %v3254, 1.442695
      %v3469 = vpow.pop %v3468
      %v3470 = vmul.f32 %v3255, 1.442695
      %v3471 = vpow.pop %v3470
      %v3472 = vmul.f32 %v3256, 1.442695
      %v3473 = vpow.pop %v3472
      %v3474 = vmul.f32 %v3257, 1.442695
      %v3475 = vpow.pop %v3474
      %v3476 = vmul.f32 %v3258, 1.442695
      %v3477 = vpow.pop %v3476
      %v3478 = vmul.f32 %v3259, 1.442695
      %v3479 = vpow.pop %v3478
      %v3480 = vmul.f32 %v3260, 1.442695
      %v3481 = vpow.pop %v3480
      %v3482 = vmul.f32 %v3261, 1.442695
      %v3483 = vpow.pop %v3482
      %v3484 = vmul.f32 %v3262, 1.442695
      %v3485 = vpow.pop %v3484
      %v3486 = vmul.f32 %v3263, 1.442695
      %v3487 = vpow.pop %v3486
      %v3488 = vmul.f32 %v3264, 1.442695
      %v3489 = vpow.pop %v3488
      %v3490 = vmul.f32 %v3265, 1.442695
      %v3491 = vpow.pop %v3490
      %v3492 = vmul.f32 %v3266, 1.442695
      %v3493 = vpow.pop %v3492
      %v3494 = vmul.f32 %v3267, 1.442695
      %v3495 = vpow.pop %v3494
      %v3496 = vmul.f32 %v3268, 1.442695
      %v3497 = vpow.pop %v3496
      %v3498 = vmul.f32 %v3269, 1.442695
      %v3499 = vpow.pop %v3498
      %v3500 = vmul.f32 %v3270, 1.442695
      %v3501 = vpow.pop %v3500
      %v3502 = vmul.f32 %v3271, 1.442695
      %v3503 = vpow.pop %v3502
      %v3504 = vmul.f32 %v3272, 1.442695
      %v3505 = vpow.pop %v3504
      %v3506 = vmul.f32 %v3273, 1.442695
      %v3507 = vpow.pop %v3506
      %v3508 = vmul.f32 %v3274, 1.442695
      %v3509 = vpow.pop %v3508
      %v3510 = vmul.f32 %v3275, 1.442695
      %v3511 = vpow.pop %v3510
      %v3512 = vmul.f32 %v3276, 1.442695
      %v3513 = vpow.pop %v3512
      %v3514 = vmul.f32 %v3277, 1.442695
      %v3515 = vpow.pop %v3514
      %v3516 = vmul.f32 %v3278, 1.442695
      %v3517 = vpow.pop %v3516
      %v3518 = vmul.f32 %v3279, 1.442695
      %v3519 = vpow.pop %v3518
      %v3520 = vmul.f32 %v3280, 1.442695
      %v3521 = vpow.pop %v3520
      %v3522 = vmul.f32 %v3281, 1.442695
      %v3523 = vpow.pop %v3522
      %v3524 = vmul.f32 %v3282, 1.442695
      %v3525 = vpow.pop %v3524
      %v3526 = vmul.f32 %v3283, 1.442695
      %v3527 = vpow.pop %v3526
      %v3528 = vmul.f32 %v3284, 1.442695
      %v3529 = vpow.pop %v3528
      %v3530 = vmul.f32 %v3285, 1.442695
      %v3531 = vpow.pop %v3530
      %v3532 = vmul.f32 %v3286, 1.442695
      %v3533 = vpow.pop %v3532
      %v3534 = vmul.f32 %v3287, 1.442695
      %v3535 = vpow.pop %v3534
      %v3536 = vmul.f32 %v3288, 1.442695
      %v3537 = vpow.pop %v3536
      %v3538 = vmul.f32 %v3289, 1.442695
      %v3539 = vpow.pop %v3538
      %v3540 = vmul.f32 %v3290, 1.442695
      %v3541 = vpow.pop %v3540
      %v3542 = vmul.f32 %v3291, 1.442695
      %v3543 = vpow.pop %v3542
      %v3544 = vmul.f32 %v3292, 1.442695
      %v3545 = vpow.pop %v3544
      %v3546 = vmul.f32 %v3293, 1.442695
      %v3547 = vpow.pop %v3546
      %v3548 = vmul.f32 %v3294, 1.442695
      %v3549 = vpow.pop %v3548
      %v3550 = vmul.f32 %v3295, 1.442695
      %v3551 = vpow.pop %v3550
      %v3552 = vadd.f32 %v3297, 1.0
      %v3553 = vadd.f32 %v3299, 1.0
      %v3554 = vadd.f32 %v3301, 1.0
      %v3555 = vadd.f32 %v3303, 1.0
      %v3556 = vadd.f32 %v3305, 1.0
      %v3557 = vadd.f32 %v3307, 1.0
      %v3558 = vadd.f32 %v3309, 1.0
      %v3559 = vadd.f32 %v3311, 1.0
      %v3560 = vadd.f32 %v3313, 1.0
      %v3561 = vadd.f32 %v3315, 1.0
      %v3562 = vadd.f32 %v3317, 1.0
      %v3563 = vadd.f32 %v3319, 1.0
      %v3564 = vadd.f32 %v3321, 1.0
      %v3565 = vadd.f32 %v3323, 1.0
      %v3566 = vadd.f32 %v3325, 1.0
      %v3567 = vadd.f32 %v3327, 1.0
      %v3568 = vadd.f32 %v3329, 1.0
      %v3569 = vadd.f32 %v3331, 1.0
      %v3570 = vadd.f32 %v3333, 1.0
      %v3571 = vadd.f32 %v3335, 1.0
      %v3572 = vadd.f32 %v3337, 1.0
      %v3573 = vadd.f32 %v3339, 1.0
      %v3574 = vadd.f32 %v3341, 1.0
      %v3575 = vadd.f32 %v3343, 1.0
      %v3576 = vadd.f32 %v3345, 1.0
      %v3577 = vadd.f32 %v3347, 1.0
      %v3578 = vadd.f32 %v3349, 1.0
      %v3579 = vadd.f32 %v3351, 1.0
      %v3580 = vadd.f32 %v3353, 1.0
      %v3581 = vadd.f32 %v3355, 1.0
      %v3582 = vadd.f32 %v3357, 1.0
      %v3583 = vadd.f32 %v3359, 1.0
      %v3584 = vadd.f32 %v3361, 1.0
      %v3585 = vadd.f32 %v3363, 1.0
      %v3586 = vadd.f32 %v3365, 1.0
      %v3587 = vadd.f32 %v3367, 1.0
      %v3588 = vadd.f32 %v3369, 1.0
      %v3589 = vadd.f32 %v3371, 1.0
      %v3590 = vadd.f32 %v3373, 1.0
      %v3591 = vadd.f32 %v3375, 1.0
      %v3592 = vadd.f32 %v3377, 1.0
      %v3593 = vadd.f32 %v3379, 1.0
      %v3594 = vadd.f32 %v3381, 1.0
      %v3595 = vadd.f32 %v3383, 1.0
      %v3596 = vadd.f32 %v3385, 1.0
      %v3597 = vadd.f32 %v3387, 1.0
      %v3598 = vadd.f32 %v3389, 1.0
      %v3599 = vadd.f32 %v3391, 1.0
      %v3600 = vadd.f32 %v3393, 1.0
      %v3601 = vadd.f32 %v3395, 1.0
      %v3602 = vadd.f32 %v3397, 1.0
      %v3603 = vadd.f32 %v3399, 1.0
      %v3604 = vadd.f32 %v3401, 1.0
      %v3605 = vadd.f32 %v3403, 1.0
      %v3606 = vadd.f32 %v3405, 1.0
      %v3607 = vadd.f32 %v3407, 1.0
      %v3608 = vadd.f32 %v3409, 1.0
      %v3609 = vadd.f32 %v3411, 1.0
      %v3610 = vadd.f32 %v3413, 1.0
      %v3611 = vadd.f32 %v3415, 1.0
      %v3612 = vadd.f32 %v3417, 1.0
      %v3613 = vadd.f32 %v3419, 1.0
      %v3614 = vadd.f32 %v3421, 1.0
      %v3615 = vadd.f32 %v3423, 1.0
      %v3616 = vadd.f32 %v3425, 1.0
      %v3617 = vadd.f32 %v3427, 1.0
      %v3618 = vadd.f32 %v3429, 1.0
      %v3619 = vadd.f32 %v3431, 1.0
      %v3620 = vadd.f32 %v3433, 1.0
      %v3621 = vadd.f32 %v3435, 1.0
      %v3622 = vadd.f32 %v3437, 1.0
      %v3623 = vadd.f32 %v3439, 1.0
      %v3624 = vadd.f32 %v3441, 1.0
      %v3625 = vadd.f32 %v3443, 1.0
      %v3626 = vadd.f32 %v3445, 1.0
      %v3627 = vadd.f32 %v3447, 1.0
      %v3628 = vadd.f32 %v3449, 1.0
      %v3629 = vadd.f32 %v3451, 1.0
      %v3630 = vadd.f32 %v3453, 1.0
      %v3631 = vadd.f32 %v3455, 1.0
      %v3632 = vadd.f32 %v3457, 1.0
      %v3633 = vadd.f32 %v3459, 1.0
      %v3634 = vadd.f32 %v3461, 1.0
      %v3635 = vadd.f32 %v3463, 1.0
      %v3636 = vadd.f32 %v3465, 1.0
      %v3637 = vadd.f32 %v3467, 1.0
      %v3638 = vadd.f32 %v3469, 1.0
      %v3639 = vadd.f32 %v3471, 1.0
      %v3640 = vadd.f32 %v3473, 1.0
      %v3641 = vadd.f32 %v3475, 1.0
      %v3642 = vadd.f32 %v3477, 1.0
      %v3643 = vadd.f32 %v3479, 1.0
      %v3644 = vadd.f32 %v3481, 1.0
      %v3645 = vadd.f32 %v3483, 1.0
      %v3646 = vadd.f32 %v3485, 1.0
      %v3647 = vadd.f32 %v3487, 1.0
      %v3648 = vadd.f32 %v3489, 1.0
      %v3649 = vadd.f32 %v3491, 1.0
      %v3650 = vadd.f32 %v3493, 1.0
      %v3651 = vadd.f32 %v3495, 1.0
      %v3652 = vadd.f32 %v3497, 1.0
      %v3653 = vadd.f32 %v3499, 1.0
      %v3654 = vadd.f32 %v3501, 1.0
      %v3655 = vadd.f32 %v3503, 1.0
      %v3656 = vadd.f32 %v3505, 1.0
      %v3657 = vadd.f32 %v3507, 1.0
      %v3658 = vadd.f32 %v3509, 1.0
      %v3659 = vadd.f32 %v3511, 1.0
      %v3660 = vadd.f32 %v3513, 1.0
      %v3661 = vadd.f32 %v3515, 1.0
      %v3662 = vadd.f32 %v3517, 1.0
      %v3663 = vadd.f32 %v3519, 1.0
      %v3664 = vadd.f32 %v3521, 1.0
      %v3665 = vadd.f32 %v3523, 1.0
      %v3666 = vadd.f32 %v3525, 1.0
      %v3667 = vadd.f32 %v3527, 1.0
      %v3668 = vadd.f32 %v3529, 1.0
      %v3669 = vadd.f32 %v3531, 1.0
      %v3670 = vadd.f32 %v3533, 1.0
      %v3671 = vadd.f32 %v3535, 1.0
      %v3672 = vadd.f32 %v3537, 1.0
      %v3673 = vadd.f32 %v3539, 1.0
      %v3674 = vadd.f32 %v3541, 1.0
      %v3675 = vadd.f32 %v3543, 1.0
      %v3676 = vadd.f32 %v3545, 1.0
      %v3677 = vadd.f32 %v3547, 1.0
      %v3678 = vadd.f32 %v3549, 1.0
      %v3679 = vadd.f32 %v3551, 1.0
      %v3680 = vrcp.pop %v3552
      %v3681 = vmul.f32 1.0, %v3680
      %v3682 = vrcp.pop %v3553
      %v3683 = vmul.f32 1.0, %v3682
      %v3684 = vrcp.pop %v3554
      %v3685 = vmul.f32 1.0, %v3684
      %v3686 = vrcp.pop %v3555
      %v3687 = vmul.f32 1.0, %v3686
      %v3688 = vrcp.pop %v3556
      %v3689 = vmul.f32 1.0, %v3688
      %v3690 = vrcp.pop %v3557
      %v3691 = vmul.f32 1.0, %v3690
      %v3692 = vrcp.pop %v3558
      %v3693 = vmul.f32 1.0, %v3692
      %v3694 = vrcp.pop %v3559
      %v3695 = vmul.f32 1.0, %v3694
      %v3696 = vrcp.pop %v3560
      %v3697 = vmul.f32 1.0, %v3696
      %v3698 = vrcp.pop %v3561
      %v3699 = vmul.f32 1.0, %v3698
      %v3700 = vrcp.pop %v3562
      %v3701 = vmul.f32 1.0, %v3700
      %v3702 = vrcp.pop %v3563
      %v3703 = vmul.f32 1.0, %v3702
      %v3704 = vrcp.pop %v3564
      %v3705 = vmul.f32 1.0, %v3704
      %v3706 = vrcp.pop %v3565
      %v3707 = vmul.f32 1.0, %v3706
      %v3708 = vrcp.pop %v3566
      %v3709 = vmul.f32 1.0, %v3708
      %v3710 = vrcp.pop %v3567
      %v3711 = vmul.f32 1.0, %v3710
      %v3712 = vrcp.pop %v3568
      %v3713 = vmul.f32 1.0, %v3712
      %v3714 = vrcp.pop %v3569
      %v3715 = vmul.f32 1.0, %v3714
      %v3716 = vrcp.pop %v3570
      %v3717 = vmul.f32 1.0, %v3716
      %v3718 = vrcp.pop %v3571
      %v3719 = vmul.f32 1.0, %v3718
      %v3720 = vrcp.pop %v3572
      %v3721 = vmul.f32 1.0, %v3720
      %v3722 = vrcp.pop %v3573
      %v3723 = vmul.f32 1.0, %v3722
      %v3724 = vrcp.pop %v3574
      %v3725 = vmul.f32 1.0, %v3724
      %v3726 = vrcp.pop %v3575
      %v3727 = vmul.f32 1.0, %v3726
      %v3728 = vrcp.pop %v3576
      %v3729 = vmul.f32 1.0, %v3728
      %v3730 = vrcp.pop %v3577
      %v3731 = vmul.f32 1.0, %v3730
      %v3732 = vrcp.pop %v3578
      %v3733 = vmul.f32 1.0, %v3732
      %v3734 = vrcp.pop %v3579
      %v3735 = vmul.f32 1.0, %v3734
      %v3736 = vrcp.pop %v3580
      %v3737 = vmul.f32 1.0, %v3736
      %v3738 = vrcp.pop %v3581
      %v3739 = vmul.f32 1.0, %v3738
      %v3740 = vrcp.pop %v3582
      %v3741 = vmul.f32 1.0, %v3740
      %v3742 = vrcp.pop %v3583
      %v3743 = vmul.f32 1.0, %v3742
      %v3744 = vrcp.pop %v3584
      %v3745 = vmul.f32 1.0, %v3744
      %v3746 = vrcp.pop %v3585
      %v3747 = vmul.f32 1.0, %v3746
      %v3748 = vrcp.pop %v3586
      %v3749 = vmul.f32 1.0, %v3748
      %v3750 = vrcp.pop %v3587
      %v3751 = vmul.f32 1.0, %v3750
      %v3752 = vrcp.pop %v3588
      %v3753 = vmul.f32 1.0, %v3752
      %v3754 = vrcp.pop %v3589
      %v3755 = vmul.f32 1.0, %v3754
      %v3756 = vrcp.pop %v3590
      %v3757 = vmul.f32 1.0, %v3756
      %v3758 = vrcp.pop %v3591
      %v3759 = vmul.f32 1.0, %v3758
      %v3760 = vrcp.pop %v3592
      %v3761 = vmul.f32 1.0, %v3760
      %v3762 = vrcp.pop %v3593
      %v3763 = vmul.f32 1.0, %v3762
      %v3764 = vrcp.pop %v3594
      %v3765 = vmul.f32 1.0, %v3764
      %v3766 = vrcp.pop %v3595
      %v3767 = vmul.f32 1.0, %v3766
      %v3768 = vrcp.pop %v3596
      %v3769 = vmul.f32 1.0, %v3768
      %v3770 = vrcp.pop %v3597
      %v3771 = vmul.f32 1.0, %v3770
      %v3772 = vrcp.pop %v3598
      %v3773 = vmul.f32 1.0, %v3772
      %v3774 = vrcp.pop %v3599
      %v3775 = vmul.f32 1.0, %v3774
      %v3776 = vrcp.pop %v3600
      %v3777 = vmul.f32 1.0, %v3776
      %v3778 = vrcp.pop %v3601
      %v3779 = vmul.f32 1.0, %v3778
      %v3780 = vrcp.pop %v3602
      %v3781 = vmul.f32 1.0, %v3780
      %v3782 = vrcp.pop %v3603
      %v3783 = vmul.f32 1.0, %v3782
      %v3784 = vrcp.pop %v3604
      %v3785 = vmul.f32 1.0, %v3784
      %v3786 = vrcp.pop %v3605
      %v3787 = vmul.f32 1.0, %v3786
      %v3788 = vrcp.pop %v3606
      %v3789 = vmul.f32 1.0, %v3788
      %v3790 = vrcp.pop %v3607
      %v3791 = vmul.f32 1.0, %v3790
      %v3792 = vrcp.pop %v3608
      %v3793 = vmul.f32 1.0, %v3792
      %v3794 = vrcp.pop %v3609
      %v3795 = vmul.f32 1.0, %v3794
      %v3796 = vrcp.pop %v3610
      %v3797 = vmul.f32 1.0, %v3796
      %v3798 = vrcp.pop %v3611
      %v3799 = vmul.f32 1.0, %v3798
      %v3800 = vrcp.pop %v3612
      %v3801 = vmul.f32 1.0, %v3800
      %v3802 = vrcp.pop %v3613
      %v3803 = vmul.f32 1.0, %v3802
      %v3804 = vrcp.pop %v3614
      %v3805 = vmul.f32 1.0, %v3804
      %v3806 = vrcp.pop %v3615
      %v3807 = vmul.f32 1.0, %v3806
      %v3808 = vrcp.pop %v3616
      %v3809 = vmul.f32 1.0, %v3808
      %v3810 = vrcp.pop %v3617
      %v3811 = vmul.f32 1.0, %v3810
      %v3812 = vrcp.pop %v3618
      %v3813 = vmul.f32 1.0, %v3812
      %v3814 = vrcp.pop %v3619
      %v3815 = vmul.f32 1.0, %v3814
      %v3816 = vrcp.pop %v3620
      %v3817 = vmul.f32 1.0, %v3816
      %v3818 = vrcp.pop %v3621
      %v3819 = vmul.f32 1.0, %v3818
      %v3820 = vrcp.pop %v3622
      %v3821 = vmul.f32 1.0, %v3820
      %v3822 = vrcp.pop %v3623
      %v3823 = vmul.f32 1.0, %v3822
      %v3824 = vrcp.pop %v3624
      %v3825 = vmul.f32 1.0, %v3824
      %v3826 = vrcp.pop %v3625
      %v3827 = vmul.f32 1.0, %v3826
      %v3828 = vrcp.pop %v3626
      %v3829 = vmul.f32 1.0, %v3828
      %v3830 = vrcp.pop %v3627
      %v3831 = vmul.f32 1.0, %v3830
      %v3832 = vrcp.pop %v3628
      %v3833 = vmul.f32 1.0, %v3832
      %v3834 = vrcp.pop %v3629
      %v3835 = vmul.f32 1.0, %v3834
      %v3836 = vrcp.pop %v3630
      %v3837 = vmul.f32 1.0, %v3836
      %v3838 = vrcp.pop %v3631
      %v3839 = vmul.f32 1.0, %v3838
      %v3840 = vrcp.pop %v3632
      %v3841 = vmul.f32 1.0, %v3840
      %v3842 = vrcp.pop %v3633
      %v3843 = vmul.f32 1.0, %v3842
      %v3844 = vrcp.pop %v3634
      %v3845 = vmul.f32 1.0, %v3844
      %v3846 = vrcp.pop %v3635
      %v3847 = vmul.f32 1.0, %v3846
      %v3848 = vrcp.pop %v3636
      %v3849 = vmul.f32 1.0, %v3848
      %v3850 = vrcp.pop %v3637
      %v3851 = vmul.f32 1.0, %v3850
      %v3852 = vrcp.pop %v3638
      %v3853 = vmul.f32 1.0, %v3852
      %v3854 = vrcp.pop %v3639
      %v3855 = vmul.f32 1.0, %v3854
      %v3856 = vrcp.pop %v3640
      %v3857 = vmul.f32 1.0, %v3856
      %v3858 = vrcp.pop %v3641
      %v3859 = vmul.f32 1.0, %v3858
      %v3860 = vrcp.pop %v3642
      %v3861 = vmul.f32 1.0, %v3860
      %v3862 = vrcp.pop %v3643
      %v3863 = vmul.f32 1.0, %v3862
      %v3864 = vrcp.pop %v3644
      %v3865 = vmul.f32 1.0, %v3864
      %v3866 = vrcp.pop %v3645
      %v3867 = vmul.f32 1.0, %v3866
      %v3868 = vrcp.pop %v3646
      %v3869 = vmul.f32 1.0, %v3868
      %v3870 = vrcp.pop %v3647
      %v3871 = vmul.f32 1.0, %v3870
      %v3872 = vrcp.pop %v3648
      %v3873 = vmul.f32 1.0, %v3872
      %v3874 = vrcp.pop %v3649
      %v3875 = vmul.f32 1.0, %v3874
      %v3876 = vrcp.pop %v3650
      %v3877 = vmul.f32 1.0, %v3876
      %v3878 = vrcp.pop %v3651
      %v3879 = vmul.f32 1.0, %v3878
      %v3880 = vrcp.pop %v3652
      %v3881 = vmul.f32 1.0, %v3880
      %v3882 = vrcp.pop %v3653
      %v3883 = vmul.f32 1.0, %v3882
      %v3884 = vrcp.pop %v3654
      %v3885 = vmul.f32 1.0, %v3884
      %v3886 = vrcp.pop %v3655
      %v3887 = vmul.f32 1.0, %v3886
      %v3888 = vrcp.pop %v3656
      %v3889 = vmul.f32 1.0, %v3888
      %v3890 = vrcp.pop %v3657
      %v3891 = vmul.f32 1.0, %v3890
      %v3892 = vrcp.pop %v3658
      %v3893 = vmul.f32 1.0, %v3892
      %v3894 = vrcp.pop %v3659
      %v3895 = vmul.f32 1.0, %v3894
      %v3896 = vrcp.pop %v3660
      %v3897 = vmul.f32 1.0, %v3896
      %v3898 = vrcp.pop %v3661
      %v3899 = vmul.f32 1.0, %v3898
      %v3900 = vrcp.pop %v3662
      %v3901 = vmul.f32 1.0, %v3900
      %v3902 = vrcp.pop %v3663
      %v3903 = vmul.f32 1.0, %v3902
      %v3904 = vrcp.pop %v3664
      %v3905 = vmul.f32 1.0, %v3904
      %v3906 = vrcp.pop %v3665
      %v3907 = vmul.f32 1.0, %v3906
      %v3908 = vrcp.pop %v3666
      %v3909 = vmul.f32 1.0, %v3908
      %v3910 = vrcp.pop %v3667
      %v3911 = vmul.f32 1.0, %v3910
      %v3912 = vrcp.pop %v3668
      %v3913 = vmul.f32 1.0, %v3912
      %v3914 = vrcp.pop %v3669
      %v3915 = vmul.f32 1.0, %v3914
      %v3916 = vrcp.pop %v3670
      %v3917 = vmul.f32 1.0, %v3916
      %v3918 = vrcp.pop %v3671
      %v3919 = vmul.f32 1.0, %v3918
      %v3920 = vrcp.pop %v3672
      %v3921 = vmul.f32 1.0, %v3920
      %v3922 = vrcp.pop %v3673
      %v3923 = vmul.f32 1.0, %v3922
      %v3924 = vrcp.pop %v3674
      %v3925 = vmul.f32 1.0, %v3924
      %v3926 = vrcp.pop %v3675
      %v3927 = vmul.f32 1.0, %v3926
      %v3928 = vrcp.pop %v3676
      %v3929 = vmul.f32 1.0, %v3928
      %v3930 = vrcp.pop %v3677
      %v3931 = vmul.f32 1.0, %v3930
      %v3932 = vrcp.pop %v3678
      %v3933 = vmul.f32 1.0, %v3932
      %v3934 = vrcp.pop %v3679
      %v3935 = vmul.f32 1.0, %v3934
      %v3936 = vmul.f32 %v2658, %v3681
      %v3937 = vmul.f32 %v2661, %v3683
      %v3938 = vmul.f32 %v2666, %v3685
      %v3939 = vmul.f32 %v2669, %v3687
      %v3940 = vmul.f32 %v2674, %v3689
      %v3941 = vmul.f32 %v2677, %v3691
      %v3942 = vmul.f32 %v2682, %v3693
      %v3943 = vmul.f32 %v2685, %v3695
      %v3944 = vmul.f32 %v2690, %v3697
      %v3945 = vmul.f32 %v2693, %v3699
      %v3946 = vmul.f32 %v2698, %v3701
      %v3947 = vmul.f32 %v2701, %v3703
      %v3948 = vmul.f32 %v2706, %v3705
      %v3949 = vmul.f32 %v2709, %v3707
      %v3950 = vmul.f32 %v2714, %v3709
      %v3951 = vmul.f32 %v2717, %v3711
      %v3952 = vmul.f32 %v2722, %v3713
      %v3953 = vmul.f32 %v2725, %v3715
      %v3954 = vmul.f32 %v2730, %v3717
      %v3955 = vmul.f32 %v2733, %v3719
      %v3956 = vmul.f32 %v2738, %v3721
      %v3957 = vmul.f32 %v2741, %v3723
      %v3958 = vmul.f32 %v2746, %v3725
      %v3959 = vmul.f32 %v2749, %v3727
      %v3960 = vmul.f32 %v2754, %v3729
      %v3961 = vmul.f32 %v2757, %v3731
      %v3962 = vmul.f32 %v2762, %v3733
      %v3963 = vmul.f32 %v2765, %v3735
      %v3964 = vmul.f32 %v2770, %v3737
      %v3965 = vmul.f32 %v2773, %v3739
      %v3966 = vmul.f32 %v2778, %v3741
      %v3967 = vmul.f32 %v2781, %v3743
      %v3968 = vmul.f32 %v2786, %v3745
      %v3969 = vmul.f32 %v2789, %v3747
      %v3970 = vmul.f32 %v2794, %v3749
      %v3971 = vmul.f32 %v2797, %v3751
      %v3972 = vmul.f32 %v2802, %v3753
      %v3973 = vmul.f32 %v2805, %v3755
      %v3974 = vmul.f32 %v2810, %v3757
      %v3975 = vmul.f32 %v2813, %v3759
      %v3976 = vmul.f32 %v2818, %v3761
      %v3977 = vmul.f32 %v2821, %v3763
      %v3978 = vmul.f32 %v2826, %v3765
      %v3979 = vmul.f32 %v2829, %v3767
      %v3980 = vmul.f32 %v2834, %v3769
      %v3981 = vmul.f32 %v2837, %v3771
      %v3982 = vmul.f32 %v2842, %v3773
      %v3983 = vmul.f32 %v2845, %v3775
      %v3984 = vmul.f32 %v2850, %v3777
      %v3985 = vmul.f32 %v2853, %v3779
      %v3986 = vmul.f32 %v2858, %v3781
      %v3987 = vmul.f32 %v2861, %v3783
      %v3988 = vmul.f32 %v2866, %v3785
      %v3989 = vmul.f32 %v2869, %v3787
      %v3990 = vmul.f32 %v2874, %v3789
      %v3991 = vmul.f32 %v2877, %v3791
      %v3992 = vmul.f32 %v2882, %v3793
      %v3993 = vmul.f32 %v2885, %v3795
      %v3994 = vmul.f32 %v2890, %v3797
      %v3995 = vmul.f32 %v2893, %v3799
      %v3996 = vmul.f32 %v2898, %v3801
      %v3997 = vmul.f32 %v2901, %v3803
      %v3998 = vmul.f32 %v2906, %v3805
      %v3999 = vmul.f32 %v2909, %v3807
      %v4000 = vmul.f32 %v2914, %v3809
      %v4001 = vmul.f32 %v2917, %v3811
      %v4002 = vmul.f32 %v2922, %v3813
      %v4003 = vmul.f32 %v2925, %v3815
      %v4004 = vmul.f32 %v2930, %v3817
      %v4005 = vmul.f32 %v2933, %v3819
      %v4006 = vmul.f32 %v2938, %v3821
      %v4007 = vmul.f32 %v2941, %v3823
      %v4008 = vmul.f32 %v2946, %v3825
      %v4009 = vmul.f32 %v2949, %v3827
      %v4010 = vmul.f32 %v2954, %v3829
      %v4011 = vmul.f32 %v2957, %v3831
      %v4012 = vmul.f32 %v2962, %v3833
      %v4013 = vmul.f32 %v2965, %v3835
      %v4014 = vmul.f32 %v2970, %v3837
      %v4015 = vmul.f32 %v2973, %v3839
      %v4016 = vmul.f32 %v2978, %v3841
      %v4017 = vmul.f32 %v2981, %v3843
      %v4018 = vmul.f32 %v2986, %v3845
      %v4019 = vmul.f32 %v2989, %v3847
      %v4020 = vmul.f32 %v2994, %v3849
      %v4021 = vmul.f32 %v2997, %v3851
      %v4022 = vmul.f32 %v3002, %v3853
      %v4023 = vmul.f32 %v3005, %v3855
      %v4024 = vmul.f32 %v3010, %v3857
      %v4025 = vmul.f32 %v3013, %v3859
      %v4026 = vmul.f32 %v3018, %v3861
      %v4027 = vmul.f32 %v3021, %v3863
      %v4028 = vmul.f32 %v3026, %v3865
      %v4029 = vmul.f32 %v3029, %v3867
      %v4030 = vmul.f32 %v3034, %v3869
      %v4031 = vmul.f32 %v3037, %v3871
      %v4032 = vmul.f32 %v3042, %v3873
      %v4033 = vmul.f32 %v3045, %v3875
      %v4034 = vmul.f32 %v3050, %v3877
      %v4035 = vmul.f32 %v3053, %v3879
      %v4036 = vmul.f32 %v3058, %v3881
      %v4037 = vmul.f32 %v3061, %v3883
      %v4038 = vmul.f32 %v3066, %v3885
      %v4039 = vmul.f32 %v3069, %v3887
      %v4040 = vmul.f32 %v3074, %v3889
      %v4041 = vmul.f32 %v3077, %v3891
      %v4042 = vmul.f32 %v3082, %v3893
      %v4043 = vmul.f32 %v3085, %v3895
      %v4044 = vmul.f32 %v3090, %v3897
      %v4045 = vmul.f32 %v3093, %v3899
      %v4046 = vmul.f32 %v3098, %v3901
      %v4047 = vmul.f32 %v3101, %v3903
      %v4048 = vmul.f32 %v3106, %v3905
      %v4049 = vmul.f32 %v3109, %v3907
      %v4050 = vmul.f32 %v3114, %v3909
      %v4051 = vmul.f32 %v3117, %v3911
      %v4052 = vmul.f32 %v3122, %v3913
      %v4053 = vmul.f32 %v3125, %v3915
      %v4054 = vmul.f32 %v3130, %v3917
      %v4055 = vmul.f32 %v3133, %v3919
      %v4056 = vmul.f32 %v3138, %v3921
      %v4057 = vmul.f32 %v3141, %v3923
      %v4058 = vmul.f32 %v3146, %v3925
      %v4059 = vmul.f32 %v3149, %v3927
      %v4060 = vmul.f32 %v3154, %v3929
      %v4061 = vmul.f32 %v3157, %v3931
      %v4062 = vmul.f32 %v3162, %v3933
      %v4063 = vmul.f32 %v3165, %v3935
      %v4064 = vpack.c.bf16 %v3937, %v3936
      %v4065 = vpack.c.bf16 %v3939, %v3938
      %v4066 = vpack.c.bf16 %v3941, %v3940
      %v4067 = vpack.c.bf16 %v3943, %v3942
      %v4068 = vpack.c.bf16 %v3945, %v3944
      %v4069 = vpack.c.bf16 %v3947, %v3946
      %v4070 = vpack.c.bf16 %v3949, %v3948
      %v4071 = vpack.c.bf16 %v3951, %v3950
      %v4072 = vpack.c.bf16 %v3953, %v3952
      %v4073 = vpack.c.bf16 %v3955, %v3954
      %v4074 = vpack.c.bf16 %v3957, %v3956
      %v4075 = vpack.c.bf16 %v3959, %v3958
      %v4076 = vpack.c.bf16 %v3961, %v3960
      %v4077 = vpack.c.bf16 %v3963, %v3962
      %v4078 = vpack.c.bf16 %v3965, %v3964
      %v4079 = vpack.c.bf16 %v3967, %v3966
      %v4080 = vpack.c.bf16 %v3969, %v3968
      %v4081 = vpack.c.bf16 %v3971, %v3970
      %v4082 = vpack.c.bf16 %v3973, %v3972
      %v4083 = vpack.c.bf16 %v3975, %v3974
      %v4084 = vpack.c.bf16 %v3977, %v3976
      %v4085 = vpack.c.bf16 %v3979, %v3978
      %v4086 = vpack.c.bf16 %v3981, %v3980
      %v4087 = vpack.c.bf16 %v3983, %v3982
      %v4088 = vpack.c.bf16 %v3985, %v3984
      %v4089 = vpack.c.bf16 %v3987, %v3986
      %v4090 = vpack.c.bf16 %v3989, %v3988
      %v4091 = vpack.c.bf16 %v3991, %v3990
      %v4092 = vpack.c.bf16 %v3993, %v3992
      %v4093 = vpack.c.bf16 %v3995, %v3994
      %v4094 = vpack.c.bf16 %v3997, %v3996
      %v4095 = vpack.c.bf16 %v3999, %v3998
      %v4096 = vpack.c.bf16 %v4001, %v4000
      %v4097 = vpack.c.bf16 %v4003, %v4002
      %v4098 = vpack.c.bf16 %v4005, %v4004
      %v4099 = vpack.c.bf16 %v4007, %v4006
      %v4100 = vpack.c.bf16 %v4009, %v4008
      %v4101 = vpack.c.bf16 %v4011, %v4010
      %v4102 = vpack.c.bf16 %v4013, %v4012
      %v4103 = vpack.c.bf16 %v4015, %v4014
      %v4104 = vpack.c.bf16 %v4017, %v4016
      %v4105 = vpack.c.bf16 %v4019, %v4018
      %v4106 = vpack.c.bf16 %v4021, %v4020
      %v4107 = vpack.c.bf16 %v4023, %v4022
      %v4108 = vpack.c.bf16 %v4025, %v4024
      %v4109 = vpack.c.bf16 %v4027, %v4026
      %v4110 = vpack.c.bf16 %v4029, %v4028
      %v4111 = vpack.c.bf16 %v4031, %v4030
      %v4112 = vpack.c.bf16 %v4033, %v4032
      %v4113 = vpack.c.bf16 %v4035, %v4034
      %v4114 = vpack.c.bf16 %v4037, %v4036
      %v4115 = vpack.c.bf16 %v4039, %v4038
      %v4116 = vpack.c.bf16 %v4041, %v4040
      %v4117 = vpack.c.bf16 %v4043, %v4042
      %v4118 = vpack.c.bf16 %v4045, %v4044
      %v4119 = vpack.c.bf16 %v4047, %v4046
      %v4120 = vpack.c.bf16 %v4049, %v4048
      %v4121 = vpack.c.bf16 %v4051, %v4050
      %v4122 = vpack.c.bf16 %v4053, %v4052
      %v4123 = vpack.c.bf16 %v4055, %v4054
      %v4124 = vpack.c.bf16 %v4057, %v4056
      %v4125 = vpack.c.bf16 %v4059, %v4058
      %v4126 = vpack.c.bf16 %v4061, %v4060
      %v4127 = vpack.c.bf16 %v4063, %v4062
      %v4128 = vld [vmem:[%s6] sm:$0xf]
      %v4129 = vld [vmem:[%s6 + $0x4] sm:$0xf]
      %v4130 = vld [vmem:[%s6 + $0x8] sm:$0xf]
      %v4131 = vld [vmem:[%s6 + $0xc] sm:$0xf]
      %v4132 = vld [vmem:[%s7] sm:$0x1]
      %v4134 = vlaneseq
      %v4135 = vshrl.u32 %v4134, 7
      %v4136 = vsub.s32 0, %v4135
      %v4137 = vrot.slane %v4132, %v4136
      %v4143 = vunpack.c.l.b16 %v4128
      %v4144 = vunpack.c.l.b16 %v4129
      %v4145 = vunpack.c.l.b16 %v4130
      %v4146 = vunpack.c.l.b16 %v4131
      %v4147 = vpack.c.b16 %v4144, %v4143
      %v4148 = vpack.c.b16 %v4146, %v4145
      %vm4151 = vcmask 261120
      %v4153 = vsel %vm4151, %v4064, 0
      %v4156 = vsel %vm4151, %v4065, 0
      %v4159 = vsel %vm4151, %v4066, 0
      %v4162 = vsel %vm4151, %v4067, 0
      %v4165 = vsel %vm4151, %v4068, 0
      %v4168 = vsel %vm4151, %v4069, 0
      %v4171 = vsel %vm4151, %v4070, 0
      %v4174 = vsel %vm4151, %v4071, 0
      %v4177 = vsel %vm4151, %v4072, 0
      %v4180 = vsel %vm4151, %v4073, 0
      %v4183 = vsel %vm4151, %v4074, 0
      %v4186 = vsel %vm4151, %v4075, 0
      %v4189 = vsel %vm4151, %v4076, 0
      %v4192 = vsel %vm4151, %v4077, 0
      %v4195 = vsel %vm4151, %v4078, 0
      %v4198 = vsel %vm4151, %v4079, 0
      %v4201 = vsel %vm4151, %v4080, 0
      %v4204 = vsel %vm4151, %v4081, 0
      %v4207 = vsel %vm4151, %v4082, 0
      %v4210 = vsel %vm4151, %v4083, 0
      %v4213 = vsel %vm4151, %v4084, 0
      %v4216 = vsel %vm4151, %v4085, 0
      %v4219 = vsel %vm4151, %v4086, 0
      %v4222 = vsel %vm4151, %v4087, 0
      %v4225 = vsel %vm4151, %v4088, 0
      %v4228 = vsel %vm4151, %v4089, 0
      %v4231 = vsel %vm4151, %v4090, 0
      %v4234 = vsel %vm4151, %v4091, 0
      %v4237 = vsel %vm4151, %v4092, 0
      %v4240 = vsel %vm4151, %v4093, 0
      %v4243 = vsel %vm4151, %v4094, 0
      %v4246 = vsel %vm4151, %v4095, 0
      %v4249 = vsel %vm4151, %v4096, 0
      %v4252 = vsel %vm4151, %v4097, 0
      %v4255 = vsel %vm4151, %v4098, 0
      %v4258 = vsel %vm4151, %v4099, 0
      %v4261 = vsel %vm4151, %v4100, 0
      %v4264 = vsel %vm4151, %v4101, 0
      %v4267 = vsel %vm4151, %v4102, 0
      %v4270 = vsel %vm4151, %v4103, 0
      %v4273 = vsel %vm4151, %v4104, 0
      %v4276 = vsel %vm4151, %v4105, 0
      %v4279 = vsel %vm4151, %v4106, 0
      %v4282 = vsel %vm4151, %v4107, 0
      %v4285 = vsel %vm4151, %v4108, 0
      %v4288 = vsel %vm4151, %v4109, 0
      %v4291 = vsel %vm4151, %v4110, 0
      %v4294 = vsel %vm4151, %v4111, 0
      %v4297 = vsel %vm4151, %v4112, 0
      %v4300 = vsel %vm4151, %v4113, 0
      %v4303 = vsel %vm4151, %v4114, 0
      %v4306 = vsel %vm4151, %v4115, 0
      %v4309 = vsel %vm4151, %v4116, 0
      %v4312 = vsel %vm4151, %v4117, 0
      %v4315 = vsel %vm4151, %v4118, 0
      %v4318 = vsel %vm4151, %v4119, 0
      %v4321 = vsel %vm4151, %v4120, 0
      %v4324 = vsel %vm4151, %v4121, 0
      %v4327 = vsel %vm4151, %v4122, 0
      %v4330 = vsel %vm4151, %v4123, 0
      %v4333 = vsel %vm4151, %v4124, 0
      %v4336 = vsel %vm4151, %v4125, 0
      %v4339 = vsel %vm4151, %v4126, 0
      %v4342 = vsel %vm4151, %v4127, 0
      %4344 = vmatprep.subr.bf16.mxu0 0
      %4345 = vmatpush1.bf16.msra.mxu0 0
      %4346 = vmatprep.subr.bf16.mxu0 0
      %4347 = vmatpush1.bf16.msra.mxu0 0
      %4348 = vmatprep.subr.bf16.mxu0 0
      %4349 = vmatpush1.bf16.msra.mxu0 0
      %4350 = vmatprep.subr.bf16.mxu0 0
      %4351 = vmatpush1.bf16.msra.mxu0 0
      %4352 = vmatprep.subr.bf16.mxu0 0
      %4353 = vmatpush1.bf16.msra.mxu0 0
      %4354 = vmatprep.subr.bf16.mxu0 0
      %4355 = vmatpush1.bf16.msra.mxu0 0
      %4356 = vmatprep.subr.bf16.mxu0 0
      %4357 = vmatpush1.bf16.msra.mxu0 %v4148
      %4358 = vmatprep.subr.bf16.mxu0 0
      %4359 = vmatpush1.bf16.msra.mxu0 %v4147
      %4360 = vmatprep.subr.bf16.mxu0 0
      %4361 = vmatpush2.bf16.msra.mxu0 0
      %4362 = vmatprep.subr.bf16.mxu0 0
      %4363 = vmatpush2.bf16.msra.mxu0 0
      %4364 = vmatprep.subr.bf16.mxu0 0
      %4365 = vmatpush2.bf16.msra.mxu0 0
      %4366 = vmatprep.subr.bf16.mxu0 0
      %4367 = vmatpush2.bf16.msra.mxu0 0
      %4368 = vmatprep.subr.bf16.mxu0 0
      %4369 = vmatpush2.bf16.msra.mxu0 0
      %4370 = vmatprep.subr.bf16.mxu0 0
      %4371 = vmatpush2.bf16.msra.mxu0 0
      %4372 = vmatprep.subr.bf16.mxu0 0
      %4373 = vmatpush2.bf16.msra.mxu0 0
      %4374 = vmatprep.subr.bf16.mxu0 0
      %4375 = vmatpush2.bf16.msra.mxu0 0
      %4376 = vmatprep.mubr.bf16.mxu0 0
      %4377 = vmatmul.mubr.bf16.gmra.mxu0 %v4153
      %v4378 = vpop.f32.mrf.mxu0
      %v4379 = vadd.f32 %v4137, %v4378
      %v4380 = vpop.f32.mrf.mxu0
      %v4381 = vpop.f32.mrf.mxu0
      %v4382 = vadd.f32 %v4137, %v4381
      %v4383 = vpop.f32.mrf.mxu0
      %4384 = vmatprep.mubr.bf16.mxu0 0
      %4385 = vmatmul.mubr.bf16.gmra.mxu0 %v4156
      %v4386 = vpop.f32.mrf.mxu0
      %v4387 = vadd.f32 %v4137, %v4386
      %v4388 = vpop.f32.mrf.mxu0
      %v4389 = vpop.f32.mrf.mxu0
      %v4390 = vadd.f32 %v4137, %v4389
      %v4391 = vpop.f32.mrf.mxu0
      %4392 = vmatprep.mubr.bf16.mxu0 0
      %4393 = vmatmul.mubr.bf16.gmra.mxu0 %v4159
      %v4394 = vpop.f32.mrf.mxu0
      %v4395 = vadd.f32 %v4137, %v4394
      %v4396 = vpop.f32.mrf.mxu0
      %v4397 = vpop.f32.mrf.mxu0
      %v4398 = vadd.f32 %v4137, %v4397
      %v4399 = vpop.f32.mrf.mxu0
      %4400 = vmatprep.mubr.bf16.mxu0 0
      %4401 = vmatmul.mubr.bf16.gmra.mxu0 %v4162
      %v4402 = vpop.f32.mrf.mxu0
      %v4403 = vadd.f32 %v4137, %v4402
      %v4404 = vpop.f32.mrf.mxu0
      %v4405 = vpop.f32.mrf.mxu0
      %v4406 = vadd.f32 %v4137, %v4405
      %v4407 = vpop.f32.mrf.mxu0
      %4408 = vmatprep.mubr.bf16.mxu0 0
      %4409 = vmatmul.mubr.bf16.gmra.mxu0 %v4165
      %v4410 = vpop.f32.mrf.mxu0
      %v4411 = vadd.f32 %v4137, %v4410
      %v4412 = vpop.f32.mrf.mxu0
      %v4413 = vpop.f32.mrf.mxu0
      %v4414 = vadd.f32 %v4137, %v4413
      %v4415 = vpop.f32.mrf.mxu0
      %4416 = vmatprep.mubr.bf16.mxu0 0
      %4417 = vmatmul.mubr.bf16.gmra.mxu0 %v4168
      %v4418 = vpop.f32.mrf.mxu0
      %v4419 = vadd.f32 %v4137, %v4418
      %v4420 = vpop.f32.mrf.mxu0
      %v4421 = vpop.f32.mrf.mxu0
      %v4422 = vadd.f32 %v4137, %v4421
      %v4423 = vpop.f32.mrf.mxu0
      %4424 = vmatprep.mubr.bf16.mxu0 0
      %4425 = vmatmul.mubr.bf16.gmra.mxu0 %v4171
      %v4426 = vpop.f32.mrf.mxu0
      %v4427 = vadd.f32 %v4137, %v4426
      %v4428 = vpop.f32.mrf.mxu0
      %v4429 = vpop.f32.mrf.mxu0
      %v4430 = vadd.f32 %v4137, %v4429
      %v4431 = vpop.f32.mrf.mxu0
      %4432 = vmatprep.mubr.bf16.mxu0 0
      %4433 = vmatmul.mubr.bf16.gmra.mxu0 %v4174
      %v4434 = vpop.f32.mrf.mxu0
      %v4435 = vadd.f32 %v4137, %v4434
      %v4436 = vpop.f32.mrf.mxu0
      %v4437 = vpop.f32.mrf.mxu0
      %v4438 = vadd.f32 %v4137, %v4437
      %v4439 = vpop.f32.mrf.mxu0
      %4440 = vmatprep.mubr.bf16.mxu0 0
      %4441 = vmatmul.mubr.bf16.gmra.mxu0 %v4177
      %v4442 = vpop.f32.mrf.mxu0
      %v4443 = vadd.f32 %v4137, %v4442
      %v4444 = vpop.f32.mrf.mxu0
      %v4445 = vpop.f32.mrf.mxu0
      %v4446 = vadd.f32 %v4137, %v4445
      %v4447 = vpop.f32.mrf.mxu0
      %4448 = vmatprep.mubr.bf16.mxu0 0
      %4449 = vmatmul.mubr.bf16.gmra.mxu0 %v4180
      %v4450 = vpop.f32.mrf.mxu0
      %v4451 = vadd.f32 %v4137, %v4450
      %v4452 = vpop.f32.mrf.mxu0
      %v4453 = vpop.f32.mrf.mxu0
      %v4454 = vadd.f32 %v4137, %v4453
      %v4455 = vpop.f32.mrf.mxu0
      %4456 = vmatprep.mubr.bf16.mxu0 0
      %4457 = vmatmul.mubr.bf16.gmra.mxu0 %v4183
      %v4458 = vpop.f32.mrf.mxu0
      %v4459 = vadd.f32 %v4137, %v4458
      %v4460 = vpop.f32.mrf.mxu0
      %v4461 = vpop.f32.mrf.mxu0
      %v4462 = vadd.f32 %v4137, %v4461
      %v4463 = vpop.f32.mrf.mxu0
      %4464 = vmatprep.mubr.bf16.mxu0 0
      %4465 = vmatmul.mubr.bf16.gmra.mxu0 %v4186
      %v4466 = vpop.f32.mrf.mxu0
      %v4467 = vadd.f32 %v4137, %v4466
      %v4468 = vpop.f32.mrf.mxu0
      %v4469 = vpop.f32.mrf.mxu0
      %v4470 = vadd.f32 %v4137, %v4469
      %v4471 = vpop.f32.mrf.mxu0
      %4472 = vmatprep.mubr.bf16.mxu0 0
      %4473 = vmatmul.mubr.bf16.gmra.mxu0 %v4189
      %v4474 = vpop.f32.mrf.mxu0
      %v4475 = vadd.f32 %v4137, %v4474
      %v4476 = vpop.f32.mrf.mxu0
      %v4477 = vpop.f32.mrf.mxu0
      %v4478 = vadd.f32 %v4137, %v4477
      %v4479 = vpop.f32.mrf.mxu0
      %4480 = vmatprep.mubr.bf16.mxu0 0
      %4481 = vmatmul.mubr.bf16.gmra.mxu0 %v4192
      %v4482 = vpop.f32.mrf.mxu0
      %v4483 = vadd.f32 %v4137, %v4482
      %v4484 = vpop.f32.mrf.mxu0
      %v4485 = vpop.f32.mrf.mxu0
      %v4486 = vadd.f32 %v4137, %v4485
      %v4487 = vpop.f32.mrf.mxu0
      %4488 = vmatprep.mubr.bf16.mxu0 0
      %4489 = vmatmul.mubr.bf16.gmra.mxu0 %v4195
      %v4490 = vpop.f32.mrf.mxu0
      %v4491 = vadd.f32 %v4137, %v4490
      %v4492 = vpop.f32.mrf.mxu0
      %v4493 = vpop.f32.mrf.mxu0
      %v4494 = vadd.f32 %v4137, %v4493
      %v4495 = vpop.f32.mrf.mxu0
      %4496 = vmatprep.mubr.bf16.mxu0 0
      %4497 = vmatmul.mubr.bf16.gmra.mxu0 %v4198
      %v4498 = vpop.f32.mrf.mxu0
      %v4499 = vadd.f32 %v4137, %v4498
      %v4500 = vpop.f32.mrf.mxu0
      %v4501 = vpop.f32.mrf.mxu0
      %v4502 = vadd.f32 %v4137, %v4501
      %v4503 = vpop.f32.mrf.mxu0
      %4504 = vmatprep.mubr.bf16.mxu0 0
      %4505 = vmatmul.mubr.bf16.gmra.mxu0 %v4201
      %v4506 = vpop.f32.mrf.mxu0
      %v4507 = vadd.f32 %v4137, %v4506
      %v4508 = vpop.f32.mrf.mxu0
      %v4509 = vpop.f32.mrf.mxu0
      %v4510 = vadd.f32 %v4137, %v4509
      %v4511 = vpop.f32.mrf.mxu0
      %4512 = vmatprep.mubr.bf16.mxu0 0
      %4513 = vmatmul.mubr.bf16.gmra.mxu0 %v4204
      %v4514 = vpop.f32.mrf.mxu0
      %v4515 = vadd.f32 %v4137, %v4514
      %v4516 = vpop.f32.mrf.mxu0
      %v4517 = vpop.f32.mrf.mxu0
      %v4518 = vadd.f32 %v4137, %v4517
      %v4519 = vpop.f32.mrf.mxu0
      %4520 = vmatprep.mubr.bf16.mxu0 0
      %4521 = vmatmul.mubr.bf16.gmra.mxu0 %v4207
      %v4522 = vpop.f32.mrf.mxu0
      %v4523 = vadd.f32 %v4137, %v4522
      %v4524 = vpop.f32.mrf.mxu0
      %v4525 = vpop.f32.mrf.mxu0
      %v4526 = vadd.f32 %v4137, %v4525
      %v4527 = vpop.f32.mrf.mxu0
      %4528 = vmatprep.mubr.bf16.mxu0 0
      %4529 = vmatmul.mubr.bf16.gmra.mxu0 %v4210
      %v4530 = vpop.f32.mrf.mxu0
      %v4531 = vadd.f32 %v4137, %v4530
      %v4532 = vpop.f32.mrf.mxu0
      %v4533 = vpop.f32.mrf.mxu0
      %v4534 = vadd.f32 %v4137, %v4533
      %v4535 = vpop.f32.mrf.mxu0
      %4536 = vmatprep.mubr.bf16.mxu0 0
      %4537 = vmatmul.mubr.bf16.gmra.mxu0 %v4213
      %v4538 = vpop.f32.mrf.mxu0
      %v4539 = vadd.f32 %v4137, %v4538
      %v4540 = vpop.f32.mrf.mxu0
      %v4541 = vpop.f32.mrf.mxu0
      %v4542 = vadd.f32 %v4137, %v4541
      %v4543 = vpop.f32.mrf.mxu0
      %4544 = vmatprep.mubr.bf16.mxu0 0
      %4545 = vmatmul.mubr.bf16.gmra.mxu0 %v4216
      %v4546 = vpop.f32.mrf.mxu0
      %v4547 = vadd.f32 %v4137, %v4546
      %v4548 = vpop.f32.mrf.mxu0
      %v4549 = vpop.f32.mrf.mxu0
      %v4550 = vadd.f32 %v4137, %v4549
      %v4551 = vpop.f32.mrf.mxu0
      %4552 = vmatprep.mubr.bf16.mxu0 0
      %4553 = vmatmul.mubr.bf16.gmra.mxu0 %v4219
      %v4554 = vpop.f32.mrf.mxu0
      %v4555 = vadd.f32 %v4137, %v4554
      %v4556 = vpop.f32.mrf.mxu0
      %v4557 = vpop.f32.mrf.mxu0
      %v4558 = vadd.f32 %v4137, %v4557
      %v4559 = vpop.f32.mrf.mxu0
      %4560 = vmatprep.mubr.bf16.mxu0 0
      %4561 = vmatmul.mubr.bf16.gmra.mxu0 %v4222
      %v4562 = vpop.f32.mrf.mxu0
      %v4563 = vadd.f32 %v4137, %v4562
      %v4564 = vpop.f32.mrf.mxu0
      %v4565 = vpop.f32.mrf.mxu0
      %v4566 = vadd.f32 %v4137, %v4565
      %v4567 = vpop.f32.mrf.mxu0
      %4568 = vmatprep.mubr.bf16.mxu0 0
      %4569 = vmatmul.mubr.bf16.gmra.mxu0 %v4225
      %v4570 = vpop.f32.mrf.mxu0
      %v4571 = vadd.f32 %v4137, %v4570
      %v4572 = vpop.f32.mrf.mxu0
      %v4573 = vpop.f32.mrf.mxu0
      %v4574 = vadd.f32 %v4137, %v4573
      %v4575 = vpop.f32.mrf.mxu0
      %4576 = vmatprep.mubr.bf16.mxu0 0
      %4577 = vmatmul.mubr.bf16.gmra.mxu0 %v4228
      %v4578 = vpop.f32.mrf.mxu0
      %v4579 = vadd.f32 %v4137, %v4578
      %v4580 = vpop.f32.mrf.mxu0
      %v4581 = vpop.f32.mrf.mxu0
      %v4582 = vadd.f32 %v4137, %v4581
      %v4583 = vpop.f32.mrf.mxu0
      %4584 = vmatprep.mubr.bf16.mxu0 0
      %4585 = vmatmul.mubr.bf16.gmra.mxu0 %v4231
      %v4586 = vpop.f32.mrf.mxu0
      %v4587 = vadd.f32 %v4137, %v4586
      %v4588 = vpop.f32.mrf.mxu0
      %v4589 = vpop.f32.mrf.mxu0
      %v4590 = vadd.f32 %v4137, %v4589
      %v4591 = vpop.f32.mrf.mxu0
      %4592 = vmatprep.mubr.bf16.mxu0 0
      %4593 = vmatmul.mubr.bf16.gmra.mxu0 %v4234
      %v4594 = vpop.f32.mrf.mxu0
      %v4595 = vadd.f32 %v4137, %v4594
      %v4596 = vpop.f32.mrf.mxu0
      %v4597 = vpop.f32.mrf.mxu0
      %v4598 = vadd.f32 %v4137, %v4597
      %v4599 = vpop.f32.mrf.mxu0
      %4600 = vmatprep.mubr.bf16.mxu0 0
      %4601 = vmatmul.mubr.bf16.gmra.mxu0 %v4237
      %v4602 = vpop.f32.mrf.mxu0
      %v4603 = vadd.f32 %v4137, %v4602
      %v4604 = vpop.f32.mrf.mxu0
      %v4605 = vpop.f32.mrf.mxu0
      %v4606 = vadd.f32 %v4137, %v4605
      %v4607 = vpop.f32.mrf.mxu0
      %4608 = vmatprep.mubr.bf16.mxu0 0
      %4609 = vmatmul.mubr.bf16.gmra.mxu0 %v4240
      %v4610 = vpop.f32.mrf.mxu0
      %v4611 = vadd.f32 %v4137, %v4610
      %v4612 = vpop.f32.mrf.mxu0
      %v4613 = vpop.f32.mrf.mxu0
      %v4614 = vadd.f32 %v4137, %v4613
      %v4615 = vpop.f32.mrf.mxu0
      %4616 = vmatprep.mubr.bf16.mxu0 0
      %4617 = vmatmul.mubr.bf16.gmra.mxu0 %v4243
      %v4618 = vpop.f32.mrf.mxu0
      %v4619 = vadd.f32 %v4137, %v4618
      %v4620 = vpop.f32.mrf.mxu0
      %v4621 = vpop.f32.mrf.mxu0
      %v4622 = vadd.f32 %v4137, %v4621
      %v4623 = vpop.f32.mrf.mxu0
      %4624 = vmatprep.mubr.bf16.mxu0 0
      %4625 = vmatmul.mubr.bf16.gmra.mxu0 %v4246
      %v4626 = vpop.f32.mrf.mxu0
      %v4627 = vadd.f32 %v4137, %v4626
      %v4628 = vpop.f32.mrf.mxu0
      %v4629 = vpop.f32.mrf.mxu0
      %v4630 = vadd.f32 %v4137, %v4629
      %v4631 = vpop.f32.mrf.mxu0
      %4632 = vmatprep.mubr.bf16.mxu0 0
      %4633 = vmatmul.mubr.bf16.gmra.mxu0 %v4249
      %v4634 = vpop.f32.mrf.mxu0
      %v4635 = vadd.f32 %v4137, %v4634
      %v4636 = vpop.f32.mrf.mxu0
      %v4637 = vpop.f32.mrf.mxu0
      %v4638 = vadd.f32 %v4137, %v4637
      %v4639 = vpop.f32.mrf.mxu0
      %4640 = vmatprep.mubr.bf16.mxu0 0
      %4641 = vmatmul.mubr.bf16.gmra.mxu0 %v4252
      %v4642 = vpop.f32.mrf.mxu0
      %v4643 = vadd.f32 %v4137, %v4642
      %v4644 = vpop.f32.mrf.mxu0
      %v4645 = vpop.f32.mrf.mxu0
      %v4646 = vadd.f32 %v4137, %v4645
      %v4647 = vpop.f32.mrf.mxu0
      %4648 = vmatprep.mubr.bf16.mxu0 0
      %4649 = vmatmul.mubr.bf16.gmra.mxu0 %v4255
      %v4650 = vpop.f32.mrf.mxu0
      %v4651 = vadd.f32 %v4137, %v4650
      %v4652 = vpop.f32.mrf.mxu0
      %v4653 = vpop.f32.mrf.mxu0
      %v4654 = vadd.f32 %v4137, %v4653
      %v4655 = vpop.f32.mrf.mxu0
      %4656 = vmatprep.mubr.bf16.mxu0 0
      %4657 = vmatmul.mubr.bf16.gmra.mxu0 %v4258
      %v4658 = vpop.f32.mrf.mxu0
      %v4659 = vadd.f32 %v4137, %v4658
      %v4660 = vpop.f32.mrf.mxu0
      %v4661 = vpop.f32.mrf.mxu0
      %v4662 = vadd.f32 %v4137, %v4661
      %v4663 = vpop.f32.mrf.mxu0
      %4664 = vmatprep.mubr.bf16.mxu0 0
      %4665 = vmatmul.mubr.bf16.gmra.mxu0 %v4261
      %v4666 = vpop.f32.mrf.mxu0
      %v4667 = vadd.f32 %v4137, %v4666
      %v4668 = vpop.f32.mrf.mxu0
      %v4669 = vpop.f32.mrf.mxu0
      %v4670 = vadd.f32 %v4137, %v4669
      %v4671 = vpop.f32.mrf.mxu0
      %4672 = vmatprep.mubr.bf16.mxu0 0
      %4673 = vmatmul.mubr.bf16.gmra.mxu0 %v4264
      %v4674 = vpop.f32.mrf.mxu0
      %v4675 = vadd.f32 %v4137, %v4674
      %v4676 = vpop.f32.mrf.mxu0
      %v4677 = vpop.f32.mrf.mxu0
      %v4678 = vadd.f32 %v4137, %v4677
      %v4679 = vpop.f32.mrf.mxu0
      %4680 = vmatprep.mubr.bf16.mxu0 0
      %4681 = vmatmul.mubr.bf16.gmra.mxu0 %v4267
      %v4682 = vpop.f32.mrf.mxu0
      %v4683 = vadd.f32 %v4137, %v4682
      %v4684 = vpop.f32.mrf.mxu0
      %v4685 = vpop.f32.mrf.mxu0
      %v4686 = vadd.f32 %v4137, %v4685
      %v4687 = vpop.f32.mrf.mxu0
      %4688 = vmatprep.mubr.bf16.mxu0 0
      %4689 = vmatmul.mubr.bf16.gmra.mxu0 %v4270
      %v4690 = vpop.f32.mrf.mxu0
      %v4691 = vadd.f32 %v4137, %v4690
      %v4692 = vpop.f32.mrf.mxu0
      %v4693 = vpop.f32.mrf.mxu0
      %v4694 = vadd.f32 %v4137, %v4693
      %v4695 = vpop.f32.mrf.mxu0
      %4696 = vmatprep.mubr.bf16.mxu0 0
      %4697 = vmatmul.mubr.bf16.gmra.mxu0 %v4273
      %v4698 = vpop.f32.mrf.mxu0
      %v4699 = vadd.f32 %v4137, %v4698
      %v4700 = vpop.f32.mrf.mxu0
      %v4701 = vpop.f32.mrf.mxu0
      %v4702 = vadd.f32 %v4137, %v4701
      %v4703 = vpop.f32.mrf.mxu0
      %4704 = vmatprep.mubr.bf16.mxu0 0
      %4705 = vmatmul.mubr.bf16.gmra.mxu0 %v4276
      %v4706 = vpop.f32.mrf.mxu0
      %v4707 = vadd.f32 %v4137, %v4706
      %v4708 = vpop.f32.mrf.mxu0
      %v4709 = vpop.f32.mrf.mxu0
      %v4710 = vadd.f32 %v4137, %v4709
      %v4711 = vpop.f32.mrf.mxu0
      %4712 = vmatprep.mubr.bf16.mxu0 0
      %4713 = vmatmul.mubr.bf16.gmra.mxu0 %v4279
      %v4714 = vpop.f32.mrf.mxu0
      %v4715 = vadd.f32 %v4137, %v4714
      %v4716 = vpop.f32.mrf.mxu0
      %v4717 = vpop.f32.mrf.mxu0
      %v4718 = vadd.f32 %v4137, %v4717
      %v4719 = vpop.f32.mrf.mxu0
      %4720 = vmatprep.mubr.bf16.mxu0 0
      %4721 = vmatmul.mubr.bf16.gmra.mxu0 %v4282
      %v4722 = vpop.f32.mrf.mxu0
      %v4723 = vadd.f32 %v4137, %v4722
      %v4724 = vpop.f32.mrf.mxu0
      %v4725 = vpop.f32.mrf.mxu0
      %v4726 = vadd.f32 %v4137, %v4725
      %v4727 = vpop.f32.mrf.mxu0
      %4728 = vmatprep.mubr.bf16.mxu0 0
      %4729 = vmatmul.mubr.bf16.gmra.mxu0 %v4285
      %v4730 = vpop.f32.mrf.mxu0
      %v4731 = vadd.f32 %v4137, %v4730
      %v4732 = vpop.f32.mrf.mxu0
      %v4733 = vpop.f32.mrf.mxu0
      %v4734 = vadd.f32 %v4137, %v4733
      %v4735 = vpop.f32.mrf.mxu0
      %4736 = vmatprep.mubr.bf16.mxu0 0
      %4737 = vmatmul.mubr.bf16.gmra.mxu0 %v4288
      %v4738 = vpop.f32.mrf.mxu0
      %v4739 = vadd.f32 %v4137, %v4738
      %v4740 = vpop.f32.mrf.mxu0
      %v4741 = vpop.f32.mrf.mxu0
      %v4742 = vadd.f32 %v4137, %v4741
      %v4743 = vpop.f32.mrf.mxu0
      %4744 = vmatprep.mubr.bf16.mxu0 0
      %4745 = vmatmul.mubr.bf16.gmra.mxu0 %v4291
      %v4746 = vpop.f32.mrf.mxu0
      %v4747 = vadd.f32 %v4137, %v4746
      %v4748 = vpop.f32.mrf.mxu0
      %v4749 = vpop.f32.mrf.mxu0
      %v4750 = vadd.f32 %v4137, %v4749
      %v4751 = vpop.f32.mrf.mxu0
      %4752 = vmatprep.mubr.bf16.mxu0 0
      %4753 = vmatmul.mubr.bf16.gmra.mxu0 %v4294
      %v4754 = vpop.f32.mrf.mxu0
      %v4755 = vadd.f32 %v4137, %v4754
      %v4756 = vpop.f32.mrf.mxu0
      %v4757 = vpop.f32.mrf.mxu0
      %v4758 = vadd.f32 %v4137, %v4757
      %v4759 = vpop.f32.mrf.mxu0
      %4760 = vmatprep.mubr.bf16.mxu0 0
      %4761 = vmatmul.mubr.bf16.gmra.mxu0 %v4297
      %v4762 = vpop.f32.mrf.mxu0
      %v4763 = vadd.f32 %v4137, %v4762
      %v4764 = vpop.f32.mrf.mxu0
      %v4765 = vpop.f32.mrf.mxu0
      %v4766 = vadd.f32 %v4137, %v4765
      %v4767 = vpop.f32.mrf.mxu0
      %4768 = vmatprep.mubr.bf16.mxu0 0
      %4769 = vmatmul.mubr.bf16.gmra.mxu0 %v4300
      %v4770 = vpop.f32.mrf.mxu0
      %v4771 = vadd.f32 %v4137, %v4770
      %v4772 = vpop.f32.mrf.mxu0
      %v4773 = vpop.f32.mrf.mxu0
      %v4774 = vadd.f32 %v4137, %v4773
      %v4775 = vpop.f32.mrf.mxu0
      %4776 = vmatprep.mubr.bf16.mxu0 0
      %4777 = vmatmul.mubr.bf16.gmra.mxu0 %v4303
      %v4778 = vpop.f32.mrf.mxu0
      %v4779 = vadd.f32 %v4137, %v4778
      %v4780 = vpop.f32.mrf.mxu0
      %v4781 = vpop.f32.mrf.mxu0
      %v4782 = vadd.f32 %v4137, %v4781
      %v4783 = vpop.f32.mrf.mxu0
      %4784 = vmatprep.mubr.bf16.mxu0 0
      %4785 = vmatmul.mubr.bf16.gmra.mxu0 %v4306
      %v4786 = vpop.f32.mrf.mxu0
      %v4787 = vadd.f32 %v4137, %v4786
      %v4788 = vpop.f32.mrf.mxu0
      %v4789 = vpop.f32.mrf.mxu0
      %v4790 = vadd.f32 %v4137, %v4789
      %v4791 = vpop.f32.mrf.mxu0
      %4792 = vmatprep.mubr.bf16.mxu0 0
      %4793 = vmatmul.mubr.bf16.gmra.mxu0 %v4309
      %v4794 = vpop.f32.mrf.mxu0
      %v4795 = vadd.f32 %v4137, %v4794
      %v4796 = vpop.f32.mrf.mxu0
      %v4797 = vpop.f32.mrf.mxu0
      %v4798 = vadd.f32 %v4137, %v4797
      %v4799 = vpop.f32.mrf.mxu0
      %4800 = vmatprep.mubr.bf16.mxu0 0
      %4801 = vmatmul.mubr.bf16.gmra.mxu0 %v4312
      %v4802 = vpop.f32.mrf.mxu0
      %v4803 = vadd.f32 %v4137, %v4802
      %v4804 = vpop.f32.mrf.mxu0
      %v4805 = vpop.f32.mrf.mxu0
      %v4806 = vadd.f32 %v4137, %v4805
      %v4807 = vpop.f32.mrf.mxu0
      %4808 = vmatprep.mubr.bf16.mxu0 0
      %4809 = vmatmul.mubr.bf16.gmra.mxu0 %v4315
      %v4810 = vpop.f32.mrf.mxu0
      %v4811 = vadd.f32 %v4137, %v4810
      %v4812 = vpop.f32.mrf.mxu0
      %v4813 = vpop.f32.mrf.mxu0
      %v4814 = vadd.f32 %v4137, %v4813
      %v4815 = vpop.f32.mrf.mxu0
      %4816 = vmatprep.mubr.bf16.mxu0 0
      %4817 = vmatmul.mubr.bf16.gmra.mxu0 %v4318
      %v4818 = vpop.f32.mrf.mxu0
      %v4819 = vadd.f32 %v4137, %v4818
      %v4820 = vpop.f32.mrf.mxu0
      %v4821 = vpop.f32.mrf.mxu0
      %v4822 = vadd.f32 %v4137, %v4821
      %v4823 = vpop.f32.mrf.mxu0
      %4824 = vmatprep.mubr.bf16.mxu0 0
      %4825 = vmatmul.mubr.bf16.gmra.mxu0 %v4321
      %v4826 = vpop.f32.mrf.mxu0
      %v4827 = vadd.f32 %v4137, %v4826
      %v4828 = vpop.f32.mrf.mxu0
      %v4829 = vpop.f32.mrf.mxu0
      %v4830 = vadd.f32 %v4137, %v4829
      %v4831 = vpop.f32.mrf.mxu0
      %4832 = vmatprep.mubr.bf16.mxu0 0
      %4833 = vmatmul.mubr.bf16.gmra.mxu0 %v4324
      %v4834 = vpop.f32.mrf.mxu0
      %v4835 = vadd.f32 %v4137, %v4834
      %v4836 = vpop.f32.mrf.mxu0
      %v4837 = vpop.f32.mrf.mxu0
      %v4838 = vadd.f32 %v4137, %v4837
      %v4839 = vpop.f32.mrf.mxu0
      %4840 = vmatprep.mubr.bf16.mxu0 0
      %4841 = vmatmul.mubr.bf16.gmra.mxu0 %v4327
      %v4842 = vpop.f32.mrf.mxu0
      %v4843 = vadd.f32 %v4137, %v4842
      %v4844 = vpop.f32.mrf.mxu0
      %v4845 = vpop.f32.mrf.mxu0
      %v4846 = vadd.f32 %v4137, %v4845
      %v4847 = vpop.f32.mrf.mxu0
      %4848 = vmatprep.mubr.bf16.mxu0 0
      %4849 = vmatmul.mubr.bf16.gmra.mxu0 %v4330
      %v4850 = vpop.f32.mrf.mxu0
      %v4851 = vadd.f32 %v4137, %v4850
      %v4852 = vpop.f32.mrf.mxu0
      %v4853 = vpop.f32.mrf.mxu0
      %v4854 = vadd.f32 %v4137, %v4853
      %v4855 = vpop.f32.mrf.mxu0
      %4856 = vmatprep.mubr.bf16.mxu0 0
      %4857 = vmatmul.mubr.bf16.gmra.mxu0 %v4333
      %v4858 = vpop.f32.mrf.mxu0
      %v4859 = vadd.f32 %v4137, %v4858
      %v4860 = vpop.f32.mrf.mxu0
      %v4861 = vpop.f32.mrf.mxu0
      %v4862 = vadd.f32 %v4137, %v4861
      %v4863 = vpop.f32.mrf.mxu0
      %4864 = vmatprep.mubr.bf16.mxu0 0
      %4865 = vmatmul.mubr.bf16.gmra.mxu0 %v4336
      %v4866 = vpop.f32.mrf.mxu0
      %v4867 = vadd.f32 %v4137, %v4866
      %v4868 = vpop.f32.mrf.mxu0
      %v4869 = vpop.f32.mrf.mxu0
      %v4870 = vadd.f32 %v4137, %v4869
      %v4871 = vpop.f32.mrf.mxu0
      %4872 = vmatprep.mubr.bf16.mxu0 0
      %4873 = vmatmul.mubr.bf16.gmra.mxu0 %v4339
      %v4874 = vpop.f32.mrf.mxu0
      %v4875 = vadd.f32 %v4137, %v4874
      %v4876 = vpop.f32.mrf.mxu0
      %v4877 = vpop.f32.mrf.mxu0
      %v4878 = vadd.f32 %v4137, %v4877
      %v4879 = vpop.f32.mrf.mxu0
      %4880 = vmatprep.mubr.bf16.mxu0 0
      %4881 = vmatmul.mubr.bf16.gmra.mxu0 %v4342
      %v4882 = vpop.f32.mrf.mxu0
      %v4883 = vadd.f32 %v4137, %v4882
      %v4884 = vpop.f32.mrf.mxu0
      %v4885 = vpop.f32.mrf.mxu0
      %v4886 = vadd.f32 %v4137, %v4885
      %v4887 = vpop.f32.mrf.mxu0
      %4888 = vdwg.mxu0
      %v4889 = vld [vmem:[%s8] sm:$0x1]
      %v4891 = vlaneseq
      %v4892 = vshrl.u32 %v4891, 7
      %v4893 = vsub.s32 0, %v4892
      %v4894 = vrot.slane %v4889, %v4893
      %v4896 = vmul.f32 %v2360, %v4894
      %v4897 = vmul.f32 %v2361, %v4894
      %v4898 = vmul.f32 %v2362, %v4894
      %v4899 = vmul.f32 %v2363, %v4894
      %v4900 = vmul.f32 %v2364, %v4894
      %v4901 = vmul.f32 %v2365, %v4894
      %v4902 = vmul.f32 %v2366, %v4894
      %v4903 = vmul.f32 %v2367, %v4894
      %v4904 = vmul.f32 %v2368, %v4894
      %v4905 = vmul.f32 %v2369, %v4894
      %v4906 = vmul.f32 %v2370, %v4894
      %v4907 = vmul.f32 %v2371, %v4894
      %v4908 = vmul.f32 %v2372, %v4894
      %v4909 = vmul.f32 %v2373, %v4894
      %v4910 = vmul.f32 %v2374, %v4894
      %v4911 = vmul.f32 %v2375, %v4894
      %v4912 = vmul.f32 %v2376, %v4894
      %v4913 = vmul.f32 %v2377, %v4894
      %v4914 = vmul.f32 %v2378, %v4894
      %v4915 = vmul.f32 %v2379, %v4894
      %v4916 = vmul.f32 %v2380, %v4894
      %v4917 = vmul.f32 %v2381, %v4894
      %v4918 = vmul.f32 %v2382, %v4894
      %v4919 = vmul.f32 %v2383, %v4894
      %v4920 = vmul.f32 %v2384, %v4894
      %v4921 = vmul.f32 %v2385, %v4894
      %v4922 = vmul.f32 %v2386, %v4894
      %v4923 = vmul.f32 %v2387, %v4894
      %v4924 = vmul.f32 %v2388, %v4894
      %v4925 = vmul.f32 %v2389, %v4894
      %v4926 = vmul.f32 %v2390, %v4894
      %v4927 = vmul.f32 %v2391, %v4894
      %v4928 = vmul.f32 %v2392, %v4894
      %v4929 = vmul.f32 %v2393, %v4894
      %v4930 = vmul.f32 %v2394, %v4894
      %v4931 = vmul.f32 %v2395, %v4894
      %v4932 = vmul.f32 %v2396, %v4894
      %v4933 = vmul.f32 %v2397, %v4894
      %v4934 = vmul.f32 %v2398, %v4894
      %v4935 = vmul.f32 %v2399, %v4894
      %v4936 = vmul.f32 %v2400, %v4894
      %v4937 = vmul.f32 %v2401, %v4894
      %v4938 = vmul.f32 %v2402, %v4894
      %v4939 = vmul.f32 %v2403, %v4894
      %v4940 = vmul.f32 %v2404, %v4894
      %v4941 = vmul.f32 %v2405, %v4894
      %v4942 = vmul.f32 %v2406, %v4894
      %v4943 = vmul.f32 %v2407, %v4894
      %v4944 = vmul.f32 %v2408, %v4894
      %v4945 = vmul.f32 %v2409, %v4894
      %v4946 = vmul.f32 %v2410, %v4894
      %v4947 = vmul.f32 %v2411, %v4894
      %v4948 = vmul.f32 %v2412, %v4894
      %v4949 = vmul.f32 %v2413, %v4894
      %v4950 = vmul.f32 %v2414, %v4894
      %v4951 = vmul.f32 %v2415, %v4894
      %v4952 = vmul.f32 %v2416, %v4894
      %v4953 = vmul.f32 %v2417, %v4894
      %v4954 = vmul.f32 %v2418, %v4894
      %v4955 = vmul.f32 %v2419, %v4894
      %v4956 = vmul.f32 %v2420, %v4894
      %v4957 = vmul.f32 %v2421, %v4894
      %v4958 = vmul.f32 %v2422, %v4894
      %v4959 = vmul.f32 %v2423, %v4894
      %v4960 = vmul.f32 %v2424, %v4894
      %v4961 = vmul.f32 %v2425, %v4894
      %v4962 = vmul.f32 %v2426, %v4894
      %v4963 = vmul.f32 %v2427, %v4894
      %v4964 = vmul.f32 %v2428, %v4894
      %v4965 = vmul.f32 %v2429, %v4894
      %v4966 = vmul.f32 %v2430, %v4894
      %v4967 = vmul.f32 %v2431, %v4894
      %v4968 = vmul.f32 %v2432, %v4894
      %v4969 = vmul.f32 %v2433, %v4894
      %v4970 = vmul.f32 %v2434, %v4894
      %v4971 = vmul.f32 %v2435, %v4894
      %v4972 = vmul.f32 %v2436, %v4894
      %v4973 = vmul.f32 %v2437, %v4894
      %v4974 = vmul.f32 %v2438, %v4894
      %v4975 = vmul.f32 %v2439, %v4894
      %v4976 = vmul.f32 %v2440, %v4894
      %v4977 = vmul.f32 %v2441, %v4894
      %v4978 = vmul.f32 %v2442, %v4894
      %v4979 = vmul.f32 %v2443, %v4894
      %v4980 = vmul.f32 %v2444, %v4894
      %v4981 = vmul.f32 %v2445, %v4894
      %v4982 = vmul.f32 %v2446, %v4894
      %v4983 = vmul.f32 %v2447, %v4894
      %v4984 = vmul.f32 %v2448, %v4894
      %v4985 = vmul.f32 %v2449, %v4894
      %v4986 = vmul.f32 %v2450, %v4894
      %v4987 = vmul.f32 %v2451, %v4894
      %v4988 = vmul.f32 %v2452, %v4894
      %v4989 = vmul.f32 %v2453, %v4894
      %v4990 = vmul.f32 %v2454, %v4894
      %v4991 = vmul.f32 %v2455, %v4894
      %v4992 = vmul.f32 %v2456, %v4894
      %v4993 = vmul.f32 %v2457, %v4894
      %v4994 = vmul.f32 %v2458, %v4894
      %v4995 = vmul.f32 %v2459, %v4894
      %v4996 = vmul.f32 %v2460, %v4894
      %v4997 = vmul.f32 %v2461, %v4894
      %v4998 = vmul.f32 %v2462, %v4894
      %v4999 = vmul.f32 %v2463, %v4894
      %v5000 = vmul.f32 %v2464, %v4894
      %v5001 = vmul.f32 %v2465, %v4894
      %v5002 = vmul.f32 %v2466, %v4894
      %v5003 = vmul.f32 %v2467, %v4894
      %v5004 = vmul.f32 %v2468, %v4894
      %v5005 = vmul.f32 %v2469, %v4894
      %v5006 = vmul.f32 %v2470, %v4894
      %v5007 = vmul.f32 %v2471, %v4894
      %v5008 = vmul.f32 %v2472, %v4894
      %v5009 = vmul.f32 %v2473, %v4894
      %v5010 = vmul.f32 %v2474, %v4894
      %v5011 = vmul.f32 %v2475, %v4894
      %v5012 = vmul.f32 %v2476, %v4894
      %v5013 = vmul.f32 %v2477, %v4894
      %v5014 = vmul.f32 %v2478, %v4894
      %v5015 = vmul.f32 %v2479, %v4894
      %v5016 = vmul.f32 %v2480, %v4894
      %v5017 = vmul.f32 %v2481, %v4894
      %v5018 = vmul.f32 %v2482, %v4894
      %v5019 = vmul.f32 %v2483, %v4894
      %v5020 = vmul.f32 %v2484, %v4894
      %v5021 = vmul.f32 %v2485, %v4894
      %v5022 = vmul.f32 %v2486, %v4894
      %v5023 = vmul.f32 %v2487, %v4894
      %5024 = vadd.xlane.f32.xlu0 %v4896
      %v5025 = vpop.xlane.xlu0 %5024
      %5026 = vadd.xlane.f32.xlu0 %v4897
      %v5027 = vpop.xlane.xlu0 %5026
      %5028 = vadd.xlane.f32.xlu0 %v4898
      %v5029 = vpop.xlane.xlu0 %5028
      %5030 = vadd.xlane.f32.xlu0 %v4899
      %v5031 = vpop.xlane.xlu0 %5030
      %5032 = vadd.xlane.f32.xlu0 %v4900
      %v5033 = vpop.xlane.xlu0 %5032
      %5034 = vadd.xlane.f32.xlu0 %v4901
      %v5035 = vpop.xlane.xlu0 %5034
      %5036 = vadd.xlane.f32.xlu0 %v4902
      %v5037 = vpop.xlane.xlu0 %5036
      %5038 = vadd.xlane.f32.xlu0 %v4903
      %v5039 = vpop.xlane.xlu0 %5038
      %5040 = vadd.xlane.f32.xlu0 %v4904
      %v5041 = vpop.xlane.xlu0 %5040
      %5042 = vadd.xlane.f32.xlu0 %v4905
      %v5043 = vpop.xlane.xlu0 %5042
      %5044 = vadd.xlane.f32.xlu0 %v4906
      %v5045 = vpop.xlane.xlu0 %5044
      %5046 = vadd.xlane.f32.xlu0 %v4907
      %v5047 = vpop.xlane.xlu0 %5046
      %5048 = vadd.xlane.f32.xlu0 %v4908
      %v5049 = vpop.xlane.xlu0 %5048
      %5050 = vadd.xlane.f32.xlu0 %v4909
      %v5051 = vpop.xlane.xlu0 %5050
      %5052 = vadd.xlane.f32.xlu0 %v4910
      %v5053 = vpop.xlane.xlu0 %5052
      %5054 = vadd.xlane.f32.xlu0 %v4911
      %v5055 = vpop.xlane.xlu0 %5054
      %5056 = vadd.xlane.f32.xlu0 %v4912
      %v5057 = vpop.xlane.xlu0 %5056
      %5058 = vadd.xlane.f32.xlu0 %v4913
      %v5059 = vpop.xlane.xlu0 %5058
      %5060 = vadd.xlane.f32.xlu0 %v4914
      %v5061 = vpop.xlane.xlu0 %5060
      %5062 = vadd.xlane.f32.xlu0 %v4915
      %v5063 = vpop.xlane.xlu0 %5062
      %5064 = vadd.xlane.f32.xlu0 %v4916
      %v5065 = vpop.xlane.xlu0 %5064
      %5066 = vadd.xlane.f32.xlu0 %v4917
      %v5067 = vpop.xlane.xlu0 %5066
      %5068 = vadd.xlane.f32.xlu0 %v4918
      %v5069 = vpop.xlane.xlu0 %5068
      %5070 = vadd.xlane.f32.xlu0 %v4919
      %v5071 = vpop.xlane.xlu0 %5070
      %5072 = vadd.xlane.f32.xlu0 %v4920
      %v5073 = vpop.xlane.xlu0 %5072
      %5074 = vadd.xlane.f32.xlu0 %v4921
      %v5075 = vpop.xlane.xlu0 %5074
      %5076 = vadd.xlane.f32.xlu0 %v4922
      %v5077 = vpop.xlane.xlu0 %5076
      %5078 = vadd.xlane.f32.xlu0 %v4923
      %v5079 = vpop.xlane.xlu0 %5078
      %5080 = vadd.xlane.f32.xlu0 %v4924
      %v5081 = vpop.xlane.xlu0 %5080
      %5082 = vadd.xlane.f32.xlu0 %v4925
      %v5083 = vpop.xlane.xlu0 %5082
      %5084 = vadd.xlane.f32.xlu0 %v4926
      %v5085 = vpop.xlane.xlu0 %5084
      %5086 = vadd.xlane.f32.xlu0 %v4927
      %v5087 = vpop.xlane.xlu0 %5086
      %5088 = vadd.xlane.f32.xlu0 %v4928
      %v5089 = vpop.xlane.xlu0 %5088
      %5090 = vadd.xlane.f32.xlu0 %v4929
      %v5091 = vpop.xlane.xlu0 %5090
      %5092 = vadd.xlane.f32.xlu0 %v4930
      %v5093 = vpop.xlane.xlu0 %5092
      %5094 = vadd.xlane.f32.xlu0 %v4931
      %v5095 = vpop.xlane.xlu0 %5094
      %5096 = vadd.xlane.f32.xlu0 %v4932
      %v5097 = vpop.xlane.xlu0 %5096
      %5098 = vadd.xlane.f32.xlu0 %v4933
      %v5099 = vpop.xlane.xlu0 %5098
      %5100 = vadd.xlane.f32.xlu0 %v4934
      %v5101 = vpop.xlane.xlu0 %5100
      %5102 = vadd.xlane.f32.xlu0 %v4935
      %v5103 = vpop.xlane.xlu0 %5102
      %5104 = vadd.xlane.f32.xlu0 %v4936
      %v5105 = vpop.xlane.xlu0 %5104
      %5106 = vadd.xlane.f32.xlu0 %v4937
      %v5107 = vpop.xlane.xlu0 %5106
      %5108 = vadd.xlane.f32.xlu0 %v4938
      %v5109 = vpop.xlane.xlu0 %5108
      %5110 = vadd.xlane.f32.xlu0 %v4939
      %v5111 = vpop.xlane.xlu0 %5110
      %5112 = vadd.xlane.f32.xlu0 %v4940
      %v5113 = vpop.xlane.xlu0 %5112
      %5114 = vadd.xlane.f32.xlu0 %v4941
      %v5115 = vpop.xlane.xlu0 %5114
      %5116 = vadd.xlane.f32.xlu0 %v4942
      %v5117 = vpop.xlane.xlu0 %5116
      %5118 = vadd.xlane.f32.xlu0 %v4943
      %v5119 = vpop.xlane.xlu0 %5118
      %5120 = vadd.xlane.f32.xlu0 %v4944
      %v5121 = vpop.xlane.xlu0 %5120
      %5122 = vadd.xlane.f32.xlu0 %v4945
      %v5123 = vpop.xlane.xlu0 %5122
      %5124 = vadd.xlane.f32.xlu0 %v4946
      %v5125 = vpop.xlane.xlu0 %5124
      %5126 = vadd.xlane.f32.xlu0 %v4947
      %v5127 = vpop.xlane.xlu0 %5126
      %5128 = vadd.xlane.f32.xlu0 %v4948
      %v5129 = vpop.xlane.xlu0 %5128
      %5130 = vadd.xlane.f32.xlu0 %v4949
      %v5131 = vpop.xlane.xlu0 %5130
      %5132 = vadd.xlane.f32.xlu0 %v4950
      %v5133 = vpop.xlane.xlu0 %5132
      %5134 = vadd.xlane.f32.xlu0 %v4951
      %v5135 = vpop.xlane.xlu0 %5134
      %5136 = vadd.xlane.f32.xlu0 %v4952
      %v5137 = vpop.xlane.xlu0 %5136
      %5138 = vadd.xlane.f32.xlu0 %v4953
      %v5139 = vpop.xlane.xlu0 %5138
      %5140 = vadd.xlane.f32.xlu0 %v4954
      %v5141 = vpop.xlane.xlu0 %5140
      %5142 = vadd.xlane.f32.xlu0 %v4955
      %v5143 = vpop.xlane.xlu0 %5142
      %5144 = vadd.xlane.f32.xlu0 %v4956
      %v5145 = vpop.xlane.xlu0 %5144
      %5146 = vadd.xlane.f32.xlu0 %v4957
      %v5147 = vpop.xlane.xlu0 %5146
      %5148 = vadd.xlane.f32.xlu0 %v4958
      %v5149 = vpop.xlane.xlu0 %5148
      %5150 = vadd.xlane.f32.xlu0 %v4959
      %v5151 = vpop.xlane.xlu0 %5150
      %5152 = vadd.xlane.f32.xlu0 %v4960
      %v5153 = vpop.xlane.xlu0 %5152
      %5154 = vadd.xlane.f32.xlu0 %v4961
      %v5155 = vpop.xlane.xlu0 %5154
      %5156 = vadd.xlane.f32.xlu0 %v4962
      %v5157 = vpop.xlane.xlu0 %5156
      %5158 = vadd.xlane.f32.xlu0 %v4963
      %v5159 = vpop.xlane.xlu0 %5158
      %5160 = vadd.xlane.f32.xlu0 %v4964
      %v5161 = vpop.xlane.xlu0 %5160
      %5162 = vadd.xlane.f32.xlu0 %v4965
      %v5163 = vpop.xlane.xlu0 %5162
      %5164 = vadd.xlane.f32.xlu0 %v4966
      %v5165 = vpop.xlane.xlu0 %5164
      %5166 = vadd.xlane.f32.xlu0 %v4967
      %v5167 = vpop.xlane.xlu0 %5166
      %5168 = vadd.xlane.f32.xlu0 %v4968
      %v5169 = vpop.xlane.xlu0 %5168
      %5170 = vadd.xlane.f32.xlu0 %v4969
      %v5171 = vpop.xlane.xlu0 %5170
      %5172 = vadd.xlane.f32.xlu0 %v4970
      %v5173 = vpop.xlane.xlu0 %5172
      %5174 = vadd.xlane.f32.xlu0 %v4971
      %v5175 = vpop.xlane.xlu0 %5174
      %5176 = vadd.xlane.f32.xlu0 %v4972
      %v5177 = vpop.xlane.xlu0 %5176
      %5178 = vadd.xlane.f32.xlu0 %v4973
      %v5179 = vpop.xlane.xlu0 %5178
      %5180 = vadd.xlane.f32.xlu0 %v4974
      %v5181 = vpop.xlane.xlu0 %5180
      %5182 = vadd.xlane.f32.xlu0 %v4975
      %v5183 = vpop.xlane.xlu0 %5182
      %5184 = vadd.xlane.f32.xlu0 %v4976
      %v5185 = vpop.xlane.xlu0 %5184
      %5186 = vadd.xlane.f32.xlu0 %v4977
      %v5187 = vpop.xlane.xlu0 %5186
      %5188 = vadd.xlane.f32.xlu0 %v4978
      %v5189 = vpop.xlane.xlu0 %5188
      %5190 = vadd.xlane.f32.xlu0 %v4979
      %v5191 = vpop.xlane.xlu0 %5190
      %5192 = vadd.xlane.f32.xlu0 %v4980
      %v5193 = vpop.xlane.xlu0 %5192
      %5194 = vadd.xlane.f32.xlu0 %v4981
      %v5195 = vpop.xlane.xlu0 %5194
      %5196 = vadd.xlane.f32.xlu0 %v4982
      %v5197 = vpop.xlane.xlu0 %5196
      %5198 = vadd.xlane.f32.xlu0 %v4983
      %v5199 = vpop.xlane.xlu0 %5198
      %5200 = vadd.xlane.f32.xlu0 %v4984
      %v5201 = vpop.xlane.xlu0 %5200
      %5202 = vadd.xlane.f32.xlu0 %v4985
      %v5203 = vpop.xlane.xlu0 %5202
      %5204 = vadd.xlane.f32.xlu0 %v4986
      %v5205 = vpop.xlane.xlu0 %5204
      %5206 = vadd.xlane.f32.xlu0 %v4987
      %v5207 = vpop.xlane.xlu0 %5206
      %5208 = vadd.xlane.f32.xlu0 %v4988
      %v5209 = vpop.xlane.xlu0 %5208
      %5210 = vadd.xlane.f32.xlu0 %v4989
      %v5211 = vpop.xlane.xlu0 %5210
      %5212 = vadd.xlane.f32.xlu0 %v4990
      %v5213 = vpop.xlane.xlu0 %5212
      %5214 = vadd.xlane.f32.xlu0 %v4991
      %v5215 = vpop.xlane.xlu0 %5214
      %5216 = vadd.xlane.f32.xlu0 %v4992
      %v5217 = vpop.xlane.xlu0 %5216
      %5218 = vadd.xlane.f32.xlu0 %v4993
      %v5219 = vpop.xlane.xlu0 %5218
      %5220 = vadd.xlane.f32.xlu0 %v4994
      %v5221 = vpop.xlane.xlu0 %5220
      %5222 = vadd.xlane.f32.xlu0 %v4995
      %v5223 = vpop.xlane.xlu0 %5222
      %5224 = vadd.xlane.f32.xlu0 %v4996
      %v5225 = vpop.xlane.xlu0 %5224
      %5226 = vadd.xlane.f32.xlu0 %v4997
      %v5227 = vpop.xlane.xlu0 %5226
      %5228 = vadd.xlane.f32.xlu0 %v4998
      %v5229 = vpop.xlane.xlu0 %5228
      %5230 = vadd.xlane.f32.xlu0 %v4999
      %v5231 = vpop.xlane.xlu0 %5230
      %5232 = vadd.xlane.f32.xlu0 %v5000
      %v5233 = vpop.xlane.xlu0 %5232
      %5234 = vadd.xlane.f32.xlu0 %v5001
      %v5235 = vpop.xlane.xlu0 %5234
      %5236 = vadd.xlane.f32.xlu0 %v5002
      %v5237 = vpop.xlane.xlu0 %5236
      %5238 = vadd.xlane.f32.xlu0 %v5003
      %v5239 = vpop.xlane.xlu0 %5238
      %5240 = vadd.xlane.f32.xlu0 %v5004
      %v5241 = vpop.xlane.xlu0 %5240
      %5242 = vadd.xlane.f32.xlu0 %v5005
      %v5243 = vpop.xlane.xlu0 %5242
      %5244 = vadd.xlane.f32.xlu0 %v5006
      %v5245 = vpop.xlane.xlu0 %5244
      %5246 = vadd.xlane.f32.xlu0 %v5007
      %v5247 = vpop.xlane.xlu0 %5246
      %5248 = vadd.xlane.f32.xlu0 %v5008
      %v5249 = vpop.xlane.xlu0 %5248
      %5250 = vadd.xlane.f32.xlu0 %v5009
      %v5251 = vpop.xlane.xlu0 %5250
      %5252 = vadd.xlane.f32.xlu0 %v5010
      %v5253 = vpop.xlane.xlu0 %5252
      %5254 = vadd.xlane.f32.xlu0 %v5011
      %v5255 = vpop.xlane.xlu0 %5254
      %5256 = vadd.xlane.f32.xlu0 %v5012
      %v5257 = vpop.xlane.xlu0 %5256
      %5258 = vadd.xlane.f32.xlu0 %v5013
      %v5259 = vpop.xlane.xlu0 %5258
      %5260 = vadd.xlane.f32.xlu0 %v5014
      %v5261 = vpop.xlane.xlu0 %5260
      %5262 = vadd.xlane.f32.xlu0 %v5015
      %v5263 = vpop.xlane.xlu0 %5262
      %5264 = vadd.xlane.f32.xlu0 %v5016
      %v5265 = vpop.xlane.xlu0 %5264
      %5266 = vadd.xlane.f32.xlu0 %v5017
      %v5267 = vpop.xlane.xlu0 %5266
      %5268 = vadd.xlane.f32.xlu0 %v5018
      %v5269 = vpop.xlane.xlu0 %5268
      %5270 = vadd.xlane.f32.xlu0 %v5019
      %v5271 = vpop.xlane.xlu0 %5270
      %5272 = vadd.xlane.f32.xlu0 %v5020
      %v5273 = vpop.xlane.xlu0 %5272
      %5274 = vadd.xlane.f32.xlu0 %v5021
      %v5275 = vpop.xlane.xlu0 %5274
      %5276 = vadd.xlane.f32.xlu0 %v5022
      %v5277 = vpop.xlane.xlu0 %5276
      %5278 = vadd.xlane.f32.xlu0 %v5023
      %v5279 = vpop.xlane.xlu0 %5278
      %v5280 = vld [vmem:[#allocation2] sm:$0x1]
      %v5282 = vlaneseq
      %v5283 = vshrl.u32 %v5282, 7
      %v5284 = vsub.s32 0, %v5283
      %v5285 = vrot.slane %v5280, %v5284
      %v5287 = vadd.f32 %v5025, %v5285
      %v5288 = vadd.f32 %v5027, %v5285
      %v5289 = vadd.f32 %v5029, %v5285
      %v5290 = vadd.f32 %v5031, %v5285
      %v5291 = vadd.f32 %v5033, %v5285
      %v5292 = vadd.f32 %v5035, %v5285
      %v5293 = vadd.f32 %v5037, %v5285
      %v5294 = vadd.f32 %v5039, %v5285
      %v5295 = vadd.f32 %v5041, %v5285
      %v5296 = vadd.f32 %v5043, %v5285
      %v5297 = vadd.f32 %v5045, %v5285
      %v5298 = vadd.f32 %v5047, %v5285
      %v5299 = vadd.f32 %v5049, %v5285
      %v5300 = vadd.f32 %v5051, %v5285
      %v5301 = vadd.f32 %v5053, %v5285
      %v5302 = vadd.f32 %v5055, %v5285
      %v5303 = vadd.f32 %v5057, %v5285
      %v5304 = vadd.f32 %v5059, %v5285
      %v5305 = vadd.f32 %v5061, %v5285
      %v5306 = vadd.f32 %v5063, %v5285
      %v5307 = vadd.f32 %v5065, %v5285
      %v5308 = vadd.f32 %v5067, %v5285
      %v5309 = vadd.f32 %v5069, %v5285
      %v5310 = vadd.f32 %v5071, %v5285
      %v5311 = vadd.f32 %v5073, %v5285
      %v5312 = vadd.f32 %v5075, %v5285
      %v5313 = vadd.f32 %v5077, %v5285
      %v5314 = vadd.f32 %v5079, %v5285
      %v5315 = vadd.f32 %v5081, %v5285
      %v5316 = vadd.f32 %v5083, %v5285
      %v5317 = vadd.f32 %v5085, %v5285
      %v5318 = vadd.f32 %v5087, %v5285
      %v5319 = vadd.f32 %v5089, %v5285
      %v5320 = vadd.f32 %v5091, %v5285
      %v5321 = vadd.f32 %v5093, %v5285
      %v5322 = vadd.f32 %v5095, %v5285
      %v5323 = vadd.f32 %v5097, %v5285
      %v5324 = vadd.f32 %v5099, %v5285
      %v5325 = vadd.f32 %v5101, %v5285
      %v5326 = vadd.f32 %v5103, %v5285
      %v5327 = vadd.f32 %v5105, %v5285
      %v5328 = vadd.f32 %v5107, %v5285
      %v5329 = vadd.f32 %v5109, %v5285
      %v5330 = vadd.f32 %v5111, %v5285
      %v5331 = vadd.f32 %v5113, %v5285
      %v5332 = vadd.f32 %v5115, %v5285
      %v5333 = vadd.f32 %v5117, %v5285
      %v5334 = vadd.f32 %v5119, %v5285
      %v5335 = vadd.f32 %v5121, %v5285
      %v5336 = vadd.f32 %v5123, %v5285
      %v5337 = vadd.f32 %v5125, %v5285
      %v5338 = vadd.f32 %v5127, %v5285
      %v5339 = vadd.f32 %v5129, %v5285
      %v5340 = vadd.f32 %v5131, %v5285
      %v5341 = vadd.f32 %v5133, %v5285
      %v5342 = vadd.f32 %v5135, %v5285
      %v5343 = vadd.f32 %v5137, %v5285
      %v5344 = vadd.f32 %v5139, %v5285
      %v5345 = vadd.f32 %v5141, %v5285
      %v5346 = vadd.f32 %v5143, %v5285
      %v5347 = vadd.f32 %v5145, %v5285
      %v5348 = vadd.f32 %v5147, %v5285
      %v5349 = vadd.f32 %v5149, %v5285
      %v5350 = vadd.f32 %v5151, %v5285
      %v5351 = vadd.f32 %v5153, %v5285
      %v5352 = vadd.f32 %v5155, %v5285
      %v5353 = vadd.f32 %v5157, %v5285
      %v5354 = vadd.f32 %v5159, %v5285
      %v5355 = vadd.f32 %v5161, %v5285
      %v5356 = vadd.f32 %v5163, %v5285
      %v5357 = vadd.f32 %v5165, %v5285
      %v5358 = vadd.f32 %v5167, %v5285
      %v5359 = vadd.f32 %v5169, %v5285
      %v5360 = vadd.f32 %v5171, %v5285
      %v5361 = vadd.f32 %v5173, %v5285
      %v5362 = vadd.f32 %v5175, %v5285
      %v5363 = vadd.f32 %v5177, %v5285
      %v5364 = vadd.f32 %v5179, %v5285
      %v5365 = vadd.f32 %v5181, %v5285
      %v5366 = vadd.f32 %v5183, %v5285
      %v5367 = vadd.f32 %v5185, %v5285
      %v5368 = vadd.f32 %v5187, %v5285
      %v5369 = vadd.f32 %v5189, %v5285
      %v5370 = vadd.f32 %v5191, %v5285
      %v5371 = vadd.f32 %v5193, %v5285
      %v5372 = vadd.f32 %v5195, %v5285
      %v5373 = vadd.f32 %v5197, %v5285
      %v5374 = vadd.f32 %v5199, %v5285
      %v5375 = vadd.f32 %v5201, %v5285
      %v5376 = vadd.f32 %v5203, %v5285
      %v5377 = vadd.f32 %v5205, %v5285
      %v5378 = vadd.f32 %v5207, %v5285
      %v5379 = vadd.f32 %v5209, %v5285
      %v5380 = vadd.f32 %v5211, %v5285
      %v5381 = vadd.f32 %v5213, %v5285
      %v5382 = vadd.f32 %v5215, %v5285
      %v5383 = vadd.f32 %v5217, %v5285
      %v5384 = vadd.f32 %v5219, %v5285
      %v5385 = vadd.f32 %v5221, %v5285
      %v5386 = vadd.f32 %v5223, %v5285
      %v5387 = vadd.f32 %v5225, %v5285
      %v5388 = vadd.f32 %v5227, %v5285
      %v5389 = vadd.f32 %v5229, %v5285
      %v5390 = vadd.f32 %v5231, %v5285
      %v5391 = vadd.f32 %v5233, %v5285
      %v5392 = vadd.f32 %v5235, %v5285
      %v5393 = vadd.f32 %v5237, %v5285
      %v5394 = vadd.f32 %v5239, %v5285
      %v5395 = vadd.f32 %v5241, %v5285
      %v5396 = vadd.f32 %v5243, %v5285
      %v5397 = vadd.f32 %v5245, %v5285
      %v5398 = vadd.f32 %v5247, %v5285
      %v5399 = vadd.f32 %v5249, %v5285
      %v5400 = vadd.f32 %v5251, %v5285
      %v5401 = vadd.f32 %v5253, %v5285
      %v5402 = vadd.f32 %v5255, %v5285
      %v5403 = vadd.f32 %v5257, %v5285
      %v5404 = vadd.f32 %v5259, %v5285
      %v5405 = vadd.f32 %v5261, %v5285
      %v5406 = vadd.f32 %v5263, %v5285
      %v5407 = vadd.f32 %v5265, %v5285
      %v5408 = vadd.f32 %v5267, %v5285
      %v5409 = vadd.f32 %v5269, %v5285
      %v5410 = vadd.f32 %v5271, %v5285
      %v5411 = vadd.f32 %v5273, %v5285
      %v5412 = vadd.f32 %v5275, %v5285
      %v5413 = vadd.f32 %v5277, %v5285
      %v5414 = vadd.f32 %v5279, %v5285
      %v5415 = vxor.u32 %v5287, 2147483648
      %v5416 = vxor.u32 %v5288, 2147483648
      %v5417 = vxor.u32 %v5289, 2147483648
      %v5418 = vxor.u32 %v5290, 2147483648
      %v5419 = vxor.u32 %v5291, 2147483648
      %v5420 = vxor.u32 %v5292, 2147483648
      %v5421 = vxor.u32 %v5293, 2147483648
      %v5422 = vxor.u32 %v5294, 2147483648
      %v5423 = vxor.u32 %v5295, 2147483648
      %v5424 = vxor.u32 %v5296, 2147483648
      %v5425 = vxor.u32 %v5297, 2147483648
      %v5426 = vxor.u32 %v5298, 2147483648
      %v5427 = vxor.u32 %v5299, 2147483648
      %v5428 = vxor.u32 %v5300, 2147483648
      %v5429 = vxor.u32 %v5301, 2147483648
      %v5430 = vxor.u32 %v5302, 2147483648
      %v5431 = vxor.u32 %v5303, 2147483648
      %v5432 = vxor.u32 %v5304, 2147483648
      %v5433 = vxor.u32 %v5305, 2147483648
      %v5434 = vxor.u32 %v5306, 2147483648
      %v5435 = vxor.u32 %v5307, 2147483648
      %v5436 = vxor.u32 %v5308, 2147483648
      %v5437 = vxor.u32 %v5309, 2147483648
      %v5438 = vxor.u32 %v5310, 2147483648
      %v5439 = vxor.u32 %v5311, 2147483648
      %v5440 = vxor.u32 %v5312, 2147483648
      %v5441 = vxor.u32 %v5313, 2147483648
      %v5442 = vxor.u32 %v5314, 2147483648
      %v5443 = vxor.u32 %v5315, 2147483648
      %v5444 = vxor.u32 %v5316, 2147483648
      %v5445 = vxor.u32 %v5317, 2147483648
      %v5446 = vxor.u32 %v5318, 2147483648
      %v5447 = vxor.u32 %v5319, 2147483648
      %v5448 = vxor.u32 %v5320, 2147483648
      %v5449 = vxor.u32 %v5321, 2147483648
      %v5450 = vxor.u32 %v5322, 2147483648
      %v5451 = vxor.u32 %v5323, 2147483648
      %v5452 = vxor.u32 %v5324, 2147483648
      %v5453 = vxor.u32 %v5325, 2147483648
      %v5454 = vxor.u32 %v5326, 2147483648
      %v5455 = vxor.u32 %v5327, 2147483648
      %v5456 = vxor.u32 %v5328, 2147483648
      %v5457 = vxor.u32 %v5329, 2147483648
      %v5458 = vxor.u32 %v5330, 2147483648
      %v5459 = vxor.u32 %v5331, 2147483648
      %v5460 = vxor.u32 %v5332, 2147483648
      %v5461 = vxor.u32 %v5333, 2147483648
      %v5462 = vxor.u32 %v5334, 2147483648
      %v5463 = vxor.u32 %v5335, 2147483648
      %v5464 = vxor.u32 %v5336, 2147483648
      %v5465 = vxor.u32 %v5337, 2147483648
      %v5466 = vxor.u32 %v5338, 2147483648
      %v5467 = vxor.u32 %v5339, 2147483648
      %v5468 = vxor.u32 %v5340, 2147483648
      %v5469 = vxor.u32 %v5341, 2147483648
      %v5470 = vxor.u32 %v5342, 2147483648
      %v5471 = vxor.u32 %v5343, 2147483648
      %v5472 = vxor.u32 %v5344, 2147483648
      %v5473 = vxor.u32 %v5345, 2147483648
      %v5474 = vxor.u32 %v5346, 2147483648
      %v5475 = vxor.u32 %v5347, 2147483648
      %v5476 = vxor.u32 %v5348, 2147483648
      %v5477 = vxor.u32 %v5349, 2147483648
      %v5478 = vxor.u32 %v5350, 2147483648
      %v5479 = vxor.u32 %v5351, 2147483648
      %v5480 = vxor.u32 %v5352, 2147483648
      %v5481 = vxor.u32 %v5353, 2147483648
      %v5482 = vxor.u32 %v5354, 2147483648
      %v5483 = vxor.u32 %v5355, 2147483648
      %v5484 = vxor.u32 %v5356, 2147483648
      %v5485 = vxor.u32 %v5357, 2147483648
      %v5486 = vxor.u32 %v5358, 2147483648
      %v5487 = vxor.u32 %v5359, 2147483648
      %v5488 = vxor.u32 %v5360, 2147483648
      %v5489 = vxor.u32 %v5361, 2147483648
      %v5490 = vxor.u32 %v5362, 2147483648
      %v5491 = vxor.u32 %v5363, 2147483648
      %v5492 = vxor.u32 %v5364, 2147483648
      %v5493 = vxor.u32 %v5365, 2147483648
      %v5494 = vxor.u32 %v5366, 2147483648
      %v5495 = vxor.u32 %v5367, 2147483648
      %v5496 = vxor.u32 %v5368, 2147483648
      %v5497 = vxor.u32 %v5369, 2147483648
      %v5498 = vxor.u32 %v5370, 2147483648
      %v5499 = vxor.u32 %v5371, 2147483648
      %v5500 = vxor.u32 %v5372, 2147483648
      %v5501 = vxor.u32 %v5373, 2147483648
      %v5502 = vxor.u32 %v5374, 2147483648
      %v5503 = vxor.u32 %v5375, 2147483648
      %v5504 = vxor.u32 %v5376, 2147483648
      %v5505 = vxor.u32 %v5377, 2147483648
      %v5506 = vxor.u32 %v5378, 2147483648
      %v5507 = vxor.u32 %v5379, 2147483648
      %v5508 = vxor.u32 %v5380, 2147483648
      %v5509 = vxor.u32 %v5381, 2147483648
      %v5510 = vxor.u32 %v5382, 2147483648
      %v5511 = vxor.u32 %v5383, 2147483648
      %v5512 = vxor.u32 %v5384, 2147483648
      %v5513 = vxor.u32 %v5385, 2147483648
      %v5514 = vxor.u32 %v5386, 2147483648
      %v5515 = vxor.u32 %v5387, 2147483648
      %v5516 = vxor.u32 %v5388, 2147483648
      %v5517 = vxor.u32 %v5389, 2147483648
      %v5518 = vxor.u32 %v5390, 2147483648
      %v5519 = vxor.u32 %v5391, 2147483648
      %v5520 = vxor.u32 %v5392, 2147483648
      %v5521 = vxor.u32 %v5393, 2147483648
      %v5522 = vxor.u32 %v5394, 2147483648
      %v5523 = vxor.u32 %v5395, 2147483648
      %v5524 = vxor.u32 %v5396, 2147483648
      %v5525 = vxor.u32 %v5397, 2147483648
      %v5526 = vxor.u32 %v5398, 2147483648
      %v5527 = vxor.u32 %v5399, 2147483648
      %v5528 = vxor.u32 %v5400, 2147483648
      %v5529 = vxor.u32 %v5401, 2147483648
      %v5530 = vxor.u32 %v5402, 2147483648
      %v5531 = vxor.u32 %v5403, 2147483648
      %v5532 = vxor.u32 %v5404, 2147483648
      %v5533 = vxor.u32 %v5405, 2147483648
      %v5534 = vxor.u32 %v5406, 2147483648
      %v5535 = vxor.u32 %v5407, 2147483648
      %v5536 = vxor.u32 %v5408, 2147483648
      %v5537 = vxor.u32 %v5409, 2147483648
      %v5538 = vxor.u32 %v5410, 2147483648
      %v5539 = vxor.u32 %v5411, 2147483648
      %v5540 = vxor.u32 %v5412, 2147483648
      %v5541 = vxor.u32 %v5413, 2147483648
      %v5542 = vxor.u32 %v5414, 2147483648
      %v5543 = vmul.f32 %v5415, 1.442695
      %v5544 = vpow.pop %v5543
      %v5545 = vmul.f32 %v5416, 1.442695
      %v5546 = vpow.pop %v5545
      %v5547 = vmul.f32 %v5417, 1.442695
      %v5548 = vpow.pop %v5547
      %v5549 = vmul.f32 %v5418, 1.442695
      %v5550 = vpow.pop %v5549
      %v5551 = vmul.f32 %v5419, 1.442695
      %v5552 = vpow.pop %v5551
      %v5553 = vmul.f32 %v5420, 1.442695
      %v5554 = vpow.pop %v5553
      %v5555 = vmul.f32 %v5421, 1.442695
      %v5556 = vpow.pop %v5555
      %v5557 = vmul.f32 %v5422, 1.442695
      %v5558 = vpow.pop %v5557
      %v5559 = vmul.f32 %v5423, 1.442695
      %v5560 = vpow.pop %v5559
      %v5561 = vmul.f32 %v5424, 1.442695
      %v5562 = vpow.pop %v5561
      %v5563 = vmul.f32 %v5425, 1.442695
      %v5564 = vpow.pop %v5563
      %v5565 = vmul.f32 %v5426, 1.442695
      %v5566 = vpow.pop %v5565
      %v5567 = vmul.f32 %v5427, 1.442695
      %v5568 = vpow.pop %v5567
      %v5569 = vmul.f32 %v5428, 1.442695
      %v5570 = vpow.pop %v5569
      %v5571 = vmul.f32 %v5429, 1.442695
      %v5572 = vpow.pop %v5571
      %v5573 = vmul.f32 %v5430, 1.442695
      %v5574 = vpow.pop %v5573
      %v5575 = vmul.f32 %v5431, 1.442695
      %v5576 = vpow.pop %v5575
      %v5577 = vmul.f32 %v5432, 1.442695
      %v5578 = vpow.pop %v5577
      %v5579 = vmul.f32 %v5433, 1.442695
      %v5580 = vpow.pop %v5579
      %v5581 = vmul.f32 %v5434, 1.442695
      %v5582 = vpow.pop %v5581
      %v5583 = vmul.f32 %v5435, 1.442695
      %v5584 = vpow.pop %v5583
      %v5585 = vmul.f32 %v5436, 1.442695
      %v5586 = vpow.pop %v5585
      %v5587 = vmul.f32 %v5437, 1.442695
      %v5588 = vpow.pop %v5587
      %v5589 = vmul.f32 %v5438, 1.442695
      %v5590 = vpow.pop %v5589
      %v5591 = vmul.f32 %v5439, 1.442695
      %v5592 = vpow.pop %v5591
      %v5593 = vmul.f32 %v5440, 1.442695
      %v5594 = vpow.pop %v5593
      %v5595 = vmul.f32 %v5441, 1.442695
      %v5596 = vpow.pop %v5595
      %v5597 = vmul.f32 %v5442, 1.442695
      %v5598 = vpow.pop %v5597
      %v5599 = vmul.f32 %v5443, 1.442695
      %v5600 = vpow.pop %v5599
      %v5601 = vmul.f32 %v5444, 1.442695
      %v5602 = vpow.pop %v5601
      %v5603 = vmul.f32 %v5445, 1.442695
      %v5604 = vpow.pop %v5603
      %v5605 = vmul.f32 %v5446, 1.442695
      %v5606 = vpow.pop %v5605
      %v5607 = vmul.f32 %v5447, 1.442695
      %v5608 = vpow.pop %v5607
      %v5609 = vmul.f32 %v5448, 1.442695
      %v5610 = vpow.pop %v5609
      %v5611 = vmul.f32 %v5449, 1.442695
      %v5612 = vpow.pop %v5611
      %v5613 = vmul.f32 %v5450, 1.442695
      %v5614 = vpow.pop %v5613
      %v5615 = vmul.f32 %v5451, 1.442695
      %v5616 = vpow.pop %v5615
      %v5617 = vmul.f32 %v5452, 1.442695
      %v5618 = vpow.pop %v5617
      %v5619 = vmul.f32 %v5453, 1.442695
      %v5620 = vpow.pop %v5619
      %v5621 = vmul.f32 %v5454, 1.442695
      %v5622 = vpow.pop %v5621
      %v5623 = vmul.f32 %v5455, 1.442695
      %v5624 = vpow.pop %v5623
      %v5625 = vmul.f32 %v5456, 1.442695
      %v5626 = vpow.pop %v5625
      %v5627 = vmul.f32 %v5457, 1.442695
      %v5628 = vpow.pop %v5627
      %v5629 = vmul.f32 %v5458, 1.442695
      %v5630 = vpow.pop %v5629
      %v5631 = vmul.f32 %v5459, 1.442695
      %v5632 = vpow.pop %v5631
      %v5633 = vmul.f32 %v5460, 1.442695
      %v5634 = vpow.pop %v5633
      %v5635 = vmul.f32 %v5461, 1.442695
      %v5636 = vpow.pop %v5635
      %v5637 = vmul.f32 %v5462, 1.442695
      %v5638 = vpow.pop %v5637
      %v5639 = vmul.f32 %v5463, 1.442695
      %v5640 = vpow.pop %v5639
      %v5641 = vmul.f32 %v5464, 1.442695
      %v5642 = vpow.pop %v5641
      %v5643 = vmul.f32 %v5465, 1.442695
      %v5644 = vpow.pop %v5643
      %v5645 = vmul.f32 %v5466, 1.442695
      %v5646 = vpow.pop %v5645
      %v5647 = vmul.f32 %v5467, 1.442695
      %v5648 = vpow.pop %v5647
      %v5649 = vmul.f32 %v5468, 1.442695
      %v5650 = vpow.pop %v5649
      %v5651 = vmul.f32 %v5469, 1.442695
      %v5652 = vpow.pop %v5651
      %v5653 = vmul.f32 %v5470, 1.442695
      %v5654 = vpow.pop %v5653
      %v5655 = vmul.f32 %v5471, 1.442695
      %v5656 = vpow.pop %v5655
      %v5657 = vmul.f32 %v5472, 1.442695
      %v5658 = vpow.pop %v5657
      %v5659 = vmul.f32 %v5473, 1.442695
      %v5660 = vpow.pop %v5659
      %v5661 = vmul.f32 %v5474, 1.442695
      %v5662 = vpow.pop %v5661
      %v5663 = vmul.f32 %v5475, 1.442695
      %v5664 = vpow.pop %v5663
      %v5665 = vmul.f32 %v5476, 1.442695
      %v5666 = vpow.pop %v5665
      %v5667 = vmul.f32 %v5477, 1.442695
      %v5668 = vpow.pop %v5667
      %v5669 = vmul.f32 %v5478, 1.442695
      %v5670 = vpow.pop %v5669
      %v5671 = vmul.f32 %v5479, 1.442695
      %v5672 = vpow.pop %v5671
      %v5673 = vmul.f32 %v5480, 1.442695
      %v5674 = vpow.pop %v5673
      %v5675 = vmul.f32 %v5481, 1.442695
      %v5676 = vpow.pop %v5675
      %v5677 = vmul.f32 %v5482, 1.442695
      %v5678 = vpow.pop %v5677
      %v5679 = vmul.f32 %v5483, 1.442695
      %v5680 = vpow.pop %v5679
      %v5681 = vmul.f32 %v5484, 1.442695
      %v5682 = vpow.pop %v5681
      %v5683 = vmul.f32 %v5485, 1.442695
      %v5684 = vpow.pop %v5683
      %v5685 = vmul.f32 %v5486, 1.442695
      %v5686 = vpow.pop %v5685
      %v5687 = vmul.f32 %v5487, 1.442695
      %v5688 = vpow.pop %v5687
      %v5689 = vmul.f32 %v5488, 1.442695
      %v5690 = vpow.pop %v5689
      %v5691 = vmul.f32 %v5489, 1.442695
      %v5692 = vpow.pop %v5691
      %v5693 = vmul.f32 %v5490, 1.442695
      %v5694 = vpow.pop %v5693
      %v5695 = vmul.f32 %v5491, 1.442695
      %v5696 = vpow.pop %v5695
      %v5697 = vmul.f32 %v5492, 1.442695
      %v5698 = vpow.pop %v5697
      %v5699 = vmul.f32 %v5493, 1.442695
      %v5700 = vpow.pop %v5699
      %v5701 = vmul.f32 %v5494, 1.442695
      %v5702 = vpow.pop %v5701
      %v5703 = vmul.f32 %v5495, 1.442695
      %v5704 = vpow.pop %v5703
      %v5705 = vmul.f32 %v5496, 1.442695
      %v5706 = vpow.pop %v5705
      %v5707 = vmul.f32 %v5497, 1.442695
      %v5708 = vpow.pop %v5707
      %v5709 = vmul.f32 %v5498, 1.442695
      %v5710 = vpow.pop %v5709
      %v5711 = vmul.f32 %v5499, 1.442695
      %v5712 = vpow.pop %v5711
      %v5713 = vmul.f32 %v5500, 1.442695
      %v5714 = vpow.pop %v5713
      %v5715 = vmul.f32 %v5501, 1.442695
      %v5716 = vpow.pop %v5715
      %v5717 = vmul.f32 %v5502, 1.442695
      %v5718 = vpow.pop %v5717
      %v5719 = vmul.f32 %v5503, 1.442695
      %v5720 = vpow.pop %v5719
      %v5721 = vmul.f32 %v5504, 1.442695
      %v5722 = vpow.pop %v5721
      %v5723 = vmul.f32 %v5505, 1.442695
      %v5724 = vpow.pop %v5723
      %v5725 = vmul.f32 %v5506, 1.442695
      %v5726 = vpow.pop %v5725
      %v5727 = vmul.f32 %v5507, 1.442695
      %v5728 = vpow.pop %v5727
      %v5729 = vmul.f32 %v5508, 1.442695
      %v5730 = vpow.pop %v5729
      %v5731 = vmul.f32 %v5509, 1.442695
      %v5732 = vpow.pop %v5731
      %v5733 = vmul.f32 %v5510, 1.442695
      %v5734 = vpow.pop %v5733
      %v5735 = vmul.f32 %v5511, 1.442695
      %v5736 = vpow.pop %v5735
      %v5737 = vmul.f32 %v5512, 1.442695
      %v5738 = vpow.pop %v5737
      %v5739 = vmul.f32 %v5513, 1.442695
      %v5740 = vpow.pop %v5739
      %v5741 = vmul.f32 %v5514, 1.442695
      %v5742 = vpow.pop %v5741
      %v5743 = vmul.f32 %v5515, 1.442695
      %v5744 = vpow.pop %v5743
      %v5745 = vmul.f32 %v5516, 1.442695
      %v5746 = vpow.pop %v5745
      %v5747 = vmul.f32 %v5517, 1.442695
      %v5748 = vpow.pop %v5747
      %v5749 = vmul.f32 %v5518, 1.442695
      %v5750 = vpow.pop %v5749
      %v5751 = vmul.f32 %v5519, 1.442695
      %v5752 = vpow.pop %v5751
      %v5753 = vmul.f32 %v5520, 1.442695
      %v5754 = vpow.pop %v5753
      %v5755 = vmul.f32 %v5521, 1.442695
      %v5756 = vpow.pop %v5755
      %v5757 = vmul.f32 %v5522, 1.442695
      %v5758 = vpow.pop %v5757
      %v5759 = vmul.f32 %v5523, 1.442695
      %v5760 = vpow.pop %v5759
      %v5761 = vmul.f32 %v5524, 1.442695
      %v5762 = vpow.pop %v5761
      %v5763 = vmul.f32 %v5525, 1.442695
      %v5764 = vpow.pop %v5763
      %v5765 = vmul.f32 %v5526, 1.442695
      %v5766 = vpow.pop %v5765
      %v5767 = vmul.f32 %v5527, 1.442695
      %v5768 = vpow.pop %v5767
      %v5769 = vmul.f32 %v5528, 1.442695
      %v5770 = vpow.pop %v5769
      %v5771 = vmul.f32 %v5529, 1.442695
      %v5772 = vpow.pop %v5771
      %v5773 = vmul.f32 %v5530, 1.442695
      %v5774 = vpow.pop %v5773
      %v5775 = vmul.f32 %v5531, 1.442695
      %v5776 = vpow.pop %v5775
      %v5777 = vmul.f32 %v5532, 1.442695
      %v5778 = vpow.pop %v5777
      %v5779 = vmul.f32 %v5533, 1.442695
      %v5780 = vpow.pop %v5779
      %v5781 = vmul.f32 %v5534, 1.442695
      %v5782 = vpow.pop %v5781
      %v5783 = vmul.f32 %v5535, 1.442695
      %v5784 = vpow.pop %v5783
      %v5785 = vmul.f32 %v5536, 1.442695
      %v5786 = vpow.pop %v5785
      %v5787 = vmul.f32 %v5537, 1.442695
      %v5788 = vpow.pop %v5787
      %v5789 = vmul.f32 %v5538, 1.442695
      %v5790 = vpow.pop %v5789
      %v5791 = vmul.f32 %v5539, 1.442695
      %v5792 = vpow.pop %v5791
      %v5793 = vmul.f32 %v5540, 1.442695
      %v5794 = vpow.pop %v5793
      %v5795 = vmul.f32 %v5541, 1.442695
      %v5796 = vpow.pop %v5795
      %v5797 = vmul.f32 %v5542, 1.442695
      %v5798 = vpow.pop %v5797
      %v5799 = vadd.f32 %v5544, 1.0
      %v5800 = vadd.f32 %v5546, 1.0
      %v5801 = vadd.f32 %v5548, 1.0
      %v5802 = vadd.f32 %v5550, 1.0
      %v5803 = vadd.f32 %v5552, 1.0
      %v5804 = vadd.f32 %v5554, 1.0
      %v5805 = vadd.f32 %v5556, 1.0
      %v5806 = vadd.f32 %v5558, 1.0
      %v5807 = vadd.f32 %v5560, 1.0
      %v5808 = vadd.f32 %v5562, 1.0
      %v5809 = vadd.f32 %v5564, 1.0
      %v5810 = vadd.f32 %v5566, 1.0
      %v5811 = vadd.f32 %v5568, 1.0
      %v5812 = vadd.f32 %v5570, 1.0
      %v5813 = vadd.f32 %v5572, 1.0
      %v5814 = vadd.f32 %v5574, 1.0
      %v5815 = vadd.f32 %v5576, 1.0
      %v5816 = vadd.f32 %v5578, 1.0
      %v5817 = vadd.f32 %v5580, 1.0
      %v5818 = vadd.f32 %v5582, 1.0
      %v5819 = vadd.f32 %v5584, 1.0
      %v5820 = vadd.f32 %v5586, 1.0
      %v5821 = vadd.f32 %v5588, 1.0
      %v5822 = vadd.f32 %v5590, 1.0
      %v5823 = vadd.f32 %v5592, 1.0
      %v5824 = vadd.f32 %v5594, 1.0
      %v5825 = vadd.f32 %v5596, 1.0
      %v5826 = vadd.f32 %v5598, 1.0
      %v5827 = vadd.f32 %v5600, 1.0
      %v5828 = vadd.f32 %v5602, 1.0
      %v5829 = vadd.f32 %v5604, 1.0
      %v5830 = vadd.f32 %v5606, 1.0
      %v5831 = vadd.f32 %v5608, 1.0
      %v5832 = vadd.f32 %v5610, 1.0
      %v5833 = vadd.f32 %v5612, 1.0
      %v5834 = vadd.f32 %v5614, 1.0
      %v5835 = vadd.f32 %v5616, 1.0
      %v5836 = vadd.f32 %v5618, 1.0
      %v5837 = vadd.f32 %v5620, 1.0
      %v5838 = vadd.f32 %v5622, 1.0
      %v5839 = vadd.f32 %v5624, 1.0
      %v5840 = vadd.f32 %v5626, 1.0
      %v5841 = vadd.f32 %v5628, 1.0
      %v5842 = vadd.f32 %v5630, 1.0
      %v5843 = vadd.f32 %v5632, 1.0
      %v5844 = vadd.f32 %v5634, 1.0
      %v5845 = vadd.f32 %v5636, 1.0
      %v5846 = vadd.f32 %v5638, 1.0
      %v5847 = vadd.f32 %v5640, 1.0
      %v5848 = vadd.f32 %v5642, 1.0
      %v5849 = vadd.f32 %v5644, 1.0
      %v5850 = vadd.f32 %v5646, 1.0
      %v5851 = vadd.f32 %v5648, 1.0
      %v5852 = vadd.f32 %v5650, 1.0
      %v5853 = vadd.f32 %v5652, 1.0
      %v5854 = vadd.f32 %v5654, 1.0
      %v5855 = vadd.f32 %v5656, 1.0
      %v5856 = vadd.f32 %v5658, 1.0
      %v5857 = vadd.f32 %v5660, 1.0
      %v5858 = vadd.f32 %v5662, 1.0
      %v5859 = vadd.f32 %v5664, 1.0
      %v5860 = vadd.f32 %v5666, 1.0
      %v5861 = vadd.f32 %v5668, 1.0
      %v5862 = vadd.f32 %v5670, 1.0
      %v5863 = vadd.f32 %v5672, 1.0
      %v5864 = vadd.f32 %v5674, 1.0
      %v5865 = vadd.f32 %v5676, 1.0
      %v5866 = vadd.f32 %v5678, 1.0
      %v5867 = vadd.f32 %v5680, 1.0
      %v5868 = vadd.f32 %v5682, 1.0
      %v5869 = vadd.f32 %v5684, 1.0
      %v5870 = vadd.f32 %v5686, 1.0
      %v5871 = vadd.f32 %v5688, 1.0
      %v5872 = vadd.f32 %v5690, 1.0
      %v5873 = vadd.f32 %v5692, 1.0
      %v5874 = vadd.f32 %v5694, 1.0
      %v5875 = vadd.f32 %v5696, 1.0
      %v5876 = vadd.f32 %v5698, 1.0
      %v5877 = vadd.f32 %v5700, 1.0
      %v5878 = vadd.f32 %v5702, 1.0
      %v5879 = vadd.f32 %v5704, 1.0
      %v5880 = vadd.f32 %v5706, 1.0
      %v5881 = vadd.f32 %v5708, 1.0
      %v5882 = vadd.f32 %v5710, 1.0
      %v5883 = vadd.f32 %v5712, 1.0
      %v5884 = vadd.f32 %v5714, 1.0
      %v5885 = vadd.f32 %v5716, 1.0
      %v5886 = vadd.f32 %v5718, 1.0
      %v5887 = vadd.f32 %v5720, 1.0
      %v5888 = vadd.f32 %v5722, 1.0
      %v5889 = vadd.f32 %v5724, 1.0
      %v5890 = vadd.f32 %v5726, 1.0
      %v5891 = vadd.f32 %v5728, 1.0
      %v5892 = vadd.f32 %v5730, 1.0
      %v5893 = vadd.f32 %v5732, 1.0
      %v5894 = vadd.f32 %v5734, 1.0
      %v5895 = vadd.f32 %v5736, 1.0
      %v5896 = vadd.f32 %v5738, 1.0
      %v5897 = vadd.f32 %v5740, 1.0
      %v5898 = vadd.f32 %v5742, 1.0
      %v5899 = vadd.f32 %v5744, 1.0
      %v5900 = vadd.f32 %v5746, 1.0
      %v5901 = vadd.f32 %v5748, 1.0
      %v5902 = vadd.f32 %v5750, 1.0
      %v5903 = vadd.f32 %v5752, 1.0
      %v5904 = vadd.f32 %v5754, 1.0
      %v5905 = vadd.f32 %v5756, 1.0
      %v5906 = vadd.f32 %v5758, 1.0
      %v5907 = vadd.f32 %v5760, 1.0
      %v5908 = vadd.f32 %v5762, 1.0
      %v5909 = vadd.f32 %v5764, 1.0
      %v5910 = vadd.f32 %v5766, 1.0
      %v5911 = vadd.f32 %v5768, 1.0
      %v5912 = vadd.f32 %v5770, 1.0
      %v5913 = vadd.f32 %v5772, 1.0
      %v5914 = vadd.f32 %v5774, 1.0
      %v5915 = vadd.f32 %v5776, 1.0
      %v5916 = vadd.f32 %v5778, 1.0
      %v5917 = vadd.f32 %v5780, 1.0
      %v5918 = vadd.f32 %v5782, 1.0
      %v5919 = vadd.f32 %v5784, 1.0
      %v5920 = vadd.f32 %v5786, 1.0
      %v5921 = vadd.f32 %v5788, 1.0
      %v5922 = vadd.f32 %v5790, 1.0
      %v5923 = vadd.f32 %v5792, 1.0
      %v5924 = vadd.f32 %v5794, 1.0
      %v5925 = vadd.f32 %v5796, 1.0
      %v5926 = vadd.f32 %v5798, 1.0
      %v5927 = vrcp.pop %v5799
      %v5928 = vmul.f32 1.0, %v5927
      %v5929 = vrcp.pop %v5800
      %v5930 = vmul.f32 1.0, %v5929
      %v5931 = vrcp.pop %v5801
      %v5932 = vmul.f32 1.0, %v5931
      %v5933 = vrcp.pop %v5802
      %v5934 = vmul.f32 1.0, %v5933
      %v5935 = vrcp.pop %v5803
      %v5936 = vmul.f32 1.0, %v5935
      %v5937 = vrcp.pop %v5804
      %v5938 = vmul.f32 1.0, %v5937
      %v5939 = vrcp.pop %v5805
      %v5940 = vmul.f32 1.0, %v5939
      %v5941 = vrcp.pop %v5806
      %v5942 = vmul.f32 1.0, %v5941
      %v5943 = vrcp.pop %v5807
      %v5944 = vmul.f32 1.0, %v5943
      %v5945 = vrcp.pop %v5808
      %v5946 = vmul.f32 1.0, %v5945
      %v5947 = vrcp.pop %v5809
      %v5948 = vmul.f32 1.0, %v5947
      %v5949 = vrcp.pop %v5810
      %v5950 = vmul.f32 1.0, %v5949
      %v5951 = vrcp.pop %v5811
      %v5952 = vmul.f32 1.0, %v5951
      %v5953 = vrcp.pop %v5812
      %v5954 = vmul.f32 1.0, %v5953
      %v5955 = vrcp.pop %v5813
      %v5956 = vmul.f32 1.0, %v5955
      %v5957 = vrcp.pop %v5814
      %v5958 = vmul.f32 1.0, %v5957
      %v5959 = vrcp.pop %v5815
      %v5960 = vmul.f32 1.0, %v5959
      %v5961 = vrcp.pop %v5816
      %v5962 = vmul.f32 1.0, %v5961
      %v5963 = vrcp.pop %v5817
      %v5964 = vmul.f32 1.0, %v5963
      %v5965 = vrcp.pop %v5818
      %v5966 = vmul.f32 1.0, %v5965
      %v5967 = vrcp.pop %v5819
      %v5968 = vmul.f32 1.0, %v5967
      %v5969 = vrcp.pop %v5820
      %v5970 = vmul.f32 1.0, %v5969
      %v5971 = vrcp.pop %v5821
      %v5972 = vmul.f32 1.0, %v5971
      %v5973 = vrcp.pop %v5822
      %v5974 = vmul.f32 1.0, %v5973
      %v5975 = vrcp.pop %v5823
      %v5976 = vmul.f32 1.0, %v5975
      %v5977 = vrcp.pop %v5824
      %v5978 = vmul.f32 1.0, %v5977
      %v5979 = vrcp.pop %v5825
      %v5980 = vmul.f32 1.0, %v5979
      %v5981 = vrcp.pop %v5826
      %v5982 = vmul.f32 1.0, %v5981
      %v5983 = vrcp.pop %v5827
      %v5984 = vmul.f32 1.0, %v5983
      %v5985 = vrcp.pop %v5828
      %v5986 = vmul.f32 1.0, %v5985
      %v5987 = vrcp.pop %v5829
      %v5988 = vmul.f32 1.0, %v5987
      %v5989 = vrcp.pop %v5830
      %v5990 = vmul.f32 1.0, %v5989
      %v5991 = vrcp.pop %v5831
      %v5992 = vmul.f32 1.0, %v5991
      %v5993 = vrcp.pop %v5832
      %v5994 = vmul.f32 1.0, %v5993
      %v5995 = vrcp.pop %v5833
      %v5996 = vmul.f32 1.0, %v5995
      %v5997 = vrcp.pop %v5834
      %v5998 = vmul.f32 1.0, %v5997
      %v5999 = vrcp.pop %v5835
      %v6000 = vmul.f32 1.0, %v5999
      %v6001 = vrcp.pop %v5836
      %v6002 = vmul.f32 1.0, %v6001
      %v6003 = vrcp.pop %v5837
      %v6004 = vmul.f32 1.0, %v6003
      %v6005 = vrcp.pop %v5838
      %v6006 = vmul.f32 1.0, %v6005
      %v6007 = vrcp.pop %v5839
      %v6008 = vmul.f32 1.0, %v6007
      %v6009 = vrcp.pop %v5840
      %v6010 = vmul.f32 1.0, %v6009
      %v6011 = vrcp.pop %v5841
      %v6012 = vmul.f32 1.0, %v6011
      %v6013 = vrcp.pop %v5842
      %v6014 = vmul.f32 1.0, %v6013
      %v6015 = vrcp.pop %v5843
      %v6016 = vmul.f32 1.0, %v6015
      %v6017 = vrcp.pop %v5844
      %v6018 = vmul.f32 1.0, %v6017
      %v6019 = vrcp.pop %v5845
      %v6020 = vmul.f32 1.0, %v6019
      %v6021 = vrcp.pop %v5846
      %v6022 = vmul.f32 1.0, %v6021
      %v6023 = vrcp.pop %v5847
      %v6024 = vmul.f32 1.0, %v6023
      %v6025 = vrcp.pop %v5848
      %v6026 = vmul.f32 1.0, %v6025
      %v6027 = vrcp.pop %v5849
      %v6028 = vmul.f32 1.0, %v6027
      %v6029 = vrcp.pop %v5850
      %v6030 = vmul.f32 1.0, %v6029
      %v6031 = vrcp.pop %v5851
      %v6032 = vmul.f32 1.0, %v6031
      %v6033 = vrcp.pop %v5852
      %v6034 = vmul.f32 1.0, %v6033
      %v6035 = vrcp.pop %v5853
      %v6036 = vmul.f32 1.0, %v6035
      %v6037 = vrcp.pop %v5854
      %v6038 = vmul.f32 1.0, %v6037
      %v6039 = vrcp.pop %v5855
      %v6040 = vmul.f32 1.0, %v6039
      %v6041 = vrcp.pop %v5856
      %v6042 = vmul.f32 1.0, %v6041
      %v6043 = vrcp.pop %v5857
      %v6044 = vmul.f32 1.0, %v6043
      %v6045 = vrcp.pop %v5858
      %v6046 = vmul.f32 1.0, %v6045
      %v6047 = vrcp.pop %v5859
      %v6048 = vmul.f32 1.0, %v6047
      %v6049 = vrcp.pop %v5860
      %v6050 = vmul.f32 1.0, %v6049
      %v6051 = vrcp.pop %v5861
      %v6052 = vmul.f32 1.0, %v6051
      %v6053 = vrcp.pop %v5862
      %v6054 = vmul.f32 1.0, %v6053
      %v6055 = vrcp.pop %v5863
      %v6056 = vmul.f32 1.0, %v6055
      %v6057 = vrcp.pop %v5864
      %v6058 = vmul.f32 1.0, %v6057
      %v6059 = vrcp.pop %v5865
      %v6060 = vmul.f32 1.0, %v6059
      %v6061 = vrcp.pop %v5866
      %v6062 = vmul.f32 1.0, %v6061
      %v6063 = vrcp.pop %v5867
      %v6064 = vmul.f32 1.0, %v6063
      %v6065 = vrcp.pop %v5868
      %v6066 = vmul.f32 1.0, %v6065
      %v6067 = vrcp.pop %v5869
      %v6068 = vmul.f32 1.0, %v6067
      %v6069 = vrcp.pop %v5870
      %v6070 = vmul.f32 1.0, %v6069
      %v6071 = vrcp.pop %v5871
      %v6072 = vmul.f32 1.0, %v6071
      %v6073 = vrcp.pop %v5872
      %v6074 = vmul.f32 1.0, %v6073
      %v6075 = vrcp.pop %v5873
      %v6076 = vmul.f32 1.0, %v6075
      %v6077 = vrcp.pop %v5874
      %v6078 = vmul.f32 1.0, %v6077
      %v6079 = vrcp.pop %v5875
      %v6080 = vmul.f32 1.0, %v6079
      %v6081 = vrcp.pop %v5876
      %v6082 = vmul.f32 1.0, %v6081
      %v6083 = vrcp.pop %v5877
      %v6084 = vmul.f32 1.0, %v6083
      %v6085 = vrcp.pop %v5878
      %v6086 = vmul.f32 1.0, %v6085
      %v6087 = vrcp.pop %v5879
      %v6088 = vmul.f32 1.0, %v6087
      %v6089 = vrcp.pop %v5880
      %v6090 = vmul.f32 1.0, %v6089
      %v6091 = vrcp.pop %v5881
      %v6092 = vmul.f32 1.0, %v6091
      %v6093 = vrcp.pop %v5882
      %v6094 = vmul.f32 1.0, %v6093
      %v6095 = vrcp.pop %v5883
      %v6096 = vmul.f32 1.0, %v6095
      %v6097 = vrcp.pop %v5884
      %v6098 = vmul.f32 1.0, %v6097
      %v6099 = vrcp.pop %v5885
      %v6100 = vmul.f32 1.0, %v6099
      %v6101 = vrcp.pop %v5886
      %v6102 = vmul.f32 1.0, %v6101
      %v6103 = vrcp.pop %v5887
      %v6104 = vmul.f32 1.0, %v6103
      %v6105 = vrcp.pop %v5888
      %v6106 = vmul.f32 1.0, %v6105
      %v6107 = vrcp.pop %v5889
      %v6108 = vmul.f32 1.0, %v6107
      %v6109 = vrcp.pop %v5890
      %v6110 = vmul.f32 1.0, %v6109
      %v6111 = vrcp.pop %v5891
      %v6112 = vmul.f32 1.0, %v6111
      %v6113 = vrcp.pop %v5892
      %v6114 = vmul.f32 1.0, %v6113
      %v6115 = vrcp.pop %v5893
      %v6116 = vmul.f32 1.0, %v6115
      %v6117 = vrcp.pop %v5894
      %v6118 = vmul.f32 1.0, %v6117
      %v6119 = vrcp.pop %v5895
      %v6120 = vmul.f32 1.0, %v6119
      %v6121 = vrcp.pop %v5896
      %v6122 = vmul.f32 1.0, %v6121
      %v6123 = vrcp.pop %v5897
      %v6124 = vmul.f32 1.0, %v6123
      %v6125 = vrcp.pop %v5898
      %v6126 = vmul.f32 1.0, %v6125
      %v6127 = vrcp.pop %v5899
      %v6128 = vmul.f32 1.0, %v6127
      %v6129 = vrcp.pop %v5900
      %v6130 = vmul.f32 1.0, %v6129
      %v6131 = vrcp.pop %v5901
      %v6132 = vmul.f32 1.0, %v6131
      %v6133 = vrcp.pop %v5902
      %v6134 = vmul.f32 1.0, %v6133
      %v6135 = vrcp.pop %v5903
      %v6136 = vmul.f32 1.0, %v6135
      %v6137 = vrcp.pop %v5904
      %v6138 = vmul.f32 1.0, %v6137
      %v6139 = vrcp.pop %v5905
      %v6140 = vmul.f32 1.0, %v6139
      %v6141 = vrcp.pop %v5906
      %v6142 = vmul.f32 1.0, %v6141
      %v6143 = vrcp.pop %v5907
      %v6144 = vmul.f32 1.0, %v6143
      %v6145 = vrcp.pop %v5908
      %v6146 = vmul.f32 1.0, %v6145
      %v6147 = vrcp.pop %v5909
      %v6148 = vmul.f32 1.0, %v6147
      %v6149 = vrcp.pop %v5910
      %v6150 = vmul.f32 1.0, %v6149
      %v6151 = vrcp.pop %v5911
      %v6152 = vmul.f32 1.0, %v6151
      %v6153 = vrcp.pop %v5912
      %v6154 = vmul.f32 1.0, %v6153
      %v6155 = vrcp.pop %v5913
      %v6156 = vmul.f32 1.0, %v6155
      %v6157 = vrcp.pop %v5914
      %v6158 = vmul.f32 1.0, %v6157
      %v6159 = vrcp.pop %v5915
      %v6160 = vmul.f32 1.0, %v6159
      %v6161 = vrcp.pop %v5916
      %v6162 = vmul.f32 1.0, %v6161
      %v6163 = vrcp.pop %v5917
      %v6164 = vmul.f32 1.0, %v6163
      %v6165 = vrcp.pop %v5918
      %v6166 = vmul.f32 1.0, %v6165
      %v6167 = vrcp.pop %v5919
      %v6168 = vmul.f32 1.0, %v6167
      %v6169 = vrcp.pop %v5920
      %v6170 = vmul.f32 1.0, %v6169
      %v6171 = vrcp.pop %v5921
      %v6172 = vmul.f32 1.0, %v6171
      %v6173 = vrcp.pop %v5922
      %v6174 = vmul.f32 1.0, %v6173
      %v6175 = vrcp.pop %v5923
      %v6176 = vmul.f32 1.0, %v6175
      %v6177 = vrcp.pop %v5924
      %v6178 = vmul.f32 1.0, %v6177
      %v6179 = vrcp.pop %v5925
      %v6180 = vmul.f32 1.0, %v6179
      %v6181 = vrcp.pop %v5926
      %v6182 = vmul.f32 1.0, %v6181
      %6184 = vset.pattern.permute.xlu0 0
      %6185 = vperm.xlu0 %6184, %v5928
      %v6186 = vpop.permute.xlu0 %6185
      %6189 = vset.pattern.permute.xlu0 0
      %6190 = vperm.xlu0 %6189, %v5930
      %v6191 = vpop.permute.xlu0 %6190
      %6194 = vset.pattern.permute.xlu0 0
      %6195 = vperm.xlu0 %6194, %v5932
      %v6196 = vpop.permute.xlu0 %6195
      %6199 = vset.pattern.permute.xlu0 0
      %6200 = vperm.xlu0 %6199, %v5934
      %v6201 = vpop.permute.xlu0 %6200
      %6204 = vset.pattern.permute.xlu0 0
      %6205 = vperm.xlu0 %6204, %v5936
      %v6206 = vpop.permute.xlu0 %6205
      %6209 = vset.pattern.permute.xlu0 0
      %6210 = vperm.xlu0 %6209, %v5938
      %v6211 = vpop.permute.xlu0 %6210
      %6214 = vset.pattern.permute.xlu0 0
      %6215 = vperm.xlu0 %6214, %v5940
      %v6216 = vpop.permute.xlu0 %6215
      %6219 = vset.pattern.permute.xlu0 0
      %6220 = vperm.xlu0 %6219, %v5942
      %v6221 = vpop.permute.xlu0 %6220
      %6224 = vset.pattern.permute.xlu0 0
      %6225 = vperm.xlu0 %6224, %v5944
      %v6226 = vpop.permute.xlu0 %6225
      %6229 = vset.pattern.permute.xlu0 0
      %6230 = vperm.xlu0 %6229, %v5946
      %v6231 = vpop.permute.xlu0 %6230
      %6234 = vset.pattern.permute.xlu0 0
      %6235 = vperm.xlu0 %6234, %v5948
      %v6236 = vpop.permute.xlu0 %6235
      %6239 = vset.pattern.permute.xlu0 0
      %6240 = vperm.xlu0 %6239, %v5950
      %v6241 = vpop.permute.xlu0 %6240
      %6244 = vset.pattern.permute.xlu0 0
      %6245 = vperm.xlu0 %6244, %v5952
      %v6246 = vpop.permute.xlu0 %6245
      %6249 = vset.pattern.permute.xlu0 0
      %6250 = vperm.xlu0 %6249, %v5954
      %v6251 = vpop.permute.xlu0 %6250
      %6254 = vset.pattern.permute.xlu0 0
      %6255 = vperm.xlu0 %6254, %v5956
      %v6256 = vpop.permute.xlu0 %6255
      %6259 = vset.pattern.permute.xlu0 0
      %6260 = vperm.xlu0 %6259, %v5958
      %v6261 = vpop.permute.xlu0 %6260
      %6264 = vset.pattern.permute.xlu0 0
      %6265 = vperm.xlu0 %6264, %v5960
      %v6266 = vpop.permute.xlu0 %6265
      %6269 = vset.pattern.permute.xlu0 0
      %6270 = vperm.xlu0 %6269, %v5962
      %v6271 = vpop.permute.xlu0 %6270
      %6274 = vset.pattern.permute.xlu0 0
      %6275 = vperm.xlu0 %6274, %v5964
      %v6276 = vpop.permute.xlu0 %6275
      %6279 = vset.pattern.permute.xlu0 0
      %6280 = vperm.xlu0 %6279, %v5966
      %v6281 = vpop.permute.xlu0 %6280
      %6284 = vset.pattern.permute.xlu0 0
      %6285 = vperm.xlu0 %6284, %v5968
      %v6286 = vpop.permute.xlu0 %6285
      %6289 = vset.pattern.permute.xlu0 0
      %6290 = vperm.xlu0 %6289, %v5970
      %v6291 = vpop.permute.xlu0 %6290
      %6294 = vset.pattern.permute.xlu0 0
      %6295 = vperm.xlu0 %6294, %v5972
      %v6296 = vpop.permute.xlu0 %6295
      %6299 = vset.pattern.permute.xlu0 0
      %6300 = vperm.xlu0 %6299, %v5974
      %v6301 = vpop.permute.xlu0 %6300
      %6304 = vset.pattern.permute.xlu0 0
      %6305 = vperm.xlu0 %6304, %v5976
      %v6306 = vpop.permute.xlu0 %6305
      %6309 = vset.pattern.permute.xlu0 0
      %6310 = vperm.xlu0 %6309, %v5978
      %v6311 = vpop.permute.xlu0 %6310
      %6314 = vset.pattern.permute.xlu0 0
      %6315 = vperm.xlu0 %6314, %v5980
      %v6316 = vpop.permute.xlu0 %6315
      %6319 = vset.pattern.permute.xlu0 0
      %6320 = vperm.xlu0 %6319, %v5982
      %v6321 = vpop.permute.xlu0 %6320
      %6324 = vset.pattern.permute.xlu0 0
      %6325 = vperm.xlu0 %6324, %v5984
      %v6326 = vpop.permute.xlu0 %6325
      %6329 = vset.pattern.permute.xlu0 0
      %6330 = vperm.xlu0 %6329, %v5986
      %v6331 = vpop.permute.xlu0 %6330
      %6334 = vset.pattern.permute.xlu0 0
      %6335 = vperm.xlu0 %6334, %v5988
      %v6336 = vpop.permute.xlu0 %6335
      %6339 = vset.pattern.permute.xlu0 0
      %6340 = vperm.xlu0 %6339, %v5990
      %v6341 = vpop.permute.xlu0 %6340
      %6344 = vset.pattern.permute.xlu0 0
      %6345 = vperm.xlu0 %6344, %v5992
      %v6346 = vpop.permute.xlu0 %6345
      %6349 = vset.pattern.permute.xlu0 0
      %6350 = vperm.xlu0 %6349, %v5994
      %v6351 = vpop.permute.xlu0 %6350
      %6354 = vset.pattern.permute.xlu0 0
      %6355 = vperm.xlu0 %6354, %v5996
      %v6356 = vpop.permute.xlu0 %6355
      %6359 = vset.pattern.permute.xlu0 0
      %6360 = vperm.xlu0 %6359, %v5998
      %v6361 = vpop.permute.xlu0 %6360
      %6364 = vset.pattern.permute.xlu0 0
      %6365 = vperm.xlu0 %6364, %v6000
      %v6366 = vpop.permute.xlu0 %6365
      %6369 = vset.pattern.permute.xlu0 0
      %6370 = vperm.xlu0 %6369, %v6002
      %v6371 = vpop.permute.xlu0 %6370
      %6374 = vset.pattern.permute.xlu0 0
      %6375 = vperm.xlu0 %6374, %v6004
      %v6376 = vpop.permute.xlu0 %6375
      %6379 = vset.pattern.permute.xlu0 0
      %6380 = vperm.xlu0 %6379, %v6006
      %v6381 = vpop.permute.xlu0 %6380
      %6384 = vset.pattern.permute.xlu0 0
      %6385 = vperm.xlu0 %6384, %v6008
      %v6386 = vpop.permute.xlu0 %6385
      %6389 = vset.pattern.permute.xlu0 0
      %6390 = vperm.xlu0 %6389, %v6010
      %v6391 = vpop.permute.xlu0 %6390
      %6394 = vset.pattern.permute.xlu0 0
      %6395 = vperm.xlu0 %6394, %v6012
      %v6396 = vpop.permute.xlu0 %6395
      %6399 = vset.pattern.permute.xlu0 0
      %6400 = vperm.xlu0 %6399, %v6014
      %v6401 = vpop.permute.xlu0 %6400
      %6404 = vset.pattern.permute.xlu0 0
      %6405 = vperm.xlu0 %6404, %v6016
      %v6406 = vpop.permute.xlu0 %6405
      %6409 = vset.pattern.permute.xlu0 0
      %6410 = vperm.xlu0 %6409, %v6018
      %v6411 = vpop.permute.xlu0 %6410
      %6414 = vset.pattern.permute.xlu0 0
      %6415 = vperm.xlu0 %6414, %v6020
      %v6416 = vpop.permute.xlu0 %6415
      %6419 = vset.pattern.permute.xlu0 0
      %6420 = vperm.xlu0 %6419, %v6022
      %v6421 = vpop.permute.xlu0 %6420
      %6424 = vset.pattern.permute.xlu0 0
      %6425 = vperm.xlu0 %6424, %v6024
      %v6426 = vpop.permute.xlu0 %6425
      %6429 = vset.pattern.permute.xlu0 0
      %6430 = vperm.xlu0 %6429, %v6026
      %v6431 = vpop.permute.xlu0 %6430
      %6434 = vset.pattern.permute.xlu0 0
      %6435 = vperm.xlu0 %6434, %v6028
      %v6436 = vpop.permute.xlu0 %6435
      %6439 = vset.pattern.permute.xlu0 0
      %6440 = vperm.xlu0 %6439, %v6030
      %v6441 = vpop.permute.xlu0 %6440
      %6444 = vset.pattern.permute.xlu0 0
      %6445 = vperm.xlu0 %6444, %v6032
      %v6446 = vpop.permute.xlu0 %6445
      %6449 = vset.pattern.permute.xlu0 0
      %6450 = vperm.xlu0 %6449, %v6034
      %v6451 = vpop.permute.xlu0 %6450
      %6454 = vset.pattern.permute.xlu0 0
      %6455 = vperm.xlu0 %6454, %v6036
      %v6456 = vpop.permute.xlu0 %6455
      %6459 = vset.pattern.permute.xlu0 0
      %6460 = vperm.xlu0 %6459, %v6038
      %v6461 = vpop.permute.xlu0 %6460
      %6464 = vset.pattern.permute.xlu0 0
      %6465 = vperm.xlu0 %6464, %v6040
      %v6466 = vpop.permute.xlu0 %6465
      %6469 = vset.pattern.permute.xlu0 0
      %6470 = vperm.xlu0 %6469, %v6042
      %v6471 = vpop.permute.xlu0 %6470
      %6474 = vset.pattern.permute.xlu0 0
      %6475 = vperm.xlu0 %6474, %v6044
      %v6476 = vpop.permute.xlu0 %6475
      %6479 = vset.pattern.permute.xlu0 0
      %6480 = vperm.xlu0 %6479, %v6046
      %v6481 = vpop.permute.xlu0 %6480
      %6484 = vset.pattern.permute.xlu0 0
      %6485 = vperm.xlu0 %6484, %v6048
      %v6486 = vpop.permute.xlu0 %6485
      %6489 = vset.pattern.permute.xlu0 0
      %6490 = vperm.xlu0 %6489, %v6050
      %v6491 = vpop.permute.xlu0 %6490
      %6494 = vset.pattern.permute.xlu0 0
      %6495 = vperm.xlu0 %6494, %v6052
      %v6496 = vpop.permute.xlu0 %6495
      %6499 = vset.pattern.permute.xlu0 0
      %6500 = vperm.xlu0 %6499, %v6054
      %v6501 = vpop.permute.xlu0 %6500
      %6504 = vset.pattern.permute.xlu0 0
      %6505 = vperm.xlu0 %6504, %v6056
      %v6506 = vpop.permute.xlu0 %6505
      %6509 = vset.pattern.permute.xlu0 0
      %6510 = vperm.xlu0 %6509, %v6058
      %v6511 = vpop.permute.xlu0 %6510
      %6514 = vset.pattern.permute.xlu0 0
      %6515 = vperm.xlu0 %6514, %v6060
      %v6516 = vpop.permute.xlu0 %6515
      %6519 = vset.pattern.permute.xlu0 0
      %6520 = vperm.xlu0 %6519, %v6062
      %v6521 = vpop.permute.xlu0 %6520
      %6524 = vset.pattern.permute.xlu0 0
      %6525 = vperm.xlu0 %6524, %v6064
      %v6526 = vpop.permute.xlu0 %6525
      %6529 = vset.pattern.permute.xlu0 0
      %6530 = vperm.xlu0 %6529, %v6066
      %v6531 = vpop.permute.xlu0 %6530
      %6534 = vset.pattern.permute.xlu0 0
      %6535 = vperm.xlu0 %6534, %v6068
      %v6536 = vpop.permute.xlu0 %6535
      %6539 = vset.pattern.permute.xlu0 0
      %6540 = vperm.xlu0 %6539, %v6070
      %v6541 = vpop.permute.xlu0 %6540
      %6544 = vset.pattern.permute.xlu0 0
      %6545 = vperm.xlu0 %6544, %v6072
      %v6546 = vpop.permute.xlu0 %6545
      %6549 = vset.pattern.permute.xlu0 0
      %6550 = vperm.xlu0 %6549, %v6074
      %v6551 = vpop.permute.xlu0 %6550
      %6554 = vset.pattern.permute.xlu0 0
      %6555 = vperm.xlu0 %6554, %v6076
      %v6556 = vpop.permute.xlu0 %6555
      %6559 = vset.pattern.permute.xlu0 0
      %6560 = vperm.xlu0 %6559, %v6078
      %v6561 = vpop.permute.xlu0 %6560
      %6564 = vset.pattern.permute.xlu0 0
      %6565 = vperm.xlu0 %6564, %v6080
      %v6566 = vpop.permute.xlu0 %6565
      %6569 = vset.pattern.permute.xlu0 0
      %6570 = vperm.xlu0 %6569, %v6082
      %v6571 = vpop.permute.xlu0 %6570
      %6574 = vset.pattern.permute.xlu0 0
      %6575 = vperm.xlu0 %6574, %v6084
      %v6576 = vpop.permute.xlu0 %6575
      %6579 = vset.pattern.permute.xlu0 0
      %6580 = vperm.xlu0 %6579, %v6086
      %v6581 = vpop.permute.xlu0 %6580
      %6584 = vset.pattern.permute.xlu0 0
      %6585 = vperm.xlu0 %6584, %v6088
      %v6586 = vpop.permute.xlu0 %6585
      %6589 = vset.pattern.permute.xlu0 0
      %6590 = vperm.xlu0 %6589, %v6090
      %v6591 = vpop.permute.xlu0 %6590
      %6594 = vset.pattern.permute.xlu0 0
      %6595 = vperm.xlu0 %6594, %v6092
      %v6596 = vpop.permute.xlu0 %6595
      %6599 = vset.pattern.permute.xlu0 0
      %6600 = vperm.xlu0 %6599, %v6094
      %v6601 = vpop.permute.xlu0 %6600
      %6604 = vset.pattern.permute.xlu0 0
      %6605 = vperm.xlu0 %6604, %v6096
      %v6606 = vpop.permute.xlu0 %6605
      %6609 = vset.pattern.permute.xlu0 0
      %6610 = vperm.xlu0 %6609, %v6098
      %v6611 = vpop.permute.xlu0 %6610
      %6614 = vset.pattern.permute.xlu0 0
      %6615 = vperm.xlu0 %6614, %v6100
      %v6616 = vpop.permute.xlu0 %6615
      %6619 = vset.pattern.permute.xlu0 0
      %6620 = vperm.xlu0 %6619, %v6102
      %v6621 = vpop.permute.xlu0 %6620
      %6624 = vset.pattern.permute.xlu0 0
      %6625 = vperm.xlu0 %6624, %v6104
      %v6626 = vpop.permute.xlu0 %6625
      %6629 = vset.pattern.permute.xlu0 0
      %6630 = vperm.xlu0 %6629, %v6106
      %v6631 = vpop.permute.xlu0 %6630
      %6634 = vset.pattern.permute.xlu0 0
      %6635 = vperm.xlu0 %6634, %v6108
      %v6636 = vpop.permute.xlu0 %6635
      %6639 = vset.pattern.permute.xlu0 0
      %6640 = vperm.xlu0 %6639, %v6110
      %v6641 = vpop.permute.xlu0 %6640
      %6644 = vset.pattern.permute.xlu0 0
      %6645 = vperm.xlu0 %6644, %v6112
      %v6646 = vpop.permute.xlu0 %6645
      %6649 = vset.pattern.permute.xlu0 0
      %6650 = vperm.xlu0 %6649, %v6114
      %v6651 = vpop.permute.xlu0 %6650
      %6654 = vset.pattern.permute.xlu0 0
      %6655 = vperm.xlu0 %6654, %v6116
      %v6656 = vpop.permute.xlu0 %6655
      %6659 = vset.pattern.permute.xlu0 0
      %6660 = vperm.xlu0 %6659, %v6118
      %v6661 = vpop.permute.xlu0 %6660
      %6664 = vset.pattern.permute.xlu0 0
      %6665 = vperm.xlu0 %6664, %v6120
      %v6666 = vpop.permute.xlu0 %6665
      %6669 = vset.pattern.permute.xlu0 0
      %6670 = vperm.xlu0 %6669, %v6122
      %v6671 = vpop.permute.xlu0 %6670
      %6674 = vset.pattern.permute.xlu0 0
      %6675 = vperm.xlu0 %6674, %v6124
      %v6676 = vpop.permute.xlu0 %6675
      %6679 = vset.pattern.permute.xlu0 0
      %6680 = vperm.xlu0 %6679, %v6126
      %v6681 = vpop.permute.xlu0 %6680
      %6684 = vset.pattern.permute.xlu0 0
      %6685 = vperm.xlu0 %6684, %v6128
      %v6686 = vpop.permute.xlu0 %6685
      %6689 = vset.pattern.permute.xlu0 0
      %6690 = vperm.xlu0 %6689, %v6130
      %v6691 = vpop.permute.xlu0 %6690
      %6694 = vset.pattern.permute.xlu0 0
      %6695 = vperm.xlu0 %6694, %v6132
      %v6696 = vpop.permute.xlu0 %6695
      %6699 = vset.pattern.permute.xlu0 0
      %6700 = vperm.xlu0 %6699, %v6134
      %v6701 = vpop.permute.xlu0 %6700
      %6704 = vset.pattern.permute.xlu0 0
      %6705 = vperm.xlu0 %6704, %v6136
      %v6706 = vpop.permute.xlu0 %6705
      %6709 = vset.pattern.permute.xlu0 0
      %6710 = vperm.xlu0 %6709, %v6138
      %v6711 = vpop.permute.xlu0 %6710
      %6714 = vset.pattern.permute.xlu0 0
      %6715 = vperm.xlu0 %6714, %v6140
      %v6716 = vpop.permute.xlu0 %6715
      %6719 = vset.pattern.permute.xlu0 0
      %6720 = vperm.xlu0 %6719, %v6142
      %v6721 = vpop.permute.xlu0 %6720
      %6724 = vset.pattern.permute.xlu0 0
      %6725 = vperm.xlu0 %6724, %v6144
      %v6726 = vpop.permute.xlu0 %6725
      %6729 = vset.pattern.permute.xlu0 0
      %6730 = vperm.xlu0 %6729, %v6146
      %v6731 = vpop.permute.xlu0 %6730
      %6734 = vset.pattern.permute.xlu0 0
      %6735 = vperm.xlu0 %6734, %v6148
      %v6736 = vpop.permute.xlu0 %6735
      %6739 = vset.pattern.permute.xlu0 0
      %6740 = vperm.xlu0 %6739, %v6150
      %v6741 = vpop.permute.xlu0 %6740
      %6744 = vset.pattern.permute.xlu0 0
      %6745 = vperm.xlu0 %6744, %v6152
      %v6746 = vpop.permute.xlu0 %6745
      %6749 = vset.pattern.permute.xlu0 0
      %6750 = vperm.xlu0 %6749, %v6154
      %v6751 = vpop.permute.xlu0 %6750
      %6754 = vset.pattern.permute.xlu0 0
      %6755 = vperm.xlu0 %6754, %v6156
      %v6756 = vpop.permute.xlu0 %6755
      %6759 = vset.pattern.permute.xlu0 0
      %6760 = vperm.xlu0 %6759, %v6158
      %v6761 = vpop.permute.xlu0 %6760
      %6764 = vset.pattern.permute.xlu0 0
      %6765 = vperm.xlu0 %6764, %v6160
      %v6766 = vpop.permute.xlu0 %6765
      %6769 = vset.pattern.permute.xlu0 0
      %6770 = vperm.xlu0 %6769, %v6162
      %v6771 = vpop.permute.xlu0 %6770
      %6774 = vset.pattern.permute.xlu0 0
      %6775 = vperm.xlu0 %6774, %v6164
      %v6776 = vpop.permute.xlu0 %6775
      %6779 = vset.pattern.permute.xlu0 0
      %6780 = vperm.xlu0 %6779, %v6166
      %v6781 = vpop.permute.xlu0 %6780
      %6784 = vset.pattern.permute.xlu0 0
      %6785 = vperm.xlu0 %6784, %v6168
      %v6786 = vpop.permute.xlu0 %6785
      %6789 = vset.pattern.permute.xlu0 0
      %6790 = vperm.xlu0 %6789, %v6170
      %v6791 = vpop.permute.xlu0 %6790
      %6794 = vset.pattern.permute.xlu0 0
      %6795 = vperm.xlu0 %6794, %v6172
      %v6796 = vpop.permute.xlu0 %6795
      %6799 = vset.pattern.permute.xlu0 0
      %6800 = vperm.xlu0 %6799, %v6174
      %v6801 = vpop.permute.xlu0 %6800
      %6804 = vset.pattern.permute.xlu0 0
      %6805 = vperm.xlu0 %6804, %v6176
      %v6806 = vpop.permute.xlu0 %6805
      %6809 = vset.pattern.permute.xlu0 0
      %6810 = vperm.xlu0 %6809, %v6178
      %v6811 = vpop.permute.xlu0 %6810
      %6814 = vset.pattern.permute.xlu0 0
      %6815 = vperm.xlu0 %6814, %v6180
      %v6816 = vpop.permute.xlu0 %6815
      %6819 = vset.pattern.permute.xlu0 0
      %6820 = vperm.xlu0 %6819, %v6182
      %v6821 = vpop.permute.xlu0 %6820
      %v6823 = vmul.f32 %v6186, %v4379
      %v6824 = vmul.f32 %v6191, %v4382
      %v6825 = vmul.f32 %v6196, %v4387
      %v6826 = vmul.f32 %v6201, %v4390
      %v6827 = vmul.f32 %v6206, %v4395
      %v6828 = vmul.f32 %v6211, %v4398
      %v6829 = vmul.f32 %v6216, %v4403
      %v6830 = vmul.f32 %v6221, %v4406
      %v6831 = vmul.f32 %v6226, %v4411
      %v6832 = vmul.f32 %v6231, %v4414
      %v6833 = vmul.f32 %v6236, %v4419
      %v6834 = vmul.f32 %v6241, %v4422
      %v6835 = vmul.f32 %v6246, %v4427
      %v6836 = vmul.f32 %v6251, %v4430
      %v6837 = vmul.f32 %v6256, %v4435
      %v6838 = vmul.f32 %v6261, %v4438
      %v6839 = vmul.f32 %v6266, %v4443
      %v6840 = vmul.f32 %v6271, %v4446
      %v6841 = vmul.f32 %v6276, %v4451
      %v6842 = vmul.f32 %v6281, %v4454
      %v6843 = vmul.f32 %v6286, %v4459
      %v6844 = vmul.f32 %v6291, %v4462
      %v6845 = vmul.f32 %v6296, %v4467
      %v6846 = vmul.f32 %v6301, %v4470
      %v6847 = vmul.f32 %v6306, %v4475
      %v6848 = vmul.f32 %v6311, %v4478
      %v6849 = vmul.f32 %v6316, %v4483
      %v6850 = vmul.f32 %v6321, %v4486
      %v6851 = vmul.f32 %v6326, %v4491
      %v6852 = vmul.f32 %v6331, %v4494
      %v6853 = vmul.f32 %v6336, %v4499
      %v6854 = vmul.f32 %v6341, %v4502
      %v6855 = vmul.f32 %v6346, %v4507
      %v6856 = vmul.f32 %v6351, %v4510
      %v6857 = vmul.f32 %v6356, %v4515
      %v6858 = vmul.f32 %v6361, %v4518
      %v6859 = vmul.f32 %v6366, %v4523
      %v6860 = vmul.f32 %v6371, %v4526
      %v6861 = vmul.f32 %v6376, %v4531
      %v6862 = vmul.f32 %v6381, %v4534
      %v6863 = vmul.f32 %v6386, %v4539
      %v6864 = vmul.f32 %v6391, %v4542
      %v6865 = vmul.f32 %v6396, %v4547
      %v6866 = vmul.f32 %v6401, %v4550
      %v6867 = vmul.f32 %v6406, %v4555
      %v6868 = vmul.f32 %v6411, %v4558
      %v6869 = vmul.f32 %v6416, %v4563
      %v6870 = vmul.f32 %v6421, %v4566
      %v6871 = vmul.f32 %v6426, %v4571
      %v6872 = vmul.f32 %v6431, %v4574
      %v6873 = vmul.f32 %v6436, %v4579
      %v6874 = vmul.f32 %v6441, %v4582
      %v6875 = vmul.f32 %v6446, %v4587
      %v6876 = vmul.f32 %v6451, %v4590
      %v6877 = vmul.f32 %v6456, %v4595
      %v6878 = vmul.f32 %v6461, %v4598
      %v6879 = vmul.f32 %v6466, %v4603
      %v6880 = vmul.f32 %v6471, %v4606
      %v6881 = vmul.f32 %v6476, %v4611
      %v6882 = vmul.f32 %v6481, %v4614
      %v6883 = vmul.f32 %v6486, %v4619
      %v6884 = vmul.f32 %v6491, %v4622
      %v6885 = vmul.f32 %v6496, %v4627
      %v6886 = vmul.f32 %v6501, %v4630
      %v6887 = vmul.f32 %v6506, %v4635
      %v6888 = vmul.f32 %v6511, %v4638
      %v6889 = vmul.f32 %v6516, %v4643
      %v6890 = vmul.f32 %v6521, %v4646
      %v6891 = vmul.f32 %v6526, %v4651
      %v6892 = vmul.f32 %v6531, %v4654
      %v6893 = vmul.f32 %v6536, %v4659
      %v6894 = vmul.f32 %v6541, %v4662
      %v6895 = vmul.f32 %v6546, %v4667
      %v6896 = vmul.f32 %v6551, %v4670
      %v6897 = vmul.f32 %v6556, %v4675
      %v6898 = vmul.f32 %v6561, %v4678
      %v6899 = vmul.f32 %v6566, %v4683
      %v6900 = vmul.f32 %v6571, %v4686
      %v6901 = vmul.f32 %v6576, %v4691
      %v6902 = vmul.f32 %v6581, %v4694
      %v6903 = vmul.f32 %v6586, %v4699
      %v6904 = vmul.f32 %v6591, %v4702
      %v6905 = vmul.f32 %v6596, %v4707
      %v6906 = vmul.f32 %v6601, %v4710
      %v6907 = vmul.f32 %v6606, %v4715
      %v6908 = vmul.f32 %v6611, %v4718
      %v6909 = vmul.f32 %v6616, %v4723
      %v6910 = vmul.f32 %v6621, %v4726
      %v6911 = vmul.f32 %v6626, %v4731
      %v6912 = vmul.f32 %v6631, %v4734
      %v6913 = vmul.f32 %v6636, %v4739
      %v6914 = vmul.f32 %v6641, %v4742
      %v6915 = vmul.f32 %v6646, %v4747
      %v6916 = vmul.f32 %v6651, %v4750
      %v6917 = vmul.f32 %v6656, %v4755
      %v6918 = vmul.f32 %v6661, %v4758
      %v6919 = vmul.f32 %v6666, %v4763
      %v6920 = vmul.f32 %v6671, %v4766
      %v6921 = vmul.f32 %v6676, %v4771
      %v6922 = vmul.f32 %v6681, %v4774
      %v6923 = vmul.f32 %v6686, %v4779
      %v6924 = vmul.f32 %v6691, %v4782
      %v6925 = vmul.f32 %v6696, %v4787
      %v6926 = vmul.f32 %v6701, %v4790
      %v6927 = vmul.f32 %v6706, %v4795
      %v6928 = vmul.f32 %v6711, %v4798
      %v6929 = vmul.f32 %v6716, %v4803
      %v6930 = vmul.f32 %v6721, %v4806
      %v6931 = vmul.f32 %v6726, %v4811
      %v6932 = vmul.f32 %v6731, %v4814
      %v6933 = vmul.f32 %v6736, %v4819
      %v6934 = vmul.f32 %v6741, %v4822
      %v6935 = vmul.f32 %v6746, %v4827
      %v6936 = vmul.f32 %v6751, %v4830
      %v6937 = vmul.f32 %v6756, %v4835
      %v6938 = vmul.f32 %v6761, %v4838
      %v6939 = vmul.f32 %v6766, %v4843
      %v6940 = vmul.f32 %v6771, %v4846
      %v6941 = vmul.f32 %v6776, %v4851
      %v6942 = vmul.f32 %v6781, %v4854
      %v6943 = vmul.f32 %v6786, %v4859
      %v6944 = vmul.f32 %v6791, %v4862
      %v6945 = vmul.f32 %v6796, %v4867
      %v6946 = vmul.f32 %v6801, %v4870
      %v6947 = vmul.f32 %v6806, %v4875
      %v6948 = vmul.f32 %v6811, %v4878
      %v6949 = vmul.f32 %v6816, %v4883
      %v6950 = vmul.f32 %v6821, %v4886
      %v6951 = vld [vmem:[%s450] sm:$0xff]
      %v6952 = vld [vmem:[%s450 + $0x8] sm:$0xff]
      %v6953 = vld [vmem:[%s450 + $0x10] sm:$0xff]
      %v6954 = vld [vmem:[%s450 + $0x18] sm:$0xff]
      %v6955 = vld [vmem:[%s450 + $0x20] sm:$0xff]
      %v6956 = vld [vmem:[%s450 + $0x28] sm:$0xff]
      %v6957 = vld [vmem:[%s450 + $0x30] sm:$0xff]
      %v6958 = vld [vmem:[%s450 + $0x38] sm:$0xff]
      %v6959 = vld [vmem:[%s450 + $0x40] sm:$0xff]
      %v6960 = vld [vmem:[%s450 + $0x48] sm:$0xff]
      %v6961 = vld [vmem:[%s450 + $0x50] sm:$0xff]
      %v6962 = vld [vmem:[%s450 + $0x58] sm:$0xff]
      %v6963 = vld [vmem:[%s450 + $0x60] sm:$0xff]
      %v6964 = vld [vmem:[%s450 + $0x68] sm:$0xff]
      %v6965 = vld [vmem:[%s450 + $0x70] sm:$0xff]
      %v6966 = vld [vmem:[%s450 + $0x78] sm:$0xff]
      %v6967 = vld [vmem:[%s450 + $0x80] sm:$0xff]
      %v6968 = vld [vmem:[%s450 + $0x88] sm:$0xff]
      %v6969 = vld [vmem:[%s450 + $0x90] sm:$0xff]
      %v6970 = vld [vmem:[%s450 + $0x98] sm:$0xff]
      %v6971 = vld [vmem:[%s450 + $0xa0] sm:$0xff]
      %v6972 = vld [vmem:[%s450 + $0xa8] sm:$0xff]
      %v6973 = vld [vmem:[%s450 + $0xb0] sm:$0xff]
      %v6974 = vld [vmem:[%s450 + $0xb8] sm:$0xff]
      %v6975 = vld [vmem:[%s450 + $0xc0] sm:$0xff]
      %v6976 = vld [vmem:[%s450 + $0xc8] sm:$0xff]
      %v6977 = vld [vmem:[%s450 + $0xd0] sm:$0xff]
      %v6978 = vld [vmem:[%s450 + $0xd8] sm:$0xff]
      %v6979 = vld [vmem:[%s450 + $0xe0] sm:$0xff]
      %v6980 = vld [vmem:[%s450 + $0xe8] sm:$0xff]
      %v6981 = vld [vmem:[%s450 + $0xf0] sm:$0xff]
      %v6982 = vld [vmem:[%s450 + $0xf8] sm:$0xff]
      %v6983 = vld [vmem:[%s450 + $0x100] sm:$0xff]
      %v6984 = vld [vmem:[%s450 + $0x108] sm:$0xff]
      %v6985 = vld [vmem:[%s450 + $0x110] sm:$0xff]
      %v6986 = vld [vmem:[%s450 + $0x118] sm:$0xff]
      %v6987 = vld [vmem:[%s450 + $0x120] sm:$0xff]
      %v6988 = vld [vmem:[%s450 + $0x128] sm:$0xff]
      %v6989 = vld [vmem:[%s450 + $0x130] sm:$0xff]
      %v6990 = vld [vmem:[%s450 + $0x138] sm:$0xff]
      %v6991 = vld [vmem:[%s450 + $0x140] sm:$0xff]
      %v6992 = vld [vmem:[%s450 + $0x148] sm:$0xff]
      %v6993 = vld [vmem:[%s450 + $0x150] sm:$0xff]
      %v6994 = vld [vmem:[%s450 + $0x158] sm:$0xff]
      %v6995 = vld [vmem:[%s450 + $0x160] sm:$0xff]
      %v6996 = vld [vmem:[%s450 + $0x168] sm:$0xff]
      %v6997 = vld [vmem:[%s450 + $0x170] sm:$0xff]
      %v6998 = vld [vmem:[%s450 + $0x178] sm:$0xff]
      %v6999 = vld [vmem:[%s450 + $0x180] sm:$0xff]
      %v7000 = vld [vmem:[%s450 + $0x188] sm:$0xff]
      %v7001 = vld [vmem:[%s450 + $0x190] sm:$0xff]
      %v7002 = vld [vmem:[%s450 + $0x198] sm:$0xff]
      %v7003 = vld [vmem:[%s450 + $0x1a0] sm:$0xff]
      %v7004 = vld [vmem:[%s450 + $0x1a8] sm:$0xff]
      %v7005 = vld [vmem:[%s450 + $0x1b0] sm:$0xff]
      %v7006 = vld [vmem:[%s450 + $0x1b8] sm:$0xff]
      %v7007 = vld [vmem:[%s450 + $0x1c0] sm:$0xff]
      %v7008 = vld [vmem:[%s450 + $0x1c8] sm:$0xff]
      %v7009 = vld [vmem:[%s450 + $0x1d0] sm:$0xff]
      %v7010 = vld [vmem:[%s450 + $0x1d8] sm:$0xff]
      %v7011 = vld [vmem:[%s450 + $0x1e0] sm:$0xff]
      %v7012 = vld [vmem:[%s450 + $0x1e8] sm:$0xff]
      %v7013 = vld [vmem:[%s450 + $0x1f0] sm:$0xff]
      %v7014 = vld [vmem:[%s450 + $0x1f8] sm:$0xff]
      %v7015 = vld [vmem:[%s450 + $0x200] sm:$0xff]
      %v7016 = vld [vmem:[%s450 + $0x208] sm:$0xff]
      %v7017 = vld [vmem:[%s450 + $0x210] sm:$0xff]
      %v7018 = vld [vmem:[%s450 + $0x218] sm:$0xff]
      %v7019 = vld [vmem:[%s450 + $0x220] sm:$0xff]
      %v7020 = vld [vmem:[%s450 + $0x228] sm:$0xff]
      %v7021 = vld [vmem:[%s450 + $0x230] sm:$0xff]
      %v7022 = vld [vmem:[%s450 + $0x238] sm:$0xff]
      %v7023 = vld [vmem:[%s450 + $0x240] sm:$0xff]
      %v7024 = vld [vmem:[%s450 + $0x248] sm:$0xff]
      %v7025 = vld [vmem:[%s450 + $0x250] sm:$0xff]
      %v7026 = vld [vmem:[%s450 + $0x258] sm:$0xff]
      %v7027 = vld [vmem:[%s450 + $0x260] sm:$0xff]
      %v7028 = vld [vmem:[%s450 + $0x268] sm:$0xff]
      %v7029 = vld [vmem:[%s450 + $0x270] sm:$0xff]
      %v7030 = vld [vmem:[%s450 + $0x278] sm:$0xff]
      %v7031 = vld [vmem:[%s450 + $0x280] sm:$0xff]
      %v7032 = vld [vmem:[%s450 + $0x288] sm:$0xff]
      %v7033 = vld [vmem:[%s450 + $0x290] sm:$0xff]
      %v7034 = vld [vmem:[%s450 + $0x298] sm:$0xff]
      %v7035 = vld [vmem:[%s450 + $0x2a0] sm:$0xff]
      %v7036 = vld [vmem:[%s450 + $0x2a8] sm:$0xff]
      %v7037 = vld [vmem:[%s450 + $0x2b0] sm:$0xff]
      %v7038 = vld [vmem:[%s450 + $0x2b8] sm:$0xff]
      %v7039 = vld [vmem:[%s450 + $0x2c0] sm:$0xff]
      %v7040 = vld [vmem:[%s450 + $0x2c8] sm:$0xff]
      %v7041 = vld [vmem:[%s450 + $0x2d0] sm:$0xff]
      %v7042 = vld [vmem:[%s450 + $0x2d8] sm:$0xff]
      %v7043 = vld [vmem:[%s450 + $0x2e0] sm:$0xff]
      %v7044 = vld [vmem:[%s450 + $0x2e8] sm:$0xff]
      %v7045 = vld [vmem:[%s450 + $0x2f0] sm:$0xff]
      %v7046 = vld [vmem:[%s450 + $0x2f8] sm:$0xff]
      %v7047 = vld [vmem:[%s450 + $0x300] sm:$0xff]
      %v7048 = vld [vmem:[%s450 + $0x308] sm:$0xff]
      %v7049 = vld [vmem:[%s450 + $0x310] sm:$0xff]
      %v7050 = vld [vmem:[%s450 + $0x318] sm:$0xff]
      %v7051 = vld [vmem:[%s450 + $0x320] sm:$0xff]
      %v7052 = vld [vmem:[%s450 + $0x328] sm:$0xff]
      %v7053 = vld [vmem:[%s450 + $0x330] sm:$0xff]
      %v7054 = vld [vmem:[%s450 + $0x338] sm:$0xff]
      %v7055 = vld [vmem:[%s450 + $0x340] sm:$0xff]
      %v7056 = vld [vmem:[%s450 + $0x348] sm:$0xff]
      %v7057 = vld [vmem:[%s450 + $0x350] sm:$0xff]
      %v7058 = vld [vmem:[%s450 + $0x358] sm:$0xff]
      %v7059 = vld [vmem:[%s450 + $0x360] sm:$0xff]
      %v7060 = vld [vmem:[%s450 + $0x368] sm:$0xff]
      %v7061 = vld [vmem:[%s450 + $0x370] sm:$0xff]
      %v7062 = vld [vmem:[%s450 + $0x378] sm:$0xff]
      %v7063 = vld [vmem:[%s450 + $0x380] sm:$0xff]
      %v7064 = vld [vmem:[%s450 + $0x388] sm:$0xff]
      %v7065 = vld [vmem:[%s450 + $0x390] sm:$0xff]
      %v7066 = vld [vmem:[%s450 + $0x398] sm:$0xff]
      %v7067 = vld [vmem:[%s450 + $0x3a0] sm:$0xff]
      %v7068 = vld [vmem:[%s450 + $0x3a8] sm:$0xff]
      %v7069 = vld [vmem:[%s450 + $0x3b0] sm:$0xff]
      %v7070 = vld [vmem:[%s450 + $0x3b8] sm:$0xff]
      %v7071 = vld [vmem:[%s450 + $0x3c0] sm:$0xff]
      %v7072 = vld [vmem:[%s450 + $0x3c8] sm:$0xff]
      %v7073 = vld [vmem:[%s450 + $0x3d0] sm:$0xff]
      %v7074 = vld [vmem:[%s450 + $0x3d8] sm:$0xff]
      %v7075 = vld [vmem:[%s450 + $0x3e0] sm:$0xff]
      %v7076 = vld [vmem:[%s450 + $0x3e8] sm:$0xff]
      %v7077 = vld [vmem:[%s450 + $0x3f0] sm:$0xff]
      %v7078 = vld [vmem:[%s450 + $0x3f8] sm:$0xff]
      %vm7079 = vcmp.eq.s32.totalorder %v6951, 0
      %vm7080 = vcmp.eq.s32.totalorder %v6952, 0
      %vm7081 = vcmp.eq.s32.totalorder %v6953, 0
      %vm7082 = vcmp.eq.s32.totalorder %v6954, 0
      %vm7083 = vcmp.eq.s32.totalorder %v6955, 0
      %vm7084 = vcmp.eq.s32.totalorder %v6956, 0
      %vm7085 = vcmp.eq.s32.totalorder %v6957, 0
      %vm7086 = vcmp.eq.s32.totalorder %v6958, 0
      %vm7087 = vcmp.eq.s32.totalorder %v6959, 0
      %vm7088 = vcmp.eq.s32.totalorder %v6960, 0
      %vm7089 = vcmp.eq.s32.totalorder %v6961, 0
      %vm7090 = vcmp.eq.s32.totalorder %v6962, 0
      %vm7091 = vcmp.eq.s32.totalorder %v6963, 0
      %vm7092 = vcmp.eq.s32.totalorder %v6964, 0
      %vm7093 = vcmp.eq.s32.totalorder %v6965, 0
      %vm7094 = vcmp.eq.s32.totalorder %v6966, 0
      %vm7095 = vcmp.eq.s32.totalorder %v6967, 0
      %vm7096 = vcmp.eq.s32.totalorder %v6968, 0
      %vm7097 = vcmp.eq.s32.totalorder %v6969, 0
      %vm7098 = vcmp.eq.s32.totalorder %v6970, 0
      %vm7099 = vcmp.eq.s32.totalorder %v6971, 0
      %vm7100 = vcmp.eq.s32.totalorder %v6972, 0
      %vm7101 = vcmp.eq.s32.totalorder %v6973, 0
      %vm7102 = vcmp.eq.s32.totalorder %v6974, 0
      %vm7103 = vcmp.eq.s32.totalorder %v6975, 0
      %vm7104 = vcmp.eq.s32.totalorder %v6976, 0
      %vm7105 = vcmp.eq.s32.totalorder %v6977, 0
      %vm7106 = vcmp.eq.s32.totalorder %v6978, 0
      %vm7107 = vcmp.eq.s32.totalorder %v6979, 0
      %vm7108 = vcmp.eq.s32.totalorder %v6980, 0
      %vm7109 = vcmp.eq.s32.totalorder %v6981, 0
      %vm7110 = vcmp.eq.s32.totalorder %v6982, 0
      %vm7111 = vcmp.eq.s32.totalorder %v6983, 0
      %vm7112 = vcmp.eq.s32.totalorder %v6984, 0
      %vm7113 = vcmp.eq.s32.totalorder %v6985, 0
      %vm7114 = vcmp.eq.s32.totalorder %v6986, 0
      %vm7115 = vcmp.eq.s32.totalorder %v6987, 0
      %vm7116 = vcmp.eq.s32.totalorder %v6988, 0
      %vm7117 = vcmp.eq.s32.totalorder %v6989, 0
      %vm7118 = vcmp.eq.s32.totalorder %v6990, 0
      %vm7119 = vcmp.eq.s32.totalorder %v6991, 0
      %vm7120 = vcmp.eq.s32.totalorder %v6992, 0
      %vm7121 = vcmp.eq.s32.totalorder %v6993, 0
      %vm7122 = vcmp.eq.s32.totalorder %v6994, 0
      %vm7123 = vcmp.eq.s32.totalorder %v6995, 0
      %vm7124 = vcmp.eq.s32.totalorder %v6996, 0
      %vm7125 = vcmp.eq.s32.totalorder %v6997, 0
      %vm7126 = vcmp.eq.s32.totalorder %v6998, 0
      %vm7127 = vcmp.eq.s32.totalorder %v6999, 0
      %vm7128 = vcmp.eq.s32.totalorder %v7000, 0
      %vm7129 = vcmp.eq.s32.totalorder %v7001, 0
      %vm7130 = vcmp.eq.s32.totalorder %v7002, 0
      %vm7131 = vcmp.eq.s32.totalorder %v7003, 0
      %vm7132 = vcmp.eq.s32.totalorder %v7004, 0
      %vm7133 = vcmp.eq.s32.totalorder %v7005, 0
      %vm7134 = vcmp.eq.s32.totalorder %v7006, 0
      %vm7135 = vcmp.eq.s32.totalorder %v7007, 0
      %vm7136 = vcmp.eq.s32.totalorder %v7008, 0
      %vm7137 = vcmp.eq.s32.totalorder %v7009, 0
      %vm7138 = vcmp.eq.s32.totalorder %v7010, 0
      %vm7139 = vcmp.eq.s32.totalorder %v7011, 0
      %vm7140 = vcmp.eq.s32.totalorder %v7012, 0
      %vm7141 = vcmp.eq.s32.totalorder %v7013, 0
      %vm7142 = vcmp.eq.s32.totalorder %v7014, 0
      %vm7143 = vcmp.eq.s32.totalorder %v7015, 0
      %vm7144 = vcmp.eq.s32.totalorder %v7016, 0
      %vm7145 = vcmp.eq.s32.totalorder %v7017, 0
      %vm7146 = vcmp.eq.s32.totalorder %v7018, 0
      %vm7147 = vcmp.eq.s32.totalorder %v7019, 0
      %vm7148 = vcmp.eq.s32.totalorder %v7020, 0
      %vm7149 = vcmp.eq.s32.totalorder %v7021, 0
      %vm7150 = vcmp.eq.s32.totalorder %v7022, 0
      %vm7151 = vcmp.eq.s32.totalorder %v7023, 0
      %vm7152 = vcmp.eq.s32.totalorder %v7024, 0
      %vm7153 = vcmp.eq.s32.totalorder %v7025, 0
      %vm7154 = vcmp.eq.s32.totalorder %v7026, 0
      %vm7155 = vcmp.eq.s32.totalorder %v7027, 0
      %vm7156 = vcmp.eq.s32.totalorder %v7028, 0
      %vm7157 = vcmp.eq.s32.totalorder %v7029, 0
      %vm7158 = vcmp.eq.s32.totalorder %v7030, 0
      %vm7159 = vcmp.eq.s32.totalorder %v7031, 0
      %vm7160 = vcmp.eq.s32.totalorder %v7032, 0
      %vm7161 = vcmp.eq.s32.totalorder %v7033, 0
      %vm7162 = vcmp.eq.s32.totalorder %v7034, 0
      %vm7163 = vcmp.eq.s32.totalorder %v7035, 0
      %vm7164 = vcmp.eq.s32.totalorder %v7036, 0
      %vm7165 = vcmp.eq.s32.totalorder %v7037, 0
      %vm7166 = vcmp.eq.s32.totalorder %v7038, 0
      %vm7167 = vcmp.eq.s32.totalorder %v7039, 0
      %vm7168 = vcmp.eq.s32.totalorder %v7040, 0
      %vm7169 = vcmp.eq.s32.totalorder %v7041, 0
      %vm7170 = vcmp.eq.s32.totalorder %v7042, 0
      %vm7171 = vcmp.eq.s32.totalorder %v7043, 0
      %vm7172 = vcmp.eq.s32.totalorder %v7044, 0
      %vm7173 = vcmp.eq.s32.totalorder %v7045, 0
      %vm7174 = vcmp.eq.s32.totalorder %v7046, 0
      %vm7175 = vcmp.eq.s32.totalorder %v7047, 0
      %vm7176 = vcmp.eq.s32.totalorder %v7048, 0
      %vm7177 = vcmp.eq.s32.totalorder %v7049, 0
      %vm7178 = vcmp.eq.s32.totalorder %v7050, 0
      %vm7179 = vcmp.eq.s32.totalorder %v7051, 0
      %vm7180 = vcmp.eq.s32.totalorder %v7052, 0
      %vm7181 = vcmp.eq.s32.totalorder %v7053, 0
      %vm7182 = vcmp.eq.s32.totalorder %v7054, 0
      %vm7183 = vcmp.eq.s32.totalorder %v7055, 0
      %vm7184 = vcmp.eq.s32.totalorder %v7056, 0
      %vm7185 = vcmp.eq.s32.totalorder %v7057, 0
      %vm7186 = vcmp.eq.s32.totalorder %v7058, 0
      %vm7187 = vcmp.eq.s32.totalorder %v7059, 0
      %vm7188 = vcmp.eq.s32.totalorder %v7060, 0
      %vm7189 = vcmp.eq.s32.totalorder %v7061, 0
      %vm7190 = vcmp.eq.s32.totalorder %v7062, 0
      %vm7191 = vcmp.eq.s32.totalorder %v7063, 0
      %vm7192 = vcmp.eq.s32.totalorder %v7064, 0
      %vm7193 = vcmp.eq.s32.totalorder %v7065, 0
      %vm7194 = vcmp.eq.s32.totalorder %v7066, 0
      %vm7195 = vcmp.eq.s32.totalorder %v7067, 0
      %vm7196 = vcmp.eq.s32.totalorder %v7068, 0
      %vm7197 = vcmp.eq.s32.totalorder %v7069, 0
      %vm7198 = vcmp.eq.s32.totalorder %v7070, 0
      %vm7199 = vcmp.eq.s32.totalorder %v7071, 0
      %vm7200 = vcmp.eq.s32.totalorder %v7072, 0
      %vm7201 = vcmp.eq.s32.totalorder %v7073, 0
      %vm7202 = vcmp.eq.s32.totalorder %v7074, 0
      %vm7203 = vcmp.eq.s32.totalorder %v7075, 0
      %vm7204 = vcmp.eq.s32.totalorder %v7076, 0
      %vm7205 = vcmp.eq.s32.totalorder %v7077, 0
      %vm7206 = vcmp.eq.s32.totalorder %v7078, 0
      %v7207 = vsel %vm7079, 1, 0
      %v7208 = vsel %vm7080, 1, 0
      %v7209 = vsel %vm7081, 1, 0
      %v7210 = vsel %vm7082, 1, 0
      %v7211 = vsel %vm7083, 1, 0
      %v7212 = vsel %vm7084, 1, 0
      %v7213 = vsel %vm7085, 1, 0
      %v7214 = vsel %vm7086, 1, 0
      %v7215 = vsel %vm7087, 1, 0
      %v7216 = vsel %vm7088, 1, 0
      %v7217 = vsel %vm7089, 1, 0
      %v7218 = vsel %vm7090, 1, 0
      %v7219 = vsel %vm7091, 1, 0
      %v7220 = vsel %vm7092, 1, 0
      %v7221 = vsel %vm7093, 1, 0
      %v7222 = vsel %vm7094, 1, 0
      %v7223 = vsel %vm7095, 1, 0
      %v7224 = vsel %vm7096, 1, 0
      %v7225 = vsel %vm7097, 1, 0
      %v7226 = vsel %vm7098, 1, 0
      %v7227 = vsel %vm7099, 1, 0
      %v7228 = vsel %vm7100, 1, 0
      %v7229 = vsel %vm7101, 1, 0
      %v7230 = vsel %vm7102, 1, 0
      %v7231 = vsel %vm7103, 1, 0
      %v7232 = vsel %vm7104, 1, 0
      %v7233 = vsel %vm7105, 1, 0
      %v7234 = vsel %vm7106, 1, 0
      %v7235 = vsel %vm7107, 1, 0
      %v7236 = vsel %vm7108, 1, 0
      %v7237 = vsel %vm7109, 1, 0
      %v7238 = vsel %vm7110, 1, 0
      %v7239 = vsel %vm7111, 1, 0
      %v7240 = vsel %vm7112, 1, 0
      %v7241 = vsel %vm7113, 1, 0
      %v7242 = vsel %vm7114, 1, 0
      %v7243 = vsel %vm7115, 1, 0
      %v7244 = vsel %vm7116, 1, 0
      %v7245 = vsel %vm7117, 1, 0
      %v7246 = vsel %vm7118, 1, 0
      %v7247 = vsel %vm7119, 1, 0
      %v7248 = vsel %vm7120, 1, 0
      %v7249 = vsel %vm7121, 1, 0
      %v7250 = vsel %vm7122, 1, 0
      %v7251 = vsel %vm7123, 1, 0
      %v7252 = vsel %vm7124, 1, 0
      %v7253 = vsel %vm7125, 1, 0
      %v7254 = vsel %vm7126, 1, 0
      %v7255 = vsel %vm7127, 1, 0
      %v7256 = vsel %vm7128, 1, 0
      %v7257 = vsel %vm7129, 1, 0
      %v7258 = vsel %vm7130, 1, 0
      %v7259 = vsel %vm7131, 1, 0
      %v7260 = vsel %vm7132, 1, 0
      %v7261 = vsel %vm7133, 1, 0
      %v7262 = vsel %vm7134, 1, 0
      %v7263 = vsel %vm7135, 1, 0
      %v7264 = vsel %vm7136, 1, 0
      %v7265 = vsel %vm7137, 1, 0
      %v7266 = vsel %vm7138, 1, 0
      %v7267 = vsel %vm7139, 1, 0
      %v7268 = vsel %vm7140, 1, 0
      %v7269 = vsel %vm7141, 1, 0
      %v7270 = vsel %vm7142, 1, 0
      %v7271 = vsel %vm7143, 1, 0
      %v7272 = vsel %vm7144, 1, 0
      %v7273 = vsel %vm7145, 1, 0
      %v7274 = vsel %vm7146, 1, 0
      %v7275 = vsel %vm7147, 1, 0
      %v7276 = vsel %vm7148, 1, 0
      %v7277 = vsel %vm7149, 1, 0
      %v7278 = vsel %vm7150, 1, 0
      %v7279 = vsel %vm7151, 1, 0
      %v7280 = vsel %vm7152, 1, 0
      %v7281 = vsel %vm7153, 1, 0
      %v7282 = vsel %vm7154, 1, 0
      %v7283 = vsel %vm7155, 1, 0
      %v7284 = vsel %vm7156, 1, 0
      %v7285 = vsel %vm7157, 1, 0
      %v7286 = vsel %vm7158, 1, 0
      %v7287 = vsel %vm7159, 1, 0
      %v7288 = vsel %vm7160, 1, 0
      %v7289 = vsel %vm7161, 1, 0
      %v7290 = vsel %vm7162, 1, 0
      %v7291 = vsel %vm7163, 1, 0
      %v7292 = vsel %vm7164, 1, 0
      %v7293 = vsel %vm7165, 1, 0
      %v7294 = vsel %vm7166, 1, 0
      %v7295 = vsel %vm7167, 1, 0
      %v7296 = vsel %vm7168, 1, 0
      %v7297 = vsel %vm7169, 1, 0
      %v7298 = vsel %vm7170, 1, 0
      %v7299 = vsel %vm7171, 1, 0
      %v7300 = vsel %vm7172, 1, 0
      %v7301 = vsel %vm7173, 1, 0
      %v7302 = vsel %vm7174, 1, 0
      %v7303 = vsel %vm7175, 1, 0
      %v7304 = vsel %vm7176, 1, 0
      %v7305 = vsel %vm7177, 1, 0
      %v7306 = vsel %vm7178, 1, 0
      %v7307 = vsel %vm7179, 1, 0
      %v7308 = vsel %vm7180, 1, 0
      %v7309 = vsel %vm7181, 1, 0
      %v7310 = vsel %vm7182, 1, 0
      %v7311 = vsel %vm7183, 1, 0
      %v7312 = vsel %vm7184, 1, 0
      %v7313 = vsel %vm7185, 1, 0
      %v7314 = vsel %vm7186, 1, 0
      %v7315 = vsel %vm7187, 1, 0
      %v7316 = vsel %vm7188, 1, 0
      %v7317 = vsel %vm7189, 1, 0
      %v7318 = vsel %vm7190, 1, 0
      %v7319 = vsel %vm7191, 1, 0
      %v7320 = vsel %vm7192, 1, 0
      %v7321 = vsel %vm7193, 1, 0
      %v7322 = vsel %vm7194, 1, 0
      %v7323 = vsel %vm7195, 1, 0
      %v7324 = vsel %vm7196, 1, 0
      %v7325 = vsel %vm7197, 1, 0
      %v7326 = vsel %vm7198, 1, 0
      %v7327 = vsel %vm7199, 1, 0
      %v7328 = vsel %vm7200, 1, 0
      %v7329 = vsel %vm7201, 1, 0
      %v7330 = vsel %vm7202, 1, 0
      %v7331 = vsel %vm7203, 1, 0
      %v7332 = vsel %vm7204, 1, 0
      %v7333 = vsel %vm7205, 1, 0
      %v7334 = vsel %vm7206, 1, 0
      %7335 = vset.pattern.permute.xlu0 0
      %7336 = vperm.xlu0 %7335, %v7207
      %v7337 = vpop.permute.xlu0 %7336
      %7338 = vset.pattern.permute.xlu0 0
      %7339 = vperm.xlu0 %7338, %v7208
      %v7340 = vpop.permute.xlu0 %7339
      %7341 = vset.pattern.permute.xlu0 0
      %7342 = vperm.xlu0 %7341, %v7209
      %v7343 = vpop.permute.xlu0 %7342
      %7344 = vset.pattern.permute.xlu0 0
      %7345 = vperm.xlu0 %7344, %v7210
      %v7346 = vpop.permute.xlu0 %7345
      %7347 = vset.pattern.permute.xlu0 0
      %7348 = vperm.xlu0 %7347, %v7211
      %v7349 = vpop.permute.xlu0 %7348
      %7350 = vset.pattern.permute.xlu0 0
      %7351 = vperm.xlu0 %7350, %v7212
      %v7352 = vpop.permute.xlu0 %7351
      %7353 = vset.pattern.permute.xlu0 0
      %7354 = vperm.xlu0 %7353, %v7213
      %v7355 = vpop.permute.xlu0 %7354
      %7356 = vset.pattern.permute.xlu0 0
      %7357 = vperm.xlu0 %7356, %v7214
      %v7358 = vpop.permute.xlu0 %7357
      %7359 = vset.pattern.permute.xlu0 0
      %7360 = vperm.xlu0 %7359, %v7215
      %v7361 = vpop.permute.xlu0 %7360
      %7362 = vset.pattern.permute.xlu0 0
      %7363 = vperm.xlu0 %7362, %v7216
      %v7364 = vpop.permute.xlu0 %7363
      %7365 = vset.pattern.permute.xlu0 0
      %7366 = vperm.xlu0 %7365, %v7217
      %v7367 = vpop.permute.xlu0 %7366
      %7368 = vset.pattern.permute.xlu0 0
      %7369 = vperm.xlu0 %7368, %v7218
      %v7370 = vpop.permute.xlu0 %7369
      %7371 = vset.pattern.permute.xlu0 0
      %7372 = vperm.xlu0 %7371, %v7219
      %v7373 = vpop.permute.xlu0 %7372
      %7374 = vset.pattern.permute.xlu0 0
      %7375 = vperm.xlu0 %7374, %v7220
      %v7376 = vpop.permute.xlu0 %7375
      %7377 = vset.pattern.permute.xlu0 0
      %7378 = vperm.xlu0 %7377, %v7221
      %v7379 = vpop.permute.xlu0 %7378
      %7380 = vset.pattern.permute.xlu0 0
      %7381 = vperm.xlu0 %7380, %v7222
      %v7382 = vpop.permute.xlu0 %7381
      %7383 = vset.pattern.permute.xlu0 0
      %7384 = vperm.xlu0 %7383, %v7223
      %v7385 = vpop.permute.xlu0 %7384
      %7386 = vset.pattern.permute.xlu0 0
      %7387 = vperm.xlu0 %7386, %v7224
      %v7388 = vpop.permute.xlu0 %7387
      %7389 = vset.pattern.permute.xlu0 0
      %7390 = vperm.xlu0 %7389, %v7225
      %v7391 = vpop.permute.xlu0 %7390
      %7392 = vset.pattern.permute.xlu0 0
      %7393 = vperm.xlu0 %7392, %v7226
      %v7394 = vpop.permute.xlu0 %7393
      %7395 = vset.pattern.permute.xlu0 0
      %7396 = vperm.xlu0 %7395, %v7227
      %v7397 = vpop.permute.xlu0 %7396
      %7398 = vset.pattern.permute.xlu0 0
      %7399 = vperm.xlu0 %7398, %v7228
      %v7400 = vpop.permute.xlu0 %7399
      %7401 = vset.pattern.permute.xlu0 0
      %7402 = vperm.xlu0 %7401, %v7229
      %v7403 = vpop.permute.xlu0 %7402
      %7404 = vset.pattern.permute.xlu0 0
      %7405 = vperm.xlu0 %7404, %v7230
      %v7406 = vpop.permute.xlu0 %7405
      %7407 = vset.pattern.permute.xlu0 0
      %7408 = vperm.xlu0 %7407, %v7231
      %v7409 = vpop.permute.xlu0 %7408
      %7410 = vset.pattern.permute.xlu0 0
      %7411 = vperm.xlu0 %7410, %v7232
      %v7412 = vpop.permute.xlu0 %7411
      %7413 = vset.pattern.permute.xlu0 0
      %7414 = vperm.xlu0 %7413, %v7233
      %v7415 = vpop.permute.xlu0 %7414
      %7416 = vset.pattern.permute.xlu0 0
      %7417 = vperm.xlu0 %7416, %v7234
      %v7418 = vpop.permute.xlu0 %7417
      %7419 = vset.pattern.permute.xlu0 0
      %7420 = vperm.xlu0 %7419, %v7235
      %v7421 = vpop.permute.xlu0 %7420
      %7422 = vset.pattern.permute.xlu0 0
      %7423 = vperm.xlu0 %7422, %v7236
      %v7424 = vpop.permute.xlu0 %7423
      %7425 = vset.pattern.permute.xlu0 0
      %7426 = vperm.xlu0 %7425, %v7237
      %v7427 = vpop.permute.xlu0 %7426
      %7428 = vset.pattern.permute.xlu0 0
      %7429 = vperm.xlu0 %7428, %v7238
      %v7430 = vpop.permute.xlu0 %7429
      %7431 = vset.pattern.permute.xlu0 0
      %7432 = vperm.xlu0 %7431, %v7239
      %v7433 = vpop.permute.xlu0 %7432
      %7434 = vset.pattern.permute.xlu0 0
      %7435 = vperm.xlu0 %7434, %v7240
      %v7436 = vpop.permute.xlu0 %7435
      %7437 = vset.pattern.permute.xlu0 0
      %7438 = vperm.xlu0 %7437, %v7241
      %v7439 = vpop.permute.xlu0 %7438
      %7440 = vset.pattern.permute.xlu0 0
      %7441 = vperm.xlu0 %7440, %v7242
      %v7442 = vpop.permute.xlu0 %7441
      %7443 = vset.pattern.permute.xlu0 0
      %7444 = vperm.xlu0 %7443, %v7243
      %v7445 = vpop.permute.xlu0 %7444
      %7446 = vset.pattern.permute.xlu0 0
      %7447 = vperm.xlu0 %7446, %v7244
      %v7448 = vpop.permute.xlu0 %7447
      %7449 = vset.pattern.permute.xlu0 0
      %7450 = vperm.xlu0 %7449, %v7245
      %v7451 = vpop.permute.xlu0 %7450
      %7452 = vset.pattern.permute.xlu0 0
      %7453 = vperm.xlu0 %7452, %v7246
      %v7454 = vpop.permute.xlu0 %7453
      %7455 = vset.pattern.permute.xlu0 0
      %7456 = vperm.xlu0 %7455, %v7247
      %v7457 = vpop.permute.xlu0 %7456
      %7458 = vset.pattern.permute.xlu0 0
      %7459 = vperm.xlu0 %7458, %v7248
      %v7460 = vpop.permute.xlu0 %7459
      %7461 = vset.pattern.permute.xlu0 0
      %7462 = vperm.xlu0 %7461, %v7249
      %v7463 = vpop.permute.xlu0 %7462
      %7464 = vset.pattern.permute.xlu0 0
      %7465 = vperm.xlu0 %7464, %v7250
      %v7466 = vpop.permute.xlu0 %7465
      %7467 = vset.pattern.permute.xlu0 0
      %7468 = vperm.xlu0 %7467, %v7251
      %v7469 = vpop.permute.xlu0 %7468
      %7470 = vset.pattern.permute.xlu0 0
      %7471 = vperm.xlu0 %7470, %v7252
      %v7472 = vpop.permute.xlu0 %7471
      %7473 = vset.pattern.permute.xlu0 0
      %7474 = vperm.xlu0 %7473, %v7253
      %v7475 = vpop.permute.xlu0 %7474
      %7476 = vset.pattern.permute.xlu0 0
      %7477 = vperm.xlu0 %7476, %v7254
      %v7478 = vpop.permute.xlu0 %7477
      %7479 = vset.pattern.permute.xlu0 0
      %7480 = vperm.xlu0 %7479, %v7255
      %v7481 = vpop.permute.xlu0 %7480
      %7482 = vset.pattern.permute.xlu0 0
      %7483 = vperm.xlu0 %7482, %v7256
      %v7484 = vpop.permute.xlu0 %7483
      %7485 = vset.pattern.permute.xlu0 0
      %7486 = vperm.xlu0 %7485, %v7257
      %v7487 = vpop.permute.xlu0 %7486
      %7488 = vset.pattern.permute.xlu0 0
      %7489 = vperm.xlu0 %7488, %v7258
      %v7490 = vpop.permute.xlu0 %7489
      %7491 = vset.pattern.permute.xlu0 0
      %7492 = vperm.xlu0 %7491, %v7259
      %v7493 = vpop.permute.xlu0 %7492
      %7494 = vset.pattern.permute.xlu0 0
      %7495 = vperm.xlu0 %7494, %v7260
      %v7496 = vpop.permute.xlu0 %7495
      %7497 = vset.pattern.permute.xlu0 0
      %7498 = vperm.xlu0 %7497, %v7261
      %v7499 = vpop.permute.xlu0 %7498
      %7500 = vset.pattern.permute.xlu0 0
      %7501 = vperm.xlu0 %7500, %v7262
      %v7502 = vpop.permute.xlu0 %7501
      %7503 = vset.pattern.permute.xlu0 0
      %7504 = vperm.xlu0 %7503, %v7263
      %v7505 = vpop.permute.xlu0 %7504
      %7506 = vset.pattern.permute.xlu0 0
      %7507 = vperm.xlu0 %7506, %v7264
      %v7508 = vpop.permute.xlu0 %7507
      %7509 = vset.pattern.permute.xlu0 0
      %7510 = vperm.xlu0 %7509, %v7265
      %v7511 = vpop.permute.xlu0 %7510
      %7512 = vset.pattern.permute.xlu0 0
      %7513 = vperm.xlu0 %7512, %v7266
      %v7514 = vpop.permute.xlu0 %7513
      %7515 = vset.pattern.permute.xlu0 0
      %7516 = vperm.xlu0 %7515, %v7267
      %v7517 = vpop.permute.xlu0 %7516
      %7518 = vset.pattern.permute.xlu0 0
      %7519 = vperm.xlu0 %7518, %v7268
      %v7520 = vpop.permute.xlu0 %7519
      %7521 = vset.pattern.permute.xlu0 0
      %7522 = vperm.xlu0 %7521, %v7269
      %v7523 = vpop.permute.xlu0 %7522
      %7524 = vset.pattern.permute.xlu0 0
      %7525 = vperm.xlu0 %7524, %v7270
      %v7526 = vpop.permute.xlu0 %7525
      %7527 = vset.pattern.permute.xlu0 0
      %7528 = vperm.xlu0 %7527, %v7271
      %v7529 = vpop.permute.xlu0 %7528
      %7530 = vset.pattern.permute.xlu0 0
      %7531 = vperm.xlu0 %7530, %v7272
      %v7532 = vpop.permute.xlu0 %7531
      %7533 = vset.pattern.permute.xlu0 0
      %7534 = vperm.xlu0 %7533, %v7273
      %v7535 = vpop.permute.xlu0 %7534
      %7536 = vset.pattern.permute.xlu0 0
      %7537 = vperm.xlu0 %7536, %v7274
      %v7538 = vpop.permute.xlu0 %7537
      %7539 = vset.pattern.permute.xlu0 0
      %7540 = vperm.xlu0 %7539, %v7275
      %v7541 = vpop.permute.xlu0 %7540
      %7542 = vset.pattern.permute.xlu0 0
      %7543 = vperm.xlu0 %7542, %v7276
      %v7544 = vpop.permute.xlu0 %7543
      %7545 = vset.pattern.permute.xlu0 0
      %7546 = vperm.xlu0 %7545, %v7277
      %v7547 = vpop.permute.xlu0 %7546
      %7548 = vset.pattern.permute.xlu0 0
      %7549 = vperm.xlu0 %7548, %v7278
      %v7550 = vpop.permute.xlu0 %7549
      %7551 = vset.pattern.permute.xlu0 0
      %7552 = vperm.xlu0 %7551, %v7279
      %v7553 = vpop.permute.xlu0 %7552
      %7554 = vset.pattern.permute.xlu0 0
      %7555 = vperm.xlu0 %7554, %v7280
      %v7556 = vpop.permute.xlu0 %7555
      %7557 = vset.pattern.permute.xlu0 0
      %7558 = vperm.xlu0 %7557, %v7281
      %v7559 = vpop.permute.xlu0 %7558
      %7560 = vset.pattern.permute.xlu0 0
      %7561 = vperm.xlu0 %7560, %v7282
      %v7562 = vpop.permute.xlu0 %7561
      %7563 = vset.pattern.permute.xlu0 0
      %7564 = vperm.xlu0 %7563, %v7283
      %v7565 = vpop.permute.xlu0 %7564
      %7566 = vset.pattern.permute.xlu0 0
      %7567 = vperm.xlu0 %7566, %v7284
      %v7568 = vpop.permute.xlu0 %7567
      %7569 = vset.pattern.permute.xlu0 0
      %7570 = vperm.xlu0 %7569, %v7285
      %v7571 = vpop.permute.xlu0 %7570
      %7572 = vset.pattern.permute.xlu0 0
      %7573 = vperm.xlu0 %7572, %v7286
      %v7574 = vpop.permute.xlu0 %7573
      %7575 = vset.pattern.permute.xlu0 0
      %7576 = vperm.xlu0 %7575, %v7287
      %v7577 = vpop.permute.xlu0 %7576
      %7578 = vset.pattern.permute.xlu0 0
      %7579 = vperm.xlu0 %7578, %v7288
      %v7580 = vpop.permute.xlu0 %7579
      %7581 = vset.pattern.permute.xlu0 0
      %7582 = vperm.xlu0 %7581, %v7289
      %v7583 = vpop.permute.xlu0 %7582
      %7584 = vset.pattern.permute.xlu0 0
      %7585 = vperm.xlu0 %7584, %v7290
      %v7586 = vpop.permute.xlu0 %7585
      %7587 = vset.pattern.permute.xlu0 0
      %7588 = vperm.xlu0 %7587, %v7291
      %v7589 = vpop.permute.xlu0 %7588
      %7590 = vset.pattern.permute.xlu0 0
      %7591 = vperm.xlu0 %7590, %v7292
      %v7592 = vpop.permute.xlu0 %7591
      %7593 = vset.pattern.permute.xlu0 0
      %7594 = vperm.xlu0 %7593, %v7293
      %v7595 = vpop.permute.xlu0 %7594
      %7596 = vset.pattern.permute.xlu0 0
      %7597 = vperm.xlu0 %7596, %v7294
      %v7598 = vpop.permute.xlu0 %7597
      %7599 = vset.pattern.permute.xlu0 0
      %7600 = vperm.xlu0 %7599, %v7295
      %v7601 = vpop.permute.xlu0 %7600
      %7602 = vset.pattern.permute.xlu0 0
      %7603 = vperm.xlu0 %7602, %v7296
      %v7604 = vpop.permute.xlu0 %7603
      %7605 = vset.pattern.permute.xlu0 0
      %7606 = vperm.xlu0 %7605, %v7297
      %v7607 = vpop.permute.xlu0 %7606
      %7608 = vset.pattern.permute.xlu0 0
      %7609 = vperm.xlu0 %7608, %v7298
      %v7610 = vpop.permute.xlu0 %7609
      %7611 = vset.pattern.permute.xlu0 0
      %7612 = vperm.xlu0 %7611, %v7299
      %v7613 = vpop.permute.xlu0 %7612
      %7614 = vset.pattern.permute.xlu0 0
      %7615 = vperm.xlu0 %7614, %v7300
      %v7616 = vpop.permute.xlu0 %7615
      %7617 = vset.pattern.permute.xlu0 0
      %7618 = vperm.xlu0 %7617, %v7301
      %v7619 = vpop.permute.xlu0 %7618
      %7620 = vset.pattern.permute.xlu0 0
      %7621 = vperm.xlu0 %7620, %v7302
      %v7622 = vpop.permute.xlu0 %7621
      %7623 = vset.pattern.permute.xlu0 0
      %7624 = vperm.xlu0 %7623, %v7303
      %v7625 = vpop.permute.xlu0 %7624
      %7626 = vset.pattern.permute.xlu0 0
      %7627 = vperm.xlu0 %7626, %v7304
      %v7628 = vpop.permute.xlu0 %7627
      %7629 = vset.pattern.permute.xlu0 0
      %7630 = vperm.xlu0 %7629, %v7305
      %v7631 = vpop.permute.xlu0 %7630
      %7632 = vset.pattern.permute.xlu0 0
      %7633 = vperm.xlu0 %7632, %v7306
      %v7634 = vpop.permute.xlu0 %7633
      %7635 = vset.pattern.permute.xlu0 0
      %7636 = vperm.xlu0 %7635, %v7307
      %v7637 = vpop.permute.xlu0 %7636
      %7638 = vset.pattern.permute.xlu0 0
      %7639 = vperm.xlu0 %7638, %v7308
      %v7640 = vpop.permute.xlu0 %7639
      %7641 = vset.pattern.permute.xlu0 0
      %7642 = vperm.xlu0 %7641, %v7309
      %v7643 = vpop.permute.xlu0 %7642
      %7644 = vset.pattern.permute.xlu0 0
      %7645 = vperm.xlu0 %7644, %v7310
      %v7646 = vpop.permute.xlu0 %7645
      %7647 = vset.pattern.permute.xlu0 0
      %7648 = vperm.xlu0 %7647, %v7311
      %v7649 = vpop.permute.xlu0 %7648
      %7650 = vset.pattern.permute.xlu0 0
      %7651 = vperm.xlu0 %7650, %v7312
      %v7652 = vpop.permute.xlu0 %7651
      %7653 = vset.pattern.permute.xlu0 0
      %7654 = vperm.xlu0 %7653, %v7313
      %v7655 = vpop.permute.xlu0 %7654
      %7656 = vset.pattern.permute.xlu0 0
      %7657 = vperm.xlu0 %7656, %v7314
      %v7658 = vpop.permute.xlu0 %7657
      %7659 = vset.pattern.permute.xlu0 0
      %7660 = vperm.xlu0 %7659, %v7315
      %v7661 = vpop.permute.xlu0 %7660
      %7662 = vset.pattern.permute.xlu0 0
      %7663 = vperm.xlu0 %7662, %v7316
      %v7664 = vpop.permute.xlu0 %7663
      %7665 = vset.pattern.permute.xlu0 0
      %7666 = vperm.xlu0 %7665, %v7317
      %v7667 = vpop.permute.xlu0 %7666
      %7668 = vset.pattern.permute.xlu0 0
      %7669 = vperm.xlu0 %7668, %v7318
      %v7670 = vpop.permute.xlu0 %7669
      %7671 = vset.pattern.permute.xlu0 0
      %7672 = vperm.xlu0 %7671, %v7319
      %v7673 = vpop.permute.xlu0 %7672
      %7674 = vset.pattern.permute.xlu0 0
      %7675 = vperm.xlu0 %7674, %v7320
      %v7676 = vpop.permute.xlu0 %7675
      %7677 = vset.pattern.permute.xlu0 0
      %7678 = vperm.xlu0 %7677, %v7321
      %v7679 = vpop.permute.xlu0 %7678
      %7680 = vset.pattern.permute.xlu0 0
      %7681 = vperm.xlu0 %7680, %v7322
      %v7682 = vpop.permute.xlu0 %7681
      %7683 = vset.pattern.permute.xlu0 0
      %7684 = vperm.xlu0 %7683, %v7323
      %v7685 = vpop.permute.xlu0 %7684
      %7686 = vset.pattern.permute.xlu0 0
      %7687 = vperm.xlu0 %7686, %v7324
      %v7688 = vpop.permute.xlu0 %7687
      %7689 = vset.pattern.permute.xlu0 0
      %7690 = vperm.xlu0 %7689, %v7325
      %v7691 = vpop.permute.xlu0 %7690
      %7692 = vset.pattern.permute.xlu0 0
      %7693 = vperm.xlu0 %7692, %v7326
      %v7694 = vpop.permute.xlu0 %7693
      %7695 = vset.pattern.permute.xlu0 0
      %7696 = vperm.xlu0 %7695, %v7327
      %v7697 = vpop.permute.xlu0 %7696
      %7698 = vset.pattern.permute.xlu0 0
      %7699 = vperm.xlu0 %7698, %v7328
      %v7700 = vpop.permute.xlu0 %7699
      %7701 = vset.pattern.permute.xlu0 0
      %7702 = vperm.xlu0 %7701, %v7329
      %v7703 = vpop.permute.xlu0 %7702
      %7704 = vset.pattern.permute.xlu0 0
      %7705 = vperm.xlu0 %7704, %v7330
      %v7706 = vpop.permute.xlu0 %7705
      %7707 = vset.pattern.permute.xlu0 0
      %7708 = vperm.xlu0 %7707, %v7331
      %v7709 = vpop.permute.xlu0 %7708
      %7710 = vset.pattern.permute.xlu0 0
      %7711 = vperm.xlu0 %7710, %v7332
      %v7712 = vpop.permute.xlu0 %7711
      %7713 = vset.pattern.permute.xlu0 0
      %7714 = vperm.xlu0 %7713, %v7333
      %v7715 = vpop.permute.xlu0 %7714
      %7716 = vset.pattern.permute.xlu0 0
      %7717 = vperm.xlu0 %7716, %v7334
      %v7718 = vpop.permute.xlu0 %7717
      %vm7719 = vcmp.eq.s32.totalorder %v7337, 1
      %vm7720 = vcmp.eq.s32.totalorder %v7340, 1
      %vm7721 = vcmp.eq.s32.totalorder %v7343, 1
      %vm7722 = vcmp.eq.s32.totalorder %v7346, 1
      %vm7723 = vcmp.eq.s32.totalorder %v7349, 1
      %vm7724 = vcmp.eq.s32.totalorder %v7352, 1
      %vm7725 = vcmp.eq.s32.totalorder %v7355, 1
      %vm7726 = vcmp.eq.s32.totalorder %v7358, 1
      %vm7727 = vcmp.eq.s32.totalorder %v7361, 1
      %vm7728 = vcmp.eq.s32.totalorder %v7364, 1
      %vm7729 = vcmp.eq.s32.totalorder %v7367, 1
      %vm7730 = vcmp.eq.s32.totalorder %v7370, 1
      %vm7731 = vcmp.eq.s32.totalorder %v7373, 1
      %vm7732 = vcmp.eq.s32.totalorder %v7376, 1
      %vm7733 = vcmp.eq.s32.totalorder %v7379, 1
      %vm7734 = vcmp.eq.s32.totalorder %v7382, 1
      %vm7735 = vcmp.eq.s32.totalorder %v7385, 1
      %vm7736 = vcmp.eq.s32.totalorder %v7388, 1
      %vm7737 = vcmp.eq.s32.totalorder %v7391, 1
      %vm7738 = vcmp.eq.s32.totalorder %v7394, 1
      %vm7739 = vcmp.eq.s32.totalorder %v7397, 1
      %vm7740 = vcmp.eq.s32.totalorder %v7400, 1
      %vm7741 = vcmp.eq.s32.totalorder %v7403, 1
      %vm7742 = vcmp.eq.s32.totalorder %v7406, 1
      %vm7743 = vcmp.eq.s32.totalorder %v7409, 1
      %vm7744 = vcmp.eq.s32.totalorder %v7412, 1
      %vm7745 = vcmp.eq.s32.totalorder %v7415, 1
      %vm7746 = vcmp.eq.s32.totalorder %v7418, 1
      %vm7747 = vcmp.eq.s32.totalorder %v7421, 1
      %vm7748 = vcmp.eq.s32.totalorder %v7424, 1
      %vm7749 = vcmp.eq.s32.totalorder %v7427, 1
      %vm7750 = vcmp.eq.s32.totalorder %v7430, 1
      %vm7751 = vcmp.eq.s32.totalorder %v7433, 1
      %vm7752 = vcmp.eq.s32.totalorder %v7436, 1
      %vm7753 = vcmp.eq.s32.totalorder %v7439, 1
      %vm7754 = vcmp.eq.s32.totalorder %v7442, 1
      %vm7755 = vcmp.eq.s32.totalorder %v7445, 1
      %vm7756 = vcmp.eq.s32.totalorder %v7448, 1
      %vm7757 = vcmp.eq.s32.totalorder %v7451, 1
      %vm7758 = vcmp.eq.s32.totalorder %v7454, 1
      %vm7759 = vcmp.eq.s32.totalorder %v7457, 1
      %vm7760 = vcmp.eq.s32.totalorder %v7460, 1
      %vm7761 = vcmp.eq.s32.totalorder %v7463, 1
      %vm7762 = vcmp.eq.s32.totalorder %v7466, 1
      %vm7763 = vcmp.eq.s32.totalorder %v7469, 1
      %vm7764 = vcmp.eq.s32.totalorder %v7472, 1
      %vm7765 = vcmp.eq.s32.totalorder %v7475, 1
      %vm7766 = vcmp.eq.s32.totalorder %v7478, 1
      %vm7767 = vcmp.eq.s32.totalorder %v7481, 1
      %vm7768 = vcmp.eq.s32.totalorder %v7484, 1
      %vm7769 = vcmp.eq.s32.totalorder %v7487, 1
      %vm7770 = vcmp.eq.s32.totalorder %v7490, 1
      %vm7771 = vcmp.eq.s32.totalorder %v7493, 1
      %vm7772 = vcmp.eq.s32.totalorder %v7496, 1
      %vm7773 = vcmp.eq.s32.totalorder %v7499, 1
      %vm7774 = vcmp.eq.s32.totalorder %v7502, 1
      %vm7775 = vcmp.eq.s32.totalorder %v7505, 1
      %vm7776 = vcmp.eq.s32.totalorder %v7508, 1
      %vm7777 = vcmp.eq.s32.totalorder %v7511, 1
      %vm7778 = vcmp.eq.s32.totalorder %v7514, 1
      %vm7779 = vcmp.eq.s32.totalorder %v7517, 1
      %vm7780 = vcmp.eq.s32.totalorder %v7520, 1
      %vm7781 = vcmp.eq.s32.totalorder %v7523, 1
      %vm7782 = vcmp.eq.s32.totalorder %v7526, 1
      %vm7783 = vcmp.eq.s32.totalorder %v7529, 1
      %vm7784 = vcmp.eq.s32.totalorder %v7532, 1
      %vm7785 = vcmp.eq.s32.totalorder %v7535, 1
      %vm7786 = vcmp.eq.s32.totalorder %v7538, 1
      %vm7787 = vcmp.eq.s32.totalorder %v7541, 1
      %vm7788 = vcmp.eq.s32.totalorder %v7544, 1
      %vm7789 = vcmp.eq.s32.totalorder %v7547, 1
      %vm7790 = vcmp.eq.s32.totalorder %v7550, 1
      %vm7791 = vcmp.eq.s32.totalorder %v7553, 1
      %vm7792 = vcmp.eq.s32.totalorder %v7556, 1
      %vm7793 = vcmp.eq.s32.totalorder %v7559, 1
      %vm7794 = vcmp.eq.s32.totalorder %v7562, 1
      %vm7795 = vcmp.eq.s32.totalorder %v7565, 1
      %vm7796 = vcmp.eq.s32.totalorder %v7568, 1
      %vm7797 = vcmp.eq.s32.totalorder %v7571, 1
      %vm7798 = vcmp.eq.s32.totalorder %v7574, 1
      %vm7799 = vcmp.eq.s32.totalorder %v7577, 1
      %vm7800 = vcmp.eq.s32.totalorder %v7580, 1
      %vm7801 = vcmp.eq.s32.totalorder %v7583, 1
      %vm7802 = vcmp.eq.s32.totalorder %v7586, 1
      %vm7803 = vcmp.eq.s32.totalorder %v7589, 1
      %vm7804 = vcmp.eq.s32.totalorder %v7592, 1
      %vm7805 = vcmp.eq.s32.totalorder %v7595, 1
      %vm7806 = vcmp.eq.s32.totalorder %v7598, 1
      %vm7807 = vcmp.eq.s32.totalorder %v7601, 1
      %vm7808 = vcmp.eq.s32.totalorder %v7604, 1
      %vm7809 = vcmp.eq.s32.totalorder %v7607, 1
      %vm7810 = vcmp.eq.s32.totalorder %v7610, 1
      %vm7811 = vcmp.eq.s32.totalorder %v7613, 1
      %vm7812 = vcmp.eq.s32.totalorder %v7616, 1
      %vm7813 = vcmp.eq.s32.totalorder %v7619, 1
      %vm7814 = vcmp.eq.s32.totalorder %v7622, 1
      %vm7815 = vcmp.eq.s32.totalorder %v7625, 1
      %vm7816 = vcmp.eq.s32.totalorder %v7628, 1
      %vm7817 = vcmp.eq.s32.totalorder %v7631, 1
      %vm7818 = vcmp.eq.s32.totalorder %v7634, 1
      %vm7819 = vcmp.eq.s32.totalorder %v7637, 1
      %vm7820 = vcmp.eq.s32.totalorder %v7640, 1
      %vm7821 = vcmp.eq.s32.totalorder %v7643, 1
      %vm7822 = vcmp.eq.s32.totalorder %v7646, 1
      %vm7823 = vcmp.eq.s32.totalorder %v7649, 1
      %vm7824 = vcmp.eq.s32.totalorder %v7652, 1
      %vm7825 = vcmp.eq.s32.totalorder %v7655, 1
      %vm7826 = vcmp.eq.s32.totalorder %v7658, 1
      %vm7827 = vcmp.eq.s32.totalorder %v7661, 1
      %vm7828 = vcmp.eq.s32.totalorder %v7664, 1
      %vm7829 = vcmp.eq.s32.totalorder %v7667, 1
      %vm7830 = vcmp.eq.s32.totalorder %v7670, 1
      %vm7831 = vcmp.eq.s32.totalorder %v7673, 1
      %vm7832 = vcmp.eq.s32.totalorder %v7676, 1
      %vm7833 = vcmp.eq.s32.totalorder %v7679, 1
      %vm7834 = vcmp.eq.s32.totalorder %v7682, 1
      %vm7835 = vcmp.eq.s32.totalorder %v7685, 1
      %vm7836 = vcmp.eq.s32.totalorder %v7688, 1
      %vm7837 = vcmp.eq.s32.totalorder %v7691, 1
      %vm7838 = vcmp.eq.s32.totalorder %v7694, 1
      %vm7839 = vcmp.eq.s32.totalorder %v7697, 1
      %vm7840 = vcmp.eq.s32.totalorder %v7700, 1
      %vm7841 = vcmp.eq.s32.totalorder %v7703, 1
      %vm7842 = vcmp.eq.s32.totalorder %v7706, 1
      %vm7843 = vcmp.eq.s32.totalorder %v7709, 1
      %vm7844 = vcmp.eq.s32.totalorder %v7712, 1
      %vm7845 = vcmp.eq.s32.totalorder %v7715, 1
      %vm7846 = vcmp.eq.s32.totalorder %v7718, 1
      %v7847 = vsel %vm7719, %v6823, 0.0
      %v7848 = vsel %vm7720, %v6824, 0.0
      %v7849 = vsel %vm7721, %v6825, 0.0
      %v7850 = vsel %vm7722, %v6826, 0.0
      %v7851 = vsel %vm7723, %v6827, 0.0
      %v7852 = vsel %vm7724, %v6828, 0.0
      %v7853 = vsel %vm7725, %v6829, 0.0
      %v7854 = vsel %vm7726, %v6830, 0.0
      %v7855 = vsel %vm7727, %v6831, 0.0
      %v7856 = vsel %vm7728, %v6832, 0.0
      %v7857 = vsel %vm7729, %v6833, 0.0
      %v7858 = vsel %vm7730, %v6834, 0.0
      %v7859 = vsel %vm7731, %v6835, 0.0
      %v7860 = vsel %vm7732, %v6836, 0.0
      %v7861 = vsel %vm7733, %v6837, 0.0
      %v7862 = vsel %vm7734, %v6838, 0.0
      %v7863 = vsel %vm7735, %v6839, 0.0
      %v7864 = vsel %vm7736, %v6840, 0.0
      %v7865 = vsel %vm7737, %v6841, 0.0
      %v7866 = vsel %vm7738, %v6842, 0.0
      %v7867 = vsel %vm7739, %v6843, 0.0
      %v7868 = vsel %vm7740, %v6844, 0.0
      %v7869 = vsel %vm7741, %v6845, 0.0
      %v7870 = vsel %vm7742, %v6846, 0.0
      %v7871 = vsel %vm7743, %v6847, 0.0
      %v7872 = vsel %vm7744, %v6848, 0.0
      %v7873 = vsel %vm7745, %v6849, 0.0
      %v7874 = vsel %vm7746, %v6850, 0.0
      %v7875 = vsel %vm7747, %v6851, 0.0
      %v7876 = vsel %vm7748, %v6852, 0.0
      %v7877 = vsel %vm7749, %v6853, 0.0
      %v7878 = vsel %vm7750, %v6854, 0.0
      %v7879 = vsel %vm7751, %v6855, 0.0
      %v7880 = vsel %vm7752, %v6856, 0.0
      %v7881 = vsel %vm7753, %v6857, 0.0
      %v7882 = vsel %vm7754, %v6858, 0.0
      %v7883 = vsel %vm7755, %v6859, 0.0
      %v7884 = vsel %vm7756, %v6860, 0.0
      %v7885 = vsel %vm7757, %v6861, 0.0
      %v7886 = vsel %vm7758, %v6862, 0.0
      %v7887 = vsel %vm7759, %v6863, 0.0
      %v7888 = vsel %vm7760, %v6864, 0.0
      %v7889 = vsel %vm7761, %v6865, 0.0
      %v7890 = vsel %vm7762, %v6866, 0.0
      %v7891 = vsel %vm7763, %v6867, 0.0
      %v7892 = vsel %vm7764, %v6868, 0.0
      %v7893 = vsel %vm7765, %v6869, 0.0
      %v7894 = vsel %vm7766, %v6870, 0.0
      %v7895 = vsel %vm7767, %v6871, 0.0
      %v7896 = vsel %vm7768, %v6872, 0.0
      %v7897 = vsel %vm7769, %v6873, 0.0
      %v7898 = vsel %vm7770, %v6874, 0.0
      %v7899 = vsel %vm7771, %v6875, 0.0
      %v7900 = vsel %vm7772, %v6876, 0.0
      %v7901 = vsel %vm7773, %v6877, 0.0
      %v7902 = vsel %vm7774, %v6878, 0.0
      %v7903 = vsel %vm7775, %v6879, 0.0
      %v7904 = vsel %vm7776, %v6880, 0.0
      %v7905 = vsel %vm7777, %v6881, 0.0
      %v7906 = vsel %vm7778, %v6882, 0.0
      %v7907 = vsel %vm7779, %v6883, 0.0
      %v7908 = vsel %vm7780, %v6884, 0.0
      %v7909 = vsel %vm7781, %v6885, 0.0
      %v7910 = vsel %vm7782, %v6886, 0.0
      %v7911 = vsel %vm7783, %v6887, 0.0
      %v7912 = vsel %vm7784, %v6888, 0.0
      %v7913 = vsel %vm7785, %v6889, 0.0
      %v7914 = vsel %vm7786, %v6890, 0.0
      %v7915 = vsel %vm7787, %v6891, 0.0
      %v7916 = vsel %vm7788, %v6892, 0.0
      %v7917 = vsel %vm7789, %v6893, 0.0
      %v7918 = vsel %vm7790, %v6894, 0.0
      %v7919 = vsel %vm7791, %v6895, 0.0
      %v7920 = vsel %vm7792, %v6896, 0.0
      %v7921 = vsel %vm7793, %v6897, 0.0
      %v7922 = vsel %vm7794, %v6898, 0.0
      %v7923 = vsel %vm7795, %v6899, 0.0
      %v7924 = vsel %vm7796, %v6900, 0.0
      %v7925 = vsel %vm7797, %v6901, 0.0
      %v7926 = vsel %vm7798, %v6902, 0.0
      %v7927 = vsel %vm7799, %v6903, 0.0
      %v7928 = vsel %vm7800, %v6904, 0.0
      %v7929 = vsel %vm7801, %v6905, 0.0
      %v7930 = vsel %vm7802, %v6906, 0.0
      %v7931 = vsel %vm7803, %v6907, 0.0
      %v7932 = vsel %vm7804, %v6908, 0.0
      %v7933 = vsel %vm7805, %v6909, 0.0
      %v7934 = vsel %vm7806, %v6910, 0.0
      %v7935 = vsel %vm7807, %v6911, 0.0
      %v7936 = vsel %vm7808, %v6912, 0.0
      %v7937 = vsel %vm7809, %v6913, 0.0
      %v7938 = vsel %vm7810, %v6914, 0.0
      %v7939 = vsel %vm7811, %v6915, 0.0
      %v7940 = vsel %vm7812, %v6916, 0.0
      %v7941 = vsel %vm7813, %v6917, 0.0
      %v7942 = vsel %vm7814, %v6918, 0.0
      %v7943 = vsel %vm7815, %v6919, 0.0
      %v7944 = vsel %vm7816, %v6920, 0.0
      %v7945 = vsel %vm7817, %v6921, 0.0
      %v7946 = vsel %vm7818, %v6922, 0.0
      %v7947 = vsel %vm7819, %v6923, 0.0
      %v7948 = vsel %vm7820, %v6924, 0.0
      %v7949 = vsel %vm7821, %v6925, 0.0
      %v7950 = vsel %vm7822, %v6926, 0.0
      %v7951 = vsel %vm7823, %v6927, 0.0
      %v7952 = vsel %vm7824, %v6928, 0.0
      %v7953 = vsel %vm7825, %v6929, 0.0
      %v7954 = vsel %vm7826, %v6930, 0.0
      %v7955 = vsel %vm7827, %v6931, 0.0
      %v7956 = vsel %vm7828, %v6932, 0.0
      %v7957 = vsel %vm7829, %v6933, 0.0
      %v7958 = vsel %vm7830, %v6934, 0.0
      %v7959 = vsel %vm7831, %v6935, 0.0
      %v7960 = vsel %vm7832, %v6936, 0.0
      %v7961 = vsel %vm7833, %v6937, 0.0
      %v7962 = vsel %vm7834, %v6938, 0.0
      %v7963 = vsel %vm7835, %v6939, 0.0
      %v7964 = vsel %vm7836, %v6940, 0.0
      %v7965 = vsel %vm7837, %v6941, 0.0
      %v7966 = vsel %vm7838, %v6942, 0.0
      %v7967 = vsel %vm7839, %v6943, 0.0
      %v7968 = vsel %vm7840, %v6944, 0.0
      %v7969 = vsel %vm7841, %v6945, 0.0
      %v7970 = vsel %vm7842, %v6946, 0.0
      %v7971 = vsel %vm7843, %v6947, 0.0
      %v7972 = vsel %vm7844, %v6948, 0.0
      %v7973 = vsel %vm7845, %v6949, 0.0
      %v7974 = vsel %vm7846, %v6950, 0.0
      %v7975 = vadd.f32 %v7847, %v7848
      %v7976 = vadd.f32 %v7975, %v7849
      %v7977 = vadd.f32 %v7976, %v7850
      %v7978 = vadd.f32 %v7977, %v7851
      %v7979 = vadd.f32 %v7978, %v7852
      %v7980 = vadd.f32 %v7979, %v7853
      %v7981 = vadd.f32 %v7980, %v7854
      %v7982 = vadd.f32 %v7981, %v7855
      %v7983 = vadd.f32 %v7982, %v7856
      %v7984 = vadd.f32 %v7983, %v7857
      %v7985 = vadd.f32 %v7984, %v7858
      %v7986 = vadd.f32 %v7985, %v7859
      %v7987 = vadd.f32 %v7986, %v7860
      %v7988 = vadd.f32 %v7987, %v7861
      %v7989 = vadd.f32 %v7988, %v7862
      %v7990 = vadd.f32 %v7989, %v7863
      %v7991 = vadd.f32 %v7990, %v7864
      %v7992 = vadd.f32 %v7991, %v7865
      %v7993 = vadd.f32 %v7992, %v7866
      %v7994 = vadd.f32 %v7993, %v7867
      %v7995 = vadd.f32 %v7994, %v7868
      %v7996 = vadd.f32 %v7995, %v7869
      %v7997 = vadd.f32 %v7996, %v7870
      %v7998 = vadd.f32 %v7997, %v7871
      %v7999 = vadd.f32 %v7998, %v7872
      %v8000 = vadd.f32 %v7999, %v7873
      %v8001 = vadd.f32 %v8000, %v7874
      %v8002 = vadd.f32 %v8001, %v7875
      %v8003 = vadd.f32 %v8002, %v7876
      %v8004 = vadd.f32 %v8003, %v7877
      %v8005 = vadd.f32 %v8004, %v7878
      %v8006 = vadd.f32 %v8005, %v7879
      %v8007 = vadd.f32 %v8006, %v7880
      %v8008 = vadd.f32 %v8007, %v7881
      %v8009 = vadd.f32 %v8008, %v7882
      %v8010 = vadd.f32 %v8009, %v7883
      %v8011 = vadd.f32 %v8010, %v7884
      %v8012 = vadd.f32 %v8011, %v7885
      %v8013 = vadd.f32 %v8012, %v7886
      %v8014 = vadd.f32 %v8013, %v7887
      %v8015 = vadd.f32 %v8014, %v7888
      %v8016 = vadd.f32 %v8015, %v7889
      %v8017 = vadd.f32 %v8016, %v7890
      %v8018 = vadd.f32 %v8017, %v7891
      %v8019 = vadd.f32 %v8018, %v7892
      %v8020 = vadd.f32 %v8019, %v7893
      %v8021 = vadd.f32 %v8020, %v7894
      %v8022 = vadd.f32 %v8021, %v7895
      %v8023 = vadd.f32 %v8022, %v7896
      %v8024 = vadd.f32 %v8023, %v7897
      %v8025 = vadd.f32 %v8024, %v7898
      %v8026 = vadd.f32 %v8025, %v7899
      %v8027 = vadd.f32 %v8026, %v7900
      %v8028 = vadd.f32 %v8027, %v7901
      %v8029 = vadd.f32 %v8028, %v7902
      %v8030 = vadd.f32 %v8029, %v7903
      %v8031 = vadd.f32 %v8030, %v7904
      %v8032 = vadd.f32 %v8031, %v7905
      %v8033 = vadd.f32 %v8032, %v7906
      %v8034 = vadd.f32 %v8033, %v7907
      %v8035 = vadd.f32 %v8034, %v7908
      %v8036 = vadd.f32 %v8035, %v7909
      %v8037 = vadd.f32 %v8036, %v7910
      %v8038 = vadd.f32 %v8037, %v7911
      %v8039 = vadd.f32 %v8038, %v7912
      %v8040 = vadd.f32 %v8039, %v7913
      %v8041 = vadd.f32 %v8040, %v7914
      %v8042 = vadd.f32 %v8041, %v7915
      %v8043 = vadd.f32 %v8042, %v7916
      %v8044 = vadd.f32 %v8043, %v7917
      %v8045 = vadd.f32 %v8044, %v7918
      %v8046 = vadd.f32 %v8045, %v7919
      %v8047 = vadd.f32 %v8046, %v7920
      %v8048 = vadd.f32 %v8047, %v7921
      %v8049 = vadd.f32 %v8048, %v7922
      %v8050 = vadd.f32 %v8049, %v7923
      %v8051 = vadd.f32 %v8050, %v7924
      %v8052 = vadd.f32 %v8051, %v7925
      %v8053 = vadd.f32 %v8052, %v7926
      %v8054 = vadd.f32 %v8053, %v7927
      %v8055 = vadd.f32 %v8054, %v7928
      %v8056 = vadd.f32 %v8055, %v7929
      %v8057 = vadd.f32 %v8056, %v7930
      %v8058 = vadd.f32 %v8057, %v7931
      %v8059 = vadd.f32 %v8058, %v7932
      %v8060 = vadd.f32 %v8059, %v7933
      %v8061 = vadd.f32 %v8060, %v7934
      %v8062 = vadd.f32 %v8061, %v7935
      %v8063 = vadd.f32 %v8062, %v7936
      %v8064 = vadd.f32 %v8063, %v7937
      %v8065 = vadd.f32 %v8064, %v7938
      %v8066 = vadd.f32 %v8065, %v7939
      %v8067 = vadd.f32 %v8066, %v7940
      %v8068 = vadd.f32 %v8067, %v7941
      %v8069 = vadd.f32 %v8068, %v7942
      %v8070 = vadd.f32 %v8069, %v7943
      %v8071 = vadd.f32 %v8070, %v7944
      %v8072 = vadd.f32 %v8071, %v7945
      %v8073 = vadd.f32 %v8072, %v7946
      %v8074 = vadd.f32 %v8073, %v7947
      %v8075 = vadd.f32 %v8074, %v7948
      %v8076 = vadd.f32 %v8075, %v7949
      %v8077 = vadd.f32 %v8076, %v7950
      %v8078 = vadd.f32 %v8077, %v7951
      %v8079 = vadd.f32 %v8078, %v7952
      %v8080 = vadd.f32 %v8079, %v7953
      %v8081 = vadd.f32 %v8080, %v7954
      %v8082 = vadd.f32 %v8081, %v7955
      %v8083 = vadd.f32 %v8082, %v7956
      %v8084 = vadd.f32 %v8083, %v7957
      %v8085 = vadd.f32 %v8084, %v7958
      %v8086 = vadd.f32 %v8085, %v7959
      %v8087 = vadd.f32 %v8086, %v7960
      %v8088 = vadd.f32 %v8087, %v7961
      %v8089 = vadd.f32 %v8088, %v7962
      %v8090 = vadd.f32 %v8089, %v7963
      %v8091 = vadd.f32 %v8090, %v7964
      %v8092 = vadd.f32 %v8091, %v7965
      %v8093 = vadd.f32 %v8092, %v7966
      %v8094 = vadd.f32 %v8093, %v7967
      %v8095 = vadd.f32 %v8094, %v7968
      %v8096 = vadd.f32 %v8095, %v7969
      %v8097 = vadd.f32 %v8096, %v7970
      %v8098 = vadd.f32 %v8097, %v7971
      %v8099 = vadd.f32 %v8098, %v7972
      %v8100 = vadd.f32 %v8099, %v7973
      %v8101 = vadd.f32 %v8100, %v7974
      %v8102 = vrot.slane %v8101, 4
      %v8103 = vadd.f32 %v8101, %v8102
      %v8104 = vrot.slane %v8103, 2
      %v8105 = vadd.f32 %v8103, %v8104
      %v8106 = vrot.slane %v8105, 1
      %v8107 = vadd.f32 %v8105, %v8106
      %vm8108 = vcmp.eq.s32.totalorder %v6951, 1
      %vm8109 = vcmp.eq.s32.totalorder %v6952, 1
      %vm8110 = vcmp.eq.s32.totalorder %v6953, 1
      %vm8111 = vcmp.eq.s32.totalorder %v6954, 1
      %vm8112 = vcmp.eq.s32.totalorder %v6955, 1
      %vm8113 = vcmp.eq.s32.totalorder %v6956, 1
      %vm8114 = vcmp.eq.s32.totalorder %v6957, 1
      %vm8115 = vcmp.eq.s32.totalorder %v6958, 1
      %vm8116 = vcmp.eq.s32.totalorder %v6959, 1
      %vm8117 = vcmp.eq.s32.totalorder %v6960, 1
      %vm8118 = vcmp.eq.s32.totalorder %v6961, 1
      %vm8119 = vcmp.eq.s32.totalorder %v6962, 1
      %vm8120 = vcmp.eq.s32.totalorder %v6963, 1
      %vm8121 = vcmp.eq.s32.totalorder %v6964, 1
      %vm8122 = vcmp.eq.s32.totalorder %v6965, 1
      %vm8123 = vcmp.eq.s32.totalorder %v6966, 1
      %vm8124 = vcmp.eq.s32.totalorder %v6967, 1
      %vm8125 = vcmp.eq.s32.totalorder %v6968, 1
      %vm8126 = vcmp.eq.s32.totalorder %v6969, 1
      %vm8127 = vcmp.eq.s32.totalorder %v6970, 1
      %vm8128 = vcmp.eq.s32.totalorder %v6971, 1
      %vm8129 = vcmp.eq.s32.totalorder %v6972, 1
      %vm8130 = vcmp.eq.s32.totalorder %v6973, 1
      %vm8131 = vcmp.eq.s32.totalorder %v6974, 1
      %vm8132 = vcmp.eq.s32.totalorder %v6975, 1
      %vm8133 = vcmp.eq.s32.totalorder %v6976, 1
      %vm8134 = vcmp.eq.s32.totalorder %v6977, 1
      %vm8135 = vcmp.eq.s32.totalorder %v6978, 1
      %vm8136 = vcmp.eq.s32.totalorder %v6979, 1
      %vm8137 = vcmp.eq.s32.totalorder %v6980, 1
      %vm8138 = vcmp.eq.s32.totalorder %v6981, 1
      %vm8139 = vcmp.eq.s32.totalorder %v6982, 1
      %vm8140 = vcmp.eq.s32.totalorder %v6983, 1
      %vm8141 = vcmp.eq.s32.totalorder %v6984, 1
      %vm8142 = vcmp.eq.s32.totalorder %v6985, 1
      %vm8143 = vcmp.eq.s32.totalorder %v6986, 1
      %vm8144 = vcmp.eq.s32.totalorder %v6987, 1
      %vm8145 = vcmp.eq.s32.totalorder %v6988, 1
      %vm8146 = vcmp.eq.s32.totalorder %v6989, 1
      %vm8147 = vcmp.eq.s32.totalorder %v6990, 1
      %vm8148 = vcmp.eq.s32.totalorder %v6991, 1
      %vm8149 = vcmp.eq.s32.totalorder %v6992, 1
      %vm8150 = vcmp.eq.s32.totalorder %v6993, 1
      %vm8151 = vcmp.eq.s32.totalorder %v6994, 1
      %vm8152 = vcmp.eq.s32.totalorder %v6995, 1
      %vm8153 = vcmp.eq.s32.totalorder %v6996, 1
      %vm8154 = vcmp.eq.s32.totalorder %v6997, 1
      %vm8155 = vcmp.eq.s32.totalorder %v6998, 1
      %vm8156 = vcmp.eq.s32.totalorder %v6999, 1
      %vm8157 = vcmp.eq.s32.totalorder %v7000, 1
      %vm8158 = vcmp.eq.s32.totalorder %v7001, 1
      %vm8159 = vcmp.eq.s32.totalorder %v7002, 1
      %vm8160 = vcmp.eq.s32.totalorder %v7003, 1
      %vm8161 = vcmp.eq.s32.totalorder %v7004, 1
      %vm8162 = vcmp.eq.s32.totalorder %v7005, 1
      %vm8163 = vcmp.eq.s32.totalorder %v7006, 1
      %vm8164 = vcmp.eq.s32.totalorder %v7007, 1
      %vm8165 = vcmp.eq.s32.totalorder %v7008, 1
      %vm8166 = vcmp.eq.s32.totalorder %v7009, 1
      %vm8167 = vcmp.eq.s32.totalorder %v7010, 1
      %vm8168 = vcmp.eq.s32.totalorder %v7011, 1
      %vm8169 = vcmp.eq.s32.totalorder %v7012, 1
      %vm8170 = vcmp.eq.s32.totalorder %v7013, 1
      %vm8171 = vcmp.eq.s32.totalorder %v7014, 1
      %vm8172 = vcmp.eq.s32.totalorder %v7015, 1
      %vm8173 = vcmp.eq.s32.totalorder %v7016, 1
      %vm8174 = vcmp.eq.s32.totalorder %v7017, 1
      %vm8175 = vcmp.eq.s32.totalorder %v7018, 1
      %vm8176 = vcmp.eq.s32.totalorder %v7019, 1
      %vm8177 = vcmp.eq.s32.totalorder %v7020, 1
      %vm8178 = vcmp.eq.s32.totalorder %v7021, 1
      %vm8179 = vcmp.eq.s32.totalorder %v7022, 1
      %vm8180 = vcmp.eq.s32.totalorder %v7023, 1
      %vm8181 = vcmp.eq.s32.totalorder %v7024, 1
      %vm8182 = vcmp.eq.s32.totalorder %v7025, 1
      %vm8183 = vcmp.eq.s32.totalorder %v7026, 1
      %vm8184 = vcmp.eq.s32.totalorder %v7027, 1
      %vm8185 = vcmp.eq.s32.totalorder %v7028, 1
      %vm8186 = vcmp.eq.s32.totalorder %v7029, 1
      %vm8187 = vcmp.eq.s32.totalorder %v7030, 1
      %vm8188 = vcmp.eq.s32.totalorder %v7031, 1
      %vm8189 = vcmp.eq.s32.totalorder %v7032, 1
      %vm8190 = vcmp.eq.s32.totalorder %v7033, 1
      %vm8191 = vcmp.eq.s32.totalorder %v7034, 1
      %vm8192 = vcmp.eq.s32.totalorder %v7035, 1
      %vm8193 = vcmp.eq.s32.totalorder %v7036, 1
      %vm8194 = vcmp.eq.s32.totalorder %v7037, 1
      %vm8195 = vcmp.eq.s32.totalorder %v7038, 1
      %vm8196 = vcmp.eq.s32.totalorder %v7039, 1
      %vm8197 = vcmp.eq.s32.totalorder %v7040, 1
      %vm8198 = vcmp.eq.s32.totalorder %v7041, 1
      %vm8199 = vcmp.eq.s32.totalorder %v7042, 1
      %vm8200 = vcmp.eq.s32.totalorder %v7043, 1
      %vm8201 = vcmp.eq.s32.totalorder %v7044, 1
      %vm8202 = vcmp.eq.s32.totalorder %v7045, 1
      %vm8203 = vcmp.eq.s32.totalorder %v7046, 1
      %vm8204 = vcmp.eq.s32.totalorder %v7047, 1
      %vm8205 = vcmp.eq.s32.totalorder %v7048, 1
      %vm8206 = vcmp.eq.s32.totalorder %v7049, 1
      %vm8207 = vcmp.eq.s32.totalorder %v7050, 1
      %vm8208 = vcmp.eq.s32.totalorder %v7051, 1
      %vm8209 = vcmp.eq.s32.totalorder %v7052, 1
      %vm8210 = vcmp.eq.s32.totalorder %v7053, 1
      %vm8211 = vcmp.eq.s32.totalorder %v7054, 1
      %vm8212 = vcmp.eq.s32.totalorder %v7055, 1
      %vm8213 = vcmp.eq.s32.totalorder %v7056, 1
      %vm8214 = vcmp.eq.s32.totalorder %v7057, 1
      %vm8215 = vcmp.eq.s32.totalorder %v7058, 1
      %vm8216 = vcmp.eq.s32.totalorder %v7059, 1
      %vm8217 = vcmp.eq.s32.totalorder %v7060, 1
      %vm8218 = vcmp.eq.s32.totalorder %v7061, 1
      %vm8219 = vcmp.eq.s32.totalorder %v7062, 1
      %vm8220 = vcmp.eq.s32.totalorder %v7063, 1
      %vm8221 = vcmp.eq.s32.totalorder %v7064, 1
      %vm8222 = vcmp.eq.s32.totalorder %v7065, 1
      %vm8223 = vcmp.eq.s32.totalorder %v7066, 1
      %vm8224 = vcmp.eq.s32.totalorder %v7067, 1
      %vm8225 = vcmp.eq.s32.totalorder %v7068, 1
      %vm8226 = vcmp.eq.s32.totalorder %v7069, 1
      %vm8227 = vcmp.eq.s32.totalorder %v7070, 1
      %vm8228 = vcmp.eq.s32.totalorder %v7071, 1
      %vm8229 = vcmp.eq.s32.totalorder %v7072, 1
      %vm8230 = vcmp.eq.s32.totalorder %v7073, 1
      %vm8231 = vcmp.eq.s32.totalorder %v7074, 1
      %vm8232 = vcmp.eq.s32.totalorder %v7075, 1
      %vm8233 = vcmp.eq.s32.totalorder %v7076, 1
      %vm8234 = vcmp.eq.s32.totalorder %v7077, 1
      %vm8235 = vcmp.eq.s32.totalorder %v7078, 1
      %v8236 = vsel %vm8108, 1, 0
      %v8237 = vsel %vm8109, 1, 0
      %v8238 = vsel %vm8110, 1, 0
      %v8239 = vsel %vm8111, 1, 0
      %v8240 = vsel %vm8112, 1, 0
      %v8241 = vsel %vm8113, 1, 0
      %v8242 = vsel %vm8114, 1, 0
      %v8243 = vsel %vm8115, 1, 0
      %v8244 = vsel %vm8116, 1, 0
      %v8245 = vsel %vm8117, 1, 0
      %v8246 = vsel %vm8118, 1, 0
      %v8247 = vsel %vm8119, 1, 0
      %v8248 = vsel %vm8120, 1, 0
      %v8249 = vsel %vm8121, 1, 0
      %v8250 = vsel %vm8122, 1, 0
      %v8251 = vsel %vm8123, 1, 0
      %v8252 = vsel %vm8124, 1, 0
      %v8253 = vsel %vm8125, 1, 0
      %v8254 = vsel %vm8126, 1, 0
      %v8255 = vsel %vm8127, 1, 0
      %v8256 = vsel %vm8128, 1, 0
      %v8257 = vsel %vm8129, 1, 0
      %v8258 = vsel %vm8130, 1, 0
      %v8259 = vsel %vm8131, 1, 0
      %v8260 = vsel %vm8132, 1, 0
      %v8261 = vsel %vm8133, 1, 0
      %v8262 = vsel %vm8134, 1, 0
      %v8263 = vsel %vm8135, 1, 0
      %v8264 = vsel %vm8136, 1, 0
      %v8265 = vsel %vm8137, 1, 0
      %v8266 = vsel %vm8138, 1, 0
      %v8267 = vsel %vm8139, 1, 0
      %v8268 = vsel %vm8140, 1, 0
      %v8269 = vsel %vm8141, 1, 0
      %v8270 = vsel %vm8142, 1, 0
      %v8271 = vsel %vm8143, 1, 0
      %v8272 = vsel %vm8144, 1, 0
      %v8273 = vsel %vm8145, 1, 0
      %v8274 = vsel %vm8146, 1, 0
      %v8275 = vsel %vm8147, 1, 0
      %v8276 = vsel %vm8148, 1, 0
      %v8277 = vsel %vm8149, 1, 0
      %v8278 = vsel %vm8150, 1, 0
      %v8279 = vsel %vm8151, 1, 0
      %v8280 = vsel %vm8152, 1, 0
      %v8281 = vsel %vm8153, 1, 0
      %v8282 = vsel %vm8154, 1, 0
      %v8283 = vsel %vm8155, 1, 0
      %v8284 = vsel %vm8156, 1, 0
      %v8285 = vsel %vm8157, 1, 0
      %v8286 = vsel %vm8158, 1, 0
      %v8287 = vsel %vm8159, 1, 0
      %v8288 = vsel %vm8160, 1, 0
      %v8289 = vsel %vm8161, 1, 0
      %v8290 = vsel %vm8162, 1, 0
      %v8291 = vsel %vm8163, 1, 0
      %v8292 = vsel %vm8164, 1, 0
      %v8293 = vsel %vm8165, 1, 0
      %v8294 = vsel %vm8166, 1, 0
      %v8295 = vsel %vm8167, 1, 0
      %v8296 = vsel %vm8168, 1, 0
      %v8297 = vsel %vm8169, 1, 0
      %v8298 = vsel %vm8170, 1, 0
      %v8299 = vsel %vm8171, 1, 0
      %v8300 = vsel %vm8172, 1, 0
      %v8301 = vsel %vm8173, 1, 0
      %v8302 = vsel %vm8174, 1, 0
      %v8303 = vsel %vm8175, 1, 0
      %v8304 = vsel %vm8176, 1, 0
      %v8305 = vsel %vm8177, 1, 0
      %v8306 = vsel %vm8178, 1, 0
      %v8307 = vsel %vm8179, 1, 0
      %v8308 = vsel %vm8180, 1, 0
      %v8309 = vsel %vm8181, 1, 0
      %v8310 = vsel %vm8182, 1, 0
      %v8311 = vsel %vm8183, 1, 0
      %v8312 = vsel %vm8184, 1, 0
      %v8313 = vsel %vm8185, 1, 0
      %v8314 = vsel %vm8186, 1, 0
      %v8315 = vsel %vm8187, 1, 0
      %v8316 = vsel %vm8188, 1, 0
      %v8317 = vsel %vm8189, 1, 0
      %v8318 = vsel %vm8190, 1, 0
      %v8319 = vsel %vm8191, 1, 0
      %v8320 = vsel %vm8192, 1, 0
      %v8321 = vsel %vm8193, 1, 0
      %v8322 = vsel %vm8194, 1, 0
      %v8323 = vsel %vm8195, 1, 0
      %v8324 = vsel %vm8196, 1, 0
      %v8325 = vsel %vm8197, 1, 0
      %v8326 = vsel %vm8198, 1, 0
      %v8327 = vsel %vm8199, 1, 0
      %v8328 = vsel %vm8200, 1, 0
      %v8329 = vsel %vm8201, 1, 0
      %v8330 = vsel %vm8202, 1, 0
      %v8331 = vsel %vm8203, 1, 0
      %v8332 = vsel %vm8204, 1, 0
      %v8333 = vsel %vm8205, 1, 0
      %v8334 = vsel %vm8206, 1, 0
      %v8335 = vsel %vm8207, 1, 0
      %v8336 = vsel %vm8208, 1, 0
      %v8337 = vsel %vm8209, 1, 0
      %v8338 = vsel %vm8210, 1, 0
      %v8339 = vsel %vm8211, 1, 0
      %v8340 = vsel %vm8212, 1, 0
      %v8341 = vsel %vm8213, 1, 0
      %v8342 = vsel %vm8214, 1, 0
      %v8343 = vsel %vm8215, 1, 0
      %v8344 = vsel %vm8216, 1, 0
      %v8345 = vsel %vm8217, 1, 0
      %v8346 = vsel %vm8218, 1, 0
      %v8347 = vsel %vm8219, 1, 0
      %v8348 = vsel %vm8220, 1, 0
      %v8349 = vsel %vm8221, 1, 0
      %v8350 = vsel %vm8222, 1, 0
      %v8351 = vsel %vm8223, 1, 0
      %v8352 = vsel %vm8224, 1, 0
      %v8353 = vsel %vm8225, 1, 0
      %v8354 = vsel %vm8226, 1, 0
      %v8355 = vsel %vm8227, 1, 0
      %v8356 = vsel %vm8228, 1, 0
      %v8357 = vsel %vm8229, 1, 0
      %v8358 = vsel %vm8230, 1, 0
      %v8359 = vsel %vm8231, 1, 0
      %v8360 = vsel %vm8232, 1, 0
      %v8361 = vsel %vm8233, 1, 0
      %v8362 = vsel %vm8234, 1, 0
      %v8363 = vsel %vm8235, 1, 0
      %8364 = vset.pattern.permute.xlu0 0
      %8365 = vperm.xlu0 %8364, %v8236
      %v8366 = vpop.permute.xlu0 %8365
      %8367 = vset.pattern.permute.xlu0 0
      %8368 = vperm.xlu0 %8367, %v8237
      %v8369 = vpop.permute.xlu0 %8368
      %8370 = vset.pattern.permute.xlu0 0
      %8371 = vperm.xlu0 %8370, %v8238
      %v8372 = vpop.permute.xlu0 %8371
      %8373 = vset.pattern.permute.xlu0 0
      %8374 = vperm.xlu0 %8373, %v8239
      %v8375 = vpop.permute.xlu0 %8374
      %8376 = vset.pattern.permute.xlu0 0
      %8377 = vperm.xlu0 %8376, %v8240
      %v8378 = vpop.permute.xlu0 %8377
      %8379 = vset.pattern.permute.xlu0 0
      %8380 = vperm.xlu0 %8379, %v8241
      %v8381 = vpop.permute.xlu0 %8380
      %8382 = vset.pattern.permute.xlu0 0
      %8383 = vperm.xlu0 %8382, %v8242
      %v8384 = vpop.permute.xlu0 %8383
      %8385 = vset.pattern.permute.xlu0 0
      %8386 = vperm.xlu0 %8385, %v8243
      %v8387 = vpop.permute.xlu0 %8386
      %8388 = vset.pattern.permute.xlu0 0
      %8389 = vperm.xlu0 %8388, %v8244
      %v8390 = vpop.permute.xlu0 %8389
      %8391 = vset.pattern.permute.xlu0 0
      %8392 = vperm.xlu0 %8391, %v8245
      %v8393 = vpop.permute.xlu0 %8392
      %8394 = vset.pattern.permute.xlu0 0
      %8395 = vperm.xlu0 %8394, %v8246
      %v8396 = vpop.permute.xlu0 %8395
      %8397 = vset.pattern.permute.xlu0 0
      %8398 = vperm.xlu0 %8397, %v8247
      %v8399 = vpop.permute.xlu0 %8398
      %8400 = vset.pattern.permute.xlu0 0
      %8401 = vperm.xlu0 %8400, %v8248
      %v8402 = vpop.permute.xlu0 %8401
      %8403 = vset.pattern.permute.xlu0 0
      %8404 = vperm.xlu0 %8403, %v8249
      %v8405 = vpop.permute.xlu0 %8404
      %8406 = vset.pattern.permute.xlu0 0
      %8407 = vperm.xlu0 %8406, %v8250
      %v8408 = vpop.permute.xlu0 %8407
      %8409 = vset.pattern.permute.xlu0 0
      %8410 = vperm.xlu0 %8409, %v8251
      %v8411 = vpop.permute.xlu0 %8410
      %8412 = vset.pattern.permute.xlu0 0
      %8413 = vperm.xlu0 %8412, %v8252
      %v8414 = vpop.permute.xlu0 %8413
      %8415 = vset.pattern.permute.xlu0 0
      %8416 = vperm.xlu0 %8415, %v8253
      %v8417 = vpop.permute.xlu0 %8416
      %8418 = vset.pattern.permute.xlu0 0
      %8419 = vperm.xlu0 %8418, %v8254
      %v8420 = vpop.permute.xlu0 %8419
      %8421 = vset.pattern.permute.xlu0 0
      %8422 = vperm.xlu0 %8421, %v8255
      %v8423 = vpop.permute.xlu0 %8422
      %8424 = vset.pattern.permute.xlu0 0
      %8425 = vperm.xlu0 %8424, %v8256
      %v8426 = vpop.permute.xlu0 %8425
      %8427 = vset.pattern.permute.xlu0 0
      %8428 = vperm.xlu0 %8427, %v8257
      %v8429 = vpop.permute.xlu0 %8428
      %8430 = vset.pattern.permute.xlu0 0
      %8431 = vperm.xlu0 %8430, %v8258
      %v8432 = vpop.permute.xlu0 %8431
      %8433 = vset.pattern.permute.xlu0 0
      %8434 = vperm.xlu0 %8433, %v8259
      %v8435 = vpop.permute.xlu0 %8434
      %8436 = vset.pattern.permute.xlu0 0
      %8437 = vperm.xlu0 %8436, %v8260
      %v8438 = vpop.permute.xlu0 %8437
      %8439 = vset.pattern.permute.xlu0 0
      %8440 = vperm.xlu0 %8439, %v8261
      %v8441 = vpop.permute.xlu0 %8440
      %8442 = vset.pattern.permute.xlu0 0
      %8443 = vperm.xlu0 %8442, %v8262
      %v8444 = vpop.permute.xlu0 %8443
      %8445 = vset.pattern.permute.xlu0 0
      %8446 = vperm.xlu0 %8445, %v8263
      %v8447 = vpop.permute.xlu0 %8446
      %8448 = vset.pattern.permute.xlu0 0
      %8449 = vperm.xlu0 %8448, %v8264
      %v8450 = vpop.permute.xlu0 %8449
      %8451 = vset.pattern.permute.xlu0 0
      %8452 = vperm.xlu0 %8451, %v8265
      %v8453 = vpop.permute.xlu0 %8452
      %8454 = vset.pattern.permute.xlu0 0
      %8455 = vperm.xlu0 %8454, %v8266
      %v8456 = vpop.permute.xlu0 %8455
      %8457 = vset.pattern.permute.xlu0 0
      %8458 = vperm.xlu0 %8457, %v8267
      %v8459 = vpop.permute.xlu0 %8458
      %8460 = vset.pattern.permute.xlu0 0
      %8461 = vperm.xlu0 %8460, %v8268
      %v8462 = vpop.permute.xlu0 %8461
      %8463 = vset.pattern.permute.xlu0 0
      %8464 = vperm.xlu0 %8463, %v8269
      %v8465 = vpop.permute.xlu0 %8464
      %8466 = vset.pattern.permute.xlu0 0
      %8467 = vperm.xlu0 %8466, %v8270
      %v8468 = vpop.permute.xlu0 %8467
      %8469 = vset.pattern.permute.xlu0 0
      %8470 = vperm.xlu0 %8469, %v8271
      %v8471 = vpop.permute.xlu0 %8470
      %8472 = vset.pattern.permute.xlu0 0
      %8473 = vperm.xlu0 %8472, %v8272
      %v8474 = vpop.permute.xlu0 %8473
      %8475 = vset.pattern.permute.xlu0 0
      %8476 = vperm.xlu0 %8475, %v8273
      %v8477 = vpop.permute.xlu0 %8476
      %8478 = vset.pattern.permute.xlu0 0
      %8479 = vperm.xlu0 %8478, %v8274
      %v8480 = vpop.permute.xlu0 %8479
      %8481 = vset.pattern.permute.xlu0 0
      %8482 = vperm.xlu0 %8481, %v8275
      %v8483 = vpop.permute.xlu0 %8482
      %8484 = vset.pattern.permute.xlu0 0
      %8485 = vperm.xlu0 %8484, %v8276
      %v8486 = vpop.permute.xlu0 %8485
      %8487 = vset.pattern.permute.xlu0 0
      %8488 = vperm.xlu0 %8487, %v8277
      %v8489 = vpop.permute.xlu0 %8488
      %8490 = vset.pattern.permute.xlu0 0
      %8491 = vperm.xlu0 %8490, %v8278
      %v8492 = vpop.permute.xlu0 %8491
      %8493 = vset.pattern.permute.xlu0 0
      %8494 = vperm.xlu0 %8493, %v8279
      %v8495 = vpop.permute.xlu0 %8494
      %8496 = vset.pattern.permute.xlu0 0
      %8497 = vperm.xlu0 %8496, %v8280
      %v8498 = vpop.permute.xlu0 %8497
      %8499 = vset.pattern.permute.xlu0 0
      %8500 = vperm.xlu0 %8499, %v8281
      %v8501 = vpop.permute.xlu0 %8500
      %8502 = vset.pattern.permute.xlu0 0
      %8503 = vperm.xlu0 %8502, %v8282
      %v8504 = vpop.permute.xlu0 %8503
      %8505 = vset.pattern.permute.xlu0 0
      %8506 = vperm.xlu0 %8505, %v8283
      %v8507 = vpop.permute.xlu0 %8506
      %8508 = vset.pattern.permute.xlu0 0
      %8509 = vperm.xlu0 %8508, %v8284
      %v8510 = vpop.permute.xlu0 %8509
      %8511 = vset.pattern.permute.xlu0 0
      %8512 = vperm.xlu0 %8511, %v8285
      %v8513 = vpop.permute.xlu0 %8512
      %8514 = vset.pattern.permute.xlu0 0
      %8515 = vperm.xlu0 %8514, %v8286
      %v8516 = vpop.permute.xlu0 %8515
      %8517 = vset.pattern.permute.xlu0 0
      %8518 = vperm.xlu0 %8517, %v8287
      %v8519 = vpop.permute.xlu0 %8518
      %8520 = vset.pattern.permute.xlu0 0
      %8521 = vperm.xlu0 %8520, %v8288
      %v8522 = vpop.permute.xlu0 %8521
      %8523 = vset.pattern.permute.xlu0 0
      %8524 = vperm.xlu0 %8523, %v8289
      %v8525 = vpop.permute.xlu0 %8524
      %8526 = vset.pattern.permute.xlu0 0
      %8527 = vperm.xlu0 %8526, %v8290
      %v8528 = vpop.permute.xlu0 %8527
      %8529 = vset.pattern.permute.xlu0 0
      %8530 = vperm.xlu0 %8529, %v8291
      %v8531 = vpop.permute.xlu0 %8530
      %8532 = vset.pattern.permute.xlu0 0
      %8533 = vperm.xlu0 %8532, %v8292
      %v8534 = vpop.permute.xlu0 %8533
      %8535 = vset.pattern.permute.xlu0 0
      %8536 = vperm.xlu0 %8535, %v8293
      %v8537 = vpop.permute.xlu0 %8536
      %8538 = vset.pattern.permute.xlu0 0
      %8539 = vperm.xlu0 %8538, %v8294
      %v8540 = vpop.permute.xlu0 %8539
      %8541 = vset.pattern.permute.xlu0 0
      %8542 = vperm.xlu0 %8541, %v8295
      %v8543 = vpop.permute.xlu0 %8542
      %8544 = vset.pattern.permute.xlu0 0
      %8545 = vperm.xlu0 %8544, %v8296
      %v8546 = vpop.permute.xlu0 %8545
      %8547 = vset.pattern.permute.xlu0 0
      %8548 = vperm.xlu0 %8547, %v8297
      %v8549 = vpop.permute.xlu0 %8548
      %8550 = vset.pattern.permute.xlu0 0
      %8551 = vperm.xlu0 %8550, %v8298
      %v8552 = vpop.permute.xlu0 %8551
      %8553 = vset.pattern.permute.xlu0 0
      %8554 = vperm.xlu0 %8553, %v8299
      %v8555 = vpop.permute.xlu0 %8554
      %8556 = vset.pattern.permute.xlu0 0
      %8557 = vperm.xlu0 %8556, %v8300
      %v8558 = vpop.permute.xlu0 %8557
      %8559 = vset.pattern.permute.xlu0 0
      %8560 = vperm.xlu0 %8559, %v8301
      %v8561 = vpop.permute.xlu0 %8560
      %8562 = vset.pattern.permute.xlu0 0
      %8563 = vperm.xlu0 %8562, %v8302
      %v8564 = vpop.permute.xlu0 %8563
      %8565 = vset.pattern.permute.xlu0 0
      %8566 = vperm.xlu0 %8565, %v8303
      %v8567 = vpop.permute.xlu0 %8566
      %8568 = vset.pattern.permute.xlu0 0
      %8569 = vperm.xlu0 %8568, %v8304
      %v8570 = vpop.permute.xlu0 %8569
      %8571 = vset.pattern.permute.xlu0 0
      %8572 = vperm.xlu0 %8571, %v8305
      %v8573 = vpop.permute.xlu0 %8572
      %8574 = vset.pattern.permute.xlu0 0
      %8575 = vperm.xlu0 %8574, %v8306
      %v8576 = vpop.permute.xlu0 %8575
      %8577 = vset.pattern.permute.xlu0 0
      %8578 = vperm.xlu0 %8577, %v8307
      %v8579 = vpop.permute.xlu0 %8578
      %8580 = vset.pattern.permute.xlu0 0
      %8581 = vperm.xlu0 %8580, %v8308
      %v8582 = vpop.permute.xlu0 %8581
      %8583 = vset.pattern.permute.xlu0 0
      %8584 = vperm.xlu0 %8583, %v8309
      %v8585 = vpop.permute.xlu0 %8584
      %8586 = vset.pattern.permute.xlu0 0
      %8587 = vperm.xlu0 %8586, %v8310
      %v8588 = vpop.permute.xlu0 %8587
      %8589 = vset.pattern.permute.xlu0 0
      %8590 = vperm.xlu0 %8589, %v8311
      %v8591 = vpop.permute.xlu0 %8590
      %8592 = vset.pattern.permute.xlu0 0
      %8593 = vperm.xlu0 %8592, %v8312
      %v8594 = vpop.permute.xlu0 %8593
      %8595 = vset.pattern.permute.xlu0 0
      %8596 = vperm.xlu0 %8595, %v8313
      %v8597 = vpop.permute.xlu0 %8596
      %8598 = vset.pattern.permute.xlu0 0
      %8599 = vperm.xlu0 %8598, %v8314
      %v8600 = vpop.permute.xlu0 %8599
      %8601 = vset.pattern.permute.xlu0 0
      %8602 = vperm.xlu0 %8601, %v8315
      %v8603 = vpop.permute.xlu0 %8602
      %8604 = vset.pattern.permute.xlu0 0
      %8605 = vperm.xlu0 %8604, %v8316
      %v8606 = vpop.permute.xlu0 %8605
      %8607 = vset.pattern.permute.xlu0 0
      %8608 = vperm.xlu0 %8607, %v8317
      %v8609 = vpop.permute.xlu0 %8608
      %8610 = vset.pattern.permute.xlu0 0
      %8611 = vperm.xlu0 %8610, %v8318
      %v8612 = vpop.permute.xlu0 %8611
      %8613 = vset.pattern.permute.xlu0 0
      %8614 = vperm.xlu0 %8613, %v8319
      %v8615 = vpop.permute.xlu0 %8614
      %8616 = vset.pattern.permute.xlu0 0
      %8617 = vperm.xlu0 %8616, %v8320
      %v8618 = vpop.permute.xlu0 %8617
      %8619 = vset.pattern.permute.xlu0 0
      %8620 = vperm.xlu0 %8619, %v8321
      %v8621 = vpop.permute.xlu0 %8620
      %8622 = vset.pattern.permute.xlu0 0
      %8623 = vperm.xlu0 %8622, %v8322
      %v8624 = vpop.permute.xlu0 %8623
      %8625 = vset.pattern.permute.xlu0 0
      %8626 = vperm.xlu0 %8625, %v8323
      %v8627 = vpop.permute.xlu0 %8626
      %8628 = vset.pattern.permute.xlu0 0
      %8629 = vperm.xlu0 %8628, %v8324
      %v8630 = vpop.permute.xlu0 %8629
      %8631 = vset.pattern.permute.xlu0 0
      %8632 = vperm.xlu0 %8631, %v8325
      %v8633 = vpop.permute.xlu0 %8632
      %8634 = vset.pattern.permute.xlu0 0
      %8635 = vperm.xlu0 %8634, %v8326
      %v8636 = vpop.permute.xlu0 %8635
      %8637 = vset.pattern.permute.xlu0 0
      %8638 = vperm.xlu0 %8637, %v8327
      %v8639 = vpop.permute.xlu0 %8638
      %8640 = vset.pattern.permute.xlu0 0
      %8641 = vperm.xlu0 %8640, %v8328
      %v8642 = vpop.permute.xlu0 %8641
      %8643 = vset.pattern.permute.xlu0 0
      %8644 = vperm.xlu0 %8643, %v8329
      %v8645 = vpop.permute.xlu0 %8644
      %8646 = vset.pattern.permute.xlu0 0
      %8647 = vperm.xlu0 %8646, %v8330
      %v8648 = vpop.permute.xlu0 %8647
      %8649 = vset.pattern.permute.xlu0 0
      %8650 = vperm.xlu0 %8649, %v8331
      %v8651 = vpop.permute.xlu0 %8650
      %8652 = vset.pattern.permute.xlu0 0
      %8653 = vperm.xlu0 %8652, %v8332
      %v8654 = vpop.permute.xlu0 %8653
      %8655 = vset.pattern.permute.xlu0 0
      %8656 = vperm.xlu0 %8655, %v8333
      %v8657 = vpop.permute.xlu0 %8656
      %8658 = vset.pattern.permute.xlu0 0
      %8659 = vperm.xlu0 %8658, %v8334
      %v8660 = vpop.permute.xlu0 %8659
      %8661 = vset.pattern.permute.xlu0 0
      %8662 = vperm.xlu0 %8661, %v8335
      %v8663 = vpop.permute.xlu0 %8662
      %8664 = vset.pattern.permute.xlu0 0
      %8665 = vperm.xlu0 %8664, %v8336
      %v8666 = vpop.permute.xlu0 %8665
      %8667 = vset.pattern.permute.xlu0 0
      %8668 = vperm.xlu0 %8667, %v8337
      %v8669 = vpop.permute.xlu0 %8668
      %8670 = vset.pattern.permute.xlu0 0
      %8671 = vperm.xlu0 %8670, %v8338
      %v8672 = vpop.permute.xlu0 %8671
      %8673 = vset.pattern.permute.xlu0 0
      %8674 = vperm.xlu0 %8673, %v8339
      %v8675 = vpop.permute.xlu0 %8674
      %8676 = vset.pattern.permute.xlu0 0
      %8677 = vperm.xlu0 %8676, %v8340
      %v8678 = vpop.permute.xlu0 %8677
      %8679 = vset.pattern.permute.xlu0 0
      %8680 = vperm.xlu0 %8679, %v8341
      %v8681 = vpop.permute.xlu0 %8680
      %8682 = vset.pattern.permute.xlu0 0
      %8683 = vperm.xlu0 %8682, %v8342
      %v8684 = vpop.permute.xlu0 %8683
      %8685 = vset.pattern.permute.xlu0 0
      %8686 = vperm.xlu0 %8685, %v8343
      %v8687 = vpop.permute.xlu0 %8686
      %8688 = vset.pattern.permute.xlu0 0
      %8689 = vperm.xlu0 %8688, %v8344
      %v8690 = vpop.permute.xlu0 %8689
      %8691 = vset.pattern.permute.xlu0 0
      %8692 = vperm.xlu0 %8691, %v8345
      %v8693 = vpop.permute.xlu0 %8692
      %8694 = vset.pattern.permute.xlu0 0
      %8695 = vperm.xlu0 %8694, %v8346
      %v8696 = vpop.permute.xlu0 %8695
      %8697 = vset.pattern.permute.xlu0 0
      %8698 = vperm.xlu0 %8697, %v8347
      %v8699 = vpop.permute.xlu0 %8698
      %8700 = vset.pattern.permute.xlu0 0
      %8701 = vperm.xlu0 %8700, %v8348
      %v8702 = vpop.permute.xlu0 %8701
      %8703 = vset.pattern.permute.xlu0 0
      %8704 = vperm.xlu0 %8703, %v8349
      %v8705 = vpop.permute.xlu0 %8704
      %8706 = vset.pattern.permute.xlu0 0
      %8707 = vperm.xlu0 %8706, %v8350
      %v8708 = vpop.permute.xlu0 %8707
      %8709 = vset.pattern.permute.xlu0 0
      %8710 = vperm.xlu0 %8709, %v8351
      %v8711 = vpop.permute.xlu0 %8710
      %8712 = vset.pattern.permute.xlu0 0
      %8713 = vperm.xlu0 %8712, %v8352
      %v8714 = vpop.permute.xlu0 %8713
      %8715 = vset.pattern.permute.xlu0 0
      %8716 = vperm.xlu0 %8715, %v8353
      %v8717 = vpop.permute.xlu0 %8716
      %8718 = vset.pattern.permute.xlu0 0
      %8719 = vperm.xlu0 %8718, %v8354
      %v8720 = vpop.permute.xlu0 %8719
      %8721 = vset.pattern.permute.xlu0 0
      %8722 = vperm.xlu0 %8721, %v8355
      %v8723 = vpop.permute.xlu0 %8722
      %8724 = vset.pattern.permute.xlu0 0
      %8725 = vperm.xlu0 %8724, %v8356
      %v8726 = vpop.permute.xlu0 %8725
      %8727 = vset.pattern.permute.xlu0 0
      %8728 = vperm.xlu0 %8727, %v8357
      %v8729 = vpop.permute.xlu0 %8728
      %8730 = vset.pattern.permute.xlu0 0
      %8731 = vperm.xlu0 %8730, %v8358
      %v8732 = vpop.permute.xlu0 %8731
      %8733 = vset.pattern.permute.xlu0 0
      %8734 = vperm.xlu0 %8733, %v8359
      %v8735 = vpop.permute.xlu0 %8734
      %8736 = vset.pattern.permute.xlu0 0
      %8737 = vperm.xlu0 %8736, %v8360
      %v8738 = vpop.permute.xlu0 %8737
      %8739 = vset.pattern.permute.xlu0 0
      %8740 = vperm.xlu0 %8739, %v8361
      %v8741 = vpop.permute.xlu0 %8740
      %8742 = vset.pattern.permute.xlu0 0
      %8743 = vperm.xlu0 %8742, %v8362
      %v8744 = vpop.permute.xlu0 %8743
      %8745 = vset.pattern.permute.xlu0 0
      %8746 = vperm.xlu0 %8745, %v8363
      %v8747 = vpop.permute.xlu0 %8746
      %vm8748 = vcmp.eq.s32.totalorder %v8366, 1
      %vm8749 = vcmp.eq.s32.totalorder %v8369, 1
      %vm8750 = vcmp.eq.s32.totalorder %v8372, 1
      %vm8751 = vcmp.eq.s32.totalorder %v8375, 1
      %vm8752 = vcmp.eq.s32.totalorder %v8378, 1
      %vm8753 = vcmp.eq.s32.totalorder %v8381, 1
      %vm8754 = vcmp.eq.s32.totalorder %v8384, 1
      %vm8755 = vcmp.eq.s32.totalorder %v8387, 1
      %vm8756 = vcmp.eq.s32.totalorder %v8390, 1
      %vm8757 = vcmp.eq.s32.totalorder %v8393, 1
      %vm8758 = vcmp.eq.s32.totalorder %v8396, 1
      %vm8759 = vcmp.eq.s32.totalorder %v8399, 1
      %vm8760 = vcmp.eq.s32.totalorder %v8402, 1
      %vm8761 = vcmp.eq.s32.totalorder %v8405, 1
      %vm8762 = vcmp.eq.s32.totalorder %v8408, 1
      %vm8763 = vcmp.eq.s32.totalorder %v8411, 1
      %vm8764 = vcmp.eq.s32.totalorder %v8414, 1
      %vm8765 = vcmp.eq.s32.totalorder %v8417, 1
      %vm8766 = vcmp.eq.s32.totalorder %v8420, 1
      %vm8767 = vcmp.eq.s32.totalorder %v8423, 1
      %vm8768 = vcmp.eq.s32.totalorder %v8426, 1
      %vm8769 = vcmp.eq.s32.totalorder %v8429, 1
      %vm8770 = vcmp.eq.s32.totalorder %v8432, 1
      %vm8771 = vcmp.eq.s32.totalorder %v8435, 1
      %vm8772 = vcmp.eq.s32.totalorder %v8438, 1
      %vm8773 = vcmp.eq.s32.totalorder %v8441, 1
      %vm8774 = vcmp.eq.s32.totalorder %v8444, 1
      %vm8775 = vcmp.eq.s32.totalorder %v8447, 1
      %vm8776 = vcmp.eq.s32.totalorder %v8450, 1
      %vm8777 = vcmp.eq.s32.totalorder %v8453, 1
      %vm8778 = vcmp.eq.s32.totalorder %v8456, 1
      %vm8779 = vcmp.eq.s32.totalorder %v8459, 1
      %vm8780 = vcmp.eq.s32.totalorder %v8462, 1
      %vm8781 = vcmp.eq.s32.totalorder %v8465, 1
      %vm8782 = vcmp.eq.s32.totalorder %v8468, 1
      %vm8783 = vcmp.eq.s32.totalorder %v8471, 1
      %vm8784 = vcmp.eq.s32.totalorder %v8474, 1
      %vm8785 = vcmp.eq.s32.totalorder %v8477, 1
      %vm8786 = vcmp.eq.s32.totalorder %v8480, 1
      %vm8787 = vcmp.eq.s32.totalorder %v8483, 1
      %vm8788 = vcmp.eq.s32.totalorder %v8486, 1
      %vm8789 = vcmp.eq.s32.totalorder %v8489, 1
      %vm8790 = vcmp.eq.s32.totalorder %v8492, 1
      %vm8791 = vcmp.eq.s32.totalorder %v8495, 1
      %vm8792 = vcmp.eq.s32.totalorder %v8498, 1
      %vm8793 = vcmp.eq.s32.totalorder %v8501, 1
      %vm8794 = vcmp.eq.s32.totalorder %v8504, 1
      %vm8795 = vcmp.eq.s32.totalorder %v8507, 1
      %vm8796 = vcmp.eq.s32.totalorder %v8510, 1
      %vm8797 = vcmp.eq.s32.totalorder %v8513, 1
      %vm8798 = vcmp.eq.s32.totalorder %v8516, 1
      %vm8799 = vcmp.eq.s32.totalorder %v8519, 1
      %vm8800 = vcmp.eq.s32.totalorder %v8522, 1
      %vm8801 = vcmp.eq.s32.totalorder %v8525, 1
      %vm8802 = vcmp.eq.s32.totalorder %v8528, 1
      %vm8803 = vcmp.eq.s32.totalorder %v8531, 1
      %vm8804 = vcmp.eq.s32.totalorder %v8534, 1
      %vm8805 = vcmp.eq.s32.totalorder %v8537, 1
      %vm8806 = vcmp.eq.s32.totalorder %v8540, 1
      %vm8807 = vcmp.eq.s32.totalorder %v8543, 1
      %vm8808 = vcmp.eq.s32.totalorder %v8546, 1
      %vm8809 = vcmp.eq.s32.totalorder %v8549, 1
      %vm8810 = vcmp.eq.s32.totalorder %v8552, 1
      %vm8811 = vcmp.eq.s32.totalorder %v8555, 1
      %vm8812 = vcmp.eq.s32.totalorder %v8558, 1
      %vm8813 = vcmp.eq.s32.totalorder %v8561, 1
      %vm8814 = vcmp.eq.s32.totalorder %v8564, 1
      %vm8815 = vcmp.eq.s32.totalorder %v8567, 1
      %vm8816 = vcmp.eq.s32.totalorder %v8570, 1
      %vm8817 = vcmp.eq.s32.totalorder %v8573, 1
      %vm8818 = vcmp.eq.s32.totalorder %v8576, 1
      %vm8819 = vcmp.eq.s32.totalorder %v8579, 1
      %vm8820 = vcmp.eq.s32.totalorder %v8582, 1
      %vm8821 = vcmp.eq.s32.totalorder %v8585, 1
      %vm8822 = vcmp.eq.s32.totalorder %v8588, 1
      %vm8823 = vcmp.eq.s32.totalorder %v8591, 1
      %vm8824 = vcmp.eq.s32.totalorder %v8594, 1
      %vm8825 = vcmp.eq.s32.totalorder %v8597, 1
      %vm8826 = vcmp.eq.s32.totalorder %v8600, 1
      %vm8827 = vcmp.eq.s32.totalorder %v8603, 1
      %vm8828 = vcmp.eq.s32.totalorder %v8606, 1
      %vm8829 = vcmp.eq.s32.totalorder %v8609, 1
      %vm8830 = vcmp.eq.s32.totalorder %v8612, 1
      %vm8831 = vcmp.eq.s32.totalorder %v8615, 1
      %vm8832 = vcmp.eq.s32.totalorder %v8618, 1
      %vm8833 = vcmp.eq.s32.totalorder %v8621, 1
      %vm8834 = vcmp.eq.s32.totalorder %v8624, 1
      %vm8835 = vcmp.eq.s32.totalorder %v8627, 1
      %vm8836 = vcmp.eq.s32.totalorder %v8630, 1
      %vm8837 = vcmp.eq.s32.totalorder %v8633, 1
      %vm8838 = vcmp.eq.s32.totalorder %v8636, 1
      %vm8839 = vcmp.eq.s32.totalorder %v8639, 1
      %vm8840 = vcmp.eq.s32.totalorder %v8642, 1
      %vm8841 = vcmp.eq.s32.totalorder %v8645, 1
      %vm8842 = vcmp.eq.s32.totalorder %v8648, 1
      %vm8843 = vcmp.eq.s32.totalorder %v8651, 1
      %vm8844 = vcmp.eq.s32.totalorder %v8654, 1
      %vm8845 = vcmp.eq.s32.totalorder %v8657, 1
      %vm8846 = vcmp.eq.s32.totalorder %v8660, 1
      %vm8847 = vcmp.eq.s32.totalorder %v8663, 1
      %vm8848 = vcmp.eq.s32.totalorder %v8666, 1
      %vm8849 = vcmp.eq.s32.totalorder %v8669, 1
      %vm8850 = vcmp.eq.s32.totalorder %v8672, 1
      %vm8851 = vcmp.eq.s32.totalorder %v8675, 1
      %vm8852 = vcmp.eq.s32.totalorder %v8678, 1
      %vm8853 = vcmp.eq.s32.totalorder %v8681, 1
      %vm8854 = vcmp.eq.s32.totalorder %v8684, 1
      %vm8855 = vcmp.eq.s32.totalorder %v8687, 1
      %vm8856 = vcmp.eq.s32.totalorder %v8690, 1
      %vm8857 = vcmp.eq.s32.totalorder %v8693, 1
      %vm8858 = vcmp.eq.s32.totalorder %v8696, 1
      %vm8859 = vcmp.eq.s32.totalorder %v8699, 1
      %vm8860 = vcmp.eq.s32.totalorder %v8702, 1
      %vm8861 = vcmp.eq.s32.totalorder %v8705, 1
      %vm8862 = vcmp.eq.s32.totalorder %v8708, 1
      %vm8863 = vcmp.eq.s32.totalorder %v8711, 1
      %vm8864 = vcmp.eq.s32.totalorder %v8714, 1
      %vm8865 = vcmp.eq.s32.totalorder %v8717, 1
      %vm8866 = vcmp.eq.s32.totalorder %v8720, 1
      %vm8867 = vcmp.eq.s32.totalorder %v8723, 1
      %vm8868 = vcmp.eq.s32.totalorder %v8726, 1
      %vm8869 = vcmp.eq.s32.totalorder %v8729, 1
      %vm8870 = vcmp.eq.s32.totalorder %v8732, 1
      %vm8871 = vcmp.eq.s32.totalorder %v8735, 1
      %vm8872 = vcmp.eq.s32.totalorder %v8738, 1
      %vm8873 = vcmp.eq.s32.totalorder %v8741, 1
      %vm8874 = vcmp.eq.s32.totalorder %v8744, 1
      %vm8875 = vcmp.eq.s32.totalorder %v8747, 1
      %v8876 = vsel %vm8748, %v6823, 0.0
      %v8877 = vsel %vm8749, %v6824, 0.0
      %v8878 = vsel %vm8750, %v6825, 0.0
      %v8879 = vsel %vm8751, %v6826, 0.0
      %v8880 = vsel %vm8752, %v6827, 0.0
      %v8881 = vsel %vm8753, %v6828, 0.0
      %v8882 = vsel %vm8754, %v6829, 0.0
      %v8883 = vsel %vm8755, %v6830, 0.0
      %v8884 = vsel %vm8756, %v6831, 0.0
      %v8885 = vsel %vm8757, %v6832, 0.0
      %v8886 = vsel %vm8758, %v6833, 0.0
      %v8887 = vsel %vm8759, %v6834, 0.0
      %v8888 = vsel %vm8760, %v6835, 0.0
      %v8889 = vsel %vm8761, %v6836, 0.0
      %v8890 = vsel %vm8762, %v6837, 0.0
      %v8891 = vsel %vm8763, %v6838, 0.0
      %v8892 = vsel %vm8764, %v6839, 0.0
      %v8893 = vsel %vm8765, %v6840, 0.0
      %v8894 = vsel %vm8766, %v6841, 0.0
      %v8895 = vsel %vm8767, %v6842, 0.0
      %v8896 = vsel %vm8768, %v6843, 0.0
      %v8897 = vsel %vm8769, %v6844, 0.0
      %v8898 = vsel %vm8770, %v6845, 0.0
      %v8899 = vsel %vm8771, %v6846, 0.0
      %v8900 = vsel %vm8772, %v6847, 0.0
      %v8901 = vsel %vm8773, %v6848, 0.0
      %v8902 = vsel %vm8774, %v6849, 0.0
      %v8903 = vsel %vm8775, %v6850, 0.0
      %v8904 = vsel %vm8776, %v6851, 0.0
      %v8905 = vsel %vm8777, %v6852, 0.0
      %v8906 = vsel %vm8778, %v6853, 0.0
      %v8907 = vsel %vm8779, %v6854, 0.0
      %v8908 = vsel %vm8780, %v6855, 0.0
      %v8909 = vsel %vm8781, %v6856, 0.0
      %v8910 = vsel %vm8782, %v6857, 0.0
      %v8911 = vsel %vm8783, %v6858, 0.0
      %v8912 = vsel %vm8784, %v6859, 0.0
      %v8913 = vsel %vm8785, %v6860, 0.0
      %v8914 = vsel %vm8786, %v6861, 0.0
      %v8915 = vsel %vm8787, %v6862, 0.0
      %v8916 = vsel %vm8788, %v6863, 0.0
      %v8917 = vsel %vm8789, %v6864, 0.0
      %v8918 = vsel %vm8790, %v6865, 0.0
      %v8919 = vsel %vm8791, %v6866, 0.0
      %v8920 = vsel %vm8792, %v6867, 0.0
      %v8921 = vsel %vm8793, %v6868, 0.0
      %v8922 = vsel %vm8794, %v6869, 0.0
      %v8923 = vsel %vm8795, %v6870, 0.0
      %v8924 = vsel %vm8796, %v6871, 0.0
      %v8925 = vsel %vm8797, %v6872, 0.0
      %v8926 = vsel %vm8798, %v6873, 0.0
      %v8927 = vsel %vm8799, %v6874, 0.0
      %v8928 = vsel %vm8800, %v6875, 0.0
      %v8929 = vsel %vm8801, %v6876, 0.0
      %v8930 = vsel %vm8802, %v6877, 0.0
      %v8931 = vsel %vm8803, %v6878, 0.0
      %v8932 = vsel %vm8804, %v6879, 0.0
      %v8933 = vsel %vm8805, %v6880, 0.0
      %v8934 = vsel %vm8806, %v6881, 0.0
      %v8935 = vsel %vm8807, %v6882, 0.0
      %v8936 = vsel %vm8808, %v6883, 0.0
      %v8937 = vsel %vm8809, %v6884, 0.0
      %v8938 = vsel %vm8810, %v6885, 0.0
      %v8939 = vsel %vm8811, %v6886, 0.0
      %v8940 = vsel %vm8812, %v6887, 0.0
      %v8941 = vsel %vm8813, %v6888, 0.0
      %v8942 = vsel %vm8814, %v6889, 0.0
      %v8943 = vsel %vm8815, %v6890, 0.0
      %v8944 = vsel %vm8816, %v6891, 0.0
      %v8945 = vsel %vm8817, %v6892, 0.0
      %v8946 = vsel %vm8818, %v6893, 0.0
      %v8947 = vsel %vm8819, %v6894, 0.0
      %v8948 = vsel %vm8820, %v6895, 0.0
      %v8949 = vsel %vm8821, %v6896, 0.0
      %v8950 = vsel %vm8822, %v6897, 0.0
      %v8951 = vsel %vm8823, %v6898, 0.0
      %v8952 = vsel %vm8824, %v6899, 0.0
      %v8953 = vsel %vm8825, %v6900, 0.0
      %v8954 = vsel %vm8826, %v6901, 0.0
      %v8955 = vsel %vm8827, %v6902, 0.0
      %v8956 = vsel %vm8828, %v6903, 0.0
      %v8957 = vsel %vm8829, %v6904, 0.0
      %v8958 = vsel %vm8830, %v6905, 0.0
      %v8959 = vsel %vm8831, %v6906, 0.0
      %v8960 = vsel %vm8832, %v6907, 0.0
      %v8961 = vsel %vm8833, %v6908, 0.0
      %v8962 = vsel %vm8834, %v6909, 0.0
      %v8963 = vsel %vm8835, %v6910, 0.0
      %v8964 = vsel %vm8836, %v6911, 0.0
      %v8965 = vsel %vm8837, %v6912, 0.0
      %v8966 = vsel %vm8838, %v6913, 0.0
      %v8967 = vsel %vm8839, %v6914, 0.0
      %v8968 = vsel %vm8840, %v6915, 0.0
      %v8969 = vsel %vm8841, %v6916, 0.0
      %v8970 = vsel %vm8842, %v6917, 0.0
      %v8971 = vsel %vm8843, %v6918, 0.0
      %v8972 = vsel %vm8844, %v6919, 0.0
      %v8973 = vsel %vm8845, %v6920, 0.0
      %v8974 = vsel %vm8846, %v6921, 0.0
      %v8975 = vsel %vm8847, %v6922, 0.0
      %v8976 = vsel %vm8848, %v6923, 0.0
      %v8977 = vsel %vm8849, %v6924, 0.0
      %v8978 = vsel %vm8850, %v6925, 0.0
      %v8979 = vsel %vm8851, %v6926, 0.0
      %v8980 = vsel %vm8852, %v6927, 0.0
      %v8981 = vsel %vm8853, %v6928, 0.0
      %v8982 = vsel %vm8854, %v6929, 0.0
      %v8983 = vsel %vm8855, %v6930, 0.0
      %v8984 = vsel %vm8856, %v6931, 0.0
      %v8985 = vsel %vm8857, %v6932, 0.0
      %v8986 = vsel %vm8858, %v6933, 0.0
      %v8987 = vsel %vm8859, %v6934, 0.0
      %v8988 = vsel %vm8860, %v6935, 0.0
      %v8989 = vsel %vm8861, %v6936, 0.0
      %v8990 = vsel %vm8862, %v6937, 0.0
      %v8991 = vsel %vm8863, %v6938, 0.0
      %v8992 = vsel %vm8864, %v6939, 0.0
      %v8993 = vsel %vm8865, %v6940, 0.0
      %v8994 = vsel %vm8866, %v6941, 0.0
      %v8995 = vsel %vm8867, %v6942, 0.0
      %v8996 = vsel %vm8868, %v6943, 0.0
      %v8997 = vsel %vm8869, %v6944, 0.0
      %v8998 = vsel %vm8870, %v6945, 0.0
      %v8999 = vsel %vm8871, %v6946, 0.0
      %v9000 = vsel %vm8872, %v6947, 0.0
      %v9001 = vsel %vm8873, %v6948, 0.0
      %v9002 = vsel %vm8874, %v6949, 0.0
      %v9003 = vsel %vm8875, %v6950, 0.0
      %v9004 = vadd.f32 %v8876, %v8877
      %v9005 = vadd.f32 %v9004, %v8878
      %v9006 = vadd.f32 %v9005, %v8879
      %v9007 = vadd.f32 %v9006, %v8880
      %v9008 = vadd.f32 %v9007, %v8881
      %v9009 = vadd.f32 %v9008, %v8882
      %v9010 = vadd.f32 %v9009, %v8883
      %v9011 = vadd.f32 %v9010, %v8884
      %v9012 = vadd.f32 %v9011, %v8885
      %v9013 = vadd.f32 %v9012, %v8886
      %v9014 = vadd.f32 %v9013, %v8887
      %v9015 = vadd.f32 %v9014, %v8888
      %v9016 = vadd.f32 %v9015, %v8889
      %v9017 = vadd.f32 %v9016, %v8890
      %v9018 = vadd.f32 %v9017, %v8891
      %v9019 = vadd.f32 %v9018, %v8892
      %v9020 = vadd.f32 %v9019, %v8893
      %v9021 = vadd.f32 %v9020, %v8894
      %v9022 = vadd.f32 %v9021, %v8895
      %v9023 = vadd.f32 %v9022, %v8896
      %v9024 = vadd.f32 %v9023, %v8897
      %v9025 = vadd.f32 %v9024, %v8898
      %v9026 = vadd.f32 %v9025, %v8899
      %v9027 = vadd.f32 %v9026, %v8900
      %v9028 = vadd.f32 %v9027, %v8901
      %v9029 = vadd.f32 %v9028, %v8902
      %v9030 = vadd.f32 %v9029, %v8903
      %v9031 = vadd.f32 %v9030, %v8904
      %v9032 = vadd.f32 %v9031, %v8905
      %v9033 = vadd.f32 %v9032, %v8906
      %v9034 = vadd.f32 %v9033, %v8907
      %v9035 = vadd.f32 %v9034, %v8908
      %v9036 = vadd.f32 %v9035, %v8909
      %v9037 = vadd.f32 %v9036, %v8910
      %v9038 = vadd.f32 %v9037, %v8911
      %v9039 = vadd.f32 %v9038, %v8912
      %v9040 = vadd.f32 %v9039, %v8913
      %v9041 = vadd.f32 %v9040, %v8914
      %v9042 = vadd.f32 %v9041, %v8915
      %v9043 = vadd.f32 %v9042, %v8916
      %v9044 = vadd.f32 %v9043, %v8917
      %v9045 = vadd.f32 %v9044, %v8918
      %v9046 = vadd.f32 %v9045, %v8919
      %v9047 = vadd.f32 %v9046, %v8920
      %v9048 = vadd.f32 %v9047, %v8921
      %v9049 = vadd.f32 %v9048, %v8922
      %v9050 = vadd.f32 %v9049, %v8923
      %v9051 = vadd.f32 %v9050, %v8924
      %v9052 = vadd.f32 %v9051, %v8925
      %v9053 = vadd.f32 %v9052, %v8926
      %v9054 = vadd.f32 %v9053, %v8927
      %v9055 = vadd.f32 %v9054, %v8928
      %v9056 = vadd.f32 %v9055, %v8929
      %v9057 = vadd.f32 %v9056, %v8930
      %v9058 = vadd.f32 %v9057, %v8931
      %v9059 = vadd.f32 %v9058, %v8932
      %v9060 = vadd.f32 %v9059, %v8933
      %v9061 = vadd.f32 %v9060, %v8934
      %v9062 = vadd.f32 %v9061, %v8935
      %v9063 = vadd.f32 %v9062, %v8936
      %v9064 = vadd.f32 %v9063, %v8937
      %v9065 = vadd.f32 %v9064, %v8938
      %v9066 = vadd.f32 %v9065, %v8939
      %v9067 = vadd.f32 %v9066, %v8940
      %v9068 = vadd.f32 %v9067, %v8941
      %v9069 = vadd.f32 %v9068, %v8942
      %v9070 = vadd.f32 %v9069, %v8943
      %v9071 = vadd.f32 %v9070, %v8944
      %v9072 = vadd.f32 %v9071, %v8945
      %v9073 = vadd.f32 %v9072, %v8946
      %v9074 = vadd.f32 %v9073, %v8947
      %v9075 = vadd.f32 %v9074, %v8948
      %v9076 = vadd.f32 %v9075, %v8949
      %v9077 = vadd.f32 %v9076, %v8950
      %v9078 = vadd.f32 %v9077, %v8951
      %v9079 = vadd.f32 %v9078, %v8952
      %v9080 = vadd.f32 %v9079, %v8953
      %v9081 = vadd.f32 %v9080, %v8954
      %v9082 = vadd.f32 %v9081, %v8955
      %v9083 = vadd.f32 %v9082, %v8956
      %v9084 = vadd.f32 %v9083, %v8957
      %v9085 = vadd.f32 %v9084, %v8958
      %v9086 = vadd.f32 %v9085, %v8959
      %v9087 = vadd.f32 %v9086, %v8960
      %v9088 = vadd.f32 %v9087, %v8961
      %v9089 = vadd.f32 %v9088, %v8962
      %v9090 = vadd.f32 %v9089, %v8963
      %v9091 = vadd.f32 %v9090, %v8964
      %v9092 = vadd.f32 %v9091, %v8965
      %v9093 = vadd.f32 %v9092, %v8966
      %v9094 = vadd.f32 %v9093, %v8967
      %v9095 = vadd.f32 %v9094, %v8968
      %v9096 = vadd.f32 %v9095, %v8969
      %v9097 = vadd.f32 %v9096, %v8970
      %v9098 = vadd.f32 %v9097, %v8971
      %v9099 = vadd.f32 %v9098, %v8972
      %v9100 = vadd.f32 %v9099, %v8973
      %v9101 = vadd.f32 %v9100, %v8974
      %v9102 = vadd.f32 %v9101, %v8975
      %v9103 = vadd.f32 %v9102, %v8976
      %v9104 = vadd.f32 %v9103, %v8977
      %v9105 = vadd.f32 %v9104, %v8978
      %v9106 = vadd.f32 %v9105, %v8979
      %v9107 = vadd.f32 %v9106, %v8980
      %v9108 = vadd.f32 %v9107, %v8981
      %v9109 = vadd.f32 %v9108, %v8982
      %v9110 = vadd.f32 %v9109, %v8983
      %v9111 = vadd.f32 %v9110, %v8984
      %v9112 = vadd.f32 %v9111, %v8985
      %v9113 = vadd.f32 %v9112, %v8986
      %v9114 = vadd.f32 %v9113, %v8987
      %v9115 = vadd.f32 %v9114, %v8988
      %v9116 = vadd.f32 %v9115, %v8989
      %v9117 = vadd.f32 %v9116, %v8990
      %v9118 = vadd.f32 %v9117, %v8991
      %v9119 = vadd.f32 %v9118, %v8992
      %v9120 = vadd.f32 %v9119, %v8993
      %v9121 = vadd.f32 %v9120, %v8994
      %v9122 = vadd.f32 %v9121, %v8995
      %v9123 = vadd.f32 %v9122, %v8996
      %v9124 = vadd.f32 %v9123, %v8997
      %v9125 = vadd.f32 %v9124, %v8998
      %v9126 = vadd.f32 %v9125, %v8999
      %v9127 = vadd.f32 %v9126, %v9000
      %v9128 = vadd.f32 %v9127, %v9001
      %v9129 = vadd.f32 %v9128, %v9002
      %v9130 = vadd.f32 %v9129, %v9003
      %v9131 = vrot.slane %v9130, 4
      %v9132 = vadd.f32 %v9130, %v9131
      %v9133 = vrot.slane %v9132, 2
      %v9134 = vadd.f32 %v9132, %v9133
      %v9135 = vrot.slane %v9134, 1
      %v9136 = vadd.f32 %v9134, %v9135
      %vm9137 = vcmp.eq.s32.totalorder %v6951, 2
      %vm9138 = vcmp.eq.s32.totalorder %v6952, 2
      %vm9139 = vcmp.eq.s32.totalorder %v6953, 2
      %vm9140 = vcmp.eq.s32.totalorder %v6954, 2
      %vm9141 = vcmp.eq.s32.totalorder %v6955, 2
      %vm9142 = vcmp.eq.s32.totalorder %v6956, 2
      %vm9143 = vcmp.eq.s32.totalorder %v6957, 2
      %vm9144 = vcmp.eq.s32.totalorder %v6958, 2
      %vm9145 = vcmp.eq.s32.totalorder %v6959, 2
      %vm9146 = vcmp.eq.s32.totalorder %v6960, 2
      %vm9147 = vcmp.eq.s32.totalorder %v6961, 2
      %vm9148 = vcmp.eq.s32.totalorder %v6962, 2
      %vm9149 = vcmp.eq.s32.totalorder %v6963, 2
      %vm9150 = vcmp.eq.s32.totalorder %v6964, 2
      %vm9151 = vcmp.eq.s32.totalorder %v6965, 2
      %vm9152 = vcmp.eq.s32.totalorder %v6966, 2
      %vm9153 = vcmp.eq.s32.totalorder %v6967, 2
      %vm9154 = vcmp.eq.s32.totalorder %v6968, 2
      %vm9155 = vcmp.eq.s32.totalorder %v6969, 2
      %vm9156 = vcmp.eq.s32.totalorder %v6970, 2
      %vm9157 = vcmp.eq.s32.totalorder %v6971, 2
      %vm9158 = vcmp.eq.s32.totalorder %v6972, 2
      %vm9159 = vcmp.eq.s32.totalorder %v6973, 2
      %vm9160 = vcmp.eq.s32.totalorder %v6974, 2
      %vm9161 = vcmp.eq.s32.totalorder %v6975, 2
      %vm9162 = vcmp.eq.s32.totalorder %v6976, 2
      %vm9163 = vcmp.eq.s32.totalorder %v6977, 2
      %vm9164 = vcmp.eq.s32.totalorder %v6978, 2
      %vm9165 = vcmp.eq.s32.totalorder %v6979, 2
      %vm9166 = vcmp.eq.s32.totalorder %v6980, 2
      %vm9167 = vcmp.eq.s32.totalorder %v6981, 2
      %vm9168 = vcmp.eq.s32.totalorder %v6982, 2
      %vm9169 = vcmp.eq.s32.totalorder %v6983, 2
      %vm9170 = vcmp.eq.s32.totalorder %v6984, 2
      %vm9171 = vcmp.eq.s32.totalorder %v6985, 2
      %vm9172 = vcmp.eq.s32.totalorder %v6986, 2
      %vm9173 = vcmp.eq.s32.totalorder %v6987, 2
      %vm9174 = vcmp.eq.s32.totalorder %v6988, 2
      %vm9175 = vcmp.eq.s32.totalorder %v6989, 2
      %vm9176 = vcmp.eq.s32.totalorder %v6990, 2
      %vm9177 = vcmp.eq.s32.totalorder %v6991, 2
      %vm9178 = vcmp.eq.s32.totalorder %v6992, 2
      %vm9179 = vcmp.eq.s32.totalorder %v6993, 2
      %vm9180 = vcmp.eq.s32.totalorder %v6994, 2
      %vm9181 = vcmp.eq.s32.totalorder %v6995, 2
      %vm9182 = vcmp.eq.s32.totalorder %v6996, 2
      %vm9183 = vcmp.eq.s32.totalorder %v6997, 2
      %vm9184 = vcmp.eq.s32.totalorder %v6998, 2
      %vm9185 = vcmp.eq.s32.totalorder %v6999, 2
      %vm9186 = vcmp.eq.s32.totalorder %v7000, 2
      %vm9187 = vcmp.eq.s32.totalorder %v7001, 2
      %vm9188 = vcmp.eq.s32.totalorder %v7002, 2
      %vm9189 = vcmp.eq.s32.totalorder %v7003, 2
      %vm9190 = vcmp.eq.s32.totalorder %v7004, 2
      %vm9191 = vcmp.eq.s32.totalorder %v7005, 2
      %vm9192 = vcmp.eq.s32.totalorder %v7006, 2
      %vm9193 = vcmp.eq.s32.totalorder %v7007, 2
      %vm9194 = vcmp.eq.s32.totalorder %v7008, 2
      %vm9195 = vcmp.eq.s32.totalorder %v7009, 2
      %vm9196 = vcmp.eq.s32.totalorder %v7010, 2
      %vm9197 = vcmp.eq.s32.totalorder %v7011, 2
      %vm9198 = vcmp.eq.s32.totalorder %v7012, 2
      %vm9199 = vcmp.eq.s32.totalorder %v7013, 2
      %vm9200 = vcmp.eq.s32.totalorder %v7014, 2
      %vm9201 = vcmp.eq.s32.totalorder %v7015, 2
      %vm9202 = vcmp.eq.s32.totalorder %v7016, 2
      %vm9203 = vcmp.eq.s32.totalorder %v7017, 2
      %vm9204 = vcmp.eq.s32.totalorder %v7018, 2
      %vm9205 = vcmp.eq.s32.totalorder %v7019, 2
      %vm9206 = vcmp.eq.s32.totalorder %v7020, 2
      %vm9207 = vcmp.eq.s32.totalorder %v7021, 2
      %vm9208 = vcmp.eq.s32.totalorder %v7022, 2
      %vm9209 = vcmp.eq.s32.totalorder %v7023, 2
      %vm9210 = vcmp.eq.s32.totalorder %v7024, 2
      %vm9211 = vcmp.eq.s32.totalorder %v7025, 2
      %vm9212 = vcmp.eq.s32.totalorder %v7026, 2
      %vm9213 = vcmp.eq.s32.totalorder %v7027, 2
      %vm9214 = vcmp.eq.s32.totalorder %v7028, 2
      %vm9215 = vcmp.eq.s32.totalorder %v7029, 2
      %vm9216 = vcmp.eq.s32.totalorder %v7030, 2
      %vm9217 = vcmp.eq.s32.totalorder %v7031, 2
      %vm9218 = vcmp.eq.s32.totalorder %v7032, 2
      %vm9219 = vcmp.eq.s32.totalorder %v7033, 2
      %vm9220 = vcmp.eq.s32.totalorder %v7034, 2
      %vm9221 = vcmp.eq.s32.totalorder %v7035, 2
      %vm9222 = vcmp.eq.s32.totalorder %v7036, 2
      %vm9223 = vcmp.eq.s32.totalorder %v7037, 2
      %vm9224 = vcmp.eq.s32.totalorder %v7038, 2
      %vm9225 = vcmp.eq.s32.totalorder %v7039, 2
      %vm9226 = vcmp.eq.s32.totalorder %v7040, 2
      %vm9227 = vcmp.eq.s32.totalorder %v7041, 2
      %vm9228 = vcmp.eq.s32.totalorder %v7042, 2
      %vm9229 = vcmp.eq.s32.totalorder %v7043, 2
      %vm9230 = vcmp.eq.s32.totalorder %v7044, 2
      %vm9231 = vcmp.eq.s32.totalorder %v7045, 2
      %vm9232 = vcmp.eq.s32.totalorder %v7046, 2
      %vm9233 = vcmp.eq.s32.totalorder %v7047, 2
      %vm9234 = vcmp.eq.s32.totalorder %v7048, 2
      %vm9235 = vcmp.eq.s32.totalorder %v7049, 2
      %vm9236 = vcmp.eq.s32.totalorder %v7050, 2
      %vm9237 = vcmp.eq.s32.totalorder %v7051, 2
      %vm9238 = vcmp.eq.s32.totalorder %v7052, 2
      %vm9239 = vcmp.eq.s32.totalorder %v7053, 2
      %vm9240 = vcmp.eq.s32.totalorder %v7054, 2
      %vm9241 = vcmp.eq.s32.totalorder %v7055, 2
      %vm9242 = vcmp.eq.s32.totalorder %v7056, 2
      %vm9243 = vcmp.eq.s32.totalorder %v7057, 2
      %vm9244 = vcmp.eq.s32.totalorder %v7058, 2
      %vm9245 = vcmp.eq.s32.totalorder %v7059, 2
      %vm9246 = vcmp.eq.s32.totalorder %v7060, 2
      %vm9247 = vcmp.eq.s32.totalorder %v7061, 2
      %vm9248 = vcmp.eq.s32.totalorder %v7062, 2
      %vm9249 = vcmp.eq.s32.totalorder %v7063, 2
      %vm9250 = vcmp.eq.s32.totalorder %v7064, 2
      %vm9251 = vcmp.eq.s32.totalorder %v7065, 2
      %vm9252 = vcmp.eq.s32.totalorder %v7066, 2
      %vm9253 = vcmp.eq.s32.totalorder %v7067, 2
      %vm9254 = vcmp.eq.s32.totalorder %v7068, 2
      %vm9255 = vcmp.eq.s32.totalorder %v7069, 2
      %vm9256 = vcmp.eq.s32.totalorder %v7070, 2
      %vm9257 = vcmp.eq.s32.totalorder %v7071, 2
      %vm9258 = vcmp.eq.s32.totalorder %v7072, 2
      %vm9259 = vcmp.eq.s32.totalorder %v7073, 2
      %vm9260 = vcmp.eq.s32.totalorder %v7074, 2
      %vm9261 = vcmp.eq.s32.totalorder %v7075, 2
      %vm9262 = vcmp.eq.s32.totalorder %v7076, 2
      %vm9263 = vcmp.eq.s32.totalorder %v7077, 2
      %vm9264 = vcmp.eq.s32.totalorder %v7078, 2
      %v9265 = vsel %vm9137, 1, 0
      %v9266 = vsel %vm9138, 1, 0
      %v9267 = vsel %vm9139, 1, 0
      %v9268 = vsel %vm9140, 1, 0
      %v9269 = vsel %vm9141, 1, 0
      %v9270 = vsel %vm9142, 1, 0
      %v9271 = vsel %vm9143, 1, 0
      %v9272 = vsel %vm9144, 1, 0
      %v9273 = vsel %vm9145, 1, 0
      %v9274 = vsel %vm9146, 1, 0
      %v9275 = vsel %vm9147, 1, 0
      %v9276 = vsel %vm9148, 1, 0
      %v9277 = vsel %vm9149, 1, 0
      %v9278 = vsel %vm9150, 1, 0
      %v9279 = vsel %vm9151, 1, 0
      %v9280 = vsel %vm9152, 1, 0
      %v9281 = vsel %vm9153, 1, 0
      %v9282 = vsel %vm9154, 1, 0
      %v9283 = vsel %vm9155, 1, 0
      %v9284 = vsel %vm9156, 1, 0
      %v9285 = vsel %vm9157, 1, 0
      %v9286 = vsel %vm9158, 1, 0
      %v9287 = vsel %vm9159, 1, 0
      %v9288 = vsel %vm9160, 1, 0
      %v9289 = vsel %vm9161, 1, 0
      %v9290 = vsel %vm9162, 1, 0
      %v9291 = vsel %vm9163, 1, 0
      %v9292 = vsel %vm9164, 1, 0
      %v9293 = vsel %vm9165, 1, 0
      %v9294 = vsel %vm9166, 1, 0
      %v9295 = vsel %vm9167, 1, 0
      %v9296 = vsel %vm9168, 1, 0
      %v9297 = vsel %vm9169, 1, 0
      %v9298 = vsel %vm9170, 1, 0
      %v9299 = vsel %vm9171, 1, 0
      %v9300 = vsel %vm9172, 1, 0
      %v9301 = vsel %vm9173, 1, 0
      %v9302 = vsel %vm9174, 1, 0
      %v9303 = vsel %vm9175, 1, 0
      %v9304 = vsel %vm9176, 1, 0
      %v9305 = vsel %vm9177, 1, 0
      %v9306 = vsel %vm9178, 1, 0
      %v9307 = vsel %vm9179, 1, 0
      %v9308 = vsel %vm9180, 1, 0
      %v9309 = vsel %vm9181, 1, 0
      %v9310 = vsel %vm9182, 1, 0
      %v9311 = vsel %vm9183, 1, 0
      %v9312 = vsel %vm9184, 1, 0
      %v9313 = vsel %vm9185, 1, 0
      %v9314 = vsel %vm9186, 1, 0
      %v9315 = vsel %vm9187, 1, 0
      %v9316 = vsel %vm9188, 1, 0
      %v9317 = vsel %vm9189, 1, 0
      %v9318 = vsel %vm9190, 1, 0
      %v9319 = vsel %vm9191, 1, 0
      %v9320 = vsel %vm9192, 1, 0
      %v9321 = vsel %vm9193, 1, 0
      %v9322 = vsel %vm9194, 1, 0
      %v9323 = vsel %vm9195, 1, 0
      %v9324 = vsel %vm9196, 1, 0
      %v9325 = vsel %vm9197, 1, 0
      %v9326 = vsel %vm9198, 1, 0
      %v9327 = vsel %vm9199, 1, 0
      %v9328 = vsel %vm9200, 1, 0
      %v9329 = vsel %vm9201, 1, 0
      %v9330 = vsel %vm9202, 1, 0
      %v9331 = vsel %vm9203, 1, 0
      %v9332 = vsel %vm9204, 1, 0
      %v9333 = vsel %vm9205, 1, 0
      %v9334 = vsel %vm9206, 1, 0
      %v9335 = vsel %vm9207, 1, 0
      %v9336 = vsel %vm9208, 1, 0
      %v9337 = vsel %vm9209, 1, 0
      %v9338 = vsel %vm9210, 1, 0
      %v9339 = vsel %vm9211, 1, 0
      %v9340 = vsel %vm9212, 1, 0
      %v9341 = vsel %vm9213, 1, 0
      %v9342 = vsel %vm9214, 1, 0
      %v9343 = vsel %vm9215, 1, 0
      %v9344 = vsel %vm9216, 1, 0
      %v9345 = vsel %vm9217, 1, 0
      %v9346 = vsel %vm9218, 1, 0
      %v9347 = vsel %vm9219, 1, 0
      %v9348 = vsel %vm9220, 1, 0
      %v9349 = vsel %vm9221, 1, 0
      %v9350 = vsel %vm9222, 1, 0
      %v9351 = vsel %vm9223, 1, 0
      %v9352 = vsel %vm9224, 1, 0
      %v9353 = vsel %vm9225, 1, 0
      %v9354 = vsel %vm9226, 1, 0
      %v9355 = vsel %vm9227, 1, 0
      %v9356 = vsel %vm9228, 1, 0
      %v9357 = vsel %vm9229, 1, 0
      %v9358 = vsel %vm9230, 1, 0
      %v9359 = vsel %vm9231, 1, 0
      %v9360 = vsel %vm9232, 1, 0
      %v9361 = vsel %vm9233, 1, 0
      %v9362 = vsel %vm9234, 1, 0
      %v9363 = vsel %vm9235, 1, 0
      %v9364 = vsel %vm9236, 1, 0
      %v9365 = vsel %vm9237, 1, 0
      %v9366 = vsel %vm9238, 1, 0
      %v9367 = vsel %vm9239, 1, 0
      %v9368 = vsel %vm9240, 1, 0
      %v9369 = vsel %vm9241, 1, 0
      %v9370 = vsel %vm9242, 1, 0
      %v9371 = vsel %vm9243, 1, 0
      %v9372 = vsel %vm9244, 1, 0
      %v9373 = vsel %vm9245, 1, 0
      %v9374 = vsel %vm9246, 1, 0
      %v9375 = vsel %vm9247, 1, 0
      %v9376 = vsel %vm9248, 1, 0
      %v9377 = vsel %vm9249, 1, 0
      %v9378 = vsel %vm9250, 1, 0
      %v9379 = vsel %vm9251, 1, 0
      %v9380 = vsel %vm9252, 1, 0
      %v9381 = vsel %vm9253, 1, 0
      %v9382 = vsel %vm9254, 1, 0
      %v9383 = vsel %vm9255, 1, 0
      %v9384 = vsel %vm9256, 1, 0
      %v9385 = vsel %vm9257, 1, 0
      %v9386 = vsel %vm9258, 1, 0
      %v9387 = vsel %vm9259, 1, 0
      %v9388 = vsel %vm9260, 1, 0
      %v9389 = vsel %vm9261, 1, 0
      %v9390 = vsel %vm9262, 1, 0
      %v9391 = vsel %vm9263, 1, 0
      %v9392 = vsel %vm9264, 1, 0
      %9393 = vset.pattern.permute.xlu0 0
      %9394 = vperm.xlu0 %9393, %v9265
      %v9395 = vpop.permute.xlu0 %9394
      %9396 = vset.pattern.permute.xlu0 0
      %9397 = vperm.xlu0 %9396, %v9266
      %v9398 = vpop.permute.xlu0 %9397
      %9399 = vset.pattern.permute.xlu0 0
      %9400 = vperm.xlu0 %9399, %v9267
      %v9401 = vpop.permute.xlu0 %9400
      %9402 = vset.pattern.permute.xlu0 0
      %9403 = vperm.xlu0 %9402, %v9268
      %v9404 = vpop.permute.xlu0 %9403
      %9405 = vset.pattern.permute.xlu0 0
      %9406 = vperm.xlu0 %9405, %v9269
      %v9407 = vpop.permute.xlu0 %9406
      %9408 = vset.pattern.permute.xlu0 0
      %9409 = vperm.xlu0 %9408, %v9270
      %v9410 = vpop.permute.xlu0 %9409
      %9411 = vset.pattern.permute.xlu0 0
      %9412 = vperm.xlu0 %9411, %v9271
      %v9413 = vpop.permute.xlu0 %9412
      %9414 = vset.pattern.permute.xlu0 0
      %9415 = vperm.xlu0 %9414, %v9272
      %v9416 = vpop.permute.xlu0 %9415
      %9417 = vset.pattern.permute.xlu0 0
      %9418 = vperm.xlu0 %9417, %v9273
      %v9419 = vpop.permute.xlu0 %9418
      %9420 = vset.pattern.permute.xlu0 0
      %9421 = vperm.xlu0 %9420, %v9274
      %v9422 = vpop.permute.xlu0 %9421
      %9423 = vset.pattern.permute.xlu0 0
      %9424 = vperm.xlu0 %9423, %v9275
      %v9425 = vpop.permute.xlu0 %9424
      %9426 = vset.pattern.permute.xlu0 0
      %9427 = vperm.xlu0 %9426, %v9276
      %v9428 = vpop.permute.xlu0 %9427
      %9429 = vset.pattern.permute.xlu0 0
      %9430 = vperm.xlu0 %9429, %v9277
      %v9431 = vpop.permute.xlu0 %9430
      %9432 = vset.pattern.permute.xlu0 0
      %9433 = vperm.xlu0 %9432, %v9278
      %v9434 = vpop.permute.xlu0 %9433
      %9435 = vset.pattern.permute.xlu0 0
      %9436 = vperm.xlu0 %9435, %v9279
      %v9437 = vpop.permute.xlu0 %9436
      %9438 = vset.pattern.permute.xlu0 0
      %9439 = vperm.xlu0 %9438, %v9280
      %v9440 = vpop.permute.xlu0 %9439
      %9441 = vset.pattern.permute.xlu0 0
      %9442 = vperm.xlu0 %9441, %v9281
      %v9443 = vpop.permute.xlu0 %9442
      %9444 = vset.pattern.permute.xlu0 0
      %9445 = vperm.xlu0 %9444, %v9282
      %v9446 = vpop.permute.xlu0 %9445
      %9447 = vset.pattern.permute.xlu0 0
      %9448 = vperm.xlu0 %9447, %v9283
      %v9449 = vpop.permute.xlu0 %9448
      %9450 = vset.pattern.permute.xlu0 0
      %9451 = vperm.xlu0 %9450, %v9284
      %v9452 = vpop.permute.xlu0 %9451
      %9453 = vset.pattern.permute.xlu0 0
      %9454 = vperm.xlu0 %9453, %v9285
      %v9455 = vpop.permute.xlu0 %9454
      %9456 = vset.pattern.permute.xlu0 0
      %9457 = vperm.xlu0 %9456, %v9286
      %v9458 = vpop.permute.xlu0 %9457
      %9459 = vset.pattern.permute.xlu0 0
      %9460 = vperm.xlu0 %9459, %v9287
      %v9461 = vpop.permute.xlu0 %9460
      %9462 = vset.pattern.permute.xlu0 0
      %9463 = vperm.xlu0 %9462, %v9288
      %v9464 = vpop.permute.xlu0 %9463
      %9465 = vset.pattern.permute.xlu0 0
      %9466 = vperm.xlu0 %9465, %v9289
      %v9467 = vpop.permute.xlu0 %9466
      %9468 = vset.pattern.permute.xlu0 0
      %9469 = vperm.xlu0 %9468, %v9290
      %v9470 = vpop.permute.xlu0 %9469
      %9471 = vset.pattern.permute.xlu0 0
      %9472 = vperm.xlu0 %9471, %v9291
      %v9473 = vpop.permute.xlu0 %9472
      %9474 = vset.pattern.permute.xlu0 0
      %9475 = vperm.xlu0 %9474, %v9292
      %v9476 = vpop.permute.xlu0 %9475
      %9477 = vset.pattern.permute.xlu0 0
      %9478 = vperm.xlu0 %9477, %v9293
      %v9479 = vpop.permute.xlu0 %9478
      %9480 = vset.pattern.permute.xlu0 0
      %9481 = vperm.xlu0 %9480, %v9294
      %v9482 = vpop.permute.xlu0 %9481
      %9483 = vset.pattern.permute.xlu0 0
      %9484 = vperm.xlu0 %9483, %v9295
      %v9485 = vpop.permute.xlu0 %9484
      %9486 = vset.pattern.permute.xlu0 0
      %9487 = vperm.xlu0 %9486, %v9296
      %v9488 = vpop.permute.xlu0 %9487
      %9489 = vset.pattern.permute.xlu0 0
      %9490 = vperm.xlu0 %9489, %v9297
      %v9491 = vpop.permute.xlu0 %9490
      %9492 = vset.pattern.permute.xlu0 0
      %9493 = vperm.xlu0 %9492, %v9298
      %v9494 = vpop.permute.xlu0 %9493
      %9495 = vset.pattern.permute.xlu0 0
      %9496 = vperm.xlu0 %9495, %v9299
      %v9497 = vpop.permute.xlu0 %9496
      %9498 = vset.pattern.permute.xlu0 0
      %9499 = vperm.xlu0 %9498, %v9300
      %v9500 = vpop.permute.xlu0 %9499
      %9501 = vset.pattern.permute.xlu0 0
      %9502 = vperm.xlu0 %9501, %v9301
      %v9503 = vpop.permute.xlu0 %9502
      %9504 = vset.pattern.permute.xlu0 0
      %9505 = vperm.xlu0 %9504, %v9302
      %v9506 = vpop.permute.xlu0 %9505
      %9507 = vset.pattern.permute.xlu0 0
      %9508 = vperm.xlu0 %9507, %v9303
      %v9509 = vpop.permute.xlu0 %9508
      %9510 = vset.pattern.permute.xlu0 0
      %9511 = vperm.xlu0 %9510, %v9304
      %v9512 = vpop.permute.xlu0 %9511
      %9513 = vset.pattern.permute.xlu0 0
      %9514 = vperm.xlu0 %9513, %v9305
      %v9515 = vpop.permute.xlu0 %9514
      %9516 = vset.pattern.permute.xlu0 0
      %9517 = vperm.xlu0 %9516, %v9306
      %v9518 = vpop.permute.xlu0 %9517
      %9519 = vset.pattern.permute.xlu0 0
      %9520 = vperm.xlu0 %9519, %v9307
      %v9521 = vpop.permute.xlu0 %9520
      %9522 = vset.pattern.permute.xlu0 0
      %9523 = vperm.xlu0 %9522, %v9308
      %v9524 = vpop.permute.xlu0 %9523
      %9525 = vset.pattern.permute.xlu0 0
      %9526 = vperm.xlu0 %9525, %v9309
      %v9527 = vpop.permute.xlu0 %9526
      %9528 = vset.pattern.permute.xlu0 0
      %9529 = vperm.xlu0 %9528, %v9310
      %v9530 = vpop.permute.xlu0 %9529
      %9531 = vset.pattern.permute.xlu0 0
      %9532 = vperm.xlu0 %9531, %v9311
      %v9533 = vpop.permute.xlu0 %9532
      %9534 = vset.pattern.permute.xlu0 0
      %9535 = vperm.xlu0 %9534, %v9312
      %v9536 = vpop.permute.xlu0 %9535
      %9537 = vset.pattern.permute.xlu0 0
      %9538 = vperm.xlu0 %9537, %v9313
      %v9539 = vpop.permute.xlu0 %9538
      %9540 = vset.pattern.permute.xlu0 0
      %9541 = vperm.xlu0 %9540, %v9314
      %v9542 = vpop.permute.xlu0 %9541
      %9543 = vset.pattern.permute.xlu0 0
      %9544 = vperm.xlu0 %9543, %v9315
      %v9545 = vpop.permute.xlu0 %9544
      %9546 = vset.pattern.permute.xlu0 0
      %9547 = vperm.xlu0 %9546, %v9316
      %v9548 = vpop.permute.xlu0 %9547
      %9549 = vset.pattern.permute.xlu0 0
      %9550 = vperm.xlu0 %9549, %v9317
      %v9551 = vpop.permute.xlu0 %9550
      %9552 = vset.pattern.permute.xlu0 0
      %9553 = vperm.xlu0 %9552, %v9318
      %v9554 = vpop.permute.xlu0 %9553
      %9555 = vset.pattern.permute.xlu0 0
      %9556 = vperm.xlu0 %9555, %v9319
      %v9557 = vpop.permute.xlu0 %9556
      %9558 = vset.pattern.permute.xlu0 0
      %9559 = vperm.xlu0 %9558, %v9320
      %v9560 = vpop.permute.xlu0 %9559
      %9561 = vset.pattern.permute.xlu0 0
      %9562 = vperm.xlu0 %9561, %v9321
      %v9563 = vpop.permute.xlu0 %9562
      %9564 = vset.pattern.permute.xlu0 0
      %9565 = vperm.xlu0 %9564, %v9322
      %v9566 = vpop.permute.xlu0 %9565
      %9567 = vset.pattern.permute.xlu0 0
      %9568 = vperm.xlu0 %9567, %v9323
      %v9569 = vpop.permute.xlu0 %9568
      %9570 = vset.pattern.permute.xlu0 0
      %9571 = vperm.xlu0 %9570, %v9324
      %v9572 = vpop.permute.xlu0 %9571
      %9573 = vset.pattern.permute.xlu0 0
      %9574 = vperm.xlu0 %9573, %v9325
      %v9575 = vpop.permute.xlu0 %9574
      %9576 = vset.pattern.permute.xlu0 0
      %9577 = vperm.xlu0 %9576, %v9326
      %v9578 = vpop.permute.xlu0 %9577
      %9579 = vset.pattern.permute.xlu0 0
      %9580 = vperm.xlu0 %9579, %v9327
      %v9581 = vpop.permute.xlu0 %9580
      %9582 = vset.pattern.permute.xlu0 0
      %9583 = vperm.xlu0 %9582, %v9328
      %v9584 = vpop.permute.xlu0 %9583
      %9585 = vset.pattern.permute.xlu0 0
      %9586 = vperm.xlu0 %9585, %v9329
      %v9587 = vpop.permute.xlu0 %9586
      %9588 = vset.pattern.permute.xlu0 0
      %9589 = vperm.xlu0 %9588, %v9330
      %v9590 = vpop.permute.xlu0 %9589
      %9591 = vset.pattern.permute.xlu0 0
      %9592 = vperm.xlu0 %9591, %v9331
      %v9593 = vpop.permute.xlu0 %9592
      %9594 = vset.pattern.permute.xlu0 0
      %9595 = vperm.xlu0 %9594, %v9332
      %v9596 = vpop.permute.xlu0 %9595
      %9597 = vset.pattern.permute.xlu0 0
      %9598 = vperm.xlu0 %9597, %v9333
      %v9599 = vpop.permute.xlu0 %9598
      %9600 = vset.pattern.permute.xlu0 0
      %9601 = vperm.xlu0 %9600, %v9334
      %v9602 = vpop.permute.xlu0 %9601
      %9603 = vset.pattern.permute.xlu0 0
      %9604 = vperm.xlu0 %9603, %v9335
      %v9605 = vpop.permute.xlu0 %9604
      %9606 = vset.pattern.permute.xlu0 0
      %9607 = vperm.xlu0 %9606, %v9336
      %v9608 = vpop.permute.xlu0 %9607
      %9609 = vset.pattern.permute.xlu0 0
      %9610 = vperm.xlu0 %9609, %v9337
      %v9611 = vpop.permute.xlu0 %9610
      %9612 = vset.pattern.permute.xlu0 0
      %9613 = vperm.xlu0 %9612, %v9338
      %v9614 = vpop.permute.xlu0 %9613
      %9615 = vset.pattern.permute.xlu0 0
      %9616 = vperm.xlu0 %9615, %v9339
      %v9617 = vpop.permute.xlu0 %9616
      %9618 = vset.pattern.permute.xlu0 0
      %9619 = vperm.xlu0 %9618, %v9340
      %v9620 = vpop.permute.xlu0 %9619
      %9621 = vset.pattern.permute.xlu0 0
      %9622 = vperm.xlu0 %9621, %v9341
      %v9623 = vpop.permute.xlu0 %9622
      %9624 = vset.pattern.permute.xlu0 0
      %9625 = vperm.xlu0 %9624, %v9342
      %v9626 = vpop.permute.xlu0 %9625
      %9627 = vset.pattern.permute.xlu0 0
      %9628 = vperm.xlu0 %9627, %v9343
      %v9629 = vpop.permute.xlu0 %9628
      %9630 = vset.pattern.permute.xlu0 0
      %9631 = vperm.xlu0 %9630, %v9344
      %v9632 = vpop.permute.xlu0 %9631
      %9633 = vset.pattern.permute.xlu0 0
      %9634 = vperm.xlu0 %9633, %v9345
      %v9635 = vpop.permute.xlu0 %9634
      %9636 = vset.pattern.permute.xlu0 0
      %9637 = vperm.xlu0 %9636, %v9346
      %v9638 = vpop.permute.xlu0 %9637
      %9639 = vset.pattern.permute.xlu0 0
      %9640 = vperm.xlu0 %9639, %v9347
      %v9641 = vpop.permute.xlu0 %9640
      %9642 = vset.pattern.permute.xlu0 0
      %9643 = vperm.xlu0 %9642, %v9348
      %v9644 = vpop.permute.xlu0 %9643
      %9645 = vset.pattern.permute.xlu0 0
      %9646 = vperm.xlu0 %9645, %v9349
      %v9647 = vpop.permute.xlu0 %9646
      %9648 = vset.pattern.permute.xlu0 0
      %9649 = vperm.xlu0 %9648, %v9350
      %v9650 = vpop.permute.xlu0 %9649
      %9651 = vset.pattern.permute.xlu0 0
      %9652 = vperm.xlu0 %9651, %v9351
      %v9653 = vpop.permute.xlu0 %9652
      %9654 = vset.pattern.permute.xlu0 0
      %9655 = vperm.xlu0 %9654, %v9352
      %v9656 = vpop.permute.xlu0 %9655
      %9657 = vset.pattern.permute.xlu0 0
      %9658 = vperm.xlu0 %9657, %v9353
      %v9659 = vpop.permute.xlu0 %9658
      %9660 = vset.pattern.permute.xlu0 0
      %9661 = vperm.xlu0 %9660, %v9354
      %v9662 = vpop.permute.xlu0 %9661
      %9663 = vset.pattern.permute.xlu0 0
      %9664 = vperm.xlu0 %9663, %v9355
      %v9665 = vpop.permute.xlu0 %9664
      %9666 = vset.pattern.permute.xlu0 0
      %9667 = vperm.xlu0 %9666, %v9356
      %v9668 = vpop.permute.xlu0 %9667
      %9669 = vset.pattern.permute.xlu0 0
      %9670 = vperm.xlu0 %9669, %v9357
      %v9671 = vpop.permute.xlu0 %9670
      %9672 = vset.pattern.permute.xlu0 0
      %9673 = vperm.xlu0 %9672, %v9358
      %v9674 = vpop.permute.xlu0 %9673
      %9675 = vset.pattern.permute.xlu0 0
      %9676 = vperm.xlu0 %9675, %v9359
      %v9677 = vpop.permute.xlu0 %9676
      %9678 = vset.pattern.permute.xlu0 0
      %9679 = vperm.xlu0 %9678, %v9360
      %v9680 = vpop.permute.xlu0 %9679
      %9681 = vset.pattern.permute.xlu0 0
      %9682 = vperm.xlu0 %9681, %v9361
      %v9683 = vpop.permute.xlu0 %9682
      %9684 = vset.pattern.permute.xlu0 0
      %9685 = vperm.xlu0 %9684, %v9362
      %v9686 = vpop.permute.xlu0 %9685
      %9687 = vset.pattern.permute.xlu0 0
      %9688 = vperm.xlu0 %9687, %v9363
      %v9689 = vpop.permute.xlu0 %9688
      %9690 = vset.pattern.permute.xlu0 0
      %9691 = vperm.xlu0 %9690, %v9364
      %v9692 = vpop.permute.xlu0 %9691
      %9693 = vset.pattern.permute.xlu0 0
      %9694 = vperm.xlu0 %9693, %v9365
      %v9695 = vpop.permute.xlu0 %9694
      %9696 = vset.pattern.permute.xlu0 0
      %9697 = vperm.xlu0 %9696, %v9366
      %v9698 = vpop.permute.xlu0 %9697
      %9699 = vset.pattern.permute.xlu0 0
      %9700 = vperm.xlu0 %9699, %v9367
      %v9701 = vpop.permute.xlu0 %9700
      %9702 = vset.pattern.permute.xlu0 0
      %9703 = vperm.xlu0 %9702, %v9368
      %v9704 = vpop.permute.xlu0 %9703
      %9705 = vset.pattern.permute.xlu0 0
      %9706 = vperm.xlu0 %9705, %v9369
      %v9707 = vpop.permute.xlu0 %9706
      %9708 = vset.pattern.permute.xlu0 0
      %9709 = vperm.xlu0 %9708, %v9370
      %v9710 = vpop.permute.xlu0 %9709
      %9711 = vset.pattern.permute.xlu0 0
      %9712 = vperm.xlu0 %9711, %v9371
      %v9713 = vpop.permute.xlu0 %9712
      %9714 = vset.pattern.permute.xlu0 0
      %9715 = vperm.xlu0 %9714, %v9372
      %v9716 = vpop.permute.xlu0 %9715
      %9717 = vset.pattern.permute.xlu0 0
      %9718 = vperm.xlu0 %9717, %v9373
      %v9719 = vpop.permute.xlu0 %9718
      %9720 = vset.pattern.permute.xlu0 0
      %9721 = vperm.xlu0 %9720, %v9374
      %v9722 = vpop.permute.xlu0 %9721
      %9723 = vset.pattern.permute.xlu0 0
      %9724 = vperm.xlu0 %9723, %v9375
      %v9725 = vpop.permute.xlu0 %9724
      %9726 = vset.pattern.permute.xlu0 0
      %9727 = vperm.xlu0 %9726, %v9376
      %v9728 = vpop.permute.xlu0 %9727
      %9729 = vset.pattern.permute.xlu0 0
      %9730 = vperm.xlu0 %9729, %v9377
      %v9731 = vpop.permute.xlu0 %9730
      %9732 = vset.pattern.permute.xlu0 0
      %9733 = vperm.xlu0 %9732, %v9378
      %v9734 = vpop.permute.xlu0 %9733
      %9735 = vset.pattern.permute.xlu0 0
      %9736 = vperm.xlu0 %9735, %v9379
      %v9737 = vpop.permute.xlu0 %9736
      %9738 = vset.pattern.permute.xlu0 0
      %9739 = vperm.xlu0 %9738, %v9380
      %v9740 = vpop.permute.xlu0 %9739
      %9741 = vset.pattern.permute.xlu0 0
      %9742 = vperm.xlu0 %9741, %v9381
      %v9743 = vpop.permute.xlu0 %9742
      %9744 = vset.pattern.permute.xlu0 0
      %9745 = vperm.xlu0 %9744, %v9382
      %v9746 = vpop.permute.xlu0 %9745
      %9747 = vset.pattern.permute.xlu0 0
      %9748 = vperm.xlu0 %9747, %v9383
      %v9749 = vpop.permute.xlu0 %9748
      %9750 = vset.pattern.permute.xlu0 0
      %9751 = vperm.xlu0 %9750, %v9384
      %v9752 = vpop.permute.xlu0 %9751
      %9753 = vset.pattern.permute.xlu0 0
      %9754 = vperm.xlu0 %9753, %v9385
      %v9755 = vpop.permute.xlu0 %9754
      %9756 = vset.pattern.permute.xlu0 0
      %9757 = vperm.xlu0 %9756, %v9386
      %v9758 = vpop.permute.xlu0 %9757
      %9759 = vset.pattern.permute.xlu0 0
      %9760 = vperm.xlu0 %9759, %v9387
      %v9761 = vpop.permute.xlu0 %9760
      %9762 = vset.pattern.permute.xlu0 0
      %9763 = vperm.xlu0 %9762, %v9388
      %v9764 = vpop.permute.xlu0 %9763
      %9765 = vset.pattern.permute.xlu0 0
      %9766 = vperm.xlu0 %9765, %v9389
      %v9767 = vpop.permute.xlu0 %9766
      %9768 = vset.pattern.permute.xlu0 0
      %9769 = vperm.xlu0 %9768, %v9390
      %v9770 = vpop.permute.xlu0 %9769
      %9771 = vset.pattern.permute.xlu0 0
      %9772 = vperm.xlu0 %9771, %v9391
      %v9773 = vpop.permute.xlu0 %9772
      %9774 = vset.pattern.permute.xlu0 0
      %9775 = vperm.xlu0 %9774, %v9392
      %v9776 = vpop.permute.xlu0 %9775
      %vm9777 = vcmp.eq.s32.totalorder %v9395, 1
      %vm9778 = vcmp.eq.s32.totalorder %v9398, 1
      %vm9779 = vcmp.eq.s32.totalorder %v9401, 1
      %vm9780 = vcmp.eq.s32.totalorder %v9404, 1
      %vm9781 = vcmp.eq.s32.totalorder %v9407, 1
      %vm9782 = vcmp.eq.s32.totalorder %v9410, 1
      %vm9783 = vcmp.eq.s32.totalorder %v9413, 1
      %vm9784 = vcmp.eq.s32.totalorder %v9416, 1
      %vm9785 = vcmp.eq.s32.totalorder %v9419, 1
      %vm9786 = vcmp.eq.s32.totalorder %v9422, 1
      %vm9787 = vcmp.eq.s32.totalorder %v9425, 1
      %vm9788 = vcmp.eq.s32.totalorder %v9428, 1
      %vm9789 = vcmp.eq.s32.totalorder %v9431, 1
      %vm9790 = vcmp.eq.s32.totalorder %v9434, 1
      %vm9791 = vcmp.eq.s32.totalorder %v9437, 1
      %vm9792 = vcmp.eq.s32.totalorder %v9440, 1
      %vm9793 = vcmp.eq.s32.totalorder %v9443, 1
      %vm9794 = vcmp.eq.s32.totalorder %v9446, 1
      %vm9795 = vcmp.eq.s32.totalorder %v9449, 1
      %vm9796 = vcmp.eq.s32.totalorder %v9452, 1
      %vm9797 = vcmp.eq.s32.totalorder %v9455, 1
      %vm9798 = vcmp.eq.s32.totalorder %v9458, 1
      %vm9799 = vcmp.eq.s32.totalorder %v9461, 1
      %vm9800 = vcmp.eq.s32.totalorder %v9464, 1
      %vm9801 = vcmp.eq.s32.totalorder %v9467, 1
      %vm9802 = vcmp.eq.s32.totalorder %v9470, 1
      %vm9803 = vcmp.eq.s32.totalorder %v9473, 1
      %vm9804 = vcmp.eq.s32.totalorder %v9476, 1
      %vm9805 = vcmp.eq.s32.totalorder %v9479, 1
      %vm9806 = vcmp.eq.s32.totalorder %v9482, 1
      %vm9807 = vcmp.eq.s32.totalorder %v9485, 1
      %vm9808 = vcmp.eq.s32.totalorder %v9488, 1
      %vm9809 = vcmp.eq.s32.totalorder %v9491, 1
      %vm9810 = vcmp.eq.s32.totalorder %v9494, 1
      %vm9811 = vcmp.eq.s32.totalorder %v9497, 1
      %vm9812 = vcmp.eq.s32.totalorder %v9500, 1
      %vm9813 = vcmp.eq.s32.totalorder %v9503, 1
      %vm9814 = vcmp.eq.s32.totalorder %v9506, 1
      %vm9815 = vcmp.eq.s32.totalorder %v9509, 1
      %vm9816 = vcmp.eq.s32.totalorder %v9512, 1
      %vm9817 = vcmp.eq.s32.totalorder %v9515, 1
      %vm9818 = vcmp.eq.s32.totalorder %v9518, 1
      %vm9819 = vcmp.eq.s32.totalorder %v9521, 1
      %vm9820 = vcmp.eq.s32.totalorder %v9524, 1
      %vm9821 = vcmp.eq.s32.totalorder %v9527, 1
      %vm9822 = vcmp.eq.s32.totalorder %v9530, 1
      %vm9823 = vcmp.eq.s32.totalorder %v9533, 1
      %vm9824 = vcmp.eq.s32.totalorder %v9536, 1
      %vm9825 = vcmp.eq.s32.totalorder %v9539, 1
      %vm9826 = vcmp.eq.s32.totalorder %v9542, 1
      %vm9827 = vcmp.eq.s32.totalorder %v9545, 1
      %vm9828 = vcmp.eq.s32.totalorder %v9548, 1
      %vm9829 = vcmp.eq.s32.totalorder %v9551, 1
      %vm9830 = vcmp.eq.s32.totalorder %v9554, 1
      %vm9831 = vcmp.eq.s32.totalorder %v9557, 1
      %vm9832 = vcmp.eq.s32.totalorder %v9560, 1
      %vm9833 = vcmp.eq.s32.totalorder %v9563, 1
      %vm9834 = vcmp.eq.s32.totalorder %v9566, 1
      %vm9835 = vcmp.eq.s32.totalorder %v9569, 1
      %vm9836 = vcmp.eq.s32.totalorder %v9572, 1
      %vm9837 = vcmp.eq.s32.totalorder %v9575, 1
      %vm9838 = vcmp.eq.s32.totalorder %v9578, 1
      %vm9839 = vcmp.eq.s32.totalorder %v9581, 1
      %vm9840 = vcmp.eq.s32.totalorder %v9584, 1
      %vm9841 = vcmp.eq.s32.totalorder %v9587, 1
      %vm9842 = vcmp.eq.s32.totalorder %v9590, 1
      %vm9843 = vcmp.eq.s32.totalorder %v9593, 1
      %vm9844 = vcmp.eq.s32.totalorder %v9596, 1
      %vm9845 = vcmp.eq.s32.totalorder %v9599, 1
      %vm9846 = vcmp.eq.s32.totalorder %v9602, 1
      %vm9847 = vcmp.eq.s32.totalorder %v9605, 1
      %vm9848 = vcmp.eq.s32.totalorder %v9608, 1
      %vm9849 = vcmp.eq.s32.totalorder %v9611, 1
      %vm9850 = vcmp.eq.s32.totalorder %v9614, 1
      %vm9851 = vcmp.eq.s32.totalorder %v9617, 1
      %vm9852 = vcmp.eq.s32.totalorder %v9620, 1
      %vm9853 = vcmp.eq.s32.totalorder %v9623, 1
      %vm9854 = vcmp.eq.s32.totalorder %v9626, 1
      %vm9855 = vcmp.eq.s32.totalorder %v9629, 1
      %vm9856 = vcmp.eq.s32.totalorder %v9632, 1
      %vm9857 = vcmp.eq.s32.totalorder %v9635, 1
      %vm9858 = vcmp.eq.s32.totalorder %v9638, 1
      %vm9859 = vcmp.eq.s32.totalorder %v9641, 1
      %vm9860 = vcmp.eq.s32.totalorder %v9644, 1
      %vm9861 = vcmp.eq.s32.totalorder %v9647, 1
      %vm9862 = vcmp.eq.s32.totalorder %v9650, 1
      %vm9863 = vcmp.eq.s32.totalorder %v9653, 1
      %vm9864 = vcmp.eq.s32.totalorder %v9656, 1
      %vm9865 = vcmp.eq.s32.totalorder %v9659, 1
      %vm9866 = vcmp.eq.s32.totalorder %v9662, 1
      %vm9867 = vcmp.eq.s32.totalorder %v9665, 1
      %vm9868 = vcmp.eq.s32.totalorder %v9668, 1
      %vm9869 = vcmp.eq.s32.totalorder %v9671, 1
      %vm9870 = vcmp.eq.s32.totalorder %v9674, 1
      %vm9871 = vcmp.eq.s32.totalorder %v9677, 1
      %vm9872 = vcmp.eq.s32.totalorder %v9680, 1
      %vm9873 = vcmp.eq.s32.totalorder %v9683, 1
      %vm9874 = vcmp.eq.s32.totalorder %v9686, 1
      %vm9875 = vcmp.eq.s32.totalorder %v9689, 1
      %vm9876 = vcmp.eq.s32.totalorder %v9692, 1
      %vm9877 = vcmp.eq.s32.totalorder %v9695, 1
      %vm9878 = vcmp.eq.s32.totalorder %v9698, 1
      %vm9879 = vcmp.eq.s32.totalorder %v9701, 1
      %vm9880 = vcmp.eq.s32.totalorder %v9704, 1
      %vm9881 = vcmp.eq.s32.totalorder %v9707, 1
      %vm9882 = vcmp.eq.s32.totalorder %v9710, 1
      %vm9883 = vcmp.eq.s32.totalorder %v9713, 1
      %vm9884 = vcmp.eq.s32.totalorder %v9716, 1
      %vm9885 = vcmp.eq.s32.totalorder %v9719, 1
      %vm9886 = vcmp.eq.s32.totalorder %v9722, 1
      %vm9887 = vcmp.eq.s32.totalorder %v9725, 1
      %vm9888 = vcmp.eq.s32.totalorder %v9728, 1
      %vm9889 = vcmp.eq.s32.totalorder %v9731, 1
      %vm9890 = vcmp.eq.s32.totalorder %v9734, 1
      %vm9891 = vcmp.eq.s32.totalorder %v9737, 1
      %vm9892 = vcmp.eq.s32.totalorder %v9740, 1
      %vm9893 = vcmp.eq.s32.totalorder %v9743, 1
      %vm9894 = vcmp.eq.s32.totalorder %v9746, 1
      %vm9895 = vcmp.eq.s32.totalorder %v9749, 1
      %vm9896 = vcmp.eq.s32.totalorder %v9752, 1
      %vm9897 = vcmp.eq.s32.totalorder %v9755, 1
      %vm9898 = vcmp.eq.s32.totalorder %v9758, 1
      %vm9899 = vcmp.eq.s32.totalorder %v9761, 1
      %vm9900 = vcmp.eq.s32.totalorder %v9764, 1
      %vm9901 = vcmp.eq.s32.totalorder %v9767, 1
      %vm9902 = vcmp.eq.s32.totalorder %v9770, 1
      %vm9903 = vcmp.eq.s32.totalorder %v9773, 1
      %vm9904 = vcmp.eq.s32.totalorder %v9776, 1
      %v9905 = vsel %vm9777, %v6823, 0.0
      %v9906 = vsel %vm9778, %v6824, 0.0
      %v9907 = vsel %vm9779, %v6825, 0.0
      %v9908 = vsel %vm9780, %v6826, 0.0
      %v9909 = vsel %vm9781, %v6827, 0.0
      %v9910 = vsel %vm9782, %v6828, 0.0
      %v9911 = vsel %vm9783, %v6829, 0.0
      %v9912 = vsel %vm9784, %v6830, 0.0
      %v9913 = vsel %vm9785, %v6831, 0.0
      %v9914 = vsel %vm9786, %v6832, 0.0
      %v9915 = vsel %vm9787, %v6833, 0.0
      %v9916 = vsel %vm9788, %v6834, 0.0
      %v9917 = vsel %vm9789, %v6835, 0.0
      %v9918 = vsel %vm9790, %v6836, 0.0
      %v9919 = vsel %vm9791, %v6837, 0.0
      %v9920 = vsel %vm9792, %v6838, 0.0
      %v9921 = vsel %vm9793, %v6839, 0.0
      %v9922 = vsel %vm9794, %v6840, 0.0
      %v9923 = vsel %vm9795, %v6841, 0.0
      %v9924 = vsel %vm9796, %v6842, 0.0
      %v9925 = vsel %vm9797, %v6843, 0.0
      %v9926 = vsel %vm9798, %v6844, 0.0
      %v9927 = vsel %vm9799, %v6845, 0.0
      %v9928 = vsel %vm9800, %v6846, 0.0
      %v9929 = vsel %vm9801, %v6847, 0.0
      %v9930 = vsel %vm9802, %v6848, 0.0
      %v9931 = vsel %vm9803, %v6849, 0.0
      %v9932 = vsel %vm9804, %v6850, 0.0
      %v9933 = vsel %vm9805, %v6851, 0.0
      %v9934 = vsel %vm9806, %v6852, 0.0
      %v9935 = vsel %vm9807, %v6853, 0.0
      %v9936 = vsel %vm9808, %v6854, 0.0
      %v9937 = vsel %vm9809, %v6855, 0.0
      %v9938 = vsel %vm9810, %v6856, 0.0
      %v9939 = vsel %vm9811, %v6857, 0.0
      %v9940 = vsel %vm9812, %v6858, 0.0
      %v9941 = vsel %vm9813, %v6859, 0.0
      %v9942 = vsel %vm9814, %v6860, 0.0
      %v9943 = vsel %vm9815, %v6861, 0.0
      %v9944 = vsel %vm9816, %v6862, 0.0
      %v9945 = vsel %vm9817, %v6863, 0.0
      %v9946 = vsel %vm9818, %v6864, 0.0
      %v9947 = vsel %vm9819, %v6865, 0.0
      %v9948 = vsel %vm9820, %v6866, 0.0
      %v9949 = vsel %vm9821, %v6867, 0.0
      %v9950 = vsel %vm9822, %v6868, 0.0
      %v9951 = vsel %vm9823, %v6869, 0.0
      %v9952 = vsel %vm9824, %v6870, 0.0
      %v9953 = vsel %vm9825, %v6871, 0.0
      %v9954 = vsel %vm9826, %v6872, 0.0
      %v9955 = vsel %vm9827, %v6873, 0.0
      %v9956 = vsel %vm9828, %v6874, 0.0
      %v9957 = vsel %vm9829, %v6875, 0.0
      %v9958 = vsel %vm9830, %v6876, 0.0
      %v9959 = vsel %vm9831, %v6877, 0.0
      %v9960 = vsel %vm9832, %v6878, 0.0
      %v9961 = vsel %vm9833, %v6879, 0.0
      %v9962 = vsel %vm9834, %v6880, 0.0
      %v9963 = vsel %vm9835, %v6881, 0.0
      %v9964 = vsel %vm9836, %v6882, 0.0
      %v9965 = vsel %vm9837, %v6883, 0.0
      %v9966 = vsel %vm9838, %v6884, 0.0
      %v9967 = vsel %vm9839, %v6885, 0.0
      %v9968 = vsel %vm9840, %v6886, 0.0
      %v9969 = vsel %vm9841, %v6887, 0.0
      %v9970 = vsel %vm9842, %v6888, 0.0
      %v9971 = vsel %vm9843, %v6889, 0.0
      %v9972 = vsel %vm9844, %v6890, 0.0
      %v9973 = vsel %vm9845, %v6891, 0.0
      %v9974 = vsel %vm9846, %v6892, 0.0
      %v9975 = vsel %vm9847, %v6893, 0.0
      %v9976 = vsel %vm9848, %v6894, 0.0
      %v9977 = vsel %vm9849, %v6895, 0.0
      %v9978 = vsel %vm9850, %v6896, 0.0
      %v9979 = vsel %vm9851, %v6897, 0.0
      %v9980 = vsel %vm9852, %v6898, 0.0
      %v9981 = vsel %vm9853, %v6899, 0.0
      %v9982 = vsel %vm9854, %v6900, 0.0
      %v9983 = vsel %vm9855, %v6901, 0.0
      %v9984 = vsel %vm9856, %v6902, 0.0
      %v9985 = vsel %vm9857, %v6903, 0.0
      %v9986 = vsel %vm9858, %v6904, 0.0
      %v9987 = vsel %vm9859, %v6905, 0.0
      %v9988 = vsel %vm9860, %v6906, 0.0
      %v9989 = vsel %vm9861, %v6907, 0.0
      %v9990 = vsel %vm9862, %v6908, 0.0
      %v9991 = vsel %vm9863, %v6909, 0.0
      %v9992 = vsel %vm9864, %v6910, 0.0
      %v9993 = vsel %vm9865, %v6911, 0.0
      %v9994 = vsel %vm9866, %v6912, 0.0
      %v9995 = vsel %vm9867, %v6913, 0.0
      %v9996 = vsel %vm9868, %v6914, 0.0
      %v9997 = vsel %vm9869, %v6915, 0.0
      %v9998 = vsel %vm9870, %v6916, 0.0
      %v9999 = vsel %vm9871, %v6917, 0.0
      %v10000 = vsel %vm9872, %v6918, 0.0
      %v10001 = vsel %vm9873, %v6919, 0.0
      %v10002 = vsel %vm9874, %v6920, 0.0
      %v10003 = vsel %vm9875, %v6921, 0.0
      %v10004 = vsel %vm9876, %v6922, 0.0
      %v10005 = vsel %vm9877, %v6923, 0.0
      %v10006 = vsel %vm9878, %v6924, 0.0
      %v10007 = vsel %vm9879, %v6925, 0.0
      %v10008 = vsel %vm9880, %v6926, 0.0
      %v10009 = vsel %vm9881, %v6927, 0.0
      %v10010 = vsel %vm9882, %v6928, 0.0
      %v10011 = vsel %vm9883, %v6929, 0.0
      %v10012 = vsel %vm9884, %v6930, 0.0
      %v10013 = vsel %vm9885, %v6931, 0.0
      %v10014 = vsel %vm9886, %v6932, 0.0
      %v10015 = vsel %vm9887, %v6933, 0.0
      %v10016 = vsel %vm9888, %v6934, 0.0
      %v10017 = vsel %vm9889, %v6935, 0.0
      %v10018 = vsel %vm9890, %v6936, 0.0
      %v10019 = vsel %vm9891, %v6937, 0.0
      %v10020 = vsel %vm9892, %v6938, 0.0
      %v10021 = vsel %vm9893, %v6939, 0.0
      %v10022 = vsel %vm9894, %v6940, 0.0
      %v10023 = vsel %vm9895, %v6941, 0.0
      %v10024 = vsel %vm9896, %v6942, 0.0
      %v10025 = vsel %vm9897, %v6943, 0.0
      %v10026 = vsel %vm9898, %v6944, 0.0
      %v10027 = vsel %vm9899, %v6945, 0.0
      %v10028 = vsel %vm9900, %v6946, 0.0
      %v10029 = vsel %vm9901, %v6947, 0.0
      %v10030 = vsel %vm9902, %v6948, 0.0
      %v10031 = vsel %vm9903, %v6949, 0.0
      %v10032 = vsel %vm9904, %v6950, 0.0
      %v10033 = vadd.f32 %v9905, %v9906
      %v10034 = vadd.f32 %v10033, %v9907
      %v10035 = vadd.f32 %v10034, %v9908
      %v10036 = vadd.f32 %v10035, %v9909
      %v10037 = vadd.f32 %v10036, %v9910
      %v10038 = vadd.f32 %v10037, %v9911
      %v10039 = vadd.f32 %v10038, %v9912
      %v10040 = vadd.f32 %v10039, %v9913
      %v10041 = vadd.f32 %v10040, %v9914
      %v10042 = vadd.f32 %v10041, %v9915
      %v10043 = vadd.f32 %v10042, %v9916
      %v10044 = vadd.f32 %v10043, %v9917
      %v10045 = vadd.f32 %v10044, %v9918
      %v10046 = vadd.f32 %v10045, %v9919
      %v10047 = vadd.f32 %v10046, %v9920
      %v10048 = vadd.f32 %v10047, %v9921
      %v10049 = vadd.f32 %v10048, %v9922
      %v10050 = vadd.f32 %v10049, %v9923
      %v10051 = vadd.f32 %v10050, %v9924
      %v10052 = vadd.f32 %v10051, %v9925
      %v10053 = vadd.f32 %v10052, %v9926
      %v10054 = vadd.f32 %v10053, %v9927
      %v10055 = vadd.f32 %v10054, %v9928
      %v10056 = vadd.f32 %v10055, %v9929
      %v10057 = vadd.f32 %v10056, %v9930
      %v10058 = vadd.f32 %v10057, %v9931
      %v10059 = vadd.f32 %v10058, %v9932
      %v10060 = vadd.f32 %v10059, %v9933
      %v10061 = vadd.f32 %v10060, %v9934
      %v10062 = vadd.f32 %v10061, %v9935
      %v10063 = vadd.f32 %v10062, %v9936
      %v10064 = vadd.f32 %v10063, %v9937
      %v10065 = vadd.f32 %v10064, %v9938
      %v10066 = vadd.f32 %v10065, %v9939
      %v10067 = vadd.f32 %v10066, %v9940
      %v10068 = vadd.f32 %v10067, %v9941
      %v10069 = vadd.f32 %v10068, %v9942
      %v10070 = vadd.f32 %v10069, %v9943
      %v10071 = vadd.f32 %v10070, %v9944
      %v10072 = vadd.f32 %v10071, %v9945
      %v10073 = vadd.f32 %v10072, %v9946
      %v10074 = vadd.f32 %v10073, %v9947
      %v10075 = vadd.f32 %v10074, %v9948
      %v10076 = vadd.f32 %v10075, %v9949
      %v10077 = vadd.f32 %v10076, %v9950
      %v10078 = vadd.f32 %v10077, %v9951
      %v10079 = vadd.f32 %v10078, %v9952
      %v10080 = vadd.f32 %v10079, %v9953
      %v10081 = vadd.f32 %v10080, %v9954
      %v10082 = vadd.f32 %v10081, %v9955
      %v10083 = vadd.f32 %v10082, %v9956
      %v10084 = vadd.f32 %v10083, %v9957
      %v10085 = vadd.f32 %v10084, %v9958
      %v10086 = vadd.f32 %v10085, %v9959
      %v10087 = vadd.f32 %v10086, %v9960
      %v10088 = vadd.f32 %v10087, %v9961
      %v10089 = vadd.f32 %v10088, %v9962
      %v10090 = vadd.f32 %v10089, %v9963
      %v10091 = vadd.f32 %v10090, %v9964
      %v10092 = vadd.f32 %v10091, %v9965
      %v10093 = vadd.f32 %v10092, %v9966
      %v10094 = vadd.f32 %v10093, %v9967
      %v10095 = vadd.f32 %v10094, %v9968
      %v10096 = vadd.f32 %v10095, %v9969
      %v10097 = vadd.f32 %v10096, %v9970
      %v10098 = vadd.f32 %v10097, %v9971
      %v10099 = vadd.f32 %v10098, %v9972
      %v10100 = vadd.f32 %v10099, %v9973
      %v10101 = vadd.f32 %v10100, %v9974
      %v10102 = vadd.f32 %v10101, %v9975
      %v10103 = vadd.f32 %v10102, %v9976
      %v10104 = vadd.f32 %v10103, %v9977
      %v10105 = vadd.f32 %v10104, %v9978
      %v10106 = vadd.f32 %v10105, %v9979
      %v10107 = vadd.f32 %v10106, %v9980
      %v10108 = vadd.f32 %v10107, %v9981
      %v10109 = vadd.f32 %v10108, %v9982
      %v10110 = vadd.f32 %v10109, %v9983
      %v10111 = vadd.f32 %v10110, %v9984
      %v10112 = vadd.f32 %v10111, %v9985
      %v10113 = vadd.f32 %v10112, %v9986
      %v10114 = vadd.f32 %v10113, %v9987
      %v10115 = vadd.f32 %v10114, %v9988
      %v10116 = vadd.f32 %v10115, %v9989
      %v10117 = vadd.f32 %v10116, %v9990
      %v10118 = vadd.f32 %v10117, %v9991
      %v10119 = vadd.f32 %v10118, %v9992
      %v10120 = vadd.f32 %v10119, %v9993
      %v10121 = vadd.f32 %v10120, %v9994
      %v10122 = vadd.f32 %v10121, %v9995
      %v10123 = vadd.f32 %v10122, %v9996
      %v10124 = vadd.f32 %v10123, %v9997
      %v10125 = vadd.f32 %v10124, %v9998
      %v10126 = vadd.f32 %v10125, %v9999
      %v10127 = vadd.f32 %v10126, %v10000
      %v10128 = vadd.f32 %v10127, %v10001
      %v10129 = vadd.f32 %v10128, %v10002
      %v10130 = vadd.f32 %v10129, %v10003
      %v10131 = vadd.f32 %v10130, %v10004
      %v10132 = vadd.f32 %v10131, %v10005
      %v10133 = vadd.f32 %v10132, %v10006
      %v10134 = vadd.f32 %v10133, %v10007
      %v10135 = vadd.f32 %v10134, %v10008
      %v10136 = vadd.f32 %v10135, %v10009
      %v10137 = vadd.f32 %v10136, %v10010
      %v10138 = vadd.f32 %v10137, %v10011
      %v10139 = vadd.f32 %v10138, %v10012
      %v10140 = vadd.f32 %v10139, %v10013
      %v10141 = vadd.f32 %v10140, %v10014
      %v10142 = vadd.f32 %v10141, %v10015
      %v10143 = vadd.f32 %v10142, %v10016
      %v10144 = vadd.f32 %v10143, %v10017
      %v10145 = vadd.f32 %v10144, %v10018
      %v10146 = vadd.f32 %v10145, %v10019
      %v10147 = vadd.f32 %v10146, %v10020
      %v10148 = vadd.f32 %v10147, %v10021
      %v10149 = vadd.f32 %v10148, %v10022
      %v10150 = vadd.f32 %v10149, %v10023
      %v10151 = vadd.f32 %v10150, %v10024
      %v10152 = vadd.f32 %v10151, %v10025
      %v10153 = vadd.f32 %v10152, %v10026
      %v10154 = vadd.f32 %v10153, %v10027
      %v10155 = vadd.f32 %v10154, %v10028
      %v10156 = vadd.f32 %v10155, %v10029
      %v10157 = vadd.f32 %v10156, %v10030
      %v10158 = vadd.f32 %v10157, %v10031
      %v10159 = vadd.f32 %v10158, %v10032
      %v10160 = vrot.slane %v10159, 4
      %v10161 = vadd.f32 %v10159, %v10160
      %v10162 = vrot.slane %v10161, 2
      %v10163 = vadd.f32 %v10161, %v10162
      %v10164 = vrot.slane %v10163, 1
      %v10165 = vadd.f32 %v10163, %v10164
      %vm10166 = vcmp.eq.s32.totalorder %v6951, 3
      %vm10167 = vcmp.eq.s32.totalorder %v6952, 3
      %vm10168 = vcmp.eq.s32.totalorder %v6953, 3
      %vm10169 = vcmp.eq.s32.totalorder %v6954, 3
      %vm10170 = vcmp.eq.s32.totalorder %v6955, 3
      %vm10171 = vcmp.eq.s32.totalorder %v6956, 3
      %vm10172 = vcmp.eq.s32.totalorder %v6957, 3
      %vm10173 = vcmp.eq.s32.totalorder %v6958, 3
      %vm10174 = vcmp.eq.s32.totalorder %v6959, 3
      %vm10175 = vcmp.eq.s32.totalorder %v6960, 3
      %vm10176 = vcmp.eq.s32.totalorder %v6961, 3
      %vm10177 = vcmp.eq.s32.totalorder %v6962, 3
      %vm10178 = vcmp.eq.s32.totalorder %v6963, 3
      %vm10179 = vcmp.eq.s32.totalorder %v6964, 3
      %vm10180 = vcmp.eq.s32.totalorder %v6965, 3
      %vm10181 = vcmp.eq.s32.totalorder %v6966, 3
      %vm10182 = vcmp.eq.s32.totalorder %v6967, 3
      %vm10183 = vcmp.eq.s32.totalorder %v6968, 3
      %vm10184 = vcmp.eq.s32.totalorder %v6969, 3
      %vm10185 = vcmp.eq.s32.totalorder %v6970, 3
      %vm10186 = vcmp.eq.s32.totalorder %v6971, 3
      %vm10187 = vcmp.eq.s32.totalorder %v6972, 3
      %vm10188 = vcmp.eq.s32.totalorder %v6973, 3
      %vm10189 = vcmp.eq.s32.totalorder %v6974, 3
      %vm10190 = vcmp.eq.s32.totalorder %v6975, 3
      %vm10191 = vcmp.eq.s32.totalorder %v6976, 3
      %vm10192 = vcmp.eq.s32.totalorder %v6977, 3
      %vm10193 = vcmp.eq.s32.totalorder %v6978, 3
      %vm10194 = vcmp.eq.s32.totalorder %v6979, 3
      %vm10195 = vcmp.eq.s32.totalorder %v6980, 3
      %vm10196 = vcmp.eq.s32.totalorder %v6981, 3
      %vm10197 = vcmp.eq.s32.totalorder %v6982, 3
      %vm10198 = vcmp.eq.s32.totalorder %v6983, 3
      %vm10199 = vcmp.eq.s32.totalorder %v6984, 3
      %vm10200 = vcmp.eq.s32.totalorder %v6985, 3
      %vm10201 = vcmp.eq.s32.totalorder %v6986, 3
      %vm10202 = vcmp.eq.s32.totalorder %v6987, 3
      %vm10203 = vcmp.eq.s32.totalorder %v6988, 3
      %vm10204 = vcmp.eq.s32.totalorder %v6989, 3
      %vm10205 = vcmp.eq.s32.totalorder %v6990, 3
      %vm10206 = vcmp.eq.s32.totalorder %v6991, 3
      %vm10207 = vcmp.eq.s32.totalorder %v6992, 3
      %vm10208 = vcmp.eq.s32.totalorder %v6993, 3
      %vm10209 = vcmp.eq.s32.totalorder %v6994, 3
      %vm10210 = vcmp.eq.s32.totalorder %v6995, 3
      %vm10211 = vcmp.eq.s32.totalorder %v6996, 3
      %vm10212 = vcmp.eq.s32.totalorder %v6997, 3
      %vm10213 = vcmp.eq.s32.totalorder %v6998, 3
      %vm10214 = vcmp.eq.s32.totalorder %v6999, 3
      %vm10215 = vcmp.eq.s32.totalorder %v7000, 3
      %vm10216 = vcmp.eq.s32.totalorder %v7001, 3
      %vm10217 = vcmp.eq.s32.totalorder %v7002, 3
      %vm10218 = vcmp.eq.s32.totalorder %v7003, 3
      %vm10219 = vcmp.eq.s32.totalorder %v7004, 3
      %vm10220 = vcmp.eq.s32.totalorder %v7005, 3
      %vm10221 = vcmp.eq.s32.totalorder %v7006, 3
      %vm10222 = vcmp.eq.s32.totalorder %v7007, 3
      %vm10223 = vcmp.eq.s32.totalorder %v7008, 3
      %vm10224 = vcmp.eq.s32.totalorder %v7009, 3
      %vm10225 = vcmp.eq.s32.totalorder %v7010, 3
      %vm10226 = vcmp.eq.s32.totalorder %v7011, 3
      %vm10227 = vcmp.eq.s32.totalorder %v7012, 3
      %vm10228 = vcmp.eq.s32.totalorder %v7013, 3
      %vm10229 = vcmp.eq.s32.totalorder %v7014, 3
      %vm10230 = vcmp.eq.s32.totalorder %v7015, 3
      %vm10231 = vcmp.eq.s32.totalorder %v7016, 3
      %vm10232 = vcmp.eq.s32.totalorder %v7017, 3
      %vm10233 = vcmp.eq.s32.totalorder %v7018, 3
      %vm10234 = vcmp.eq.s32.totalorder %v7019, 3
      %vm10235 = vcmp.eq.s32.totalorder %v7020, 3
      %vm10236 = vcmp.eq.s32.totalorder %v7021, 3
      %vm10237 = vcmp.eq.s32.totalorder %v7022, 3
      %vm10238 = vcmp.eq.s32.totalorder %v7023, 3
      %vm10239 = vcmp.eq.s32.totalorder %v7024, 3
      %vm10240 = vcmp.eq.s32.totalorder %v7025, 3
      %vm10241 = vcmp.eq.s32.totalorder %v7026, 3
      %vm10242 = vcmp.eq.s32.totalorder %v7027, 3
      %vm10243 = vcmp.eq.s32.totalorder %v7028, 3
      %vm10244 = vcmp.eq.s32.totalorder %v7029, 3
      %vm10245 = vcmp.eq.s32.totalorder %v7030, 3
      %vm10246 = vcmp.eq.s32.totalorder %v7031, 3
      %vm10247 = vcmp.eq.s32.totalorder %v7032, 3
      %vm10248 = vcmp.eq.s32.totalorder %v7033, 3
      %vm10249 = vcmp.eq.s32.totalorder %v7034, 3
      %vm10250 = vcmp.eq.s32.totalorder %v7035, 3
      %vm10251 = vcmp.eq.s32.totalorder %v7036, 3
      %vm10252 = vcmp.eq.s32.totalorder %v7037, 3
      %vm10253 = vcmp.eq.s32.totalorder %v7038, 3
      %vm10254 = vcmp.eq.s32.totalorder %v7039, 3
      %vm10255 = vcmp.eq.s32.totalorder %v7040, 3
      %vm10256 = vcmp.eq.s32.totalorder %v7041, 3
      %vm10257 = vcmp.eq.s32.totalorder %v7042, 3
      %vm10258 = vcmp.eq.s32.totalorder %v7043, 3
      %vm10259 = vcmp.eq.s32.totalorder %v7044, 3
      %vm10260 = vcmp.eq.s32.totalorder %v7045, 3
      %vm10261 = vcmp.eq.s32.totalorder %v7046, 3
      %vm10262 = vcmp.eq.s32.totalorder %v7047, 3
      %vm10263 = vcmp.eq.s32.totalorder %v7048, 3
      %vm10264 = vcmp.eq.s32.totalorder %v7049, 3
      %vm10265 = vcmp.eq.s32.totalorder %v7050, 3
      %vm10266 = vcmp.eq.s32.totalorder %v7051, 3
      %vm10267 = vcmp.eq.s32.totalorder %v7052, 3
      %vm10268 = vcmp.eq.s32.totalorder %v7053, 3
      %vm10269 = vcmp.eq.s32.totalorder %v7054, 3
      %vm10270 = vcmp.eq.s32.totalorder %v7055, 3
      %vm10271 = vcmp.eq.s32.totalorder %v7056, 3
      %vm10272 = vcmp.eq.s32.totalorder %v7057, 3
      %vm10273 = vcmp.eq.s32.totalorder %v7058, 3
      %vm10274 = vcmp.eq.s32.totalorder %v7059, 3
      %vm10275 = vcmp.eq.s32.totalorder %v7060, 3
      %vm10276 = vcmp.eq.s32.totalorder %v7061, 3
      %vm10277 = vcmp.eq.s32.totalorder %v7062, 3
      %vm10278 = vcmp.eq.s32.totalorder %v7063, 3
      %vm10279 = vcmp.eq.s32.totalorder %v7064, 3
      %vm10280 = vcmp.eq.s32.totalorder %v7065, 3
      %vm10281 = vcmp.eq.s32.totalorder %v7066, 3
      %vm10282 = vcmp.eq.s32.totalorder %v7067, 3
      %vm10283 = vcmp.eq.s32.totalorder %v7068, 3
      %vm10284 = vcmp.eq.s32.totalorder %v7069, 3
      %vm10285 = vcmp.eq.s32.totalorder %v7070, 3
      %vm10286 = vcmp.eq.s32.totalorder %v7071, 3
      %vm10287 = vcmp.eq.s32.totalorder %v7072, 3
      %vm10288 = vcmp.eq.s32.totalorder %v7073, 3
      %vm10289 = vcmp.eq.s32.totalorder %v7074, 3
      %vm10290 = vcmp.eq.s32.totalorder %v7075, 3
      %vm10291 = vcmp.eq.s32.totalorder %v7076, 3
      %vm10292 = vcmp.eq.s32.totalorder %v7077, 3
      %vm10293 = vcmp.eq.s32.totalorder %v7078, 3
      %v10294 = vsel %vm10166, 1, 0
      %v10295 = vsel %vm10167, 1, 0
      %v10296 = vsel %vm10168, 1, 0
      %v10297 = vsel %vm10169, 1, 0
      %v10298 = vsel %vm10170, 1, 0
      %v10299 = vsel %vm10171, 1, 0
      %v10300 = vsel %vm10172, 1, 0
      %v10301 = vsel %vm10173, 1, 0
      %v10302 = vsel %vm10174, 1, 0
      %v10303 = vsel %vm10175, 1, 0
      %v10304 = vsel %vm10176, 1, 0
      %v10305 = vsel %vm10177, 1, 0
      %v10306 = vsel %vm10178, 1, 0
      %v10307 = vsel %vm10179, 1, 0
      %v10308 = vsel %vm10180, 1, 0
      %v10309 = vsel %vm10181, 1, 0
      %v10310 = vsel %vm10182, 1, 0
      %v10311 = vsel %vm10183, 1, 0
      %v10312 = vsel %vm10184, 1, 0
      %v10313 = vsel %vm10185, 1, 0
      %v10314 = vsel %vm10186, 1, 0
      %v10315 = vsel %vm10187, 1, 0
      %v10316 = vsel %vm10188, 1, 0
      %v10317 = vsel %vm10189, 1, 0
      %v10318 = vsel %vm10190, 1, 0
      %v10319 = vsel %vm10191, 1, 0
      %v10320 = vsel %vm10192, 1, 0
      %v10321 = vsel %vm10193, 1, 0
      %v10322 = vsel %vm10194, 1, 0
      %v10323 = vsel %vm10195, 1, 0
      %v10324 = vsel %vm10196, 1, 0
      %v10325 = vsel %vm10197, 1, 0
      %v10326 = vsel %vm10198, 1, 0
      %v10327 = vsel %vm10199, 1, 0
      %v10328 = vsel %vm10200, 1, 0
      %v10329 = vsel %vm10201, 1, 0
      %v10330 = vsel %vm10202, 1, 0
      %v10331 = vsel %vm10203, 1, 0
      %v10332 = vsel %vm10204, 1, 0
      %v10333 = vsel %vm10205, 1, 0
      %v10334 = vsel %vm10206, 1, 0
      %v10335 = vsel %vm10207, 1, 0
      %v10336 = vsel %vm10208, 1, 0
      %v10337 = vsel %vm10209, 1, 0
      %v10338 = vsel %vm10210, 1, 0
      %v10339 = vsel %vm10211, 1, 0
      %v10340 = vsel %vm10212, 1, 0
      %v10341 = vsel %vm10213, 1, 0
      %v10342 = vsel %vm10214, 1, 0
      %v10343 = vsel %vm10215, 1, 0
      %v10344 = vsel %vm10216, 1, 0
      %v10345 = vsel %vm10217, 1, 0
      %v10346 = vsel %vm10218, 1, 0
      %v10347 = vsel %vm10219, 1, 0
      %v10348 = vsel %vm10220, 1, 0
      %v10349 = vsel %vm10221, 1, 0
      %v10350 = vsel %vm10222, 1, 0
      %v10351 = vsel %vm10223, 1, 0
      %v10352 = vsel %vm10224, 1, 0
      %v10353 = vsel %vm10225, 1, 0
      %v10354 = vsel %vm10226, 1, 0
      %v10355 = vsel %vm10227, 1, 0
      %v10356 = vsel %vm10228, 1, 0
      %v10357 = vsel %vm10229, 1, 0
      %v10358 = vsel %vm10230, 1, 0
      %v10359 = vsel %vm10231, 1, 0
      %v10360 = vsel %vm10232, 1, 0
      %v10361 = vsel %vm10233, 1, 0
      %v10362 = vsel %vm10234, 1, 0
      %v10363 = vsel %vm10235, 1, 0
      %v10364 = vsel %vm10236, 1, 0
      %v10365 = vsel %vm10237, 1, 0
      %v10366 = vsel %vm10238, 1, 0
      %v10367 = vsel %vm10239, 1, 0
      %v10368 = vsel %vm10240, 1, 0
      %v10369 = vsel %vm10241, 1, 0
      %v10370 = vsel %vm10242, 1, 0
      %v10371 = vsel %vm10243, 1, 0
      %v10372 = vsel %vm10244, 1, 0
      %v10373 = vsel %vm10245, 1, 0
      %v10374 = vsel %vm10246, 1, 0
      %v10375 = vsel %vm10247, 1, 0
      %v10376 = vsel %vm10248, 1, 0
      %v10377 = vsel %vm10249, 1, 0
      %v10378 = vsel %vm10250, 1, 0
      %v10379 = vsel %vm10251, 1, 0
      %v10380 = vsel %vm10252, 1, 0
      %v10381 = vsel %vm10253, 1, 0
      %v10382 = vsel %vm10254, 1, 0
      %v10383 = vsel %vm10255, 1, 0
      %v10384 = vsel %vm10256, 1, 0
      %v10385 = vsel %vm10257, 1, 0
      %v10386 = vsel %vm10258, 1, 0
      %v10387 = vsel %vm10259, 1, 0
      %v10388 = vsel %vm10260, 1, 0
      %v10389 = vsel %vm10261, 1, 0
      %v10390 = vsel %vm10262, 1, 0
      %v10391 = vsel %vm10263, 1, 0
      %v10392 = vsel %vm10264, 1, 0
      %v10393 = vsel %vm10265, 1, 0
      %v10394 = vsel %vm10266, 1, 0
      %v10395 = vsel %vm10267, 1, 0
      %v10396 = vsel %vm10268, 1, 0
      %v10397 = vsel %vm10269, 1, 0
      %v10398 = vsel %vm10270, 1, 0
      %v10399 = vsel %vm10271, 1, 0
      %v10400 = vsel %vm10272, 1, 0
      %v10401 = vsel %vm10273, 1, 0
      %v10402 = vsel %vm10274, 1, 0
      %v10403 = vsel %vm10275, 1, 0
      %v10404 = vsel %vm10276, 1, 0
      %v10405 = vsel %vm10277, 1, 0
      %v10406 = vsel %vm10278, 1, 0
      %v10407 = vsel %vm10279, 1, 0
      %v10408 = vsel %vm10280, 1, 0
      %v10409 = vsel %vm10281, 1, 0
      %v10410 = vsel %vm10282, 1, 0
      %v10411 = vsel %vm10283, 1, 0
      %v10412 = vsel %vm10284, 1, 0
      %v10413 = vsel %vm10285, 1, 0
      %v10414 = vsel %vm10286, 1, 0
      %v10415 = vsel %vm10287, 1, 0
      %v10416 = vsel %vm10288, 1, 0
      %v10417 = vsel %vm10289, 1, 0
      %v10418 = vsel %vm10290, 1, 0
      %v10419 = vsel %vm10291, 1, 0
      %v10420 = vsel %vm10292, 1, 0
      %v10421 = vsel %vm10293, 1, 0
      %10422 = vset.pattern.permute.xlu0 0
      %10423 = vperm.xlu0 %10422, %v10294
      %v10424 = vpop.permute.xlu0 %10423
      %10425 = vset.pattern.permute.xlu0 0
      %10426 = vperm.xlu0 %10425, %v10295
      %v10427 = vpop.permute.xlu0 %10426
      %10428 = vset.pattern.permute.xlu0 0
      %10429 = vperm.xlu0 %10428, %v10296
      %v10430 = vpop.permute.xlu0 %10429
      %10431 = vset.pattern.permute.xlu0 0
      %10432 = vperm.xlu0 %10431, %v10297
      %v10433 = vpop.permute.xlu0 %10432
      %10434 = vset.pattern.permute.xlu0 0
      %10435 = vperm.xlu0 %10434, %v10298
      %v10436 = vpop.permute.xlu0 %10435
      %10437 = vset.pattern.permute.xlu0 0
      %10438 = vperm.xlu0 %10437, %v10299
      %v10439 = vpop.permute.xlu0 %10438
      %10440 = vset.pattern.permute.xlu0 0
      %10441 = vperm.xlu0 %10440, %v10300
      %v10442 = vpop.permute.xlu0 %10441
      %10443 = vset.pattern.permute.xlu0 0
      %10444 = vperm.xlu0 %10443, %v10301
      %v10445 = vpop.permute.xlu0 %10444
      %10446 = vset.pattern.permute.xlu0 0
      %10447 = vperm.xlu0 %10446, %v10302
      %v10448 = vpop.permute.xlu0 %10447
      %10449 = vset.pattern.permute.xlu0 0
      %10450 = vperm.xlu0 %10449, %v10303
      %v10451 = vpop.permute.xlu0 %10450
      %10452 = vset.pattern.permute.xlu0 0
      %10453 = vperm.xlu0 %10452, %v10304
      %v10454 = vpop.permute.xlu0 %10453
      %10455 = vset.pattern.permute.xlu0 0
      %10456 = vperm.xlu0 %10455, %v10305
      %v10457 = vpop.permute.xlu0 %10456
      %10458 = vset.pattern.permute.xlu0 0
      %10459 = vperm.xlu0 %10458, %v10306
      %v10460 = vpop.permute.xlu0 %10459
      %10461 = vset.pattern.permute.xlu0 0
      %10462 = vperm.xlu0 %10461, %v10307
      %v10463 = vpop.permute.xlu0 %10462
      %10464 = vset.pattern.permute.xlu0 0
      %10465 = vperm.xlu0 %10464, %v10308
      %v10466 = vpop.permute.xlu0 %10465
      %10467 = vset.pattern.permute.xlu0 0
      %10468 = vperm.xlu0 %10467, %v10309
      %v10469 = vpop.permute.xlu0 %10468
      %10470 = vset.pattern.permute.xlu0 0
      %10471 = vperm.xlu0 %10470, %v10310
      %v10472 = vpop.permute.xlu0 %10471
      %10473 = vset.pattern.permute.xlu0 0
      %10474 = vperm.xlu0 %10473, %v10311
      %v10475 = vpop.permute.xlu0 %10474
      %10476 = vset.pattern.permute.xlu0 0
      %10477 = vperm.xlu0 %10476, %v10312
      %v10478 = vpop.permute.xlu0 %10477
      %10479 = vset.pattern.permute.xlu0 0
      %10480 = vperm.xlu0 %10479, %v10313
      %v10481 = vpop.permute.xlu0 %10480
      %10482 = vset.pattern.permute.xlu0 0
      %10483 = vperm.xlu0 %10482, %v10314
      %v10484 = vpop.permute.xlu0 %10483
      %10485 = vset.pattern.permute.xlu0 0
      %10486 = vperm.xlu0 %10485, %v10315
      %v10487 = vpop.permute.xlu0 %10486
      %10488 = vset.pattern.permute.xlu0 0
      %10489 = vperm.xlu0 %10488, %v10316
      %v10490 = vpop.permute.xlu0 %10489
      %10491 = vset.pattern.permute.xlu0 0
      %10492 = vperm.xlu0 %10491, %v10317
      %v10493 = vpop.permute.xlu0 %10492
      %10494 = vset.pattern.permute.xlu0 0
      %10495 = vperm.xlu0 %10494, %v10318
      %v10496 = vpop.permute.xlu0 %10495
      %10497 = vset.pattern.permute.xlu0 0
      %10498 = vperm.xlu0 %10497, %v10319
      %v10499 = vpop.permute.xlu0 %10498
      %10500 = vset.pattern.permute.xlu0 0
      %10501 = vperm.xlu0 %10500, %v10320
      %v10502 = vpop.permute.xlu0 %10501
      %10503 = vset.pattern.permute.xlu0 0
      %10504 = vperm.xlu0 %10503, %v10321
      %v10505 = vpop.permute.xlu0 %10504
      %10506 = vset.pattern.permute.xlu0 0
      %10507 = vperm.xlu0 %10506, %v10322
      %v10508 = vpop.permute.xlu0 %10507
      %10509 = vset.pattern.permute.xlu0 0
      %10510 = vperm.xlu0 %10509, %v10323
      %v10511 = vpop.permute.xlu0 %10510
      %10512 = vset.pattern.permute.xlu0 0
      %10513 = vperm.xlu0 %10512, %v10324
      %v10514 = vpop.permute.xlu0 %10513
      %10515 = vset.pattern.permute.xlu0 0
      %10516 = vperm.xlu0 %10515, %v10325
      %v10517 = vpop.permute.xlu0 %10516
      %10518 = vset.pattern.permute.xlu0 0
      %10519 = vperm.xlu0 %10518, %v10326
      %v10520 = vpop.permute.xlu0 %10519
      %10521 = vset.pattern.permute.xlu0 0
      %10522 = vperm.xlu0 %10521, %v10327
      %v10523 = vpop.permute.xlu0 %10522
      %10524 = vset.pattern.permute.xlu0 0
      %10525 = vperm.xlu0 %10524, %v10328
      %v10526 = vpop.permute.xlu0 %10525
      %10527 = vset.pattern.permute.xlu0 0
      %10528 = vperm.xlu0 %10527, %v10329
      %v10529 = vpop.permute.xlu0 %10528
      %10530 = vset.pattern.permute.xlu0 0
      %10531 = vperm.xlu0 %10530, %v10330
      %v10532 = vpop.permute.xlu0 %10531
      %10533 = vset.pattern.permute.xlu0 0
      %10534 = vperm.xlu0 %10533, %v10331
      %v10535 = vpop.permute.xlu0 %10534
      %10536 = vset.pattern.permute.xlu0 0
      %10537 = vperm.xlu0 %10536, %v10332
      %v10538 = vpop.permute.xlu0 %10537
      %10539 = vset.pattern.permute.xlu0 0
      %10540 = vperm.xlu0 %10539, %v10333
      %v10541 = vpop.permute.xlu0 %10540
      %10542 = vset.pattern.permute.xlu0 0
      %10543 = vperm.xlu0 %10542, %v10334
      %v10544 = vpop.permute.xlu0 %10543
      %10545 = vset.pattern.permute.xlu0 0
      %10546 = vperm.xlu0 %10545, %v10335
      %v10547 = vpop.permute.xlu0 %10546
      %10548 = vset.pattern.permute.xlu0 0
      %10549 = vperm.xlu0 %10548, %v10336
      %v10550 = vpop.permute.xlu0 %10549
      %10551 = vset.pattern.permute.xlu0 0
      %10552 = vperm.xlu0 %10551, %v10337
      %v10553 = vpop.permute.xlu0 %10552
      %10554 = vset.pattern.permute.xlu0 0
      %10555 = vperm.xlu0 %10554, %v10338
      %v10556 = vpop.permute.xlu0 %10555
      %10557 = vset.pattern.permute.xlu0 0
      %10558 = vperm.xlu0 %10557, %v10339
      %v10559 = vpop.permute.xlu0 %10558
      %10560 = vset.pattern.permute.xlu0 0
      %10561 = vperm.xlu0 %10560, %v10340
      %v10562 = vpop.permute.xlu0 %10561
      %10563 = vset.pattern.permute.xlu0 0
      %10564 = vperm.xlu0 %10563, %v10341
      %v10565 = vpop.permute.xlu0 %10564
      %10566 = vset.pattern.permute.xlu0 0
      %10567 = vperm.xlu0 %10566, %v10342
      %v10568 = vpop.permute.xlu0 %10567
      %10569 = vset.pattern.permute.xlu0 0
      %10570 = vperm.xlu0 %10569, %v10343
      %v10571 = vpop.permute.xlu0 %10570
      %10572 = vset.pattern.permute.xlu0 0
      %10573 = vperm.xlu0 %10572, %v10344
      %v10574 = vpop.permute.xlu0 %10573
      %10575 = vset.pattern.permute.xlu0 0
      %10576 = vperm.xlu0 %10575, %v10345
      %v10577 = vpop.permute.xlu0 %10576
      %10578 = vset.pattern.permute.xlu0 0
      %10579 = vperm.xlu0 %10578, %v10346
      %v10580 = vpop.permute.xlu0 %10579
      %10581 = vset.pattern.permute.xlu0 0
      %10582 = vperm.xlu0 %10581, %v10347
      %v10583 = vpop.permute.xlu0 %10582
      %10584 = vset.pattern.permute.xlu0 0
      %10585 = vperm.xlu0 %10584, %v10348
      %v10586 = vpop.permute.xlu0 %10585
      %10587 = vset.pattern.permute.xlu0 0
      %10588 = vperm.xlu0 %10587, %v10349
      %v10589 = vpop.permute.xlu0 %10588
      %10590 = vset.pattern.permute.xlu0 0
      %10591 = vperm.xlu0 %10590, %v10350
      %v10592 = vpop.permute.xlu0 %10591
      %10593 = vset.pattern.permute.xlu0 0
      %10594 = vperm.xlu0 %10593, %v10351
      %v10595 = vpop.permute.xlu0 %10594
      %10596 = vset.pattern.permute.xlu0 0
      %10597 = vperm.xlu0 %10596, %v10352
      %v10598 = vpop.permute.xlu0 %10597
      %10599 = vset.pattern.permute.xlu0 0
      %10600 = vperm.xlu0 %10599, %v10353
      %v10601 = vpop.permute.xlu0 %10600
      %10602 = vset.pattern.permute.xlu0 0
      %10603 = vperm.xlu0 %10602, %v10354
      %v10604 = vpop.permute.xlu0 %10603
      %10605 = vset.pattern.permute.xlu0 0
      %10606 = vperm.xlu0 %10605, %v10355
      %v10607 = vpop.permute.xlu0 %10606
      %10608 = vset.pattern.permute.xlu0 0
      %10609 = vperm.xlu0 %10608, %v10356
      %v10610 = vpop.permute.xlu0 %10609
      %10611 = vset.pattern.permute.xlu0 0
      %10612 = vperm.xlu0 %10611, %v10357
      %v10613 = vpop.permute.xlu0 %10612
      %10614 = vset.pattern.permute.xlu0 0
      %10615 = vperm.xlu0 %10614, %v10358
      %v10616 = vpop.permute.xlu0 %10615
      %10617 = vset.pattern.permute.xlu0 0
      %10618 = vperm.xlu0 %10617, %v10359
      %v10619 = vpop.permute.xlu0 %10618
      %10620 = vset.pattern.permute.xlu0 0
      %10621 = vperm.xlu0 %10620, %v10360
      %v10622 = vpop.permute.xlu0 %10621
      %10623 = vset.pattern.permute.xlu0 0
      %10624 = vperm.xlu0 %10623, %v10361
      %v10625 = vpop.permute.xlu0 %10624
      %10626 = vset.pattern.permute.xlu0 0
      %10627 = vperm.xlu0 %10626, %v10362
      %v10628 = vpop.permute.xlu0 %10627
      %10629 = vset.pattern.permute.xlu0 0
      %10630 = vperm.xlu0 %10629, %v10363
      %v10631 = vpop.permute.xlu0 %10630
      %10632 = vset.pattern.permute.xlu0 0
      %10633 = vperm.xlu0 %10632, %v10364
      %v10634 = vpop.permute.xlu0 %10633
      %10635 = vset.pattern.permute.xlu0 0
      %10636 = vperm.xlu0 %10635, %v10365
      %v10637 = vpop.permute.xlu0 %10636
      %10638 = vset.pattern.permute.xlu0 0
      %10639 = vperm.xlu0 %10638, %v10366
      %v10640 = vpop.permute.xlu0 %10639
      %10641 = vset.pattern.permute.xlu0 0
      %10642 = vperm.xlu0 %10641, %v10367
      %v10643 = vpop.permute.xlu0 %10642
      %10644 = vset.pattern.permute.xlu0 0
      %10645 = vperm.xlu0 %10644, %v10368
      %v10646 = vpop.permute.xlu0 %10645
      %10647 = vset.pattern.permute.xlu0 0
      %10648 = vperm.xlu0 %10647, %v10369
      %v10649 = vpop.permute.xlu0 %10648
      %10650 = vset.pattern.permute.xlu0 0
      %10651 = vperm.xlu0 %10650, %v10370
      %v10652 = vpop.permute.xlu0 %10651
      %10653 = vset.pattern.permute.xlu0 0
      %10654 = vperm.xlu0 %10653, %v10371
      %v10655 = vpop.permute.xlu0 %10654
      %10656 = vset.pattern.permute.xlu0 0
      %10657 = vperm.xlu0 %10656, %v10372
      %v10658 = vpop.permute.xlu0 %10657
      %10659 = vset.pattern.permute.xlu0 0
      %10660 = vperm.xlu0 %10659, %v10373
      %v10661 = vpop.permute.xlu0 %10660
      %10662 = vset.pattern.permute.xlu0 0
      %10663 = vperm.xlu0 %10662, %v10374
      %v10664 = vpop.permute.xlu0 %10663
      %10665 = vset.pattern.permute.xlu0 0
      %10666 = vperm.xlu0 %10665, %v10375
      %v10667 = vpop.permute.xlu0 %10666
      %10668 = vset.pattern.permute.xlu0 0
      %10669 = vperm.xlu0 %10668, %v10376
      %v10670 = vpop.permute.xlu0 %10669
      %10671 = vset.pattern.permute.xlu0 0
      %10672 = vperm.xlu0 %10671, %v10377
      %v10673 = vpop.permute.xlu0 %10672
      %10674 = vset.pattern.permute.xlu0 0
      %10675 = vperm.xlu0 %10674, %v10378
      %v10676 = vpop.permute.xlu0 %10675
      %10677 = vset.pattern.permute.xlu0 0
      %10678 = vperm.xlu0 %10677, %v10379
      %v10679 = vpop.permute.xlu0 %10678
      %10680 = vset.pattern.permute.xlu0 0
      %10681 = vperm.xlu0 %10680, %v10380
      %v10682 = vpop.permute.xlu0 %10681
      %10683 = vset.pattern.permute.xlu0 0
      %10684 = vperm.xlu0 %10683, %v10381
      %v10685 = vpop.permute.xlu0 %10684
      %10686 = vset.pattern.permute.xlu0 0
      %10687 = vperm.xlu0 %10686, %v10382
      %v10688 = vpop.permute.xlu0 %10687
      %10689 = vset.pattern.permute.xlu0 0
      %10690 = vperm.xlu0 %10689, %v10383
      %v10691 = vpop.permute.xlu0 %10690
      %10692 = vset.pattern.permute.xlu0 0
      %10693 = vperm.xlu0 %10692, %v10384
      %v10694 = vpop.permute.xlu0 %10693
      %10695 = vset.pattern.permute.xlu0 0
      %10696 = vperm.xlu0 %10695, %v10385
      %v10697 = vpop.permute.xlu0 %10696
      %10698 = vset.pattern.permute.xlu0 0
      %10699 = vperm.xlu0 %10698, %v10386
      %v10700 = vpop.permute.xlu0 %10699
      %10701 = vset.pattern.permute.xlu0 0
      %10702 = vperm.xlu0 %10701, %v10387
      %v10703 = vpop.permute.xlu0 %10702
      %10704 = vset.pattern.permute.xlu0 0
      %10705 = vperm.xlu0 %10704, %v10388
      %v10706 = vpop.permute.xlu0 %10705
      %10707 = vset.pattern.permute.xlu0 0
      %10708 = vperm.xlu0 %10707, %v10389
      %v10709 = vpop.permute.xlu0 %10708
      %10710 = vset.pattern.permute.xlu0 0
      %10711 = vperm.xlu0 %10710, %v10390
      %v10712 = vpop.permute.xlu0 %10711
      %10713 = vset.pattern.permute.xlu0 0
      %10714 = vperm.xlu0 %10713, %v10391
      %v10715 = vpop.permute.xlu0 %10714
      %10716 = vset.pattern.permute.xlu0 0
      %10717 = vperm.xlu0 %10716, %v10392
      %v10718 = vpop.permute.xlu0 %10717
      %10719 = vset.pattern.permute.xlu0 0
      %10720 = vperm.xlu0 %10719, %v10393
      %v10721 = vpop.permute.xlu0 %10720
      %10722 = vset.pattern.permute.xlu0 0
      %10723 = vperm.xlu0 %10722, %v10394
      %v10724 = vpop.permute.xlu0 %10723
      %10725 = vset.pattern.permute.xlu0 0
      %10726 = vperm.xlu0 %10725, %v10395
      %v10727 = vpop.permute.xlu0 %10726
      %10728 = vset.pattern.permute.xlu0 0
      %10729 = vperm.xlu0 %10728, %v10396
      %v10730 = vpop.permute.xlu0 %10729
      %10731 = vset.pattern.permute.xlu0 0
      %10732 = vperm.xlu0 %10731, %v10397
      %v10733 = vpop.permute.xlu0 %10732
      %10734 = vset.pattern.permute.xlu0 0
      %10735 = vperm.xlu0 %10734, %v10398
      %v10736 = vpop.permute.xlu0 %10735
      %10737 = vset.pattern.permute.xlu0 0
      %10738 = vperm.xlu0 %10737, %v10399
      %v10739 = vpop.permute.xlu0 %10738
      %10740 = vset.pattern.permute.xlu0 0
      %10741 = vperm.xlu0 %10740, %v10400
      %v10742 = vpop.permute.xlu0 %10741
      %10743 = vset.pattern.permute.xlu0 0
      %10744 = vperm.xlu0 %10743, %v10401
      %v10745 = vpop.permute.xlu0 %10744
      %10746 = vset.pattern.permute.xlu0 0
      %10747 = vperm.xlu0 %10746, %v10402
      %v10748 = vpop.permute.xlu0 %10747
      %10749 = vset.pattern.permute.xlu0 0
      %10750 = vperm.xlu0 %10749, %v10403
      %v10751 = vpop.permute.xlu0 %10750
      %10752 = vset.pattern.permute.xlu0 0
      %10753 = vperm.xlu0 %10752, %v10404
      %v10754 = vpop.permute.xlu0 %10753
      %10755 = vset.pattern.permute.xlu0 0
      %10756 = vperm.xlu0 %10755, %v10405
      %v10757 = vpop.permute.xlu0 %10756
      %10758 = vset.pattern.permute.xlu0 0
      %10759 = vperm.xlu0 %10758, %v10406
      %v10760 = vpop.permute.xlu0 %10759
      %10761 = vset.pattern.permute.xlu0 0
      %10762 = vperm.xlu0 %10761, %v10407
      %v10763 = vpop.permute.xlu0 %10762
      %10764 = vset.pattern.permute.xlu0 0
      %10765 = vperm.xlu0 %10764, %v10408
      %v10766 = vpop.permute.xlu0 %10765
      %10767 = vset.pattern.permute.xlu0 0
      %10768 = vperm.xlu0 %10767, %v10409
      %v10769 = vpop.permute.xlu0 %10768
      %10770 = vset.pattern.permute.xlu0 0
      %10771 = vperm.xlu0 %10770, %v10410
      %v10772 = vpop.permute.xlu0 %10771
      %10773 = vset.pattern.permute.xlu0 0
      %10774 = vperm.xlu0 %10773, %v10411
      %v10775 = vpop.permute.xlu0 %10774
      %10776 = vset.pattern.permute.xlu0 0
      %10777 = vperm.xlu0 %10776, %v10412
      %v10778 = vpop.permute.xlu0 %10777
      %10779 = vset.pattern.permute.xlu0 0
      %10780 = vperm.xlu0 %10779, %v10413
      %v10781 = vpop.permute.xlu0 %10780
      %10782 = vset.pattern.permute.xlu0 0
      %10783 = vperm.xlu0 %10782, %v10414
      %v10784 = vpop.permute.xlu0 %10783
      %10785 = vset.pattern.permute.xlu0 0
      %10786 = vperm.xlu0 %10785, %v10415
      %v10787 = vpop.permute.xlu0 %10786
      %10788 = vset.pattern.permute.xlu0 0
      %10789 = vperm.xlu0 %10788, %v10416
      %v10790 = vpop.permute.xlu0 %10789
      %10791 = vset.pattern.permute.xlu0 0
      %10792 = vperm.xlu0 %10791, %v10417
      %v10793 = vpop.permute.xlu0 %10792
      %10794 = vset.pattern.permute.xlu0 0
      %10795 = vperm.xlu0 %10794, %v10418
      %v10796 = vpop.permute.xlu0 %10795
      %10797 = vset.pattern.permute.xlu0 0
      %10798 = vperm.xlu0 %10797, %v10419
      %v10799 = vpop.permute.xlu0 %10798
      %10800 = vset.pattern.permute.xlu0 0
      %10801 = vperm.xlu0 %10800, %v10420
      %v10802 = vpop.permute.xlu0 %10801
      %10803 = vset.pattern.permute.xlu0 0
      %10804 = vperm.xlu0 %10803, %v10421
      %v10805 = vpop.permute.xlu0 %10804
      %vm10806 = vcmp.eq.s32.totalorder %v10424, 1
      %vm10807 = vcmp.eq.s32.totalorder %v10427, 1
      %vm10808 = vcmp.eq.s32.totalorder %v10430, 1
      %vm10809 = vcmp.eq.s32.totalorder %v10433, 1
      %vm10810 = vcmp.eq.s32.totalorder %v10436, 1
      %vm10811 = vcmp.eq.s32.totalorder %v10439, 1
      %vm10812 = vcmp.eq.s32.totalorder %v10442, 1
      %vm10813 = vcmp.eq.s32.totalorder %v10445, 1
      %vm10814 = vcmp.eq.s32.totalorder %v10448, 1
      %vm10815 = vcmp.eq.s32.totalorder %v10451, 1
      %vm10816 = vcmp.eq.s32.totalorder %v10454, 1
      %vm10817 = vcmp.eq.s32.totalorder %v10457, 1
      %vm10818 = vcmp.eq.s32.totalorder %v10460, 1
      %vm10819 = vcmp.eq.s32.totalorder %v10463, 1
      %vm10820 = vcmp.eq.s32.totalorder %v10466, 1
      %vm10821 = vcmp.eq.s32.totalorder %v10469, 1
      %vm10822 = vcmp.eq.s32.totalorder %v10472, 1
      %vm10823 = vcmp.eq.s32.totalorder %v10475, 1
      %vm10824 = vcmp.eq.s32.totalorder %v10478, 1
      %vm10825 = vcmp.eq.s32.totalorder %v10481, 1
      %vm10826 = vcmp.eq.s32.totalorder %v10484, 1
      %vm10827 = vcmp.eq.s32.totalorder %v10487, 1
      %vm10828 = vcmp.eq.s32.totalorder %v10490, 1
      %vm10829 = vcmp.eq.s32.totalorder %v10493, 1
      %vm10830 = vcmp.eq.s32.totalorder %v10496, 1
      %vm10831 = vcmp.eq.s32.totalorder %v10499, 1
      %vm10832 = vcmp.eq.s32.totalorder %v10502, 1
      %vm10833 = vcmp.eq.s32.totalorder %v10505, 1
      %vm10834 = vcmp.eq.s32.totalorder %v10508, 1
      %vm10835 = vcmp.eq.s32.totalorder %v10511, 1
      %vm10836 = vcmp.eq.s32.totalorder %v10514, 1
      %vm10837 = vcmp.eq.s32.totalorder %v10517, 1
      %vm10838 = vcmp.eq.s32.totalorder %v10520, 1
      %vm10839 = vcmp.eq.s32.totalorder %v10523, 1
      %vm10840 = vcmp.eq.s32.totalorder %v10526, 1
      %vm10841 = vcmp.eq.s32.totalorder %v10529, 1
      %vm10842 = vcmp.eq.s32.totalorder %v10532, 1
      %vm10843 = vcmp.eq.s32.totalorder %v10535, 1
      %vm10844 = vcmp.eq.s32.totalorder %v10538, 1
      %vm10845 = vcmp.eq.s32.totalorder %v10541, 1
      %vm10846 = vcmp.eq.s32.totalorder %v10544, 1
      %vm10847 = vcmp.eq.s32.totalorder %v10547, 1
      %vm10848 = vcmp.eq.s32.totalorder %v10550, 1
      %vm10849 = vcmp.eq.s32.totalorder %v10553, 1
      %vm10850 = vcmp.eq.s32.totalorder %v10556, 1
      %vm10851 = vcmp.eq.s32.totalorder %v10559, 1
      %vm10852 = vcmp.eq.s32.totalorder %v10562, 1
      %vm10853 = vcmp.eq.s32.totalorder %v10565, 1
      %vm10854 = vcmp.eq.s32.totalorder %v10568, 1
      %vm10855 = vcmp.eq.s32.totalorder %v10571, 1
      %vm10856 = vcmp.eq.s32.totalorder %v10574, 1
      %vm10857 = vcmp.eq.s32.totalorder %v10577, 1
      %vm10858 = vcmp.eq.s32.totalorder %v10580, 1
      %vm10859 = vcmp.eq.s32.totalorder %v10583, 1
      %vm10860 = vcmp.eq.s32.totalorder %v10586, 1
      %vm10861 = vcmp.eq.s32.totalorder %v10589, 1
      %vm10862 = vcmp.eq.s32.totalorder %v10592, 1
      %vm10863 = vcmp.eq.s32.totalorder %v10595, 1
      %vm10864 = vcmp.eq.s32.totalorder %v10598, 1
      %vm10865 = vcmp.eq.s32.totalorder %v10601, 1
      %vm10866 = vcmp.eq.s32.totalorder %v10604, 1
      %vm10867 = vcmp.eq.s32.totalorder %v10607, 1
      %vm10868 = vcmp.eq.s32.totalorder %v10610, 1
      %vm10869 = vcmp.eq.s32.totalorder %v10613, 1
      %vm10870 = vcmp.eq.s32.totalorder %v10616, 1
      %vm10871 = vcmp.eq.s32.totalorder %v10619, 1
      %vm10872 = vcmp.eq.s32.totalorder %v10622, 1
      %vm10873 = vcmp.eq.s32.totalorder %v10625, 1
      %vm10874 = vcmp.eq.s32.totalorder %v10628, 1
      %vm10875 = vcmp.eq.s32.totalorder %v10631, 1
      %vm10876 = vcmp.eq.s32.totalorder %v10634, 1
      %vm10877 = vcmp.eq.s32.totalorder %v10637, 1
      %vm10878 = vcmp.eq.s32.totalorder %v10640, 1
      %vm10879 = vcmp.eq.s32.totalorder %v10643, 1
      %vm10880 = vcmp.eq.s32.totalorder %v10646, 1
      %vm10881 = vcmp.eq.s32.totalorder %v10649, 1
      %vm10882 = vcmp.eq.s32.totalorder %v10652, 1
      %vm10883 = vcmp.eq.s32.totalorder %v10655, 1
      %vm10884 = vcmp.eq.s32.totalorder %v10658, 1
      %vm10885 = vcmp.eq.s32.totalorder %v10661, 1
      %vm10886 = vcmp.eq.s32.totalorder %v10664, 1
      %vm10887 = vcmp.eq.s32.totalorder %v10667, 1
      %vm10888 = vcmp.eq.s32.totalorder %v10670, 1
      %vm10889 = vcmp.eq.s32.totalorder %v10673, 1
      %vm10890 = vcmp.eq.s32.totalorder %v10676, 1
      %vm10891 = vcmp.eq.s32.totalorder %v10679, 1
      %vm10892 = vcmp.eq.s32.totalorder %v10682, 1
      %vm10893 = vcmp.eq.s32.totalorder %v10685, 1
      %vm10894 = vcmp.eq.s32.totalorder %v10688, 1
      %vm10895 = vcmp.eq.s32.totalorder %v10691, 1
      %vm10896 = vcmp.eq.s32.totalorder %v10694, 1
      %vm10897 = vcmp.eq.s32.totalorder %v10697, 1
      %vm10898 = vcmp.eq.s32.totalorder %v10700, 1
      %vm10899 = vcmp.eq.s32.totalorder %v10703, 1
      %vm10900 = vcmp.eq.s32.totalorder %v10706, 1
      %vm10901 = vcmp.eq.s32.totalorder %v10709, 1
      %vm10902 = vcmp.eq.s32.totalorder %v10712, 1
      %vm10903 = vcmp.eq.s32.totalorder %v10715, 1
      %vm10904 = vcmp.eq.s32.totalorder %v10718, 1
      %vm10905 = vcmp.eq.s32.totalorder %v10721, 1
      %vm10906 = vcmp.eq.s32.totalorder %v10724, 1
      %vm10907 = vcmp.eq.s32.totalorder %v10727, 1
      %vm10908 = vcmp.eq.s32.totalorder %v10730, 1
      %vm10909 = vcmp.eq.s32.totalorder %v10733, 1
      %vm10910 = vcmp.eq.s32.totalorder %v10736, 1
      %vm10911 = vcmp.eq.s32.totalorder %v10739, 1
      %vm10912 = vcmp.eq.s32.totalorder %v10742, 1
      %vm10913 = vcmp.eq.s32.totalorder %v10745, 1
      %vm10914 = vcmp.eq.s32.totalorder %v10748, 1
      %vm10915 = vcmp.eq.s32.totalorder %v10751, 1
      %vm10916 = vcmp.eq.s32.totalorder %v10754, 1
      %vm10917 = vcmp.eq.s32.totalorder %v10757, 1
      %vm10918 = vcmp.eq.s32.totalorder %v10760, 1
      %vm10919 = vcmp.eq.s32.totalorder %v10763, 1
      %vm10920 = vcmp.eq.s32.totalorder %v10766, 1
      %vm10921 = vcmp.eq.s32.totalorder %v10769, 1
      %vm10922 = vcmp.eq.s32.totalorder %v10772, 1
      %vm10923 = vcmp.eq.s32.totalorder %v10775, 1
      %vm10924 = vcmp.eq.s32.totalorder %v10778, 1
      %vm10925 = vcmp.eq.s32.totalorder %v10781, 1
      %vm10926 = vcmp.eq.s32.totalorder %v10784, 1
      %vm10927 = vcmp.eq.s32.totalorder %v10787, 1
      %vm10928 = vcmp.eq.s32.totalorder %v10790, 1
      %vm10929 = vcmp.eq.s32.totalorder %v10793, 1
      %vm10930 = vcmp.eq.s32.totalorder %v10796, 1
      %vm10931 = vcmp.eq.s32.totalorder %v10799, 1
      %vm10932 = vcmp.eq.s32.totalorder %v10802, 1
      %vm10933 = vcmp.eq.s32.totalorder %v10805, 1
      %v10934 = vsel %vm10806, %v6823, 0.0
      %v10935 = vsel %vm10807, %v6824, 0.0
      %v10936 = vsel %vm10808, %v6825, 0.0
      %v10937 = vsel %vm10809, %v6826, 0.0
      %v10938 = vsel %vm10810, %v6827, 0.0
      %v10939 = vsel %vm10811, %v6828, 0.0
      %v10940 = vsel %vm10812, %v6829, 0.0
      %v10941 = vsel %vm10813, %v6830, 0.0
      %v10942 = vsel %vm10814, %v6831, 0.0
      %v10943 = vsel %vm10815, %v6832, 0.0
      %v10944 = vsel %vm10816, %v6833, 0.0
      %v10945 = vsel %vm10817, %v6834, 0.0
      %v10946 = vsel %vm10818, %v6835, 0.0
      %v10947 = vsel %vm10819, %v6836, 0.0
      %v10948 = vsel %vm10820, %v6837, 0.0
      %v10949 = vsel %vm10821, %v6838, 0.0
      %v10950 = vsel %vm10822, %v6839, 0.0
      %v10951 = vsel %vm10823, %v6840, 0.0
      %v10952 = vsel %vm10824, %v6841, 0.0
      %v10953 = vsel %vm10825, %v6842, 0.0
      %v10954 = vsel %vm10826, %v6843, 0.0
      %v10955 = vsel %vm10827, %v6844, 0.0
      %v10956 = vsel %vm10828, %v6845, 0.0
      %v10957 = vsel %vm10829, %v6846, 0.0
      %v10958 = vsel %vm10830, %v6847, 0.0
      %v10959 = vsel %vm10831, %v6848, 0.0
      %v10960 = vsel %vm10832, %v6849, 0.0
      %v10961 = vsel %vm10833, %v6850, 0.0
      %v10962 = vsel %vm10834, %v6851, 0.0
      %v10963 = vsel %vm10835, %v6852, 0.0
      %v10964 = vsel %vm10836, %v6853, 0.0
      %v10965 = vsel %vm10837, %v6854, 0.0
      %v10966 = vsel %vm10838, %v6855, 0.0
      %v10967 = vsel %vm10839, %v6856, 0.0
      %v10968 = vsel %vm10840, %v6857, 0.0
      %v10969 = vsel %vm10841, %v6858, 0.0
      %v10970 = vsel %vm10842, %v6859, 0.0
      %v10971 = vsel %vm10843, %v6860, 0.0
      %v10972 = vsel %vm10844, %v6861, 0.0
      %v10973 = vsel %vm10845, %v6862, 0.0
      %v10974 = vsel %vm10846, %v6863, 0.0
      %v10975 = vsel %vm10847, %v6864, 0.0
      %v10976 = vsel %vm10848, %v6865, 0.0
      %v10977 = vsel %vm10849, %v6866, 0.0
      %v10978 = vsel %vm10850, %v6867, 0.0
      %v10979 = vsel %vm10851, %v6868, 0.0
      %v10980 = vsel %vm10852, %v6869, 0.0
      %v10981 = vsel %vm10853, %v6870, 0.0
      %v10982 = vsel %vm10854, %v6871, 0.0
      %v10983 = vsel %vm10855, %v6872, 0.0
      %v10984 = vsel %vm10856, %v6873, 0.0
      %v10985 = vsel %vm10857, %v6874, 0.0
      %v10986 = vsel %vm10858, %v6875, 0.0
      %v10987 = vsel %vm10859, %v6876, 0.0
      %v10988 = vsel %vm10860, %v6877, 0.0
      %v10989 = vsel %vm10861, %v6878, 0.0
      %v10990 = vsel %vm10862, %v6879, 0.0
      %v10991 = vsel %vm10863, %v6880, 0.0
      %v10992 = vsel %vm10864, %v6881, 0.0
      %v10993 = vsel %vm10865, %v6882, 0.0
      %v10994 = vsel %vm10866, %v6883, 0.0
      %v10995 = vsel %vm10867, %v6884, 0.0
      %v10996 = vsel %vm10868, %v6885, 0.0
      %v10997 = vsel %vm10869, %v6886, 0.0
      %v10998 = vsel %vm10870, %v6887, 0.0
      %v10999 = vsel %vm10871, %v6888, 0.0
      %v11000 = vsel %vm10872, %v6889, 0.0
      %v11001 = vsel %vm10873, %v6890, 0.0
      %v11002 = vsel %vm10874, %v6891, 0.0
      %v11003 = vsel %vm10875, %v6892, 0.0
      %v11004 = vsel %vm10876, %v6893, 0.0
      %v11005 = vsel %vm10877, %v6894, 0.0
      %v11006 = vsel %vm10878, %v6895, 0.0
      %v11007 = vsel %vm10879, %v6896, 0.0
      %v11008 = vsel %vm10880, %v6897, 0.0
      %v11009 = vsel %vm10881, %v6898, 0.0
      %v11010 = vsel %vm10882, %v6899, 0.0
      %v11011 = vsel %vm10883, %v6900, 0.0
      %v11012 = vsel %vm10884, %v6901, 0.0
      %v11013 = vsel %vm10885, %v6902, 0.0
      %v11014 = vsel %vm10886, %v6903, 0.0
      %v11015 = vsel %vm10887, %v6904, 0.0
      %v11016 = vsel %vm10888, %v6905, 0.0
      %v11017 = vsel %vm10889, %v6906, 0.0
      %v11018 = vsel %vm10890, %v6907, 0.0
      %v11019 = vsel %vm10891, %v6908, 0.0
      %v11020 = vsel %vm10892, %v6909, 0.0
      %v11021 = vsel %vm10893, %v6910, 0.0
      %v11022 = vsel %vm10894, %v6911, 0.0
      %v11023 = vsel %vm10895, %v6912, 0.0
      %v11024 = vsel %vm10896, %v6913, 0.0
      %v11025 = vsel %vm10897, %v6914, 0.0
      %v11026 = vsel %vm10898, %v6915, 0.0
      %v11027 = vsel %vm10899, %v6916, 0.0
      %v11028 = vsel %vm10900, %v6917, 0.0
      %v11029 = vsel %vm10901, %v6918, 0.0
      %v11030 = vsel %vm10902, %v6919, 0.0
      %v11031 = vsel %vm10903, %v6920, 0.0
      %v11032 = vsel %vm10904, %v6921, 0.0
      %v11033 = vsel %vm10905, %v6922, 0.0
      %v11034 = vsel %vm10906, %v6923, 0.0
      %v11035 = vsel %vm10907, %v6924, 0.0
      %v11036 = vsel %vm10908, %v6925, 0.0
      %v11037 = vsel %vm10909, %v6926, 0.0
      %v11038 = vsel %vm10910, %v6927, 0.0
      %v11039 = vsel %vm10911, %v6928, 0.0
      %v11040 = vsel %vm10912, %v6929, 0.0
      %v11041 = vsel %vm10913, %v6930, 0.0
      %v11042 = vsel %vm10914, %v6931, 0.0
      %v11043 = vsel %vm10915, %v6932, 0.0
      %v11044 = vsel %vm10916, %v6933, 0.0
      %v11045 = vsel %vm10917, %v6934, 0.0
      %v11046 = vsel %vm10918, %v6935, 0.0
      %v11047 = vsel %vm10919, %v6936, 0.0
      %v11048 = vsel %vm10920, %v6937, 0.0
      %v11049 = vsel %vm10921, %v6938, 0.0
      %v11050 = vsel %vm10922, %v6939, 0.0
      %v11051 = vsel %vm10923, %v6940, 0.0
      %v11052 = vsel %vm10924, %v6941, 0.0
      %v11053 = vsel %vm10925, %v6942, 0.0
      %v11054 = vsel %vm10926, %v6943, 0.0
      %v11055 = vsel %vm10927, %v6944, 0.0
      %v11056 = vsel %vm10928, %v6945, 0.0
      %v11057 = vsel %vm10929, %v6946, 0.0
      %v11058 = vsel %vm10930, %v6947, 0.0
      %v11059 = vsel %vm10931, %v6948, 0.0
      %v11060 = vsel %vm10932, %v6949, 0.0
      %v11061 = vsel %vm10933, %v6950, 0.0
      %v11062 = vadd.f32 %v10934, %v10935
      %v11063 = vadd.f32 %v11062, %v10936
      %v11064 = vadd.f32 %v11063, %v10937
      %v11065 = vadd.f32 %v11064, %v10938
      %v11066 = vadd.f32 %v11065, %v10939
      %v11067 = vadd.f32 %v11066, %v10940
      %v11068 = vadd.f32 %v11067, %v10941
      %v11069 = vadd.f32 %v11068, %v10942
      %v11070 = vadd.f32 %v11069, %v10943
      %v11071 = vadd.f32 %v11070, %v10944
      %v11072 = vadd.f32 %v11071, %v10945
      %v11073 = vadd.f32 %v11072, %v10946
      %v11074 = vadd.f32 %v11073, %v10947
      %v11075 = vadd.f32 %v11074, %v10948
      %v11076 = vadd.f32 %v11075, %v10949
      %v11077 = vadd.f32 %v11076, %v10950
      %v11078 = vadd.f32 %v11077, %v10951
      %v11079 = vadd.f32 %v11078, %v10952
      %v11080 = vadd.f32 %v11079, %v10953
      %v11081 = vadd.f32 %v11080, %v10954
      %v11082 = vadd.f32 %v11081, %v10955
      %v11083 = vadd.f32 %v11082, %v10956
      %v11084 = vadd.f32 %v11083, %v10957
      %v11085 = vadd.f32 %v11084, %v10958
      %v11086 = vadd.f32 %v11085, %v10959
      %v11087 = vadd.f32 %v11086, %v10960
      %v11088 = vadd.f32 %v11087, %v10961
      %v11089 = vadd.f32 %v11088, %v10962
      %v11090 = vadd.f32 %v11089, %v10963
      %v11091 = vadd.f32 %v11090, %v10964
      %v11092 = vadd.f32 %v11091, %v10965
      %v11093 = vadd.f32 %v11092, %v10966
      %v11094 = vadd.f32 %v11093, %v10967
      %v11095 = vadd.f32 %v11094, %v10968
      %v11096 = vadd.f32 %v11095, %v10969
      %v11097 = vadd.f32 %v11096, %v10970
      %v11098 = vadd.f32 %v11097, %v10971
      %v11099 = vadd.f32 %v11098, %v10972
      %v11100 = vadd.f32 %v11099, %v10973
      %v11101 = vadd.f32 %v11100, %v10974
      %v11102 = vadd.f32 %v11101, %v10975
      %v11103 = vadd.f32 %v11102, %v10976
      %v11104 = vadd.f32 %v11103, %v10977
      %v11105 = vadd.f32 %v11104, %v10978
      %v11106 = vadd.f32 %v11105, %v10979
      %v11107 = vadd.f32 %v11106, %v10980
      %v11108 = vadd.f32 %v11107, %v10981
      %v11109 = vadd.f32 %v11108, %v10982
      %v11110 = vadd.f32 %v11109, %v10983
      %v11111 = vadd.f32 %v11110, %v10984
      %v11112 = vadd.f32 %v11111, %v10985
      %v11113 = vadd.f32 %v11112, %v10986
      %v11114 = vadd.f32 %v11113, %v10987
      %v11115 = vadd.f32 %v11114, %v10988
      %v11116 = vadd.f32 %v11115, %v10989
      %v11117 = vadd.f32 %v11116, %v10990
      %v11118 = vadd.f32 %v11117, %v10991
      %v11119 = vadd.f32 %v11118, %v10992
      %v11120 = vadd.f32 %v11119, %v10993
      %v11121 = vadd.f32 %v11120, %v10994
      %v11122 = vadd.f32 %v11121, %v10995
      %v11123 = vadd.f32 %v11122, %v10996
      %v11124 = vadd.f32 %v11123, %v10997
      %v11125 = vadd.f32 %v11124, %v10998
      %v11126 = vadd.f32 %v11125, %v10999
      %v11127 = vadd.f32 %v11126, %v11000
      %v11128 = vadd.f32 %v11127, %v11001
      %v11129 = vadd.f32 %v11128, %v11002
      %v11130 = vadd.f32 %v11129, %v11003
      %v11131 = vadd.f32 %v11130, %v11004
      %v11132 = vadd.f32 %v11131, %v11005
      %v11133 = vadd.f32 %v11132, %v11006
      %v11134 = vadd.f32 %v11133, %v11007
      %v11135 = vadd.f32 %v11134, %v11008
      %v11136 = vadd.f32 %v11135, %v11009
      %v11137 = vadd.f32 %v11136, %v11010
      %v11138 = vadd.f32 %v11137, %v11011
      %v11139 = vadd.f32 %v11138, %v11012
      %v11140 = vadd.f32 %v11139, %v11013
      %v11141 = vadd.f32 %v11140, %v11014
      %v11142 = vadd.f32 %v11141, %v11015
      %v11143 = vadd.f32 %v11142, %v11016
      %v11144 = vadd.f32 %v11143, %v11017
      %v11145 = vadd.f32 %v11144, %v11018
      %v11146 = vadd.f32 %v11145, %v11019
      %v11147 = vadd.f32 %v11146, %v11020
      %v11148 = vadd.f32 %v11147, %v11021
      %v11149 = vadd.f32 %v11148, %v11022
      %v11150 = vadd.f32 %v11149, %v11023
      %v11151 = vadd.f32 %v11150, %v11024
      %v11152 = vadd.f32 %v11151, %v11025
      %v11153 = vadd.f32 %v11152, %v11026
      %v11154 = vadd.f32 %v11153, %v11027
      %v11155 = vadd.f32 %v11154, %v11028
      %v11156 = vadd.f32 %v11155, %v11029
      %v11157 = vadd.f32 %v11156, %v11030
      %v11158 = vadd.f32 %v11157, %v11031
      %v11159 = vadd.f32 %v11158, %v11032
      %v11160 = vadd.f32 %v11159, %v11033
      %v11161 = vadd.f32 %v11160, %v11034
      %v11162 = vadd.f32 %v11161, %v11035
      %v11163 = vadd.f32 %v11162, %v11036
      %v11164 = vadd.f32 %v11163, %v11037
      %v11165 = vadd.f32 %v11164, %v11038
      %v11166 = vadd.f32 %v11165, %v11039
      %v11167 = vadd.f32 %v11166, %v11040
      %v11168 = vadd.f32 %v11167, %v11041
      %v11169 = vadd.f32 %v11168, %v11042
      %v11170 = vadd.f32 %v11169, %v11043
      %v11171 = vadd.f32 %v11170, %v11044
      %v11172 = vadd.f32 %v11171, %v11045
      %v11173 = vadd.f32 %v11172, %v11046
      %v11174 = vadd.f32 %v11173, %v11047
      %v11175 = vadd.f32 %v11174, %v11048
      %v11176 = vadd.f32 %v11175, %v11049
      %v11177 = vadd.f32 %v11176, %v11050
      %v11178 = vadd.f32 %v11177, %v11051
      %v11179 = vadd.f32 %v11178, %v11052
      %v11180 = vadd.f32 %v11179, %v11053
      %v11181 = vadd.f32 %v11180, %v11054
      %v11182 = vadd.f32 %v11181, %v11055
      %v11183 = vadd.f32 %v11182, %v11056
      %v11184 = vadd.f32 %v11183, %v11057
      %v11185 = vadd.f32 %v11184, %v11058
      %v11186 = vadd.f32 %v11185, %v11059
      %v11187 = vadd.f32 %v11186, %v11060
      %v11188 = vadd.f32 %v11187, %v11061
      %v11189 = vrot.slane %v11188, 4
      %v11190 = vadd.f32 %v11188, %v11189
      %v11191 = vrot.slane %v11190, 2
      %v11192 = vadd.f32 %v11190, %v11191
      %v11193 = vrot.slane %v11192, 1
      %v11194 = vadd.f32 %v11192, %v11193
      %vm11195 = vcmp.eq.s32.totalorder %v6951, 4
      %vm11196 = vcmp.eq.s32.totalorder %v6952, 4
      %vm11197 = vcmp.eq.s32.totalorder %v6953, 4
      %vm11198 = vcmp.eq.s32.totalorder %v6954, 4
      %vm11199 = vcmp.eq.s32.totalorder %v6955, 4
      %vm11200 = vcmp.eq.s32.totalorder %v6956, 4
      %vm11201 = vcmp.eq.s32.totalorder %v6957, 4
      %vm11202 = vcmp.eq.s32.totalorder %v6958, 4
      %vm11203 = vcmp.eq.s32.totalorder %v6959, 4
      %vm11204 = vcmp.eq.s32.totalorder %v6960, 4
      %vm11205 = vcmp.eq.s32.totalorder %v6961, 4
      %vm11206 = vcmp.eq.s32.totalorder %v6962, 4
      %vm11207 = vcmp.eq.s32.totalorder %v6963, 4
      %vm11208 = vcmp.eq.s32.totalorder %v6964, 4
      %vm11209 = vcmp.eq.s32.totalorder %v6965, 4
      %vm11210 = vcmp.eq.s32.totalorder %v6966, 4
      %vm11211 = vcmp.eq.s32.totalorder %v6967, 4
      %vm11212 = vcmp.eq.s32.totalorder %v6968, 4
      %vm11213 = vcmp.eq.s32.totalorder %v6969, 4
      %vm11214 = vcmp.eq.s32.totalorder %v6970, 4
      %vm11215 = vcmp.eq.s32.totalorder %v6971, 4
      %vm11216 = vcmp.eq.s32.totalorder %v6972, 4
      %vm11217 = vcmp.eq.s32.totalorder %v6973, 4
      %vm11218 = vcmp.eq.s32.totalorder %v6974, 4
      %vm11219 = vcmp.eq.s32.totalorder %v6975, 4
      %vm11220 = vcmp.eq.s32.totalorder %v6976, 4
      %vm11221 = vcmp.eq.s32.totalorder %v6977, 4
      %vm11222 = vcmp.eq.s32.totalorder %v6978, 4
      %vm11223 = vcmp.eq.s32.totalorder %v6979, 4
      %vm11224 = vcmp.eq.s32.totalorder %v6980, 4
      %vm11225 = vcmp.eq.s32.totalorder %v6981, 4
      %vm11226 = vcmp.eq.s32.totalorder %v6982, 4
      %vm11227 = vcmp.eq.s32.totalorder %v6983, 4
      %vm11228 = vcmp.eq.s32.totalorder %v6984, 4
      %vm11229 = vcmp.eq.s32.totalorder %v6985, 4
      %vm11230 = vcmp.eq.s32.totalorder %v6986, 4
      %vm11231 = vcmp.eq.s32.totalorder %v6987, 4
      %vm11232 = vcmp.eq.s32.totalorder %v6988, 4
      %vm11233 = vcmp.eq.s32.totalorder %v6989, 4
      %vm11234 = vcmp.eq.s32.totalorder %v6990, 4
      %vm11235 = vcmp.eq.s32.totalorder %v6991, 4
      %vm11236 = vcmp.eq.s32.totalorder %v6992, 4
      %vm11237 = vcmp.eq.s32.totalorder %v6993, 4
      %vm11238 = vcmp.eq.s32.totalorder %v6994, 4
      %vm11239 = vcmp.eq.s32.totalorder %v6995, 4
      %vm11240 = vcmp.eq.s32.totalorder %v6996, 4
      %vm11241 = vcmp.eq.s32.totalorder %v6997, 4
      %vm11242 = vcmp.eq.s32.totalorder %v6998, 4
      %vm11243 = vcmp.eq.s32.totalorder %v6999, 4
      %vm11244 = vcmp.eq.s32.totalorder %v7000, 4
      %vm11245 = vcmp.eq.s32.totalorder %v7001, 4
      %vm11246 = vcmp.eq.s32.totalorder %v7002, 4
      %vm11247 = vcmp.eq.s32.totalorder %v7003, 4
      %vm11248 = vcmp.eq.s32.totalorder %v7004, 4
      %vm11249 = vcmp.eq.s32.totalorder %v7005, 4
      %vm11250 = vcmp.eq.s32.totalorder %v7006, 4
      %vm11251 = vcmp.eq.s32.totalorder %v7007, 4
      %vm11252 = vcmp.eq.s32.totalorder %v7008, 4
      %vm11253 = vcmp.eq.s32.totalorder %v7009, 4
      %vm11254 = vcmp.eq.s32.totalorder %v7010, 4
      %vm11255 = vcmp.eq.s32.totalorder %v7011, 4
      %vm11256 = vcmp.eq.s32.totalorder %v7012, 4
      %vm11257 = vcmp.eq.s32.totalorder %v7013, 4
      %vm11258 = vcmp.eq.s32.totalorder %v7014, 4
      %vm11259 = vcmp.eq.s32.totalorder %v7015, 4
      %vm11260 = vcmp.eq.s32.totalorder %v7016, 4
      %vm11261 = vcmp.eq.s32.totalorder %v7017, 4
      %vm11262 = vcmp.eq.s32.totalorder %v7018, 4
      %vm11263 = vcmp.eq.s32.totalorder %v7019, 4
      %vm11264 = vcmp.eq.s32.totalorder %v7020, 4
      %vm11265 = vcmp.eq.s32.totalorder %v7021, 4
      %vm11266 = vcmp.eq.s32.totalorder %v7022, 4
      %vm11267 = vcmp.eq.s32.totalorder %v7023, 4
      %vm11268 = vcmp.eq.s32.totalorder %v7024, 4
      %vm11269 = vcmp.eq.s32.totalorder %v7025, 4
      %vm11270 = vcmp.eq.s32.totalorder %v7026, 4
      %vm11271 = vcmp.eq.s32.totalorder %v7027, 4
      %vm11272 = vcmp.eq.s32.totalorder %v7028, 4
      %vm11273 = vcmp.eq.s32.totalorder %v7029, 4
      %vm11274 = vcmp.eq.s32.totalorder %v7030, 4
      %vm11275 = vcmp.eq.s32.totalorder %v7031, 4
      %vm11276 = vcmp.eq.s32.totalorder %v7032, 4
      %vm11277 = vcmp.eq.s32.totalorder %v7033, 4
      %vm11278 = vcmp.eq.s32.totalorder %v7034, 4
      %vm11279 = vcmp.eq.s32.totalorder %v7035, 4
      %vm11280 = vcmp.eq.s32.totalorder %v7036, 4
      %vm11281 = vcmp.eq.s32.totalorder %v7037, 4
      %vm11282 = vcmp.eq.s32.totalorder %v7038, 4
      %vm11283 = vcmp.eq.s32.totalorder %v7039, 4
      %vm11284 = vcmp.eq.s32.totalorder %v7040, 4
      %vm11285 = vcmp.eq.s32.totalorder %v7041, 4
      %vm11286 = vcmp.eq.s32.totalorder %v7042, 4
      %vm11287 = vcmp.eq.s32.totalorder %v7043, 4
      %vm11288 = vcmp.eq.s32.totalorder %v7044, 4
      %vm11289 = vcmp.eq.s32.totalorder %v7045, 4
      %vm11290 = vcmp.eq.s32.totalorder %v7046, 4
      %vm11291 = vcmp.eq.s32.totalorder %v7047, 4
      %vm11292 = vcmp.eq.s32.totalorder %v7048, 4
      %vm11293 = vcmp.eq.s32.totalorder %v7049, 4
      %vm11294 = vcmp.eq.s32.totalorder %v7050, 4
      %vm11295 = vcmp.eq.s32.totalorder %v7051, 4
      %vm11296 = vcmp.eq.s32.totalorder %v7052, 4
      %vm11297 = vcmp.eq.s32.totalorder %v7053, 4
      %vm11298 = vcmp.eq.s32.totalorder %v7054, 4
      %vm11299 = vcmp.eq.s32.totalorder %v7055, 4
      %vm11300 = vcmp.eq.s32.totalorder %v7056, 4
      %vm11301 = vcmp.eq.s32.totalorder %v7057, 4
      %vm11302 = vcmp.eq.s32.totalorder %v7058, 4
      %vm11303 = vcmp.eq.s32.totalorder %v7059, 4
      %vm11304 = vcmp.eq.s32.totalorder %v7060, 4
      %vm11305 = vcmp.eq.s32.totalorder %v7061, 4
      %vm11306 = vcmp.eq.s32.totalorder %v7062, 4
      %vm11307 = vcmp.eq.s32.totalorder %v7063, 4
      %vm11308 = vcmp.eq.s32.totalorder %v7064, 4
      %vm11309 = vcmp.eq.s32.totalorder %v7065, 4
      %vm11310 = vcmp.eq.s32.totalorder %v7066, 4
      %vm11311 = vcmp.eq.s32.totalorder %v7067, 4
      %vm11312 = vcmp.eq.s32.totalorder %v7068, 4
      %vm11313 = vcmp.eq.s32.totalorder %v7069, 4
      %vm11314 = vcmp.eq.s32.totalorder %v7070, 4
      %vm11315 = vcmp.eq.s32.totalorder %v7071, 4
      %vm11316 = vcmp.eq.s32.totalorder %v7072, 4
      %vm11317 = vcmp.eq.s32.totalorder %v7073, 4
      %vm11318 = vcmp.eq.s32.totalorder %v7074, 4
      %vm11319 = vcmp.eq.s32.totalorder %v7075, 4
      %vm11320 = vcmp.eq.s32.totalorder %v7076, 4
      %vm11321 = vcmp.eq.s32.totalorder %v7077, 4
      %vm11322 = vcmp.eq.s32.totalorder %v7078, 4
      %v11323 = vsel %vm11195, 1, 0
      %v11324 = vsel %vm11196, 1, 0
      %v11325 = vsel %vm11197, 1, 0
      %v11326 = vsel %vm11198, 1, 0
      %v11327 = vsel %vm11199, 1, 0
      %v11328 = vsel %vm11200, 1, 0
      %v11329 = vsel %vm11201, 1, 0
      %v11330 = vsel %vm11202, 1, 0
      %v11331 = vsel %vm11203, 1, 0
      %v11332 = vsel %vm11204, 1, 0
      %v11333 = vsel %vm11205, 1, 0
      %v11334 = vsel %vm11206, 1, 0
      %v11335 = vsel %vm11207, 1, 0
      %v11336 = vsel %vm11208, 1, 0
      %v11337 = vsel %vm11209, 1, 0
      %v11338 = vsel %vm11210, 1, 0
      %v11339 = vsel %vm11211, 1, 0
      %v11340 = vsel %vm11212, 1, 0
      %v11341 = vsel %vm11213, 1, 0
      %v11342 = vsel %vm11214, 1, 0
      %v11343 = vsel %vm11215, 1, 0
      %v11344 = vsel %vm11216, 1, 0
      %v11345 = vsel %vm11217, 1, 0
      %v11346 = vsel %vm11218, 1, 0
      %v11347 = vsel %vm11219, 1, 0
      %v11348 = vsel %vm11220, 1, 0
      %v11349 = vsel %vm11221, 1, 0
      %v11350 = vsel %vm11222, 1, 0
      %v11351 = vsel %vm11223, 1, 0
      %v11352 = vsel %vm11224, 1, 0
      %v11353 = vsel %vm11225, 1, 0
      %v11354 = vsel %vm11226, 1, 0
      %v11355 = vsel %vm11227, 1, 0
      %v11356 = vsel %vm11228, 1, 0
      %v11357 = vsel %vm11229, 1, 0
      %v11358 = vsel %vm11230, 1, 0
      %v11359 = vsel %vm11231, 1, 0
      %v11360 = vsel %vm11232, 1, 0
      %v11361 = vsel %vm11233, 1, 0
      %v11362 = vsel %vm11234, 1, 0
      %v11363 = vsel %vm11235, 1, 0
      %v11364 = vsel %vm11236, 1, 0
      %v11365 = vsel %vm11237, 1, 0
      %v11366 = vsel %vm11238, 1, 0
      %v11367 = vsel %vm11239, 1, 0
      %v11368 = vsel %vm11240, 1, 0
      %v11369 = vsel %vm11241, 1, 0
      %v11370 = vsel %vm11242, 1, 0
      %v11371 = vsel %vm11243, 1, 0
      %v11372 = vsel %vm11244, 1, 0
      %v11373 = vsel %vm11245, 1, 0
      %v11374 = vsel %vm11246, 1, 0
      %v11375 = vsel %vm11247, 1, 0
      %v11376 = vsel %vm11248, 1, 0
      %v11377 = vsel %vm11249, 1, 0
      %v11378 = vsel %vm11250, 1, 0
      %v11379 = vsel %vm11251, 1, 0
      %v11380 = vsel %vm11252, 1, 0
      %v11381 = vsel %vm11253, 1, 0
      %v11382 = vsel %vm11254, 1, 0
      %v11383 = vsel %vm11255, 1, 0
      %v11384 = vsel %vm11256, 1, 0
      %v11385 = vsel %vm11257, 1, 0
      %v11386 = vsel %vm11258, 1, 0
      %v11387 = vsel %vm11259, 1, 0
      %v11388 = vsel %vm11260, 1, 0
      %v11389 = vsel %vm11261, 1, 0
      %v11390 = vsel %vm11262, 1, 0
      %v11391 = vsel %vm11263, 1, 0
      %v11392 = vsel %vm11264, 1, 0
      %v11393 = vsel %vm11265, 1, 0
      %v11394 = vsel %vm11266, 1, 0
      %v11395 = vsel %vm11267, 1, 0
      %v11396 = vsel %vm11268, 1, 0
      %v11397 = vsel %vm11269, 1, 0
      %v11398 = vsel %vm11270, 1, 0
      %v11399 = vsel %vm11271, 1, 0
      %v11400 = vsel %vm11272, 1, 0
      %v11401 = vsel %vm11273, 1, 0
      %v11402 = vsel %vm11274, 1, 0
      %v11403 = vsel %vm11275, 1, 0
      %v11404 = vsel %vm11276, 1, 0
      %v11405 = vsel %vm11277, 1, 0
      %v11406 = vsel %vm11278, 1, 0
      %v11407 = vsel %vm11279, 1, 0
      %v11408 = vsel %vm11280, 1, 0
      %v11409 = vsel %vm11281, 1, 0
      %v11410 = vsel %vm11282, 1, 0
      %v11411 = vsel %vm11283, 1, 0
      %v11412 = vsel %vm11284, 1, 0
      %v11413 = vsel %vm11285, 1, 0
      %v11414 = vsel %vm11286, 1, 0
      %v11415 = vsel %vm11287, 1, 0
      %v11416 = vsel %vm11288, 1, 0
      %v11417 = vsel %vm11289, 1, 0
      %v11418 = vsel %vm11290, 1, 0
      %v11419 = vsel %vm11291, 1, 0
      %v11420 = vsel %vm11292, 1, 0
      %v11421 = vsel %vm11293, 1, 0
      %v11422 = vsel %vm11294, 1, 0
      %v11423 = vsel %vm11295, 1, 0
      %v11424 = vsel %vm11296, 1, 0
      %v11425 = vsel %vm11297, 1, 0
      %v11426 = vsel %vm11298, 1, 0
      %v11427 = vsel %vm11299, 1, 0
      %v11428 = vsel %vm11300, 1, 0
      %v11429 = vsel %vm11301, 1, 0
      %v11430 = vsel %vm11302, 1, 0
      %v11431 = vsel %vm11303, 1, 0
      %v11432 = vsel %vm11304, 1, 0
      %v11433 = vsel %vm11305, 1, 0
      %v11434 = vsel %vm11306, 1, 0
      %v11435 = vsel %vm11307, 1, 0
      %v11436 = vsel %vm11308, 1, 0
      %v11437 = vsel %vm11309, 1, 0
      %v11438 = vsel %vm11310, 1, 0
      %v11439 = vsel %vm11311, 1, 0
      %v11440 = vsel %vm11312, 1, 0
      %v11441 = vsel %vm11313, 1, 0
      %v11442 = vsel %vm11314, 1, 0
      %v11443 = vsel %vm11315, 1, 0
      %v11444 = vsel %vm11316, 1, 0
      %v11445 = vsel %vm11317, 1, 0
      %v11446 = vsel %vm11318, 1, 0
      %v11447 = vsel %vm11319, 1, 0
      %v11448 = vsel %vm11320, 1, 0
      %v11449 = vsel %vm11321, 1, 0
      %v11450 = vsel %vm11322, 1, 0
      %11451 = vset.pattern.permute.xlu0 0
      %11452 = vperm.xlu0 %11451, %v11323
      %v11453 = vpop.permute.xlu0 %11452
      %11454 = vset.pattern.permute.xlu0 0
      %11455 = vperm.xlu0 %11454, %v11324
      %v11456 = vpop.permute.xlu0 %11455
      %11457 = vset.pattern.permute.xlu0 0
      %11458 = vperm.xlu0 %11457, %v11325
      %v11459 = vpop.permute.xlu0 %11458
      %11460 = vset.pattern.permute.xlu0 0
      %11461 = vperm.xlu0 %11460, %v11326
      %v11462 = vpop.permute.xlu0 %11461
      %11463 = vset.pattern.permute.xlu0 0
      %11464 = vperm.xlu0 %11463, %v11327
      %v11465 = vpop.permute.xlu0 %11464
      %11466 = vset.pattern.permute.xlu0 0
      %11467 = vperm.xlu0 %11466, %v11328
      %v11468 = vpop.permute.xlu0 %11467
      %11469 = vset.pattern.permute.xlu0 0
      %11470 = vperm.xlu0 %11469, %v11329
      %v11471 = vpop.permute.xlu0 %11470
      %11472 = vset.pattern.permute.xlu0 0
      %11473 = vperm.xlu0 %11472, %v11330
      %v11474 = vpop.permute.xlu0 %11473
      %11475 = vset.pattern.permute.xlu0 0
      %11476 = vperm.xlu0 %11475, %v11331
      %v11477 = vpop.permute.xlu0 %11476
      %11478 = vset.pattern.permute.xlu0 0
      %11479 = vperm.xlu0 %11478, %v11332
      %v11480 = vpop.permute.xlu0 %11479
      %11481 = vset.pattern.permute.xlu0 0
      %11482 = vperm.xlu0 %11481, %v11333
      %v11483 = vpop.permute.xlu0 %11482
      %11484 = vset.pattern.permute.xlu0 0
      %11485 = vperm.xlu0 %11484, %v11334
      %v11486 = vpop.permute.xlu0 %11485
      %11487 = vset.pattern.permute.xlu0 0
      %11488 = vperm.xlu0 %11487, %v11335
      %v11489 = vpop.permute.xlu0 %11488
      %11490 = vset.pattern.permute.xlu0 0
      %11491 = vperm.xlu0 %11490, %v11336
      %v11492 = vpop.permute.xlu0 %11491
      %11493 = vset.pattern.permute.xlu0 0
      %11494 = vperm.xlu0 %11493, %v11337
      %v11495 = vpop.permute.xlu0 %11494
      %11496 = vset.pattern.permute.xlu0 0
      %11497 = vperm.xlu0 %11496, %v11338
      %v11498 = vpop.permute.xlu0 %11497
      %11499 = vset.pattern.permute.xlu0 0
      %11500 = vperm.xlu0 %11499, %v11339
      %v11501 = vpop.permute.xlu0 %11500
      %11502 = vset.pattern.permute.xlu0 0
      %11503 = vperm.xlu0 %11502, %v11340
      %v11504 = vpop.permute.xlu0 %11503
      %11505 = vset.pattern.permute.xlu0 0
      %11506 = vperm.xlu0 %11505, %v11341
      %v11507 = vpop.permute.xlu0 %11506
      %11508 = vset.pattern.permute.xlu0 0
      %11509 = vperm.xlu0 %11508, %v11342
      %v11510 = vpop.permute.xlu0 %11509
      %11511 = vset.pattern.permute.xlu0 0
      %11512 = vperm.xlu0 %11511, %v11343
      %v11513 = vpop.permute.xlu0 %11512
      %11514 = vset.pattern.permute.xlu0 0
      %11515 = vperm.xlu0 %11514, %v11344
      %v11516 = vpop.permute.xlu0 %11515
      %11517 = vset.pattern.permute.xlu0 0
      %11518 = vperm.xlu0 %11517, %v11345
      %v11519 = vpop.permute.xlu0 %11518
      %11520 = vset.pattern.permute.xlu0 0
      %11521 = vperm.xlu0 %11520, %v11346
      %v11522 = vpop.permute.xlu0 %11521
      %11523 = vset.pattern.permute.xlu0 0
      %11524 = vperm.xlu0 %11523, %v11347
      %v11525 = vpop.permute.xlu0 %11524
      %11526 = vset.pattern.permute.xlu0 0
      %11527 = vperm.xlu0 %11526, %v11348
      %v11528 = vpop.permute.xlu0 %11527
      %11529 = vset.pattern.permute.xlu0 0
      %11530 = vperm.xlu0 %11529, %v11349
      %v11531 = vpop.permute.xlu0 %11530
      %11532 = vset.pattern.permute.xlu0 0
      %11533 = vperm.xlu0 %11532, %v11350
      %v11534 = vpop.permute.xlu0 %11533
      %11535 = vset.pattern.permute.xlu0 0
      %11536 = vperm.xlu0 %11535, %v11351
      %v11537 = vpop.permute.xlu0 %11536
      %11538 = vset.pattern.permute.xlu0 0
      %11539 = vperm.xlu0 %11538, %v11352
      %v11540 = vpop.permute.xlu0 %11539
      %11541 = vset.pattern.permute.xlu0 0
      %11542 = vperm.xlu0 %11541, %v11353
      %v11543 = vpop.permute.xlu0 %11542
      %11544 = vset.pattern.permute.xlu0 0
      %11545 = vperm.xlu0 %11544, %v11354
      %v11546 = vpop.permute.xlu0 %11545
      %11547 = vset.pattern.permute.xlu0 0
      %11548 = vperm.xlu0 %11547, %v11355
      %v11549 = vpop.permute.xlu0 %11548
      %11550 = vset.pattern.permute.xlu0 0
      %11551 = vperm.xlu0 %11550, %v11356
      %v11552 = vpop.permute.xlu0 %11551
      %11553 = vset.pattern.permute.xlu0 0
      %11554 = vperm.xlu0 %11553, %v11357
      %v11555 = vpop.permute.xlu0 %11554
      %11556 = vset.pattern.permute.xlu0 0
      %11557 = vperm.xlu0 %11556, %v11358
      %v11558 = vpop.permute.xlu0 %11557
      %11559 = vset.pattern.permute.xlu0 0
      %11560 = vperm.xlu0 %11559, %v11359
      %v11561 = vpop.permute.xlu0 %11560
      %11562 = vset.pattern.permute.xlu0 0
      %11563 = vperm.xlu0 %11562, %v11360
      %v11564 = vpop.permute.xlu0 %11563
      %11565 = vset.pattern.permute.xlu0 0
      %11566 = vperm.xlu0 %11565, %v11361
      %v11567 = vpop.permute.xlu0 %11566
      %11568 = vset.pattern.permute.xlu0 0
      %11569 = vperm.xlu0 %11568, %v11362
      %v11570 = vpop.permute.xlu0 %11569
      %11571 = vset.pattern.permute.xlu0 0
      %11572 = vperm.xlu0 %11571, %v11363
      %v11573 = vpop.permute.xlu0 %11572
      %11574 = vset.pattern.permute.xlu0 0
      %11575 = vperm.xlu0 %11574, %v11364
      %v11576 = vpop.permute.xlu0 %11575
      %11577 = vset.pattern.permute.xlu0 0
      %11578 = vperm.xlu0 %11577, %v11365
      %v11579 = vpop.permute.xlu0 %11578
      %11580 = vset.pattern.permute.xlu0 0
      %11581 = vperm.xlu0 %11580, %v11366
      %v11582 = vpop.permute.xlu0 %11581
      %11583 = vset.pattern.permute.xlu0 0
      %11584 = vperm.xlu0 %11583, %v11367
      %v11585 = vpop.permute.xlu0 %11584
      %11586 = vset.pattern.permute.xlu0 0
      %11587 = vperm.xlu0 %11586, %v11368
      %v11588 = vpop.permute.xlu0 %11587
      %11589 = vset.pattern.permute.xlu0 0
      %11590 = vperm.xlu0 %11589, %v11369
      %v11591 = vpop.permute.xlu0 %11590
      %11592 = vset.pattern.permute.xlu0 0
      %11593 = vperm.xlu0 %11592, %v11370
      %v11594 = vpop.permute.xlu0 %11593
      %11595 = vset.pattern.permute.xlu0 0
      %11596 = vperm.xlu0 %11595, %v11371
      %v11597 = vpop.permute.xlu0 %11596
      %11598 = vset.pattern.permute.xlu0 0
      %11599 = vperm.xlu0 %11598, %v11372
      %v11600 = vpop.permute.xlu0 %11599
      %11601 = vset.pattern.permute.xlu0 0
      %11602 = vperm.xlu0 %11601, %v11373
      %v11603 = vpop.permute.xlu0 %11602
      %11604 = vset.pattern.permute.xlu0 0
      %11605 = vperm.xlu0 %11604, %v11374
      %v11606 = vpop.permute.xlu0 %11605
      %11607 = vset.pattern.permute.xlu0 0
      %11608 = vperm.xlu0 %11607, %v11375
      %v11609 = vpop.permute.xlu0 %11608
      %11610 = vset.pattern.permute.xlu0 0
      %11611 = vperm.xlu0 %11610, %v11376
      %v11612 = vpop.permute.xlu0 %11611
      %11613 = vset.pattern.permute.xlu0 0
      %11614 = vperm.xlu0 %11613, %v11377
      %v11615 = vpop.permute.xlu0 %11614
      %11616 = vset.pattern.permute.xlu0 0
      %11617 = vperm.xlu0 %11616, %v11378
      %v11618 = vpop.permute.xlu0 %11617
      %11619 = vset.pattern.permute.xlu0 0
      %11620 = vperm.xlu0 %11619, %v11379
      %v11621 = vpop.permute.xlu0 %11620
      %11622 = vset.pattern.permute.xlu0 0
      %11623 = vperm.xlu0 %11622, %v11380
      %v11624 = vpop.permute.xlu0 %11623
      %11625 = vset.pattern.permute.xlu0 0
      %11626 = vperm.xlu0 %11625, %v11381
      %v11627 = vpop.permute.xlu0 %11626
      %11628 = vset.pattern.permute.xlu0 0
      %11629 = vperm.xlu0 %11628, %v11382
      %v11630 = vpop.permute.xlu0 %11629
      %11631 = vset.pattern.permute.xlu0 0
      %11632 = vperm.xlu0 %11631, %v11383
      %v11633 = vpop.permute.xlu0 %11632
      %11634 = vset.pattern.permute.xlu0 0
      %11635 = vperm.xlu0 %11634, %v11384
      %v11636 = vpop.permute.xlu0 %11635
      %11637 = vset.pattern.permute.xlu0 0
      %11638 = vperm.xlu0 %11637, %v11385
      %v11639 = vpop.permute.xlu0 %11638
      %11640 = vset.pattern.permute.xlu0 0
      %11641 = vperm.xlu0 %11640, %v11386
      %v11642 = vpop.permute.xlu0 %11641
      %11643 = vset.pattern.permute.xlu0 0
      %11644 = vperm.xlu0 %11643, %v11387
      %v11645 = vpop.permute.xlu0 %11644
      %11646 = vset.pattern.permute.xlu0 0
      %11647 = vperm.xlu0 %11646, %v11388
      %v11648 = vpop.permute.xlu0 %11647
      %11649 = vset.pattern.permute.xlu0 0
      %11650 = vperm.xlu0 %11649, %v11389
      %v11651 = vpop.permute.xlu0 %11650
      %11652 = vset.pattern.permute.xlu0 0
      %11653 = vperm.xlu0 %11652, %v11390
      %v11654 = vpop.permute.xlu0 %11653
      %11655 = vset.pattern.permute.xlu0 0
      %11656 = vperm.xlu0 %11655, %v11391
      %v11657 = vpop.permute.xlu0 %11656
      %11658 = vset.pattern.permute.xlu0 0
      %11659 = vperm.xlu0 %11658, %v11392
      %v11660 = vpop.permute.xlu0 %11659
      %11661 = vset.pattern.permute.xlu0 0
      %11662 = vperm.xlu0 %11661, %v11393
      %v11663 = vpop.permute.xlu0 %11662
      %11664 = vset.pattern.permute.xlu0 0
      %11665 = vperm.xlu0 %11664, %v11394
      %v11666 = vpop.permute.xlu0 %11665
      %11667 = vset.pattern.permute.xlu0 0
      %11668 = vperm.xlu0 %11667, %v11395
      %v11669 = vpop.permute.xlu0 %11668
      %11670 = vset.pattern.permute.xlu0 0
      %11671 = vperm.xlu0 %11670, %v11396
      %v11672 = vpop.permute.xlu0 %11671
      %11673 = vset.pattern.permute.xlu0 0
      %11674 = vperm.xlu0 %11673, %v11397
      %v11675 = vpop.permute.xlu0 %11674
      %11676 = vset.pattern.permute.xlu0 0
      %11677 = vperm.xlu0 %11676, %v11398
      %v11678 = vpop.permute.xlu0 %11677
      %11679 = vset.pattern.permute.xlu0 0
      %11680 = vperm.xlu0 %11679, %v11399
      %v11681 = vpop.permute.xlu0 %11680
      %11682 = vset.pattern.permute.xlu0 0
      %11683 = vperm.xlu0 %11682, %v11400
      %v11684 = vpop.permute.xlu0 %11683
      %11685 = vset.pattern.permute.xlu0 0
      %11686 = vperm.xlu0 %11685, %v11401
      %v11687 = vpop.permute.xlu0 %11686
      %11688 = vset.pattern.permute.xlu0 0
      %11689 = vperm.xlu0 %11688, %v11402
      %v11690 = vpop.permute.xlu0 %11689
      %11691 = vset.pattern.permute.xlu0 0
      %11692 = vperm.xlu0 %11691, %v11403
      %v11693 = vpop.permute.xlu0 %11692
      %11694 = vset.pattern.permute.xlu0 0
      %11695 = vperm.xlu0 %11694, %v11404
      %v11696 = vpop.permute.xlu0 %11695
      %11697 = vset.pattern.permute.xlu0 0
      %11698 = vperm.xlu0 %11697, %v11405
      %v11699 = vpop.permute.xlu0 %11698
      %11700 = vset.pattern.permute.xlu0 0
      %11701 = vperm.xlu0 %11700, %v11406
      %v11702 = vpop.permute.xlu0 %11701
      %11703 = vset.pattern.permute.xlu0 0
      %11704 = vperm.xlu0 %11703, %v11407
      %v11705 = vpop.permute.xlu0 %11704
      %11706 = vset.pattern.permute.xlu0 0
      %11707 = vperm.xlu0 %11706, %v11408
      %v11708 = vpop.permute.xlu0 %11707
      %11709 = vset.pattern.permute.xlu0 0
      %11710 = vperm.xlu0 %11709, %v11409
      %v11711 = vpop.permute.xlu0 %11710
      %11712 = vset.pattern.permute.xlu0 0
      %11713 = vperm.xlu0 %11712, %v11410
      %v11714 = vpop.permute.xlu0 %11713
      %11715 = vset.pattern.permute.xlu0 0
      %11716 = vperm.xlu0 %11715, %v11411
      %v11717 = vpop.permute.xlu0 %11716
      %11718 = vset.pattern.permute.xlu0 0
      %11719 = vperm.xlu0 %11718, %v11412
      %v11720 = vpop.permute.xlu0 %11719
      %11721 = vset.pattern.permute.xlu0 0
      %11722 = vperm.xlu0 %11721, %v11413
      %v11723 = vpop.permute.xlu0 %11722
      %11724 = vset.pattern.permute.xlu0 0
      %11725 = vperm.xlu0 %11724, %v11414
      %v11726 = vpop.permute.xlu0 %11725
      %11727 = vset.pattern.permute.xlu0 0
      %11728 = vperm.xlu0 %11727, %v11415
      %v11729 = vpop.permute.xlu0 %11728
      %11730 = vset.pattern.permute.xlu0 0
      %11731 = vperm.xlu0 %11730, %v11416
      %v11732 = vpop.permute.xlu0 %11731
      %11733 = vset.pattern.permute.xlu0 0
      %11734 = vperm.xlu0 %11733, %v11417
      %v11735 = vpop.permute.xlu0 %11734
      %11736 = vset.pattern.permute.xlu0 0
      %11737 = vperm.xlu0 %11736, %v11418
      %v11738 = vpop.permute.xlu0 %11737
      %11739 = vset.pattern.permute.xlu0 0
      %11740 = vperm.xlu0 %11739, %v11419
      %v11741 = vpop.permute.xlu0 %11740
      %11742 = vset.pattern.permute.xlu0 0
      %11743 = vperm.xlu0 %11742, %v11420
      %v11744 = vpop.permute.xlu0 %11743
      %11745 = vset.pattern.permute.xlu0 0
      %11746 = vperm.xlu0 %11745, %v11421
      %v11747 = vpop.permute.xlu0 %11746
      %11748 = vset.pattern.permute.xlu0 0
      %11749 = vperm.xlu0 %11748, %v11422
      %v11750 = vpop.permute.xlu0 %11749
      %11751 = vset.pattern.permute.xlu0 0
      %11752 = vperm.xlu0 %11751, %v11423
      %v11753 = vpop.permute.xlu0 %11752
      %11754 = vset.pattern.permute.xlu0 0
      %11755 = vperm.xlu0 %11754, %v11424
      %v11756 = vpop.permute.xlu0 %11755
      %11757 = vset.pattern.permute.xlu0 0
      %11758 = vperm.xlu0 %11757, %v11425
      %v11759 = vpop.permute.xlu0 %11758
      %11760 = vset.pattern.permute.xlu0 0
      %11761 = vperm.xlu0 %11760, %v11426
      %v11762 = vpop.permute.xlu0 %11761
      %11763 = vset.pattern.permute.xlu0 0
      %11764 = vperm.xlu0 %11763, %v11427
      %v11765 = vpop.permute.xlu0 %11764
      %11766 = vset.pattern.permute.xlu0 0
      %11767 = vperm.xlu0 %11766, %v11428
      %v11768 = vpop.permute.xlu0 %11767
      %11769 = vset.pattern.permute.xlu0 0
      %11770 = vperm.xlu0 %11769, %v11429
      %v11771 = vpop.permute.xlu0 %11770
      %11772 = vset.pattern.permute.xlu0 0
      %11773 = vperm.xlu0 %11772, %v11430
      %v11774 = vpop.permute.xlu0 %11773
      %11775 = vset.pattern.permute.xlu0 0
      %11776 = vperm.xlu0 %11775, %v11431
      %v11777 = vpop.permute.xlu0 %11776
      %11778 = vset.pattern.permute.xlu0 0
      %11779 = vperm.xlu0 %11778, %v11432
      %v11780 = vpop.permute.xlu0 %11779
      %11781 = vset.pattern.permute.xlu0 0
      %11782 = vperm.xlu0 %11781, %v11433
      %v11783 = vpop.permute.xlu0 %11782
      %11784 = vset.pattern.permute.xlu0 0
      %11785 = vperm.xlu0 %11784, %v11434
      %v11786 = vpop.permute.xlu0 %11785
      %11787 = vset.pattern.permute.xlu0 0
      %11788 = vperm.xlu0 %11787, %v11435
      %v11789 = vpop.permute.xlu0 %11788
      %11790 = vset.pattern.permute.xlu0 0
      %11791 = vperm.xlu0 %11790, %v11436
      %v11792 = vpop.permute.xlu0 %11791
      %11793 = vset.pattern.permute.xlu0 0
      %11794 = vperm.xlu0 %11793, %v11437
      %v11795 = vpop.permute.xlu0 %11794
      %11796 = vset.pattern.permute.xlu0 0
      %11797 = vperm.xlu0 %11796, %v11438
      %v11798 = vpop.permute.xlu0 %11797
      %11799 = vset.pattern.permute.xlu0 0
      %11800 = vperm.xlu0 %11799, %v11439
      %v11801 = vpop.permute.xlu0 %11800
      %11802 = vset.pattern.permute.xlu0 0
      %11803 = vperm.xlu0 %11802, %v11440
      %v11804 = vpop.permute.xlu0 %11803
      %11805 = vset.pattern.permute.xlu0 0
      %11806 = vperm.xlu0 %11805, %v11441
      %v11807 = vpop.permute.xlu0 %11806
      %11808 = vset.pattern.permute.xlu0 0
      %11809 = vperm.xlu0 %11808, %v11442
      %v11810 = vpop.permute.xlu0 %11809
      %11811 = vset.pattern.permute.xlu0 0
      %11812 = vperm.xlu0 %11811, %v11443
      %v11813 = vpop.permute.xlu0 %11812
      %11814 = vset.pattern.permute.xlu0 0
      %11815 = vperm.xlu0 %11814, %v11444
      %v11816 = vpop.permute.xlu0 %11815
      %11817 = vset.pattern.permute.xlu0 0
      %11818 = vperm.xlu0 %11817, %v11445
      %v11819 = vpop.permute.xlu0 %11818
      %11820 = vset.pattern.permute.xlu0 0
      %11821 = vperm.xlu0 %11820, %v11446
      %v11822 = vpop.permute.xlu0 %11821
      %11823 = vset.pattern.permute.xlu0 0
      %11824 = vperm.xlu0 %11823, %v11447
      %v11825 = vpop.permute.xlu0 %11824
      %11826 = vset.pattern.permute.xlu0 0
      %11827 = vperm.xlu0 %11826, %v11448
      %v11828 = vpop.permute.xlu0 %11827
      %11829 = vset.pattern.permute.xlu0 0
      %11830 = vperm.xlu0 %11829, %v11449
      %v11831 = vpop.permute.xlu0 %11830
      %11832 = vset.pattern.permute.xlu0 0
      %11833 = vperm.xlu0 %11832, %v11450
      %v11834 = vpop.permute.xlu0 %11833
      %vm11835 = vcmp.eq.s32.totalorder %v11453, 1
      %vm11836 = vcmp.eq.s32.totalorder %v11456, 1
      %vm11837 = vcmp.eq.s32.totalorder %v11459, 1
      %vm11838 = vcmp.eq.s32.totalorder %v11462, 1
      %vm11839 = vcmp.eq.s32.totalorder %v11465, 1
      %vm11840 = vcmp.eq.s32.totalorder %v11468, 1
      %vm11841 = vcmp.eq.s32.totalorder %v11471, 1
      %vm11842 = vcmp.eq.s32.totalorder %v11474, 1
      %vm11843 = vcmp.eq.s32.totalorder %v11477, 1
      %vm11844 = vcmp.eq.s32.totalorder %v11480, 1
      %vm11845 = vcmp.eq.s32.totalorder %v11483, 1
      %vm11846 = vcmp.eq.s32.totalorder %v11486, 1
      %vm11847 = vcmp.eq.s32.totalorder %v11489, 1
      %vm11848 = vcmp.eq.s32.totalorder %v11492, 1
      %vm11849 = vcmp.eq.s32.totalorder %v11495, 1
      %vm11850 = vcmp.eq.s32.totalorder %v11498, 1
      %vm11851 = vcmp.eq.s32.totalorder %v11501, 1
      %vm11852 = vcmp.eq.s32.totalorder %v11504, 1
      %vm11853 = vcmp.eq.s32.totalorder %v11507, 1
      %vm11854 = vcmp.eq.s32.totalorder %v11510, 1
      %vm11855 = vcmp.eq.s32.totalorder %v11513, 1
      %vm11856 = vcmp.eq.s32.totalorder %v11516, 1
      %vm11857 = vcmp.eq.s32.totalorder %v11519, 1
      %vm11858 = vcmp.eq.s32.totalorder %v11522, 1
      %vm11859 = vcmp.eq.s32.totalorder %v11525, 1
      %vm11860 = vcmp.eq.s32.totalorder %v11528, 1
      %vm11861 = vcmp.eq.s32.totalorder %v11531, 1
      %vm11862 = vcmp.eq.s32.totalorder %v11534, 1
      %vm11863 = vcmp.eq.s32.totalorder %v11537, 1
      %vm11864 = vcmp.eq.s32.totalorder %v11540, 1
      %vm11865 = vcmp.eq.s32.totalorder %v11543, 1
      %vm11866 = vcmp.eq.s32.totalorder %v11546, 1
      %vm11867 = vcmp.eq.s32.totalorder %v11549, 1
      %vm11868 = vcmp.eq.s32.totalorder %v11552, 1
      %vm11869 = vcmp.eq.s32.totalorder %v11555, 1
      %vm11870 = vcmp.eq.s32.totalorder %v11558, 1
      %vm11871 = vcmp.eq.s32.totalorder %v11561, 1
      %vm11872 = vcmp.eq.s32.totalorder %v11564, 1
      %vm11873 = vcmp.eq.s32.totalorder %v11567, 1
      %vm11874 = vcmp.eq.s32.totalorder %v11570, 1
      %vm11875 = vcmp.eq.s32.totalorder %v11573, 1
      %vm11876 = vcmp.eq.s32.totalorder %v11576, 1
      %vm11877 = vcmp.eq.s32.totalorder %v11579, 1
      %vm11878 = vcmp.eq.s32.totalorder %v11582, 1
      %vm11879 = vcmp.eq.s32.totalorder %v11585, 1
      %vm11880 = vcmp.eq.s32.totalorder %v11588, 1
      %vm11881 = vcmp.eq.s32.totalorder %v11591, 1
      %vm11882 = vcmp.eq.s32.totalorder %v11594, 1
      %vm11883 = vcmp.eq.s32.totalorder %v11597, 1
      %vm11884 = vcmp.eq.s32.totalorder %v11600, 1
      %vm11885 = vcmp.eq.s32.totalorder %v11603, 1
      %vm11886 = vcmp.eq.s32.totalorder %v11606, 1
      %vm11887 = vcmp.eq.s32.totalorder %v11609, 1
      %vm11888 = vcmp.eq.s32.totalorder %v11612, 1
      %vm11889 = vcmp.eq.s32.totalorder %v11615, 1
      %vm11890 = vcmp.eq.s32.totalorder %v11618, 1
      %vm11891 = vcmp.eq.s32.totalorder %v11621, 1
      %vm11892 = vcmp.eq.s32.totalorder %v11624, 1
      %vm11893 = vcmp.eq.s32.totalorder %v11627, 1
      %vm11894 = vcmp.eq.s32.totalorder %v11630, 1
      %vm11895 = vcmp.eq.s32.totalorder %v11633, 1
      %vm11896 = vcmp.eq.s32.totalorder %v11636, 1
      %vm11897 = vcmp.eq.s32.totalorder %v11639, 1
      %vm11898 = vcmp.eq.s32.totalorder %v11642, 1
      %vm11899 = vcmp.eq.s32.totalorder %v11645, 1
      %vm11900 = vcmp.eq.s32.totalorder %v11648, 1
      %vm11901 = vcmp.eq.s32.totalorder %v11651, 1
      %vm11902 = vcmp.eq.s32.totalorder %v11654, 1
      %vm11903 = vcmp.eq.s32.totalorder %v11657, 1
      %vm11904 = vcmp.eq.s32.totalorder %v11660, 1
      %vm11905 = vcmp.eq.s32.totalorder %v11663, 1
      %vm11906 = vcmp.eq.s32.totalorder %v11666, 1
      %vm11907 = vcmp.eq.s32.totalorder %v11669, 1
      %vm11908 = vcmp.eq.s32.totalorder %v11672, 1
      %vm11909 = vcmp.eq.s32.totalorder %v11675, 1
      %vm11910 = vcmp.eq.s32.totalorder %v11678, 1
      %vm11911 = vcmp.eq.s32.totalorder %v11681, 1
      %vm11912 = vcmp.eq.s32.totalorder %v11684, 1
      %vm11913 = vcmp.eq.s32.totalorder %v11687, 1
      %vm11914 = vcmp.eq.s32.totalorder %v11690, 1
      %vm11915 = vcmp.eq.s32.totalorder %v11693, 1
      %vm11916 = vcmp.eq.s32.totalorder %v11696, 1
      %vm11917 = vcmp.eq.s32.totalorder %v11699, 1
      %vm11918 = vcmp.eq.s32.totalorder %v11702, 1
      %vm11919 = vcmp.eq.s32.totalorder %v11705, 1
      %vm11920 = vcmp.eq.s32.totalorder %v11708, 1
      %vm11921 = vcmp.eq.s32.totalorder %v11711, 1
      %vm11922 = vcmp.eq.s32.totalorder %v11714, 1
      %vm11923 = vcmp.eq.s32.totalorder %v11717, 1
      %vm11924 = vcmp.eq.s32.totalorder %v11720, 1
      %vm11925 = vcmp.eq.s32.totalorder %v11723, 1
      %vm11926 = vcmp.eq.s32.totalorder %v11726, 1
      %vm11927 = vcmp.eq.s32.totalorder %v11729, 1
      %vm11928 = vcmp.eq.s32.totalorder %v11732, 1
      %vm11929 = vcmp.eq.s32.totalorder %v11735, 1
      %vm11930 = vcmp.eq.s32.totalorder %v11738, 1
      %vm11931 = vcmp.eq.s32.totalorder %v11741, 1
      %vm11932 = vcmp.eq.s32.totalorder %v11744, 1
      %vm11933 = vcmp.eq.s32.totalorder %v11747, 1
      %vm11934 = vcmp.eq.s32.totalorder %v11750, 1
      %vm11935 = vcmp.eq.s32.totalorder %v11753, 1
      %vm11936 = vcmp.eq.s32.totalorder %v11756, 1
      %vm11937 = vcmp.eq.s32.totalorder %v11759, 1
      %vm11938 = vcmp.eq.s32.totalorder %v11762, 1
      %vm11939 = vcmp.eq.s32.totalorder %v11765, 1
      %vm11940 = vcmp.eq.s32.totalorder %v11768, 1
      %vm11941 = vcmp.eq.s32.totalorder %v11771, 1
      %vm11942 = vcmp.eq.s32.totalorder %v11774, 1
      %vm11943 = vcmp.eq.s32.totalorder %v11777, 1
      %vm11944 = vcmp.eq.s32.totalorder %v11780, 1
      %vm11945 = vcmp.eq.s32.totalorder %v11783, 1
      %vm11946 = vcmp.eq.s32.totalorder %v11786, 1
      %vm11947 = vcmp.eq.s32.totalorder %v11789, 1
      %vm11948 = vcmp.eq.s32.totalorder %v11792, 1
      %vm11949 = vcmp.eq.s32.totalorder %v11795, 1
      %vm11950 = vcmp.eq.s32.totalorder %v11798, 1
      %vm11951 = vcmp.eq.s32.totalorder %v11801, 1
      %vm11952 = vcmp.eq.s32.totalorder %v11804, 1
      %vm11953 = vcmp.eq.s32.totalorder %v11807, 1
      %vm11954 = vcmp.eq.s32.totalorder %v11810, 1
      %vm11955 = vcmp.eq.s32.totalorder %v11813, 1
      %vm11956 = vcmp.eq.s32.totalorder %v11816, 1
      %vm11957 = vcmp.eq.s32.totalorder %v11819, 1
      %vm11958 = vcmp.eq.s32.totalorder %v11822, 1
      %vm11959 = vcmp.eq.s32.totalorder %v11825, 1
      %vm11960 = vcmp.eq.s32.totalorder %v11828, 1
      %vm11961 = vcmp.eq.s32.totalorder %v11831, 1
      %vm11962 = vcmp.eq.s32.totalorder %v11834, 1
      %v11963 = vsel %vm11835, %v6823, 0.0
      %v11964 = vsel %vm11836, %v6824, 0.0
      %v11965 = vsel %vm11837, %v6825, 0.0
      %v11966 = vsel %vm11838, %v6826, 0.0
      %v11967 = vsel %vm11839, %v6827, 0.0
      %v11968 = vsel %vm11840, %v6828, 0.0
      %v11969 = vsel %vm11841, %v6829, 0.0
      %v11970 = vsel %vm11842, %v6830, 0.0
      %v11971 = vsel %vm11843, %v6831, 0.0
      %v11972 = vsel %vm11844, %v6832, 0.0
      %v11973 = vsel %vm11845, %v6833, 0.0
      %v11974 = vsel %vm11846, %v6834, 0.0
      %v11975 = vsel %vm11847, %v6835, 0.0
      %v11976 = vsel %vm11848, %v6836, 0.0
      %v11977 = vsel %vm11849, %v6837, 0.0
      %v11978 = vsel %vm11850, %v6838, 0.0
      %v11979 = vsel %vm11851, %v6839, 0.0
      %v11980 = vsel %vm11852, %v6840, 0.0
      %v11981 = vsel %vm11853, %v6841, 0.0
      %v11982 = vsel %vm11854, %v6842, 0.0
      %v11983 = vsel %vm11855, %v6843, 0.0
      %v11984 = vsel %vm11856, %v6844, 0.0
      %v11985 = vsel %vm11857, %v6845, 0.0
      %v11986 = vsel %vm11858, %v6846, 0.0
      %v11987 = vsel %vm11859, %v6847, 0.0
      %v11988 = vsel %vm11860, %v6848, 0.0
      %v11989 = vsel %vm11861, %v6849, 0.0
      %v11990 = vsel %vm11862, %v6850, 0.0
      %v11991 = vsel %vm11863, %v6851, 0.0
      %v11992 = vsel %vm11864, %v6852, 0.0
      %v11993 = vsel %vm11865, %v6853, 0.0
      %v11994 = vsel %vm11866, %v6854, 0.0
      %v11995 = vsel %vm11867, %v6855, 0.0
      %v11996 = vsel %vm11868, %v6856, 0.0
      %v11997 = vsel %vm11869, %v6857, 0.0
      %v11998 = vsel %vm11870, %v6858, 0.0
      %v11999 = vsel %vm11871, %v6859, 0.0
      %v12000 = vsel %vm11872, %v6860, 0.0
      %v12001 = vsel %vm11873, %v6861, 0.0
      %v12002 = vsel %vm11874, %v6862, 0.0
      %v12003 = vsel %vm11875, %v6863, 0.0
      %v12004 = vsel %vm11876, %v6864, 0.0
      %v12005 = vsel %vm11877, %v6865, 0.0
      %v12006 = vsel %vm11878, %v6866, 0.0
      %v12007 = vsel %vm11879, %v6867, 0.0
      %v12008 = vsel %vm11880, %v6868, 0.0
      %v12009 = vsel %vm11881, %v6869, 0.0
      %v12010 = vsel %vm11882, %v6870, 0.0
      %v12011 = vsel %vm11883, %v6871, 0.0
      %v12012 = vsel %vm11884, %v6872, 0.0
      %v12013 = vsel %vm11885, %v6873, 0.0
      %v12014 = vsel %vm11886, %v6874, 0.0
      %v12015 = vsel %vm11887, %v6875, 0.0
      %v12016 = vsel %vm11888, %v6876, 0.0
      %v12017 = vsel %vm11889, %v6877, 0.0
      %v12018 = vsel %vm11890, %v6878, 0.0
      %v12019 = vsel %vm11891, %v6879, 0.0
      %v12020 = vsel %vm11892, %v6880, 0.0
      %v12021 = vsel %vm11893, %v6881, 0.0
      %v12022 = vsel %vm11894, %v6882, 0.0
      %v12023 = vsel %vm11895, %v6883, 0.0
      %v12024 = vsel %vm11896, %v6884, 0.0
      %v12025 = vsel %vm11897, %v6885, 0.0
      %v12026 = vsel %vm11898, %v6886, 0.0
      %v12027 = vsel %vm11899, %v6887, 0.0
      %v12028 = vsel %vm11900, %v6888, 0.0
      %v12029 = vsel %vm11901, %v6889, 0.0
      %v12030 = vsel %vm11902, %v6890, 0.0
      %v12031 = vsel %vm11903, %v6891, 0.0
      %v12032 = vsel %vm11904, %v6892, 0.0
      %v12033 = vsel %vm11905, %v6893, 0.0
      %v12034 = vsel %vm11906, %v6894, 0.0
      %v12035 = vsel %vm11907, %v6895, 0.0
      %v12036 = vsel %vm11908, %v6896, 0.0
      %v12037 = vsel %vm11909, %v6897, 0.0
      %v12038 = vsel %vm11910, %v6898, 0.0
      %v12039 = vsel %vm11911, %v6899, 0.0
      %v12040 = vsel %vm11912, %v6900, 0.0
      %v12041 = vsel %vm11913, %v6901, 0.0
      %v12042 = vsel %vm11914, %v6902, 0.0
      %v12043 = vsel %vm11915, %v6903, 0.0
      %v12044 = vsel %vm11916, %v6904, 0.0
      %v12045 = vsel %vm11917, %v6905, 0.0
      %v12046 = vsel %vm11918, %v6906, 0.0
      %v12047 = vsel %vm11919, %v6907, 0.0
      %v12048 = vsel %vm11920, %v6908, 0.0
      %v12049 = vsel %vm11921, %v6909, 0.0
      %v12050 = vsel %vm11922, %v6910, 0.0
      %v12051 = vsel %vm11923, %v6911, 0.0
      %v12052 = vsel %vm11924, %v6912, 0.0
      %v12053 = vsel %vm11925, %v6913, 0.0
      %v12054 = vsel %vm11926, %v6914, 0.0
      %v12055 = vsel %vm11927, %v6915, 0.0
      %v12056 = vsel %vm11928, %v6916, 0.0
      %v12057 = vsel %vm11929, %v6917, 0.0
      %v12058 = vsel %vm11930, %v6918, 0.0
      %v12059 = vsel %vm11931, %v6919, 0.0
      %v12060 = vsel %vm11932, %v6920, 0.0
      %v12061 = vsel %vm11933, %v6921, 0.0
      %v12062 = vsel %vm11934, %v6922, 0.0
      %v12063 = vsel %vm11935, %v6923, 0.0
      %v12064 = vsel %vm11936, %v6924, 0.0
      %v12065 = vsel %vm11937, %v6925, 0.0
      %v12066 = vsel %vm11938, %v6926, 0.0
      %v12067 = vsel %vm11939, %v6927, 0.0
      %v12068 = vsel %vm11940, %v6928, 0.0
      %v12069 = vsel %vm11941, %v6929, 0.0
      %v12070 = vsel %vm11942, %v6930, 0.0
      %v12071 = vsel %vm11943, %v6931, 0.0
      %v12072 = vsel %vm11944, %v6932, 0.0
      %v12073 = vsel %vm11945, %v6933, 0.0
      %v12074 = vsel %vm11946, %v6934, 0.0
      %v12075 = vsel %vm11947, %v6935, 0.0
      %v12076 = vsel %vm11948, %v6936, 0.0
      %v12077 = vsel %vm11949, %v6937, 0.0
      %v12078 = vsel %vm11950, %v6938, 0.0
      %v12079 = vsel %vm11951, %v6939, 0.0
      %v12080 = vsel %vm11952, %v6940, 0.0
      %v12081 = vsel %vm11953, %v6941, 0.0
      %v12082 = vsel %vm11954, %v6942, 0.0
      %v12083 = vsel %vm11955, %v6943, 0.0
      %v12084 = vsel %vm11956, %v6944, 0.0
      %v12085 = vsel %vm11957, %v6945, 0.0
      %v12086 = vsel %vm11958, %v6946, 0.0
      %v12087 = vsel %vm11959, %v6947, 0.0
      %v12088 = vsel %vm11960, %v6948, 0.0
      %v12089 = vsel %vm11961, %v6949, 0.0
      %v12090 = vsel %vm11962, %v6950, 0.0
      %v12091 = vadd.f32 %v11963, %v11964
      %v12092 = vadd.f32 %v12091, %v11965
      %v12093 = vadd.f32 %v12092, %v11966
      %v12094 = vadd.f32 %v12093, %v11967
      %v12095 = vadd.f32 %v12094, %v11968
      %v12096 = vadd.f32 %v12095, %v11969
      %v12097 = vadd.f32 %v12096, %v11970
      %v12098 = vadd.f32 %v12097, %v11971
      %v12099 = vadd.f32 %v12098, %v11972
      %v12100 = vadd.f32 %v12099, %v11973
      %v12101 = vadd.f32 %v12100, %v11974
      %v12102 = vadd.f32 %v12101, %v11975
      %v12103 = vadd.f32 %v12102, %v11976
      %v12104 = vadd.f32 %v12103, %v11977
      %v12105 = vadd.f32 %v12104, %v11978
      %v12106 = vadd.f32 %v12105, %v11979
      %v12107 = vadd.f32 %v12106, %v11980
      %v12108 = vadd.f32 %v12107, %v11981
      %v12109 = vadd.f32 %v12108, %v11982
      %v12110 = vadd.f32 %v12109, %v11983
      %v12111 = vadd.f32 %v12110, %v11984
      %v12112 = vadd.f32 %v12111, %v11985
      %v12113 = vadd.f32 %v12112, %v11986
      %v12114 = vadd.f32 %v12113, %v11987
      %v12115 = vadd.f32 %v12114, %v11988
      %v12116 = vadd.f32 %v12115, %v11989
      %v12117 = vadd.f32 %v12116, %v11990
      %v12118 = vadd.f32 %v12117, %v11991
      %v12119 = vadd.f32 %v12118, %v11992
      %v12120 = vadd.f32 %v12119, %v11993
      %v12121 = vadd.f32 %v12120, %v11994
      %v12122 = vadd.f32 %v12121, %v11995
      %v12123 = vadd.f32 %v12122, %v11996
      %v12124 = vadd.f32 %v12123, %v11997
      %v12125 = vadd.f32 %v12124, %v11998
      %v12126 = vadd.f32 %v12125, %v11999
      %v12127 = vadd.f32 %v12126, %v12000
      %v12128 = vadd.f32 %v12127, %v12001
      %v12129 = vadd.f32 %v12128, %v12002
      %v12130 = vadd.f32 %v12129, %v12003
      %v12131 = vadd.f32 %v12130, %v12004
      %v12132 = vadd.f32 %v12131, %v12005
      %v12133 = vadd.f32 %v12132, %v12006
      %v12134 = vadd.f32 %v12133, %v12007
      %v12135 = vadd.f32 %v12134, %v12008
      %v12136 = vadd.f32 %v12135, %v12009
      %v12137 = vadd.f32 %v12136, %v12010
      %v12138 = vadd.f32 %v12137, %v12011
      %v12139 = vadd.f32 %v12138, %v12012
      %v12140 = vadd.f32 %v12139, %v12013
      %v12141 = vadd.f32 %v12140, %v12014
      %v12142 = vadd.f32 %v12141, %v12015
      %v12143 = vadd.f32 %v12142, %v12016
      %v12144 = vadd.f32 %v12143, %v12017
      %v12145 = vadd.f32 %v12144, %v12018
      %v12146 = vadd.f32 %v12145, %v12019
      %v12147 = vadd.f32 %v12146, %v12020
      %v12148 = vadd.f32 %v12147, %v12021
      %v12149 = vadd.f32 %v12148, %v12022
      %v12150 = vadd.f32 %v12149, %v12023
      %v12151 = vadd.f32 %v12150, %v12024
      %v12152 = vadd.f32 %v12151, %v12025
      %v12153 = vadd.f32 %v12152, %v12026
      %v12154 = vadd.f32 %v12153, %v12027
      %v12155 = vadd.f32 %v12154, %v12028
      %v12156 = vadd.f32 %v12155, %v12029
      %v12157 = vadd.f32 %v12156, %v12030
      %v12158 = vadd.f32 %v12157, %v12031
      %v12159 = vadd.f32 %v12158, %v12032
      %v12160 = vadd.f32 %v12159, %v12033
      %v12161 = vadd.f32 %v12160, %v12034
      %v12162 = vadd.f32 %v12161, %v12035
      %v12163 = vadd.f32 %v12162, %v12036
      %v12164 = vadd.f32 %v12163, %v12037
      %v12165 = vadd.f32 %v12164, %v12038
      %v12166 = vadd.f32 %v12165, %v12039
      %v12167 = vadd.f32 %v12166, %v12040
      %v12168 = vadd.f32 %v12167, %v12041
      %v12169 = vadd.f32 %v12168, %v12042
      %v12170 = vadd.f32 %v12169, %v12043
      %v12171 = vadd.f32 %v12170, %v12044
      %v12172 = vadd.f32 %v12171, %v12045
      %v12173 = vadd.f32 %v12172, %v12046
      %v12174 = vadd.f32 %v12173, %v12047
      %v12175 = vadd.f32 %v12174, %v12048
      %v12176 = vadd.f32 %v12175, %v12049
      %v12177 = vadd.f32 %v12176, %v12050
      %v12178 = vadd.f32 %v12177, %v12051
      %v12179 = vadd.f32 %v12178, %v12052
      %v12180 = vadd.f32 %v12179, %v12053
      %v12181 = vadd.f32 %v12180, %v12054
      %v12182 = vadd.f32 %v12181, %v12055
      %v12183 = vadd.f32 %v12182, %v12056
      %v12184 = vadd.f32 %v12183, %v12057
      %v12185 = vadd.f32 %v12184, %v12058
      %v12186 = vadd.f32 %v12185, %v12059
      %v12187 = vadd.f32 %v12186, %v12060
      %v12188 = vadd.f32 %v12187, %v12061
      %v12189 = vadd.f32 %v12188, %v12062
      %v12190 = vadd.f32 %v12189, %v12063
      %v12191 = vadd.f32 %v12190, %v12064
      %v12192 = vadd.f32 %v12191, %v12065
      %v12193 = vadd.f32 %v12192, %v12066
      %v12194 = vadd.f32 %v12193, %v12067
      %v12195 = vadd.f32 %v12194, %v12068
      %v12196 = vadd.f32 %v12195, %v12069
      %v12197 = vadd.f32 %v12196, %v12070
      %v12198 = vadd.f32 %v12197, %v12071
      %v12199 = vadd.f32 %v12198, %v12072
      %v12200 = vadd.f32 %v12199, %v12073
      %v12201 = vadd.f32 %v12200, %v12074
      %v12202 = vadd.f32 %v12201, %v12075
      %v12203 = vadd.f32 %v12202, %v12076
      %v12204 = vadd.f32 %v12203, %v12077
      %v12205 = vadd.f32 %v12204, %v12078
      %v12206 = vadd.f32 %v12205, %v12079
      %v12207 = vadd.f32 %v12206, %v12080
      %v12208 = vadd.f32 %v12207, %v12081
      %v12209 = vadd.f32 %v12208, %v12082
      %v12210 = vadd.f32 %v12209, %v12083
      %v12211 = vadd.f32 %v12210, %v12084
      %v12212 = vadd.f32 %v12211, %v12085
      %v12213 = vadd.f32 %v12212, %v12086
      %v12214 = vadd.f32 %v12213, %v12087
      %v12215 = vadd.f32 %v12214, %v12088
      %v12216 = vadd.f32 %v12215, %v12089
      %v12217 = vadd.f32 %v12216, %v12090
      %v12218 = vrot.slane %v12217, 4
      %v12219 = vadd.f32 %v12217, %v12218
      %v12220 = vrot.slane %v12219, 2
      %v12221 = vadd.f32 %v12219, %v12220
      %v12222 = vrot.slane %v12221, 1
      %v12223 = vadd.f32 %v12221, %v12222
      %v12224 = vld [vmem:[%s457] sm:$0x1f]
      %vm12225 = vcmask 1040384
      %v12226 = vsel %vm12225, %v8107, %v9136
      %vm12227 = vcmask 1041408
      %v12228 = vsel %vm12227, %v12226, %v10165
      %vm12229 = vcmask 1042432
      %v12230 = vsel %vm12229, %v12228, %v11194
      %vm12231 = vcmask 1043456
      %v12232 = vsel %vm12231, %v12230, %v12223
      %v12233 = vadd.f32 %v12224, %v12232
      %12234 = vst [vmem:[%s457] sm:$0x1f] %v12233
      %p12235 = scmp.lt.s32.totalorder %s27, 1
      %s12236 = scalar_select %p12235, %s27, 1
      %s12237 = smul.addr %s12236, 8
      %s12238 = scalar_lea.vmem %s10, %s12237
      // Predicated region
      $region65: #{tpu_custom_call.1} parent=59 // pred_check
        %p12239 = pneg %p285
      $region66: #{tpu_custom_call.1} parent=59 // pred_check_branch
        %12241 = sbr.rel (%p12239) target = $region68
      $region67: #{tpu_custom_call.1} parent=59 // pred_region
        _
      $region68: #{tpu_custom_call.1} parent=59 // pred_fallthru
        _
    $region60: #{tpu_custom_call.1} parent=5 // pred_fallthru
      _
    %p12242 = scmp.le.s32.totalorder 2, %s18
    // Predicated region
    $region69: #{tpu_custom_call.1} parent=5 // pred_check
      %p12243 = pneg %p12242
    $region70: #{tpu_custom_call.1} parent=5 // pred_check_branch
      %12245 = sbr.rel (%p12243) target = $region72
    $region71: #{tpu_custom_call.1} parent=5 // pred_region
      %s12246 = ssub.s32 %s18, 2
      // Predicated region
      $region73: #{tpu_custom_call.1} parent=71 // pred_check
        %p12247 = pneg %p291
      $region74: #{tpu_custom_call.1} parent=71 // pred_check_branch
        %12249 = sbr.rel (%p12247) target = $region76
      $region75: #{tpu_custom_call.1} parent=71 // pred_region
        %p12250 = scmp.lt.s32.totalorder %s29, 1
        %s12251 = scalar_select %p12250, %s29, 1
        %s12252 = smul.addr %s12251, 8
        %s12253 = scalar_lea.vmem %s10, %s12252
      $region76: #{tpu_custom_call.1} parent=71 // pred_fallthru
        _
    $region72: #{tpu_custom_call.1} parent=5 // pred_fallthru
      _
  $region6: #{tpu_custom_call.1} parent=0 // loop_footer
    %s22 = sadd.s32 1, %s18
  $region7: #{tpu_custom_call.1} parent=0 // loop_footer_branch
    %17 = sbr.rel target = $region3
  $region8: #{tpu_custom_call.1} parent=0 // loop_exit
    _

</llo_original>
